<compile_context>
chip_gen: v5e
topology: v5e:2x2
jax: 0.10.0
libtpu: 0.0.40
codegen_flags: <defaults>
</compile_context>

<pallas_src>
import functools

import jax
import jax.numpy as jnp
from jax.experimental import pallas as pl
from jax.experimental.pallas import tpu as pltpu


def _layernorm(t, g, b, eps=1e-5):
    mu = jnp.mean(t, axis=-1, keepdims=True)
    var = jnp.mean(jnp.square(t - mu), axis=-1, keepdims=True)
    return (t - mu) * jax.lax.rsqrt(var + eps) * g + b


def _sigmoid(t):
    return pl.reciprocal(1.0 + jnp.exp(-t), approx=True)


def _ssfenet_kernel(
    x_ref, gate_ref,
    n1_g_ref, n1_b_ref, n2_g_ref, n2_b_ref,
    in_w_ref, in_b_ref, out_w_ref, out_b_ref,
    mlp_w1_ref, mlp_b1_ref, mlp_w2_ref, mlp_b2_ref,
    cr_w_ref, cr_b_ref, frfbm_w_ref,
    ds_w_ref, ds_b_ref, fix_w_ref,
    hmask_ref, hmask_t_ref,
    o_ref,
    *, batch, c_in,
):
    f32 = jnp.float32
    n1_g, n1_b = n1_g_ref[...], n1_b_ref[...]
    n2_g, n2_b = n2_g_ref[...], n2_b_ref[...]
    in_b = in_b_ref[...]
    out_b = out_b_ref[...]
    hmask = hmask_ref[...]        # (C, heads) block-diagonal 0/1
    hmask_t = hmask_t_ref[...]    # (heads, C)

    # ---- SE gate (precomputed in wrapper) + norm1 + qkv projection ----
    # All batches' q/k/v are needed simultaneously by the cross-batch attn.
    qs, ks, vs = [], [], []
    for b in range(batch):
        x1 = x_ref[b] * gate_ref[pl.ds(b, 1), :]                      # (TN, C)
        xn = _layernorm(x1, n1_g, n1_b)
        qkv = jnp.dot(xn, in_w_ref[...], preferred_element_type=f32) + in_b
        qs.append(qkv[:, :c_in])            # attention scale folded into in_w
        ks.append(qkv[:, c_in:2 * c_in])
        vs.append(qkv[:, 2 * c_in:])

    for i in range(batch):
        # ---- attention over the batch axis (per spatial token, per head) ----
        # per-head scores: elementwise q_i * k_j, then segment-sum over each
        # head's lanes with one full-width (TN, C) @ (C, heads) matmul.
        s = [jnp.dot(qs[i] * ks[j], hmask, preferred_element_type=f32)
             for j in range(batch)]                                # B x (TN, H)
        m = s[0]
        for j in range(1, batch):
            m = jnp.maximum(m, s[j])
        e = [jnp.exp(sj - m) for sj in s]
        denom = e[0]
        for j in range(1, batch):
            denom = denom + e[j]
        inv = pl.reciprocal(denom, approx=True)                    # EUP
        # broadcast per-head probs back to C lanes and weight the values
        o = jnp.dot(e[0] * inv, hmask_t, preferred_element_type=f32) * vs[0]
        for j in range(1, batch):
            p = jnp.dot(e[j] * inv, hmask_t, preferred_element_type=f32)
            o = o + p * vs[j]
        a = jnp.dot(o, out_w_ref[...], preferred_element_type=f32) + out_b

        # ---- "x = x + norm1(x)", MLP, "x = x + norm2(x)" ----
        a2 = a + _layernorm(a, n1_g, n1_b)
        h = jnp.maximum(
            jnp.dot(a2, mlp_w1_ref[...], preferred_element_type=f32)
            + mlp_b1_ref[...], 0.0)
        mo = (jnp.dot(h, mlp_w2_ref[...], preferred_element_type=f32)
              + mlp_b2_ref[...])
        m2 = mo + _layernorm(mo, n2_g, n2_b)

        # conv_reduce (1x1, BN folded) + ReLU
        cr = jnp.maximum(
            jnp.dot(m2, cr_w_ref[...], preferred_element_type=f32)
            + cr_b_ref[...], 0.0)
        # SpectralNoiseSuppression (FrFBM approximated, see TODO above)
        ns = cr * _sigmoid(jnp.dot(cr, frfbm_w_ref[...],
                                   preferred_element_type=f32))

        # downsample identity (1x1 + BN folded), computed right before use
        identity = (jnp.dot(x_ref[i], ds_w_ref[...], preferred_element_type=f32)
                    + ds_b_ref[...])
        y = ns + identity

        # output_fix (1x1) + ReLU, stored straight into the output block
        o_ref[i] = jnp.maximum(
            jnp.dot(y, fix_w_ref[...], preferred_element_type=f32), 0.0
        ).astype(o_ref.dtype)


def _pick_token_tile(n, target):
    tn = None
    for cand in range(8, min(n, target) + 1, 8):
        if n % cand == 0:
            tn = cand
    return tn if tn is not None else n


def ssfenet_block_forward(x_nchw, p, *, num_heads=4, tile_tokens=128):
    B, C, H, W = x_nchw.shape
    N = H * W
    c_fix = p["fix_w"].shape[1]
    hd = C // num_heads
    f32 = jnp.float32

    # NCHW -> (B, N, C); every grid block covers the same token range for all
    # batch elements, which the cross-batch attention needs.
    x_tok = jnp.transpose(x_nchw, (0, 2, 3, 1)).reshape(B, N, C)

    # --- tiny precomputations done once in plain XLA (outside the kernel) ---
    # SE gate requires a global spatial mean, so it cannot be token-tiled.
    pooled = jnp.mean(x_tok, axis=1)                                  # (B, C)
    gate = jax.nn.sigmoid(jnp.maximum(pooled @ p["se_w1"], 0.0) @ p["se_w2"])

    # Fold attention scale into the Q columns of the in-projection.
    scale = 1.0 / float(hd) ** 0.5
    in_w = p["in_w"].at[:, :C].multiply(scale)
    in_b = p["in_b"].at[:, :C].multiply(scale)

    # Fold eval-mode BatchNorm scale/bias into the adjacent 1x1 convs.
    cr_w = p["cr_w"] * p["bn_s"]
    cr_b = p["bn_b"]
    ds_w = p["ds_w"] * p["ds_s"]
    ds_b = p["ds_b"]

    # Block-diagonal 0/1 head mask for per-head reduce / prob broadcast.
    head_ids = jnp.arange(C, dtype=jnp.int32) // hd
    hmask = (head_ids[:, None]
             == jnp.arange(num_heads, dtype=jnp.int32)[None, :]).astype(f32)
    hmask_t = hmask.T

    tn = _pick_token_tile(N, tile_tokens)
    grid = (N // tn,)

    weights = (gate, p["n1_g"], p["n1_b"], p["n2_g"], p["n2_b"],
               in_w, in_b, p["out_w"], p["out_b"],
               p["mlp_w1"], p["mlp_b1"], p["mlp_w2"], p["mlp_b2"],
               cr_w, cr_b, p["frfbm_w"], ds_w, ds_b, p["fix_w"],
               hmask, hmask_t)

    def full_spec(a):
        nd = a.ndim
        return pl.BlockSpec(a.shape, lambda i: (0,) * nd)

    in_specs = ([pl.BlockSpec((B, tn, C), lambda i: (0, i, 0))]
                + [full_spec(a) for a in weights])
    out_specs = pl.BlockSpec((B, tn, c_fix), lambda i: (0, i, 0))

    kernel = functools.partial(_ssfenet_kernel, batch=B, c_in=C)
    out = pl.pallas_call(
        kernel,
        out_shape=jax.ShapeDtypeStruct((B, N, c_fix), f32),
        grid=grid,
        in_specs=in_specs,
        out_specs=out_specs,
        compiler_params=pltpu.CompilerParams(
            dimension_semantics=("parallel",),
            vmem_limit_bytes=32 * 1024 * 1024),
    )(x_tok, *weights)
    return out.reshape(B, H, W, c_fix).transpose(0, 3, 1, 2)


def init_params(key, c_in, c_out, c_fix=64, reduction=16):
    ks = jax.random.split(key, 14)

    def w(k, shape, scale=0.1):
        return jax.random.normal(k, shape, jnp.float32) * scale

    c_red = max(c_in // reduction, 1)
    eps = 1e-5
    bn_scale = jnp.float32(1.0 / (1.0 + eps) ** 0.5)  # gamma=1, beta=0, rm=0, rv=1
    return {
        "se_w1": w(ks[0], (c_in, c_red)),
        "se_w2": w(ks[1], (c_red, c_in)),
        "n1_g": jnp.ones((1, c_in), jnp.float32),
        "n1_b": jnp.zeros((1, c_in), jnp.float32),
        "n2_g": jnp.ones((1, c_in), jnp.float32),
        "n2_b": jnp.zeros((1, c_in), jnp.float32),
        "in_w": w(ks[2], (c_in, 3 * c_in)),
        "in_b": w(ks[3], (1, 3 * c_in), 0.02),
        "out_w": w(ks[4], (c_in, c_in)),
        "out_b": w(ks[5], (1, c_in), 0.02),
        "mlp_w1": w(ks[6], (c_in, 4 * c_in)),
        "mlp_b1": w(ks[7], (1, 4 * c_in), 0.02),
        "mlp_w2": w(ks[8], (4 * c_in, c_in)),
        "mlp_b2": w(ks[9], (1, c_in), 0.02),
        "cr_w": w(ks[10], (c_in, c_out)),
        "bn_s": jnp.full((1, c_out), bn_scale, jnp.float32),
        "bn_b": jnp.zeros((1, c_out), jnp.float32),
        "frfbm_w": w(ks[11], (c_out, c_out)),
        "ds_w": w(ks[12], (c_in, c_out)),
        "ds_s": jnp.full((1, c_out), bn_scale, jnp.float32),
        "ds_b": jnp.zeros((1, c_out), jnp.float32),
        "fix_w": w(ks[13], (c_out, c_fix)),
    }


def reference_forward(x, p, *, num_heads=4):
    """Pure-JAX reference mirroring the PyTorch forward (same approximations)."""
    B, C, H, W = x.shape
    N = H * W
    c_out = p["cr_w"].shape[1]
    c_fix = p["fix_w"].shape[1]
    xt = jnp.transpose(x, (0, 2, 3, 1)).reshape(B * N, C)

    identity = (xt @ p["ds_w"]) * p["ds_s"] + p["ds_b"]

    pooled = x.mean(axis=(2, 3))                                  # (B, C)
    wgt = jax.nn.sigmoid(jnp.maximum(pooled @ p["se_w1"], 0.0) @ p["se_w2"])
    x1 = xt.reshape(B, N, C) * wgt[:, None, :]

    def ln(t, g, b):
        mu = t.mean(-1, keepdims=True)
        var = ((t - mu) ** 2).mean(-1, keepdims=True)
        return (t - mu) / jnp.sqrt(var + 1e-5) * g + b

    xn = ln(x1, p["n1_g"], p["n1_b"])
    qkv = xn @ p["in_w"] + p["in_b"]
    q, k, v = qkv[..., :C], qkv[..., C:2 * C], qkv[..., 2 * C:]
    hd = C // num_heads
    qh = q.reshape(B, N, num_heads, hd) * (hd ** -0.5)
    kh = k.reshape(B, N, num_heads, hd)
    vh = v.reshape(B, N, num_heads, hd)
    s = jnp.einsum("inhd,jnhd->nhij", qh, kh)
    pattn = jax.nn.softmax(s, axis=-1)
    o = jnp.einsum("nhij,jnhd->inhd", pattn, vh).reshape(B, N, C)
    a = o @ p["out_w"] + p["out_b"]

    a2 = a + ln(a, p["n1_g"], p["n1_b"])
    mout = jnp.maximum(a2 @ p["mlp_w1"] + p["mlp_b1"], 0.0) @ p["mlp_w2"] + p["mlp_b2"]
    m2 = mout + ln(mout, p["n2_g"], p["n2_b"])

    cr = jnp.maximum((m2 @ p["cr_w"]) * p["bn_s"] + p["bn_b"], 0.0)
    ns = cr * jax.nn.sigmoid(cr @ p["frfbm_w"])
    y = ns + identity.reshape(B, N, c_out)
    out = jnp.maximum(y @ p["fix_w"], 0.0)
    return out.reshape(B, H, W, c_fix).transpose(0, 3, 1, 2)


if __name__ == "__main__":
    key = jax.random.PRNGKey(0)
    kx, kp = jax.random.split(key)
    B, C_in, H, W = 2, 32, 16, 16
    C_out = 16
    x = jax.random.normal(kx, (B, C_in, H, W), jnp.float32)
    params = init_params(kp, C_in, C_out)

    out = jax.jit(ssfenet_block_forward)(x, params)
    out = jax.block_until_ready(out)
    assert out.shape == (B, 64, H, W), out.shape

    ref = reference_forward(x, params)
    max_err = float(jnp.max(jnp.abs(out - ref)))
    assert jnp.allclose(out, ref, atol=1e-2, rtol=1e-2), max_err

    print("KERNEL_OK")
</pallas_src>

<mosaic_0001>
module attributes {stable_mosaic.version = 11 : i64} {
  func.func @_ssfenet_kernel(%arg0: i32, %arg1: memref<2x128x32xf32, #tpu.memory_space<vmem>>, %arg2: memref<2x32xf32, #tpu.memory_space<vmem>>, %arg3: memref<1x32xf32, #tpu.memory_space<vmem>>, %arg4: memref<1x32xf32, #tpu.memory_space<vmem>>, %arg5: memref<1x32xf32, #tpu.memory_space<vmem>>, %arg6: memref<1x32xf32, #tpu.memory_space<vmem>>, %arg7: memref<32x96xf32, #tpu.memory_space<vmem>>, %arg8: memref<1x96xf32, #tpu.memory_space<vmem>>, %arg9: memref<32x32xf32, #tpu.memory_space<vmem>>, %arg10: memref<1x32xf32, #tpu.memory_space<vmem>>, %arg11: memref<32x128xf32, #tpu.memory_space<vmem>>, %arg12: memref<1x128xf32, #tpu.memory_space<vmem>>, %arg13: memref<128x32xf32, #tpu.memory_space<vmem>>, %arg14: memref<1x32xf32, #tpu.memory_space<vmem>>, %arg15: memref<32x16xf32, #tpu.memory_space<vmem>>, %arg16: memref<1x16xf32, #tpu.memory_space<vmem>>, %arg17: memref<16x16xf32, #tpu.memory_space<vmem>>, %arg18: memref<32x16xf32, #tpu.memory_space<vmem>>, %arg19: memref<1x16xf32, #tpu.memory_space<vmem>>, %arg20: memref<16x64xf32, #tpu.memory_space<vmem>>, %arg21: memref<32x4xf32, #tpu.memory_space<vmem>>, %arg22: memref<4x32xf32, #tpu.memory_space<vmem>>, %arg23: memref<2x128x64xf32, #tpu.memory_space<vmem>>) attributes {dimension_semantics = [#tpu.dimension_semantics<parallel>], iteration_bounds = array<i64: 2>, scalar_prefetch = 0 : i64, scratch_operands = 0 : i64, tpu.core_type = #tpu.core_type<tc>, window_params = [{transform_indices = @transform_0, window_bounds = array<i64: 2, 128, 32>}, {pipeline_mode = #tpu.pipeline_mode<synchronous>, transform_indices = @transform_1, window_bounds = array<i64: 2, 32>}, {pipeline_mode = #tpu.pipeline_mode<synchronous>, transform_indices = @transform_2, window_bounds = array<i64: 1, 32>}, {pipeline_mode = #tpu.pipeline_mode<synchronous>, transform_indices = @transform_3, window_bounds = array<i64: 1, 32>}, {pipeline_mode = #tpu.pipeline_mode<synchronous>, transform_indices = @transform_4, window_bounds = array<i64: 1, 32>}, {pipeline_mode = #tpu.pipeline_mode<synchronous>, transform_indices = @transform_5, window_bounds = array<i64: 1, 32>}, {pipeline_mode = #tpu.pipeline_mode<synchronous>, transform_indices = @transform_6, window_bounds = array<i64: 32, 96>}, {pipeline_mode = #tpu.pipeline_mode<synchronous>, transform_indices = @transform_7, window_bounds = array<i64: 1, 96>}, {pipeline_mode = #tpu.pipeline_mode<synchronous>, transform_indices = @transform_8, window_bounds = array<i64: 32, 32>}, {pipeline_mode = #tpu.pipeline_mode<synchronous>, transform_indices = @transform_9, window_bounds = array<i64: 1, 32>}, {pipeline_mode = #tpu.pipeline_mode<synchronous>, transform_indices = @transform_10, window_bounds = array<i64: 32, 128>}, {pipeline_mode = #tpu.pipeline_mode<synchronous>, transform_indices = @transform_11, window_bounds = array<i64: 1, 128>}, {pipeline_mode = #tpu.pipeline_mode<synchronous>, transform_indices = @transform_12, window_bounds = array<i64: 128, 32>}, {pipeline_mode = #tpu.pipeline_mode<synchronous>, transform_indices = @transform_13, window_bounds = array<i64: 1, 32>}, {pipeline_mode = #tpu.pipeline_mode<synchronous>, transform_indices = @transform_14, window_bounds = array<i64: 32, 16>}, {pipeline_mode = #tpu.pipeline_mode<synchronous>, transform_indices = @transform_15, window_bounds = array<i64: 1, 16>}, {pipeline_mode = #tpu.pipeline_mode<synchronous>, transform_indices = @transform_16, window_bounds = array<i64: 16, 16>}, {pipeline_mode = #tpu.pipeline_mode<synchronous>, transform_indices = @transform_17, window_bounds = array<i64: 32, 16>}, {pipeline_mode = #tpu.pipeline_mode<synchronous>, transform_indices = @transform_18, window_bounds = array<i64: 1, 16>}, {pipeline_mode = #tpu.pipeline_mode<synchronous>, transform_indices = @transform_19, window_bounds = array<i64: 16, 64>}, {pipeline_mode = #tpu.pipeline_mode<synchronous>, transform_indices = @transform_20, window_bounds = array<i64: 32, 4>}, {pipeline_mode = #tpu.pipeline_mode<synchronous>, transform_indices = @transform_21, window_bounds = array<i64: 4, 32>}, {transform_indices = @transform_22, window_bounds = array<i64: 2, 128, 64>}]} {
    %c0 = arith.constant 0 : index
    %c0_0 = arith.constant 0 : index
    %0 = vector.load %arg3[%c0, %c0_0] : memref<1x32xf32, #tpu.memory_space<vmem>>, vector<1x32xf32>
    %c0_1 = arith.constant 0 : index
    %c0_2 = arith.constant 0 : index
    %1 = vector.load %arg4[%c0_1, %c0_2] : memref<1x32xf32, #tpu.memory_space<vmem>>, vector<1x32xf32>
    %c0_3 = arith.constant 0 : index
    %c0_4 = arith.constant 0 : index
    %2 = vector.load %arg5[%c0_3, %c0_4] : memref<1x32xf32, #tpu.memory_space<vmem>>, vector<1x32xf32>
    %c0_5 = arith.constant 0 : index
    %c0_6 = arith.constant 0 : index
    %3 = vector.load %arg6[%c0_5, %c0_6] : memref<1x32xf32, #tpu.memory_space<vmem>>, vector<1x32xf32>
    %c0_7 = arith.constant 0 : index
    %c0_8 = arith.constant 0 : index
    %4 = vector.load %arg8[%c0_7, %c0_8] : memref<1x96xf32, #tpu.memory_space<vmem>>, vector<1x96xf32>
    %c0_9 = arith.constant 0 : index
    %c0_10 = arith.constant 0 : index
    %5 = vector.load %arg10[%c0_9, %c0_10] : memref<1x32xf32, #tpu.memory_space<vmem>>, vector<1x32xf32>
    %c0_11 = arith.constant 0 : index
    %c0_12 = arith.constant 0 : index
    %6 = vector.load %arg21[%c0_11, %c0_12] : memref<32x4xf32, #tpu.memory_space<vmem>>, vector<32x4xf32>
    %c0_13 = arith.constant 0 : index
    %c0_14 = arith.constant 0 : index
    %7 = vector.load %arg22[%c0_13, %c0_14] : memref<4x32xf32, #tpu.memory_space<vmem>>, vector<4x32xf32>
    %c0_15 = arith.constant 0 : index
    %c0_16 = arith.constant 0 : index
    %c0_17 = arith.constant 0 : index
    %8 = vector.load %arg1[%c0_15, %c0_16, %c0_17] : memref<2x128x32xf32, #tpu.memory_space<vmem>>, vector<1x128x32xf32>
    %9 = vector.shape_cast %8 : vector<1x128x32xf32> to vector<128x32xf32>
    %c0_18 = arith.constant 0 : index
    %c0_19 = arith.constant 0 : index
    %10 = vector.load %arg2[%c0_18, %c0_19] : memref<2x32xf32, #tpu.memory_space<vmem>>, vector<1x32xf32>
    %11 = vector.broadcast %10 : vector<1x32xf32> to vector<128x32xf32>
    %12 = arith.mulf %9, %11 : vector<128x32xf32>
    %cst = arith.constant dense<0.000000e+00> : vector<128xf32>
    %13 = vector.multi_reduction <add>, %12, %cst [1] : vector<128x32xf32> to vector<128xf32>
    %14 = vector.shape_cast %13 : vector<128xf32> to vector<128x1xf32>
    %cst_20 = arith.constant 3.200000e+01 : f32
    %15 = vector.broadcast %cst_20 : f32 to vector<128x1xf32>
    %16 = arith.divf %14, %15 : vector<128x1xf32>
    %17 = vector.broadcast %16 : vector<128x1xf32> to vector<128x32xf32>
    %18 = arith.subf %12, %17 : vector<128x32xf32>
    %19 = arith.mulf %18, %18 : vector<128x32xf32>
    %cst_21 = arith.constant dense<0.000000e+00> : vector<128xf32>
    %20 = vector.multi_reduction <add>, %19, %cst_21 [1] : vector<128x32xf32> to vector<128xf32>
    %21 = vector.shape_cast %20 : vector<128xf32> to vector<128x1xf32>
    %cst_22 = arith.constant 3.200000e+01 : f32
    %22 = vector.broadcast %cst_22 : f32 to vector<128x1xf32>
    %23 = arith.divf %21, %22 : vector<128x1xf32>
    %24 = vector.broadcast %16 : vector<128x1xf32> to vector<128x32xf32>
    %25 = arith.subf %12, %24 : vector<128x32xf32>
    %cst_23 = arith.constant 9.99999974E-6 : f32
    %26 = vector.broadcast %cst_23 : f32 to vector<128x1xf32>
    %27 = arith.addf %23, %26 : vector<128x1xf32>
    %28 = math.rsqrt %27 : vector<128x1xf32>
    %29 = vector.broadcast %28 : vector<128x1xf32> to vector<128x32xf32>
    %30 = arith.mulf %25, %29 : vector<128x32xf32>
    %31 = vector.broadcast %0 : vector<1x32xf32> to vector<128x32xf32>
    %32 = arith.mulf %30, %31 : vector<128x32xf32>
    %33 = vector.broadcast %1 : vector<1x32xf32> to vector<128x32xf32>
    %34 = arith.addf %32, %33 : vector<128x32xf32>
    %c0_24 = arith.constant 0 : index
    %c0_25 = arith.constant 0 : index
    %35 = vector.load %arg7[%c0_24, %c0_25] : memref<32x96xf32, #tpu.memory_space<vmem>>, vector<32x96xf32>
    %cst_26 = arith.constant dense<0.000000e+00> : vector<128x96xf32>
    %36 = tpu.matmul %34, %35, %cst_26 {dimension_numbers = #tpu.dot_dimension_numbers<[1], [0], [0], [1], [0, 0, 1, 1], [], []>} : vector<128x32xf32>, vector<32x96xf32>, vector<128x96xf32> -> vector<128x96xf32>
    %37 = vector.broadcast %4 : vector<1x96xf32> to vector<128x96xf32>
    %38 = arith.addf %36, %37 : vector<128x96xf32>
    %39 = vector.extract_strided_slice %38 {offsets = [0, 0], sizes = [128, 32], strides = [1, 1]} : vector<128x96xf32> to vector<128x32xf32>
    %40 = vector.extract_strided_slice %38 {offsets = [0, 32], sizes = [128, 32], strides = [1, 1]} : vector<128x96xf32> to vector<128x32xf32>
    %41 = vector.extract_strided_slice %38 {offsets = [0, 64], sizes = [128, 32], strides = [1, 1]} : vector<128x96xf32> to vector<128x32xf32>
    %c1 = arith.constant 1 : index
    %c0_27 = arith.constant 0 : index
    %c0_28 = arith.constant 0 : index
    %42 = vector.load %arg1[%c1, %c0_27, %c0_28] : memref<2x128x32xf32, #tpu.memory_space<vmem>>, vector<1x128x32xf32>
    %43 = vector.shape_cast %42 : vector<1x128x32xf32> to vector<128x32xf32>
    %c1_29 = arith.constant 1 : index
    %c0_30 = arith.constant 0 : index
    %44 = vector.load %arg2[%c1_29, %c0_30] : memref<2x32xf32, #tpu.memory_space<vmem>>, vector<1x32xf32>
    %45 = vector.broadcast %44 : vector<1x32xf32> to vector<128x32xf32>
    %46 = arith.mulf %43, %45 : vector<128x32xf32>
    %cst_31 = arith.constant dense<0.000000e+00> : vector<128xf32>
    %47 = vector.multi_reduction <add>, %46, %cst_31 [1] : vector<128x32xf32> to vector<128xf32>
    %48 = vector.shape_cast %47 : vector<128xf32> to vector<128x1xf32>
    %cst_32 = arith.constant 3.200000e+01 : f32
    %49 = vector.broadcast %cst_32 : f32 to vector<128x1xf32>
    %50 = arith.divf %48, %49 : vector<128x1xf32>
    %51 = vector.broadcast %50 : vector<128x1xf32> to vector<128x32xf32>
    %52 = arith.subf %46, %51 : vector<128x32xf32>
    %53 = arith.mulf %52, %52 : vector<128x32xf32>
    %cst_33 = arith.constant dense<0.000000e+00> : vector<128xf32>
    %54 = vector.multi_reduction <add>, %53, %cst_33 [1] : vector<128x32xf32> to vector<128xf32>
    %55 = vector.shape_cast %54 : vector<128xf32> to vector<128x1xf32>
    %cst_34 = arith.constant 3.200000e+01 : f32
    %56 = vector.broadcast %cst_34 : f32 to vector<128x1xf32>
    %57 = arith.divf %55, %56 : vector<128x1xf32>
    %58 = vector.broadcast %50 : vector<128x1xf32> to vector<128x32xf32>
    %59 = arith.subf %46, %58 : vector<128x32xf32>
    %cst_35 = arith.constant 9.99999974E-6 : f32
    %60 = vector.broadcast %cst_35 : f32 to vector<128x1xf32>
    %61 = arith.addf %57, %60 : vector<128x1xf32>
    %62 = math.rsqrt %61 : vector<128x1xf32>
    %63 = vector.broadcast %62 : vector<128x1xf32> to vector<128x32xf32>
    %64 = arith.mulf %59, %63 : vector<128x32xf32>
    %65 = vector.broadcast %0 : vector<1x32xf32> to vector<128x32xf32>
    %66 = arith.mulf %64, %65 : vector<128x32xf32>
    %67 = vector.broadcast %1 : vector<1x32xf32> to vector<128x32xf32>
    %68 = arith.addf %66, %67 : vector<128x32xf32>
    %c0_36 = arith.constant 0 : index
    %c0_37 = arith.constant 0 : index
    %69 = vector.load %arg7[%c0_36, %c0_37] : memref<32x96xf32, #tpu.memory_space<vmem>>, vector<32x96xf32>
    %cst_38 = arith.constant dense<0.000000e+00> : vector<128x96xf32>
    %70 = tpu.matmul %68, %69, %cst_38 {dimension_numbers = #tpu.dot_dimension_numbers<[1], [0], [0], [1], [0, 0, 1, 1], [], []>} : vector<128x32xf32>, vector<32x96xf32>, vector<128x96xf32> -> vector<128x96xf32>
    %71 = vector.broadcast %4 : vector<1x96xf32> to vector<128x96xf32>
    %72 = arith.addf %70, %71 : vector<128x96xf32>
    %73 = vector.extract_strided_slice %72 {offsets = [0, 0], sizes = [128, 32], strides = [1, 1]} : vector<128x96xf32> to vector<128x32xf32>
    %74 = vector.extract_strided_slice %72 {offsets = [0, 32], sizes = [128, 32], strides = [1, 1]} : vector<128x96xf32> to vector<128x32xf32>
    %75 = vector.extract_strided_slice %72 {offsets = [0, 64], sizes = [128, 32], strides = [1, 1]} : vector<128x96xf32> to vector<128x32xf32>
    %76 = arith.mulf %39, %40 : vector<128x32xf32>
    %cst_39 = arith.constant dense<0.000000e+00> : vector<128x4xf32>
    %77 = tpu.matmul %76, %6, %cst_39 {dimension_numbers = #tpu.dot_dimension_numbers<[1], [0], [0], [1], [0, 0, 1, 1], [], []>} : vector<128x32xf32>, vector<32x4xf32>, vector<128x4xf32> -> vector<128x4xf32>
    %78 = arith.mulf %39, %74 : vector<128x32xf32>
    %cst_40 = arith.constant dense<0.000000e+00> : vector<128x4xf32>
    %79 = tpu.matmul %78, %6, %cst_40 {dimension_numbers = #tpu.dot_dimension_numbers<[1], [0], [0], [1], [0, 0, 1, 1], [], []>} : vector<128x32xf32>, vector<32x4xf32>, vector<128x4xf32> -> vector<128x4xf32>
    %80 = arith.maximumf %77, %79 : vector<128x4xf32>
    %81 = arith.subf %77, %80 : vector<128x4xf32>
    %82 = math.exp %81 : vector<128x4xf32>
    %83 = arith.subf %79, %80 : vector<128x4xf32>
    %84 = math.exp %83 : vector<128x4xf32>
    %85 = arith.addf %82, %84 : vector<128x4xf32>
    %86 = tpu.reciprocal %85 {approx = true} : vector<128x4xf32> -> vector<128x4xf32>
    %87 = arith.mulf %82, %86 : vector<128x4xf32>
    %cst_41 = arith.constant dense<0.000000e+00> : vector<128x32xf32>
    %88 = tpu.matmul %87, %7, %cst_41 {dimension_numbers = #tpu.dot_dimension_numbers<[1], [0], [0], [1], [0, 0, 1, 1], [], []>} : vector<128x4xf32>, vector<4x32xf32>, vector<128x32xf32> -> vector<128x32xf32>
    %89 = arith.mulf %88, %41 : vector<128x32xf32>
    %90 = arith.mulf %84, %86 : vector<128x4xf32>
    %cst_42 = arith.constant dense<0.000000e+00> : vector<128x32xf32>
    %91 = tpu.matmul %90, %7, %cst_42 {dimension_numbers = #tpu.dot_dimension_numbers<[1], [0], [0], [1], [0, 0, 1, 1], [], []>} : vector<128x4xf32>, vector<4x32xf32>, vector<128x32xf32> -> vector<128x32xf32>
    %92 = arith.mulf %91, %75 : vector<128x32xf32>
    %93 = arith.addf %89, %92 : vector<128x32xf32>
    %c0_43 = arith.constant 0 : index
    %c0_44 = arith.constant 0 : index
    %94 = vector.load %arg9[%c0_43, %c0_44] : memref<32x32xf32, #tpu.memory_space<vmem>>, vector<32x32xf32>
    %cst_45 = arith.constant dense<0.000000e+00> : vector<128x32xf32>
    %95 = tpu.matmul %93, %94, %cst_45 {dimension_numbers = #tpu.dot_dimension_numbers<[1], [0], [0], [1], [0, 0, 1, 1], [], []>} : vector<128x32xf32>, vector<32x32xf32>, vector<128x32xf32> -> vector<128x32xf32>
    %96 = vector.broadcast %5 : vector<1x32xf32> to vector<128x32xf32>
    %97 = arith.addf %95, %96 : vector<128x32xf32>
    %cst_46 = arith.constant dense<0.000000e+00> : vector<128xf32>
    %98 = vector.multi_reduction <add>, %97, %cst_46 [1] : vector<128x32xf32> to vector<128xf32>
    %99 = vector.shape_cast %98 : vector<128xf32> to vector<128x1xf32>
    %cst_47 = arith.constant 3.200000e+01 : f32
    %100 = vector.broadcast %cst_47 : f32 to vector<128x1xf32>
    %101 = arith.divf %99, %100 : vector<128x1xf32>
    %102 = vector.broadcast %101 : vector<128x1xf32> to vector<128x32xf32>
    %103 = arith.subf %97, %102 : vector<128x32xf32>
    %104 = arith.mulf %103, %103 : vector<128x32xf32>
    %cst_48 = arith.constant dense<0.000000e+00> : vector<128xf32>
    %105 = vector.multi_reduction <add>, %104, %cst_48 [1] : vector<128x32xf32> to vector<128xf32>
    %106 = vector.shape_cast %105 : vector<128xf32> to vector<128x1xf32>
    %cst_49 = arith.constant 3.200000e+01 : f32
    %107 = vector.broadcast %cst_49 : f32 to vector<128x1xf32>
    %108 = arith.divf %106, %107 : vector<128x1xf32>
    %109 = vector.broadcast %101 : vector<128x1xf32> to vector<128x32xf32>
    %110 = arith.subf %97, %109 : vector<128x32xf32>
    %cst_50 = arith.constant 9.99999974E-6 : f32
    %111 = vector.broadcast %cst_50 : f32 to vector<128x1xf32>
    %112 = arith.addf %108, %111 : vector<128x1xf32>
    %113 = math.rsqrt %112 : vector<128x1xf32>
    %114 = vector.broadcast %113 : vector<128x1xf32> to vector<128x32xf32>
    %115 = arith.mulf %110, %114 : vector<128x32xf32>
    %116 = vector.broadcast %0 : vector<1x32xf32> to vector<128x32xf32>
    %117 = arith.mulf %115, %116 : vector<128x32xf32>
    %118 = vector.broadcast %1 : vector<1x32xf32> to vector<128x32xf32>
    %119 = arith.addf %117, %118 : vector<128x32xf32>
    %120 = arith.addf %97, %119 : vector<128x32xf32>
    %c0_51 = arith.constant 0 : index
    %c0_52 = arith.constant 0 : index
    %121 = vector.load %arg11[%c0_51, %c0_52] : memref<32x128xf32, #tpu.memory_space<vmem>>, vector<32x128xf32>
    %cst_53 = arith.constant dense<0.000000e+00> : vector<128x128xf32>
    %122 = tpu.matmul %120, %121, %cst_53 {dimension_numbers = #tpu.dot_dimension_numbers<[1], [0], [0], [1], [0, 0, 1, 1], [], []>} : vector<128x32xf32>, vector<32x128xf32>, vector<128x128xf32> -> vector<128x128xf32>
    %c0_54 = arith.constant 0 : index
    %c0_55 = arith.constant 0 : index
    %123 = vector.load %arg12[%c0_54, %c0_55] : memref<1x128xf32, #tpu.memory_space<vmem>>, vector<1x128xf32>
    %124 = vector.broadcast %123 : vector<1x128xf32> to vector<128x128xf32>
    %125 = arith.addf %122, %124 : vector<128x128xf32>
    %cst_56 = arith.constant 0.000000e+00 : f32
    %126 = vector.broadcast %cst_56 : f32 to vector<128x128xf32>
    %127 = arith.maximumf %125, %126 : vector<128x128xf32>
    %c0_57 = arith.constant 0 : index
    %c0_58 = arith.constant 0 : index
    %128 = vector.load %arg13[%c0_57, %c0_58] : memref<128x32xf32, #tpu.memory_space<vmem>>, vector<128x32xf32>
    %cst_59 = arith.constant dense<0.000000e+00> : vector<128x32xf32>
    %129 = tpu.matmul %127, %128, %cst_59 {dimension_numbers = #tpu.dot_dimension_numbers<[1], [0], [0], [1], [0, 0, 1, 1], [], []>} : vector<128x128xf32>, vector<128x32xf32>, vector<128x32xf32> -> vector<128x32xf32>
    %c0_60 = arith.constant 0 : index
    %c0_61 = arith.constant 0 : index
    %130 = vector.load %arg14[%c0_60, %c0_61] : memref<1x32xf32, #tpu.memory_space<vmem>>, vector<1x32xf32>
    %131 = vector.broadcast %130 : vector<1x32xf32> to vector<128x32xf32>
    %132 = arith.addf %129, %131 : vector<128x32xf32>
    %cst_62 = arith.constant dense<0.000000e+00> : vector<128xf32>
    %133 = vector.multi_reduction <add>, %132, %cst_62 [1] : vector<128x32xf32> to vector<128xf32>
    %134 = vector.shape_cast %133 : vector<128xf32> to vector<128x1xf32>
    %cst_63 = arith.constant 3.200000e+01 : f32
    %135 = vector.broadcast %cst_63 : f32 to vector<128x1xf32>
    %136 = arith.divf %134, %135 : vector<128x1xf32>
    %137 = vector.broadcast %136 : vector<128x1xf32> to vector<128x32xf32>
    %138 = arith.subf %132, %137 : vector<128x32xf32>
    %139 = arith.mulf %138, %138 : vector<128x32xf32>
    %cst_64 = arith.constant dense<0.000000e+00> : vector<128xf32>
    %140 = vector.multi_reduction <add>, %139, %cst_64 [1] : vector<128x32xf32> to vector<128xf32>
    %141 = vector.shape_cast %140 : vector<128xf32> to vector<128x1xf32>
    %cst_65 = arith.constant 3.200000e+01 : f32
    %142 = vector.broadcast %cst_65 : f32 to vector<128x1xf32>
    %143 = arith.divf %141, %142 : vector<128x1xf32>
    %144 = vector.broadcast %136 : vector<128x1xf32> to vector<128x32xf32>
    %145 = arith.subf %132, %144 : vector<128x32xf32>
    %cst_66 = arith.constant 9.99999974E-6 : f32
    %146 = vector.broadcast %cst_66 : f32 to vector<128x1xf32>
    %147 = arith.addf %143, %146 : vector<128x1xf32>
    %148 = math.rsqrt %147 : vector<128x1xf32>
    %149 = vector.broadcast %148 : vector<128x1xf32> to vector<128x32xf32>
    %150 = arith.mulf %145, %149 : vector<128x32xf32>
    %151 = vector.broadcast %2 : vector<1x32xf32> to vector<128x32xf32>
    %152 = arith.mulf %150, %151 : vector<128x32xf32>
    %153 = vector.broadcast %3 : vector<1x32xf32> to vector<128x32xf32>
    %154 = arith.addf %152, %153 : vector<128x32xf32>
    %155 = arith.addf %132, %154 : vector<128x32xf32>
    %c0_67 = arith.constant 0 : index
    %c0_68 = arith.constant 0 : index
    %156 = vector.load %arg15[%c0_67, %c0_68] : memref<32x16xf32, #tpu.memory_space<vmem>>, vector<32x16xf32>
    %cst_69 = arith.constant dense<0.000000e+00> : vector<128x16xf32>
    %157 = tpu.matmul %155, %156, %cst_69 {dimension_numbers = #tpu.dot_dimension_numbers<[1], [0], [0], [1], [0, 0, 1, 1], [], []>} : vector<128x32xf32>, vector<32x16xf32>, vector<128x16xf32> -> vector<128x16xf32>
    %c0_70 = arith.constant 0 : index
    %c0_71 = arith.constant 0 : index
    %158 = vector.load %arg16[%c0_70, %c0_71] : memref<1x16xf32, #tpu.memory_space<vmem>>, vector<1x16xf32>
    %159 = vector.broadcast %158 : vector<1x16xf32> to vector<128x16xf32>
    %160 = arith.addf %157, %159 : vector<128x16xf32>
    %cst_72 = arith.constant 0.000000e+00 : f32
    %161 = vector.broadcast %cst_72 : f32 to vector<128x16xf32>
    %162 = arith.maximumf %160, %161 : vector<128x16xf32>
    %c0_73 = arith.constant 0 : index
    %c0_74 = arith.constant 0 : index
    %163 = vector.load %arg17[%c0_73, %c0_74] : memref<16x16xf32, #tpu.memory_space<vmem>>, vector<16x16xf32>
    %cst_75 = arith.constant dense<0.000000e+00> : vector<128x16xf32>
    %164 = tpu.matmul %162, %163, %cst_75 {dimension_numbers = #tpu.dot_dimension_numbers<[1], [0], [0], [1], [0, 0, 1, 1], [], []>} : vector<128x16xf32>, vector<16x16xf32>, vector<128x16xf32> -> vector<128x16xf32>
    %cst_76 = arith.constant 0.000000e+00 : f32
    %165 = vector.broadcast %cst_76 : f32 to vector<128x16xf32>
    %166 = arith.subf %165, %164 : vector<128x16xf32>
    %167 = math.exp %166 : vector<128x16xf32>
    %cst_77 = arith.constant 1.000000e+00 : f32
    %168 = vector.broadcast %cst_77 : f32 to vector<128x16xf32>
    %169 = arith.addf %168, %167 : vector<128x16xf32>
    %170 = tpu.reciprocal %169 {approx = true} : vector<128x16xf32> -> vector<128x16xf32>
    %171 = arith.mulf %162, %170 : vector<128x16xf32>
    %c0_78 = arith.constant 0 : index
    %c0_79 = arith.constant 0 : index
    %c0_80 = arith.constant 0 : index
    %172 = vector.load %arg1[%c0_78, %c0_79, %c0_80] : memref<2x128x32xf32, #tpu.memory_space<vmem>>, vector<1x128x32xf32>
    %173 = vector.shape_cast %172 : vector<1x128x32xf32> to vector<128x32xf32>
    %c0_81 = arith.constant 0 : index
    %c0_82 = arith.constant 0 : index
    %174 = vector.load %arg18[%c0_81, %c0_82] : memref<32x16xf32, #tpu.memory_space<vmem>>, vector<32x16xf32>
    %cst_83 = arith.constant dense<0.000000e+00> : vector<128x16xf32>
    %175 = tpu.matmul %173, %174, %cst_83 {dimension_numbers = #tpu.dot_dimension_numbers<[1], [0], [0], [1], [0, 0, 1, 1], [], []>} : vector<128x32xf32>, vector<32x16xf32>, vector<128x16xf32> -> vector<128x16xf32>
    %c0_84 = arith.constant 0 : index
    %c0_85 = arith.constant 0 : index
    %176 = vector.load %arg19[%c0_84, %c0_85] : memref<1x16xf32, #tpu.memory_space<vmem>>, vector<1x16xf32>
    %177 = vector.broadcast %176 : vector<1x16xf32> to vector<128x16xf32>
    %178 = arith.addf %175, %177 : vector<128x16xf32>
    %179 = arith.addf %171, %178 : vector<128x16xf32>
    %c0_86 = arith.constant 0 : index
    %c0_87 = arith.constant 0 : index
    %180 = vector.load %arg20[%c0_86, %c0_87] : memref<16x64xf32, #tpu.memory_space<vmem>>, vector<16x64xf32>
    %cst_88 = arith.constant dense<0.000000e+00> : vector<128x64xf32>
    %181 = tpu.matmul %179, %180, %cst_88 {dimension_numbers = #tpu.dot_dimension_numbers<[1], [0], [0], [1], [0, 0, 1, 1], [], []>} : vector<128x16xf32>, vector<16x64xf32>, vector<128x64xf32> -> vector<128x64xf32>
    %cst_89 = arith.constant 0.000000e+00 : f32
    %182 = vector.broadcast %cst_89 : f32 to vector<128x64xf32>
    %183 = arith.maximumf %181, %182 : vector<128x64xf32>
    %c0_90 = arith.constant 0 : index
    %c0_91 = arith.constant 0 : index
    %c0_92 = arith.constant 0 : index
    %184 = vector.load %arg23[%c0_90, %c0_91, %c0_92] : memref<2x128x64xf32, #tpu.memory_space<vmem>>, vector<1x128x64xf32>
    %185 = vector.shape_cast %184 : vector<1x128x64xf32> to vector<128x64xf32>
    %186 = vector.shape_cast %183 : vector<128x64xf32> to vector<1x128x64xf32>
    tpu.vector_store %arg23[%c0_90, %c0_91, %c0_92], %186 {strides = array<i32>} : memref<2x128x64xf32, #tpu.memory_space<vmem>>, vector<1x128x64xf32>,
    %187 = arith.mulf %73, %40 : vector<128x32xf32>
    %cst_93 = arith.constant dense<0.000000e+00> : vector<128x4xf32>
    %188 = tpu.matmul %187, %6, %cst_93 {dimension_numbers = #tpu.dot_dimension_numbers<[1], [0], [0], [1], [0, 0, 1, 1], [], []>} : vector<128x32xf32>, vector<32x4xf32>, vector<128x4xf32> -> vector<128x4xf32>
    %189 = arith.mulf %73, %74 : vector<128x32xf32>
    %cst_94 = arith.constant dense<0.000000e+00> : vector<128x4xf32>
    %190 = tpu.matmul %189, %6, %cst_94 {dimension_numbers = #tpu.dot_dimension_numbers<[1], [0], [0], [1], [0, 0, 1, 1], [], []>} : vector<128x32xf32>, vector<32x4xf32>, vector<128x4xf32> -> vector<128x4xf32>
    %191 = arith.maximumf %188, %190 : vector<128x4xf32>
    %192 = arith.subf %188, %191 : vector<128x4xf32>
    %193 = math.exp %192 : vector<128x4xf32>
    %194 = arith.subf %190, %191 : vector<128x4xf32>
    %195 = math.exp %194 : vector<128x4xf32>
    %196 = arith.addf %193, %195 : vector<128x4xf32>
    %197 = tpu.reciprocal %196 {approx = true} : vector<128x4xf32> -> vector<128x4xf32>
    %198 = arith.mulf %193, %197 : vector<128x4xf32>
    %cst_95 = arith.constant dense<0.000000e+00> : vector<128x32xf32>
    %199 = tpu.matmul %198, %7, %cst_95 {dimension_numbers = #tpu.dot_dimension_numbers<[1], [0], [0], [1], [0, 0, 1, 1], [], []>} : vector<128x4xf32>, vector<4x32xf32>, vector<128x32xf32> -> vector<128x32xf32>
    %200 = arith.mulf %199, %41 : vector<128x32xf32>
    %201 = arith.mulf %195, %197 : vector<128x4xf32>
    %cst_96 = arith.constant dense<0.000000e+00> : vector<128x32xf32>
    %202 = tpu.matmul %201, %7, %cst_96 {dimension_numbers = #tpu.dot_dimension_numbers<[1], [0], [0], [1], [0, 0, 1, 1], [], []>} : vector<128x4xf32>, vector<4x32xf32>, vector<128x32xf32> -> vector<128x32xf32>
    %203 = arith.mulf %202, %75 : vector<128x32xf32>
    %204 = arith.addf %200, %203 : vector<128x32xf32>
    %c0_97 = arith.constant 0 : index
    %c0_98 = arith.constant 0 : index
    %205 = vector.load %arg9[%c0_97, %c0_98] : memref<32x32xf32, #tpu.memory_space<vmem>>, vector<32x32xf32>
    %cst_99 = arith.constant dense<0.000000e+00> : vector<128x32xf32>
    %206 = tpu.matmul %204, %205, %cst_99 {dimension_numbers = #tpu.dot_dimension_numbers<[1], [0], [0], [1], [0, 0, 1, 1], [], []>} : vector<128x32xf32>, vector<32x32xf32>, vector<128x32xf32> -> vector<128x32xf32>
    %207 = vector.broadcast %5 : vector<1x32xf32> to vector<128x32xf32>
    %208 = arith.addf %206, %207 : vector<128x32xf32>
    %cst_100 = arith.constant dense<0.000000e+00> : vector<128xf32>
    %209 = vector.multi_reduction <add>, %208, %cst_100 [1] : vector<128x32xf32> to vector<128xf32>
    %210 = vector.shape_cast %209 : vector<128xf32> to vector<128x1xf32>
    %cst_101 = arith.constant 3.200000e+01 : f32
    %211 = vector.broadcast %cst_101 : f32 to vector<128x1xf32>
    %212 = arith.divf %210, %211 : vector<128x1xf32>
    %213 = vector.broadcast %212 : vector<128x1xf32> to vector<128x32xf32>
    %214 = arith.subf %208, %213 : vector<128x32xf32>
    %215 = arith.mulf %214, %214 : vector<128x32xf32>
    %cst_102 = arith.constant dense<0.000000e+00> : vector<128xf32>
    %216 = vector.multi_reduction <add>, %215, %cst_102 [1] : vector<128x32xf32> to vector<128xf32>
    %217 = vector.shape_cast %216 : vector<128xf32> to vector<128x1xf32>
    %cst_103 = arith.constant 3.200000e+01 : f32
    %218 = vector.broadcast %cst_103 : f32 to vector<128x1xf32>
    %219 = arith.divf %217, %218 : vector<128x1xf32>
    %220 = vector.broadcast %212 : vector<128x1xf32> to vector<128x32xf32>
    %221 = arith.subf %208, %220 : vector<128x32xf32>
    %cst_104 = arith.constant 9.99999974E-6 : f32
    %222 = vector.broadcast %cst_104 : f32 to vector<128x1xf32>
    %223 = arith.addf %219, %222 : vector<128x1xf32>
    %224 = math.rsqrt %223 : vector<128x1xf32>
    %225 = vector.broadcast %224 : vector<128x1xf32> to vector<128x32xf32>
    %226 = arith.mulf %221, %225 : vector<128x32xf32>
    %227 = vector.broadcast %0 : vector<1x32xf32> to vector<128x32xf32>
    %228 = arith.mulf %226, %227 : vector<128x32xf32>
    %229 = vector.broadcast %1 : vector<1x32xf32> to vector<128x32xf32>
    %230 = arith.addf %228, %229 : vector<128x32xf32>
    %231 = arith.addf %208, %230 : vector<128x32xf32>
    %c0_105 = arith.constant 0 : index
    %c0_106 = arith.constant 0 : index
    %232 = vector.load %arg11[%c0_105, %c0_106] : memref<32x128xf32, #tpu.memory_space<vmem>>, vector<32x128xf32>
    %cst_107 = arith.constant dense<0.000000e+00> : vector<128x128xf32>
    %233 = tpu.matmul %231, %232, %cst_107 {dimension_numbers = #tpu.dot_dimension_numbers<[1], [0], [0], [1], [0, 0, 1, 1], [], []>} : vector<128x32xf32>, vector<32x128xf32>, vector<128x128xf32> -> vector<128x128xf32>
    %c0_108 = arith.constant 0 : index
    %c0_109 = arith.constant 0 : index
    %234 = vector.load %arg12[%c0_108, %c0_109] : memref<1x128xf32, #tpu.memory_space<vmem>>, vector<1x128xf32>
    %235 = vector.broadcast %234 : vector<1x128xf32> to vector<128x128xf32>
    %236 = arith.addf %233, %235 : vector<128x128xf32>
    %cst_110 = arith.constant 0.000000e+00 : f32
    %237 = vector.broadcast %cst_110 : f32 to vector<128x128xf32>
    %238 = arith.maximumf %236, %237 : vector<128x128xf32>
    %c0_111 = arith.constant 0 : index
    %c0_112 = arith.constant 0 : index
    %239 = vector.load %arg13[%c0_111, %c0_112] : memref<128x32xf32, #tpu.memory_space<vmem>>, vector<128x32xf32>
    %cst_113 = arith.constant dense<0.000000e+00> : vector<128x32xf32>
    %240 = tpu.matmul %238, %239, %cst_113 {dimension_numbers = #tpu.dot_dimension_numbers<[1], [0], [0], [1], [0, 0, 1, 1], [], []>} : vector<128x128xf32>, vector<128x32xf32>, vector<128x32xf32> -> vector<128x32xf32>
    %c0_114 = arith.constant 0 : index
    %c0_115 = arith.constant 0 : index
    %241 = vector.load %arg14[%c0_114, %c0_115] : memref<1x32xf32, #tpu.memory_space<vmem>>, vector<1x32xf32>
    %242 = vector.broadcast %241 : vector<1x32xf32> to vector<128x32xf32>
    %243 = arith.addf %240, %242 : vector<128x32xf32>
    %cst_116 = arith.constant dense<0.000000e+00> : vector<128xf32>
    %244 = vector.multi_reduction <add>, %243, %cst_116 [1] : vector<128x32xf32> to vector<128xf32>
    %245 = vector.shape_cast %244 : vector<128xf32> to vector<128x1xf32>
    %cst_117 = arith.constant 3.200000e+01 : f32
    %246 = vector.broadcast %cst_117 : f32 to vector<128x1xf32>
    %247 = arith.divf %245, %246 : vector<128x1xf32>
    %248 = vector.broadcast %247 : vector<128x1xf32> to vector<128x32xf32>
    %249 = arith.subf %243, %248 : vector<128x32xf32>
    %250 = arith.mulf %249, %249 : vector<128x32xf32>
    %cst_118 = arith.constant dense<0.000000e+00> : vector<128xf32>
    %251 = vector.multi_reduction <add>, %250, %cst_118 [1] : vector<128x32xf32> to vector<128xf32>
    %252 = vector.shape_cast %251 : vector<128xf32> to vector<128x1xf32>
    %cst_119 = arith.constant 3.200000e+01 : f32
    %253 = vector.broadcast %cst_119 : f32 to vector<128x1xf32>
    %254 = arith.divf %252, %253 : vector<128x1xf32>
    %255 = vector.broadcast %247 : vector<128x1xf32> to vector<128x32xf32>
    %256 = arith.subf %243, %255 : vector<128x32xf32>
    %cst_120 = arith.constant 9.99999974E-6 : f32
    %257 = vector.broadcast %cst_120 : f32 to vector<128x1xf32>
    %258 = arith.addf %254, %257 : vector<128x1xf32>
    %259 = math.rsqrt %258 : vector<128x1xf32>
    %260 = vector.broadcast %259 : vector<128x1xf32> to vector<128x32xf32>
    %261 = arith.mulf %256, %260 : vector<128x32xf32>
    %262 = vector.broadcast %2 : vector<1x32xf32> to vector<128x32xf32>
    %263 = arith.mulf %261, %262 : vector<128x32xf32>
    %264 = vector.broadcast %3 : vector<1x32xf32> to vector<128x32xf32>
    %265 = arith.addf %263, %264 : vector<128x32xf32>
    %266 = arith.addf %243, %265 : vector<128x32xf32>
    %c0_121 = arith.constant 0 : index
    %c0_122 = arith.constant 0 : index
    %267 = vector.load %arg15[%c0_121, %c0_122] : memref<32x16xf32, #tpu.memory_space<vmem>>, vector<32x16xf32>
    %cst_123 = arith.constant dense<0.000000e+00> : vector<128x16xf32>
    %268 = tpu.matmul %266, %267, %cst_123 {dimension_numbers = #tpu.dot_dimension_numbers<[1], [0], [0], [1], [0, 0, 1, 1], [], []>} : vector<128x32xf32>, vector<32x16xf32>, vector<128x16xf32> -> vector<128x16xf32>
    %c0_124 = arith.constant 0 : index
    %c0_125 = arith.constant 0 : index
    %269 = vector.load %arg16[%c0_124, %c0_125] : memref<1x16xf32, #tpu.memory_space<vmem>>, vector<1x16xf32>
    %270 = vector.broadcast %269 : vector<1x16xf32> to vector<128x16xf32>
    %271 = arith.addf %268, %270 : vector<128x16xf32>
    %cst_126 = arith.constant 0.000000e+00 : f32
    %272 = vector.broadcast %cst_126 : f32 to vector<128x16xf32>
    %273 = arith.maximumf %271, %272 : vector<128x16xf32>
    %c0_127 = arith.constant 0 : index
    %c0_128 = arith.constant 0 : index
    %274 = vector.load %arg17[%c0_127, %c0_128] : memref<16x16xf32, #tpu.memory_space<vmem>>, vector<16x16xf32>
    %cst_129 = arith.constant dense<0.000000e+00> : vector<128x16xf32>
    %275 = tpu.matmul %273, %274, %cst_129 {dimension_numbers = #tpu.dot_dimension_numbers<[1], [0], [0], [1], [0, 0, 1, 1], [], []>} : vector<128x16xf32>, vector<16x16xf32>, vector<128x16xf32> -> vector<128x16xf32>
    %cst_130 = arith.constant 0.000000e+00 : f32
    %276 = vector.broadcast %cst_130 : f32 to vector<128x16xf32>
    %277 = arith.subf %276, %275 : vector<128x16xf32>
    %278 = math.exp %277 : vector<128x16xf32>
    %cst_131 = arith.constant 1.000000e+00 : f32
    %279 = vector.broadcast %cst_131 : f32 to vector<128x16xf32>
    %280 = arith.addf %279, %278 : vector<128x16xf32>
    %281 = tpu.reciprocal %280 {approx = true} : vector<128x16xf32> -> vector<128x16xf32>
    %282 = arith.mulf %273, %281 : vector<128x16xf32>
    %c1_132 = arith.constant 1 : index
    %c0_133 = arith.constant 0 : index
    %c0_134 = arith.constant 0 : index
    %283 = vector.load %arg1[%c1_132, %c0_133, %c0_134] : memref<2x128x32xf32, #tpu.memory_space<vmem>>, vector<1x128x32xf32>
    %284 = vector.shape_cast %283 : vector<1x128x32xf32> to vector<128x32xf32>
    %c0_135 = arith.constant 0 : index
    %c0_136 = arith.constant 0 : index
    %285 = vector.load %arg18[%c0_135, %c0_136] : memref<32x16xf32, #tpu.memory_space<vmem>>, vector<32x16xf32>
    %cst_137 = arith.constant dense<0.000000e+00> : vector<128x16xf32>
    %286 = tpu.matmul %284, %285, %cst_137 {dimension_numbers = #tpu.dot_dimension_numbers<[1], [0], [0], [1], [0, 0, 1, 1], [], []>} : vector<128x32xf32>, vector<32x16xf32>, vector<128x16xf32> -> vector<128x16xf32>
    %c0_138 = arith.constant 0 : index
    %c0_139 = arith.constant 0 : index
    %287 = vector.load %arg19[%c0_138, %c0_139] : memref<1x16xf32, #tpu.memory_space<vmem>>, vector<1x16xf32>
    %288 = vector.broadcast %287 : vector<1x16xf32> to vector<128x16xf32>
    %289 = arith.addf %286, %288 : vector<128x16xf32>
    %290 = arith.addf %282, %289 : vector<128x16xf32>
    %c0_140 = arith.constant 0 : index
    %c0_141 = arith.constant 0 : index
    %291 = vector.load %arg20[%c0_140, %c0_141] : memref<16x64xf32, #tpu.memory_space<vmem>>, vector<16x64xf32>
    %cst_142 = arith.constant dense<0.000000e+00> : vector<128x64xf32>
    %292 = tpu.matmul %290, %291, %cst_142 {dimension_numbers = #tpu.dot_dimension_numbers<[1], [0], [0], [1], [0, 0, 1, 1], [], []>} : vector<128x16xf32>, vector<16x64xf32>, vector<128x64xf32> -> vector<128x64xf32>
    %cst_143 = arith.constant 0.000000e+00 : f32
    %293 = vector.broadcast %cst_143 : f32 to vector<128x64xf32>
    %294 = arith.maximumf %292, %293 : vector<128x64xf32>
    %c1_144 = arith.constant 1 : index
    %c0_145 = arith.constant 0 : index
    %c0_146 = arith.constant 0 : index
    %295 = vector.load %arg23[%c1_144, %c0_145, %c0_146] : memref<2x128x64xf32, #tpu.memory_space<vmem>>, vector<1x128x64xf32>
    %296 = vector.shape_cast %295 : vector<1x128x64xf32> to vector<128x64xf32>
    %297 = vector.shape_cast %294 : vector<128x64xf32> to vector<1x128x64xf32>
    tpu.vector_store %arg23[%c1_144, %c0_145, %c0_146], %297 {strides = array<i32>} : memref<2x128x64xf32, #tpu.memory_space<vmem>>, vector<1x128x64xf32>,
    return
  }
  func.func @transform_0(%arg0: i32) -> (i32, i32, i32) {
    %c0_i32 = arith.constant 0 : i32
    %c0_i32_0 = arith.constant 0 : i32
    %c0_i32_1 = arith.constant 0 : i32
    return %c0_i32, %arg0, %c0_i32_0 : i32, i32, i32
  }
  func.func @transform_1(%arg0: i32) -> (i32, i32) {
    %c0_i32 = arith.constant 0 : i32
    %c0_i32_0 = arith.constant 0 : i32
    %c0_i32_1 = arith.constant 0 : i32
    return %c0_i32, %c0_i32_0 : i32, i32
  }
  func.func @transform_2(%arg0: i32) -> (i32, i32) {
    %c0_i32 = arith.constant 0 : i32
    %c0_i32_0 = arith.constant 0 : i32
    %c0_i32_1 = arith.constant 0 : i32
    return %c0_i32, %c0_i32_0 : i32, i32
  }
  func.func @transform_3(%arg0: i32) -> (i32, i32) {
    %c0_i32 = arith.constant 0 : i32
    %c0_i32_0 = arith.constant 0 : i32
    %c0_i32_1 = arith.constant 0 : i32
    return %c0_i32, %c0_i32_0 : i32, i32
  }
  func.func @transform_4(%arg0: i32) -> (i32, i32) {
    %c0_i32 = arith.constant 0 : i32
    %c0_i32_0 = arith.constant 0 : i32
    %c0_i32_1 = arith.constant 0 : i32
    return %c0_i32, %c0_i32_0 : i32, i32
  }
  func.func @transform_5(%arg0: i32) -> (i32, i32) {
    %c0_i32 = arith.constant 0 : i32
    %c0_i32_0 = arith.constant 0 : i32
    %c0_i32_1 = arith.constant 0 : i32
    return %c0_i32, %c0_i32_0 : i32, i32
  }
  func.func @transform_6(%arg0: i32) -> (i32, i32) {
    %c0_i32 = arith.constant 0 : i32
    %c0_i32_0 = arith.constant 0 : i32
    %c0_i32_1 = arith.constant 0 : i32
    return %c0_i32, %c0_i32_0 : i32, i32
  }
  func.func @transform_7(%arg0: i32) -> (i32, i32) {
    %c0_i32 = arith.constant 0 : i32
    %c0_i32_0 = arith.constant 0 : i32
    %c0_i32_1 = arith.constant 0 : i32
    return %c0_i32, %c0_i32_0 : i32, i32
  }
  func.func @transform_8(%arg0: i32) -> (i32, i32) {
    %c0_i32 = arith.constant 0 : i32
    %c0_i32_0 = arith.constant 0 : i32
    %c0_i32_1 = arith.constant 0 : i32
    return %c0_i32, %c0_i32_0 : i32, i32
  }
  func.func @transform_9(%arg0: i32) -> (i32, i32) {
    %c0_i32 = arith.constant 0 : i32
    %c0_i32_0 = arith.constant 0 : i32
    %c0_i32_1 = arith.constant 0 : i32
    return %c0_i32, %c0_i32_0 : i32, i32
  }
  func.func @transform_10(%arg0: i32) -> (i32, i32) {
    %c0_i32 = arith.constant 0 : i32
    %c0_i32_0 = arith.constant 0 : i32
    %c0_i32_1 = arith.constant 0 : i32
    return %c0_i32, %c0_i32_0 : i32, i32
  }
  func.func @transform_11(%arg0: i32) -> (i32, i32) {
    %c0_i32 = arith.constant 0 : i32
    %c0_i32_0 = arith.constant 0 : i32
    %c0_i32_1 = arith.constant 0 : i32
    return %c0_i32, %c0_i32_0 : i32, i32
  }
  func.func @transform_12(%arg0: i32) -> (i32, i32) {
    %c0_i32 = arith.constant 0 : i32
    %c0_i32_0 = arith.constant 0 : i32
    %c0_i32_1 = arith.constant 0 : i32
    return %c0_i32, %c0_i32_0 : i32, i32
  }
  func.func @transform_13(%arg0: i32) -> (i32, i32) {
    %c0_i32 = arith.constant 0 : i32
    %c0_i32_0 = arith.constant 0 : i32
    %c0_i32_1 = arith.constant 0 : i32
    return %c0_i32, %c0_i32_0 : i32, i32
  }
  func.func @transform_14(%arg0: i32) -> (i32, i32) {
    %c0_i32 = arith.constant 0 : i32
    %c0_i32_0 = arith.constant 0 : i32
    %c0_i32_1 = arith.constant 0 : i32
    return %c0_i32, %c0_i32_0 : i32, i32
  }
  func.func @transform_15(%arg0: i32) -> (i32, i32) {
    %c0_i32 = arith.constant 0 : i32
    %c0_i32_0 = arith.constant 0 : i32
    %c0_i32_1 = arith.constant 0 : i32
    return %c0_i32, %c0_i32_0 : i32, i32
  }
  func.func @transform_16(%arg0: i32) -> (i32, i32) {
    %c0_i32 = arith.constant 0 : i32
    %c0_i32_0 = arith.constant 0 : i32
    %c0_i32_1 = arith.constant 0 : i32
    return %c0_i32, %c0_i32_0 : i32, i32
  }
  func.func @transform_17(%arg0: i32) -> (i32, i32) {
    %c0_i32 = arith.constant 0 : i32
    %c0_i32_0 = arith.constant 0 : i32
    %c0_i32_1 = arith.constant 0 : i32
    return %c0_i32, %c0_i32_0 : i32, i32
  }
  func.func @transform_18(%arg0: i32) -> (i32, i32) {
    %c0_i32 = arith.constant 0 : i32
    %c0_i32_0 = arith.constant 0 : i32
    %c0_i32_1 = arith.constant 0 : i32
    return %c0_i32, %c0_i32_0 : i32, i32
  }
  func.func @transform_19(%arg0: i32) -> (i32, i32) {
    %c0_i32 = arith.constant 0 : i32
    %c0_i32_0 = arith.constant 0 : i32
    %c0_i32_1 = arith.constant 0 : i32
    return %c0_i32, %c0_i32_0 : i32, i32
  }
  func.func @transform_20(%arg0: i32) -> (i32, i32) {
    %c0_i32 = arith.constant 0 : i32
    %c0_i32_0 = arith.constant 0 : i32
    %c0_i32_1 = arith.constant 0 : i32
    return %c0_i32, %c0_i32_0 : i32, i32
  }
  func.func @transform_21(%arg0: i32) -> (i32, i32) {
    %c0_i32 = arith.constant 0 : i32
    %c0_i32_0 = arith.constant 0 : i32
    %c0_i32_1 = arith.constant 0 : i32
    return %c0_i32, %c0_i32_0 : i32, i32
  }
  func.func @transform_22(%arg0: i32) -> (i32, i32, i32) {
    %c0_i32 = arith.constant 0 : i32
    %c0_i32_0 = arith.constant 0 : i32
    %c0_i32_1 = arith.constant 0 : i32
    return %c0_i32, %arg0, %c0_i32_0 : i32, i32, i32
  }
}

</mosaic_0001>

<llo_original>
// kernel: ssfenet_block_forward.1
$region0: #{ssfenet_block_forward.1}
  #allocation0 [shape = 'u32[]', space=smem, size = 0x4, offset = 0x4, fixed_abs, tag = 'smem constant byte address 0x4 - core index']
  #allocation1 [shape = 'u32[72,128]{1,0:T(1,128)}', space=vmem, size = 0x9000, scoped, tag = 'internal scratch']
  #allocation5 [shape = 's32[]', space=sflag, size = 0x4, offset = 0, fixed_abs, tag = 'sflag constant byte address 0x0 - dummy sync flag']
  %s0 = inlined_call_operand.vmem [shape: f32[2,256,32], index: 0, kind: input, shape index: {}]
  %s1 = inlined_call_operand.vmem [shape: f32[2,32], index: 1, kind: input, shape index: {}]
  %s2 = inlined_call_operand.vmem [shape: f32[1,32], index: 2, kind: input, shape index: {}]
  %s3 = inlined_call_operand.vmem [shape: f32[1,32], index: 3, kind: input, shape index: {}]
  %s4 = inlined_call_operand.vmem [shape: f32[1,32], index: 4, kind: input, shape index: {}]
  %s5 = inlined_call_operand.vmem [shape: f32[1,32], index: 5, kind: input, shape index: {}]
  %s6 = inlined_call_operand.vmem [shape: f32[32,96], index: 6, kind: input, shape index: {}]
  %s7 = inlined_call_operand.vmem [shape: f32[1,96], index: 7, kind: input, shape index: {}]
  %s8 = inlined_call_operand.vmem [shape: f32[32,32], index: 8, kind: input, shape index: {}]
  %s9 = inlined_call_operand.vmem [shape: f32[1,32], index: 9, kind: input, shape index: {}]
  %s10 = inlined_call_operand.vmem [shape: f32[32,128], index: 10, kind: input, shape index: {}]
  %s11 = inlined_call_operand.vmem [shape: f32[1,128], index: 11, kind: input, shape index: {}]
  %s12 = inlined_call_operand.vmem [shape: f32[128,32], index: 12, kind: input, shape index: {}]
  %s13 = inlined_call_operand.vmem [shape: f32[1,32], index: 13, kind: input, shape index: {}]
  %s14 = inlined_call_operand.vmem [shape: f32[32,16], index: 14, kind: input, shape index: {}]
  %s15 = inlined_call_operand.vmem [shape: f32[1,16], index: 15, kind: input, shape index: {}]
  %s16 = inlined_call_operand.vmem [shape: f32[16,16], index: 16, kind: input, shape index: {}]
  %s17 = inlined_call_operand.vmem [shape: f32[32,16], index: 17, kind: input, shape index: {}]
  %s18 = inlined_call_operand.vmem [shape: f32[1,16], index: 18, kind: input, shape index: {}]
  %s19 = inlined_call_operand.vmem [shape: f32[16,64], index: 19, kind: input, shape index: {}]
  %s20 = inlined_call_operand.vmem [shape: f32[32,4], index: 20, kind: input, shape index: {}]
  %s21 = inlined_call_operand.vmem [shape: f32[4,32], index: 21, kind: input, shape index: {}]
  %s22 = inlined_call_operand.hbm [shape: f32[2,256,64], index: 22, kind: output, shape index: {}]
  %s23 = sld [smem:[#allocation0]]
  $region159: #{ssfenet_block_forward.1} parent=0
    _
  %s25 = ssub.s32 1, %s23
  %s26 = scalar_select 0, %s25, %s23
  $region1: #{ssfenet_block_forward.1} parent=0
    #allocation2 [shape = 'u8[262144]{0}', space=vmem, size = 0x40000, scoped, tag = 'input window, operand 0']
    #allocation3 [shape = 'u8[262144]{0}', space=vmem, size = 0x40000, scoped, tag = 'output window, operand 0']
    #allocation4 [shape = 's32[2]{0}', space=sflag, size = 0x8, scoped, tag = 'scoped memory for ssfenet_block_forward.1']
    %27 = vsyncpa [#allocation4], 0
    %s28 = scalar_lea.sflag [#allocation4], 1
    %29 = vsyncpa %s28, 0
    loop: start=0, step=1, limit=4
    $region2: #{ssfenet_block_forward.1} parent=1 // loop_pre_header
      _
    $region3: #{ssfenet_block_forward.1} parent=1 // loop_header
      %s31 = sphi 0, %s35
      %p32 = scmp.ge.s32.totalorder %s31, 4
      %s41 = sphi 0, %s43
      %s44 = sphi 0, %s41
      %s45 = sphi 0, %s44
      %s61 = sphi 0, %s45
      %s65 = sphi 0, %s65
      %s67 = sphi 0, %s65
      %s68 = sphi 0, %s67
      %s82 = sphi 0, %s68
      %s86 = sphi 0, %s86
      %s88 = sphi 0, %s86
      %s89 = sphi 0, %s88
      %s103 = sphi 0, %s89
      %s107 = sphi 0, %s107
      %s109 = sphi 0, %s107
      %s110 = sphi 0, %s109
      %s124 = sphi 0, %s110
      %s128 = sphi 0, %s128
      %s130 = sphi 0, %s128
      %s131 = sphi 0, %s130
      %s145 = sphi 0, %s131
      %s149 = sphi 0, %s149
      %s151 = sphi 0, %s149
      %s152 = sphi 0, %s151
      %s166 = sphi 0, %s152
      %s170 = sphi 0, %s170
      %s172 = sphi 0, %s170
      %s173 = sphi 0, %s172
      %s187 = sphi 0, %s173
      %s191 = sphi 0, %s191
      %s193 = sphi 0, %s191
      %s194 = sphi 0, %s193
      %s208 = sphi 0, %s194
      %s212 = sphi 0, %s212
      %s214 = sphi 0, %s212
      %s215 = sphi 0, %s214
      %s229 = sphi 0, %s215
      %s233 = sphi 0, %s233
      %s235 = sphi 0, %s233
      %s236 = sphi 0, %s235
      %s250 = sphi 0, %s236
      %s254 = sphi 0, %s254
      %s256 = sphi 0, %s254
      %s257 = sphi 0, %s256
      %s271 = sphi 0, %s257
      %s275 = sphi 0, %s275
      %s277 = sphi 0, %s275
      %s278 = sphi 0, %s277
      %s292 = sphi 0, %s278
      %s296 = sphi 0, %s296
      %s298 = sphi 0, %s296
      %s299 = sphi 0, %s298
      %s313 = sphi 0, %s299
      %s317 = sphi 0, %s317
      %s319 = sphi 0, %s317
      %s320 = sphi 0, %s319
      %s334 = sphi 0, %s320
      %s338 = sphi 0, %s338
      %s340 = sphi 0, %s338
      %s341 = sphi 0, %s340
      %s355 = sphi 0, %s341
      %s359 = sphi 0, %s359
      %s361 = sphi 0, %s359
      %s362 = sphi 0, %s361
      %s376 = sphi 0, %s362
      %s380 = sphi 0, %s380
      %s382 = sphi 0, %s380
      %s383 = sphi 0, %s382
      %s397 = sphi 0, %s383
      %s401 = sphi 0, %s401
      %s403 = sphi 0, %s401
      %s404 = sphi 0, %s403
      %s418 = sphi 0, %s404
      %s422 = sphi 0, %s422
      %s424 = sphi 0, %s422
      %s425 = sphi 0, %s424
      %s439 = sphi 0, %s425
      %s443 = sphi 0, %s443
      %s445 = sphi 0, %s443
      %s446 = sphi 0, %s445
      %s460 = sphi 0, %s446
      %s464 = sphi 0, %s464
      %s466 = sphi 0, %s464
      %s467 = sphi 0, %s466
      %s481 = sphi 0, %s467
      %s485 = sphi 0, %s485
      %s487 = sphi 0, %s485
      %s488 = sphi 0, %s487
      %s502 = sphi 0, %s488
      %s508 = sphi 0, %s510
      %s511 = sphi 0, %s508
      %s512 = sphi 0, %s511
      %s528 = sphi 0, %s512
    $region4: #{ssfenet_block_forward.1} parent=1 // loop_header_branch
      %34 = sbr.rel (%p32) target = $region8
    $region5: #{ssfenet_block_forward.1} parent=1 // loop_body
      %s36 = ssub.s32 %s31, 1
      %s37 = ssub.s32 %s31, 2
      %s38 = sadd.s32 %s31, 1
      %s39 = ssub.s32 %s31, %s38
      %p40 = scmp.eq.s32.totalorder %s39, 0
      %s42 = sadd.s32 %s41, 1
      %s43 = scalar_select %p40, %s41, %s42
      %p46 = pneg %p40
      %p47 = scmp.eq.s32.totalorder %s31, 1
      %p48 = por %p46, %p47
      %p49 = scmp.ne.s32.totalorder %s41, %s44
      %p50 = scmp.eq.s32.totalorder %s31, 0
      %p51 = por %p49, %p50
      %p52 = scmp.ne.s32.totalorder %s41, %s44
      %p53 = scmp.eq.s32.totalorder %s36, 1
      %p54 = por %p52, %p53
      %p55 = scmp.ne.s32.totalorder %s44, %s45
      %p56 = scmp.eq.s32.totalorder %s36, 0
      %p57 = por %p55, %p56
      %p58 = scmp.ne.s32.totalorder %s44, %s45
      %p59 = scmp.eq.s32.totalorder %s37, 1
      %p60 = por %p58, %p59
      %p62 = scmp.ne.s32.totalorder %s45, %s61
      %p63 = scmp.eq.s32.totalorder %s37, 0
      %p64 = por %p62, %p63
      %s66 = sadd.s32 %s65, 1
      %p69 = scmp.eq.s32.totalorder %s31, 1
      %p70 = scmp.ne.s32.totalorder %s65, %s67
      %p71 = scmp.eq.s32.totalorder %s31, 0
      %p72 = por %p70, %p71
      %p73 = scmp.ne.s32.totalorder %s65, %s67
      %p74 = scmp.eq.s32.totalorder %s36, 1
      %p75 = por %p73, %p74
      %p76 = scmp.ne.s32.totalorder %s67, %s68
      %p77 = scmp.eq.s32.totalorder %s36, 0
      %p78 = por %p76, %p77
      %p79 = scmp.ne.s32.totalorder %s67, %s68
      %p80 = scmp.eq.s32.totalorder %s37, 1
      %p81 = por %p79, %p80
      %p83 = scmp.ne.s32.totalorder %s68, %s82
      %p84 = scmp.eq.s32.totalorder %s37, 0
      %p85 = por %p83, %p84
      %s87 = sadd.s32 %s86, 1
      %p90 = scmp.eq.s32.totalorder %s31, 1
      %p91 = scmp.ne.s32.totalorder %s86, %s88
      %p92 = scmp.eq.s32.totalorder %s31, 0
      %p93 = por %p91, %p92
      %p94 = scmp.ne.s32.totalorder %s86, %s88
      %p95 = scmp.eq.s32.totalorder %s36, 1
      %p96 = por %p94, %p95
      %p97 = scmp.ne.s32.totalorder %s88, %s89
      %p98 = scmp.eq.s32.totalorder %s36, 0
      %p99 = por %p97, %p98
      %p100 = scmp.ne.s32.totalorder %s88, %s89
      %p101 = scmp.eq.s32.totalorder %s37, 1
      %p102 = por %p100, %p101
      %p104 = scmp.ne.s32.totalorder %s89, %s103
      %p105 = scmp.eq.s32.totalorder %s37, 0
      %p106 = por %p104, %p105
      %s108 = sadd.s32 %s107, 1
      %p111 = scmp.eq.s32.totalorder %s31, 1
      %p112 = scmp.ne.s32.totalorder %s107, %s109
      %p113 = scmp.eq.s32.totalorder %s31, 0
      %p114 = por %p112, %p113
      %p115 = scmp.ne.s32.totalorder %s107, %s109
      %p116 = scmp.eq.s32.totalorder %s36, 1
      %p117 = por %p115, %p116
      %p118 = scmp.ne.s32.totalorder %s109, %s110
      %p119 = scmp.eq.s32.totalorder %s36, 0
      %p120 = por %p118, %p119
      %p121 = scmp.ne.s32.totalorder %s109, %s110
      %p122 = scmp.eq.s32.totalorder %s37, 1
      %p123 = por %p121, %p122
      %p125 = scmp.ne.s32.totalorder %s110, %s124
      %p126 = scmp.eq.s32.totalorder %s37, 0
      %p127 = por %p125, %p126
      %s129 = sadd.s32 %s128, 1
      %p132 = scmp.eq.s32.totalorder %s31, 1
      %p133 = scmp.ne.s32.totalorder %s128, %s130
      %p134 = scmp.eq.s32.totalorder %s31, 0
      %p135 = por %p133, %p134
      %p136 = scmp.ne.s32.totalorder %s128, %s130
      %p137 = scmp.eq.s32.totalorder %s36, 1
      %p138 = por %p136, %p137
      %p139 = scmp.ne.s32.totalorder %s130, %s131
      %p140 = scmp.eq.s32.totalorder %s36, 0
      %p141 = por %p139, %p140
      %p142 = scmp.ne.s32.totalorder %s130, %s131
      %p143 = scmp.eq.s32.totalorder %s37, 1
      %p144 = por %p142, %p143
      %p146 = scmp.ne.s32.totalorder %s131, %s145
      %p147 = scmp.eq.s32.totalorder %s37, 0
      %p148 = por %p146, %p147
      %s150 = sadd.s32 %s149, 1
      %p153 = scmp.eq.s32.totalorder %s31, 1
      %p154 = scmp.ne.s32.totalorder %s149, %s151
      %p155 = scmp.eq.s32.totalorder %s31, 0
      %p156 = por %p154, %p155
      %p157 = scmp.ne.s32.totalorder %s149, %s151
      %p158 = scmp.eq.s32.totalorder %s36, 1
      %p159 = por %p157, %p158
      %p160 = scmp.ne.s32.totalorder %s151, %s152
      %p161 = scmp.eq.s32.totalorder %s36, 0
      %p162 = por %p160, %p161
      %p163 = scmp.ne.s32.totalorder %s151, %s152
      %p164 = scmp.eq.s32.totalorder %s37, 1
      %p165 = por %p163, %p164
      %p167 = scmp.ne.s32.totalorder %s152, %s166
      %p168 = scmp.eq.s32.totalorder %s37, 0
      %p169 = por %p167, %p168
      %s171 = sadd.s32 %s170, 1
      %p174 = scmp.eq.s32.totalorder %s31, 1
      %p175 = scmp.ne.s32.totalorder %s170, %s172
      %p176 = scmp.eq.s32.totalorder %s31, 0
      %p177 = por %p175, %p176
      %p178 = scmp.ne.s32.totalorder %s170, %s172
      %p179 = scmp.eq.s32.totalorder %s36, 1
      %p180 = por %p178, %p179
      %p181 = scmp.ne.s32.totalorder %s172, %s173
      %p182 = scmp.eq.s32.totalorder %s36, 0
      %p183 = por %p181, %p182
      %p184 = scmp.ne.s32.totalorder %s172, %s173
      %p185 = scmp.eq.s32.totalorder %s37, 1
      %p186 = por %p184, %p185
      %p188 = scmp.ne.s32.totalorder %s173, %s187
      %p189 = scmp.eq.s32.totalorder %s37, 0
      %p190 = por %p188, %p189
      %s192 = sadd.s32 %s191, 1
      %p195 = scmp.eq.s32.totalorder %s31, 1
      %p196 = scmp.ne.s32.totalorder %s191, %s193
      %p197 = scmp.eq.s32.totalorder %s31, 0
      %p198 = por %p196, %p197
      %p199 = scmp.ne.s32.totalorder %s191, %s193
      %p200 = scmp.eq.s32.totalorder %s36, 1
      %p201 = por %p199, %p200
      %p202 = scmp.ne.s32.totalorder %s193, %s194
      %p203 = scmp.eq.s32.totalorder %s36, 0
      %p204 = por %p202, %p203
      %p205 = scmp.ne.s32.totalorder %s193, %s194
      %p206 = scmp.eq.s32.totalorder %s37, 1
      %p207 = por %p205, %p206
      %p209 = scmp.ne.s32.totalorder %s194, %s208
      %p210 = scmp.eq.s32.totalorder %s37, 0
      %p211 = por %p209, %p210
      %s213 = sadd.s32 %s212, 1
      %p216 = scmp.eq.s32.totalorder %s31, 1
      %p217 = scmp.ne.s32.totalorder %s212, %s214
      %p218 = scmp.eq.s32.totalorder %s31, 0
      %p219 = por %p217, %p218
      %p220 = scmp.ne.s32.totalorder %s212, %s214
      %p221 = scmp.eq.s32.totalorder %s36, 1
      %p222 = por %p220, %p221
      %p223 = scmp.ne.s32.totalorder %s214, %s215
      %p224 = scmp.eq.s32.totalorder %s36, 0
      %p225 = por %p223, %p224
      %p226 = scmp.ne.s32.totalorder %s214, %s215
      %p227 = scmp.eq.s32.totalorder %s37, 1
      %p228 = por %p226, %p227
      %p230 = scmp.ne.s32.totalorder %s215, %s229
      %p231 = scmp.eq.s32.totalorder %s37, 0
      %p232 = por %p230, %p231
      %s234 = sadd.s32 %s233, 1
      %p237 = scmp.eq.s32.totalorder %s31, 1
      %p238 = scmp.ne.s32.totalorder %s233, %s235
      %p239 = scmp.eq.s32.totalorder %s31, 0
      %p240 = por %p238, %p239
      %p241 = scmp.ne.s32.totalorder %s233, %s235
      %p242 = scmp.eq.s32.totalorder %s36, 1
      %p243 = por %p241, %p242
      %p244 = scmp.ne.s32.totalorder %s235, %s236
      %p245 = scmp.eq.s32.totalorder %s36, 0
      %p246 = por %p244, %p245
      %p247 = scmp.ne.s32.totalorder %s235, %s236
      %p248 = scmp.eq.s32.totalorder %s37, 1
      %p249 = por %p247, %p248
      %p251 = scmp.ne.s32.totalorder %s236, %s250
      %p252 = scmp.eq.s32.totalorder %s37, 0
      %p253 = por %p251, %p252
      %s255 = sadd.s32 %s254, 1
      %p258 = scmp.eq.s32.totalorder %s31, 1
      %p259 = scmp.ne.s32.totalorder %s254, %s256
      %p260 = scmp.eq.s32.totalorder %s31, 0
      %p261 = por %p259, %p260
      %p262 = scmp.ne.s32.totalorder %s254, %s256
      %p263 = scmp.eq.s32.totalorder %s36, 1
      %p264 = por %p262, %p263
      %p265 = scmp.ne.s32.totalorder %s256, %s257
      %p266 = scmp.eq.s32.totalorder %s36, 0
      %p267 = por %p265, %p266
      %p268 = scmp.ne.s32.totalorder %s256, %s257
      %p269 = scmp.eq.s32.totalorder %s37, 1
      %p270 = por %p268, %p269
      %p272 = scmp.ne.s32.totalorder %s257, %s271
      %p273 = scmp.eq.s32.totalorder %s37, 0
      %p274 = por %p272, %p273
      %s276 = sadd.s32 %s275, 1
      %p279 = scmp.eq.s32.totalorder %s31, 1
      %p280 = scmp.ne.s32.totalorder %s275, %s277
      %p281 = scmp.eq.s32.totalorder %s31, 0
      %p282 = por %p280, %p281
      %p283 = scmp.ne.s32.totalorder %s275, %s277
      %p284 = scmp.eq.s32.totalorder %s36, 1
      %p285 = por %p283, %p284
      %p286 = scmp.ne.s32.totalorder %s277, %s278
      %p287 = scmp.eq.s32.totalorder %s36, 0
      %p288 = por %p286, %p287
      %p289 = scmp.ne.s32.totalorder %s277, %s278
      %p290 = scmp.eq.s32.totalorder %s37, 1
      %p291 = por %p289, %p290
      %p293 = scmp.ne.s32.totalorder %s278, %s292
      %p294 = scmp.eq.s32.totalorder %s37, 0
      %p295 = por %p293, %p294
      %s297 = sadd.s32 %s296, 1
      %p300 = scmp.eq.s32.totalorder %s31, 1
      %p301 = scmp.ne.s32.totalorder %s296, %s298
      %p302 = scmp.eq.s32.totalorder %s31, 0
      %p303 = por %p301, %p302
      %p304 = scmp.ne.s32.totalorder %s296, %s298
      %p305 = scmp.eq.s32.totalorder %s36, 1
      %p306 = por %p304, %p305
      %p307 = scmp.ne.s32.totalorder %s298, %s299
      %p308 = scmp.eq.s32.totalorder %s36, 0
      %p309 = por %p307, %p308
      %p310 = scmp.ne.s32.totalorder %s298, %s299
      %p311 = scmp.eq.s32.totalorder %s37, 1
      %p312 = por %p310, %p311
      %p314 = scmp.ne.s32.totalorder %s299, %s313
      %p315 = scmp.eq.s32.totalorder %s37, 0
      %p316 = por %p314, %p315
      %s318 = sadd.s32 %s317, 1
      %p321 = scmp.eq.s32.totalorder %s31, 1
      %p322 = scmp.ne.s32.totalorder %s317, %s319
      %p323 = scmp.eq.s32.totalorder %s31, 0
      %p324 = por %p322, %p323
      %p325 = scmp.ne.s32.totalorder %s317, %s319
      %p326 = scmp.eq.s32.totalorder %s36, 1
      %p327 = por %p325, %p326
      %p328 = scmp.ne.s32.totalorder %s319, %s320
      %p329 = scmp.eq.s32.totalorder %s36, 0
      %p330 = por %p328, %p329
      %p331 = scmp.ne.s32.totalorder %s319, %s320
      %p332 = scmp.eq.s32.totalorder %s37, 1
      %p333 = por %p331, %p332
      %p335 = scmp.ne.s32.totalorder %s320, %s334
      %p336 = scmp.eq.s32.totalorder %s37, 0
      %p337 = por %p335, %p336
      %s339 = sadd.s32 %s338, 1
      %p342 = scmp.eq.s32.totalorder %s31, 1
      %p343 = scmp.ne.s32.totalorder %s338, %s340
      %p344 = scmp.eq.s32.totalorder %s31, 0
      %p345 = por %p343, %p344
      %p346 = scmp.ne.s32.totalorder %s338, %s340
      %p347 = scmp.eq.s32.totalorder %s36, 1
      %p348 = por %p346, %p347
      %p349 = scmp.ne.s32.totalorder %s340, %s341
      %p350 = scmp.eq.s32.totalorder %s36, 0
      %p351 = por %p349, %p350
      %p352 = scmp.ne.s32.totalorder %s340, %s341
      %p353 = scmp.eq.s32.totalorder %s37, 1
      %p354 = por %p352, %p353
      %p356 = scmp.ne.s32.totalorder %s341, %s355
      %p357 = scmp.eq.s32.totalorder %s37, 0
      %p358 = por %p356, %p357
      %s360 = sadd.s32 %s359, 1
      %p363 = scmp.eq.s32.totalorder %s31, 1
      %p364 = scmp.ne.s32.totalorder %s359, %s361
      %p365 = scmp.eq.s32.totalorder %s31, 0
      %p366 = por %p364, %p365
      %p367 = scmp.ne.s32.totalorder %s359, %s361
      %p368 = scmp.eq.s32.totalorder %s36, 1
      %p369 = por %p367, %p368
      %p370 = scmp.ne.s32.totalorder %s361, %s362
      %p371 = scmp.eq.s32.totalorder %s36, 0
      %p372 = por %p370, %p371
      %p373 = scmp.ne.s32.totalorder %s361, %s362
      %p374 = scmp.eq.s32.totalorder %s37, 1
      %p375 = por %p373, %p374
      %p377 = scmp.ne.s32.totalorder %s362, %s376
      %p378 = scmp.eq.s32.totalorder %s37, 0
      %p379 = por %p377, %p378
      %s381 = sadd.s32 %s380, 1
      %p384 = scmp.eq.s32.totalorder %s31, 1
      %p385 = scmp.ne.s32.totalorder %s380, %s382
      %p386 = scmp.eq.s32.totalorder %s31, 0
      %p387 = por %p385, %p386
      %p388 = scmp.ne.s32.totalorder %s380, %s382
      %p389 = scmp.eq.s32.totalorder %s36, 1
      %p390 = por %p388, %p389
      %p391 = scmp.ne.s32.totalorder %s382, %s383
      %p392 = scmp.eq.s32.totalorder %s36, 0
      %p393 = por %p391, %p392
      %p394 = scmp.ne.s32.totalorder %s382, %s383
      %p395 = scmp.eq.s32.totalorder %s37, 1
      %p396 = por %p394, %p395
      %p398 = scmp.ne.s32.totalorder %s383, %s397
      %p399 = scmp.eq.s32.totalorder %s37, 0
      %p400 = por %p398, %p399
      %s402 = sadd.s32 %s401, 1
      %p405 = scmp.eq.s32.totalorder %s31, 1
      %p406 = scmp.ne.s32.totalorder %s401, %s403
      %p407 = scmp.eq.s32.totalorder %s31, 0
      %p408 = por %p406, %p407
      %p409 = scmp.ne.s32.totalorder %s401, %s403
      %p410 = scmp.eq.s32.totalorder %s36, 1
      %p411 = por %p409, %p410
      %p412 = scmp.ne.s32.totalorder %s403, %s404
      %p413 = scmp.eq.s32.totalorder %s36, 0
      %p414 = por %p412, %p413
      %p415 = scmp.ne.s32.totalorder %s403, %s404
      %p416 = scmp.eq.s32.totalorder %s37, 1
      %p417 = por %p415, %p416
      %p419 = scmp.ne.s32.totalorder %s404, %s418
      %p420 = scmp.eq.s32.totalorder %s37, 0
      %p421 = por %p419, %p420
      %s423 = sadd.s32 %s422, 1
      %p426 = scmp.eq.s32.totalorder %s31, 1
      %p427 = scmp.ne.s32.totalorder %s422, %s424
      %p428 = scmp.eq.s32.totalorder %s31, 0
      %p429 = por %p427, %p428
      %p430 = scmp.ne.s32.totalorder %s422, %s424
      %p431 = scmp.eq.s32.totalorder %s36, 1
      %p432 = por %p430, %p431
      %p433 = scmp.ne.s32.totalorder %s424, %s425
      %p434 = scmp.eq.s32.totalorder %s36, 0
      %p435 = por %p433, %p434
      %p436 = scmp.ne.s32.totalorder %s424, %s425
      %p437 = scmp.eq.s32.totalorder %s37, 1
      %p438 = por %p436, %p437
      %p440 = scmp.ne.s32.totalorder %s425, %s439
      %p441 = scmp.eq.s32.totalorder %s37, 0
      %p442 = por %p440, %p441
      %s444 = sadd.s32 %s443, 1
      %p447 = scmp.eq.s32.totalorder %s31, 1
      %p448 = scmp.ne.s32.totalorder %s443, %s445
      %p449 = scmp.eq.s32.totalorder %s31, 0
      %p450 = por %p448, %p449
      %p451 = scmp.ne.s32.totalorder %s443, %s445
      %p452 = scmp.eq.s32.totalorder %s36, 1
      %p453 = por %p451, %p452
      %p454 = scmp.ne.s32.totalorder %s445, %s446
      %p455 = scmp.eq.s32.totalorder %s36, 0
      %p456 = por %p454, %p455
      %p457 = scmp.ne.s32.totalorder %s445, %s446
      %p458 = scmp.eq.s32.totalorder %s37, 1
      %p459 = por %p457, %p458
      %p461 = scmp.ne.s32.totalorder %s446, %s460
      %p462 = scmp.eq.s32.totalorder %s37, 0
      %p463 = por %p461, %p462
      %s465 = sadd.s32 %s464, 1
      %p468 = scmp.eq.s32.totalorder %s31, 1
      %p469 = scmp.ne.s32.totalorder %s464, %s466
      %p470 = scmp.eq.s32.totalorder %s31, 0
      %p471 = por %p469, %p470
      %p472 = scmp.ne.s32.totalorder %s464, %s466
      %p473 = scmp.eq.s32.totalorder %s36, 1
      %p474 = por %p472, %p473
      %p475 = scmp.ne.s32.totalorder %s466, %s467
      %p476 = scmp.eq.s32.totalorder %s36, 0
      %p477 = por %p475, %p476
      %p478 = scmp.ne.s32.totalorder %s466, %s467
      %p479 = scmp.eq.s32.totalorder %s37, 1
      %p480 = por %p478, %p479
      %p482 = scmp.ne.s32.totalorder %s467, %s481
      %p483 = scmp.eq.s32.totalorder %s37, 0
      %p484 = por %p482, %p483
      %s486 = sadd.s32 %s485, 1
      %p489 = scmp.eq.s32.totalorder %s31, 1
      %p490 = scmp.ne.s32.totalorder %s485, %s487
      %p491 = scmp.eq.s32.totalorder %s31, 0
      %p492 = por %p490, %p491
      %p493 = scmp.ne.s32.totalorder %s485, %s487
      %p494 = scmp.eq.s32.totalorder %s36, 1
      %p495 = por %p493, %p494
      %p496 = scmp.ne.s32.totalorder %s487, %s488
      %p497 = scmp.eq.s32.totalorder %s36, 0
      %p498 = por %p496, %p497
      %p499 = scmp.ne.s32.totalorder %s487, %s488
      %p500 = scmp.eq.s32.totalorder %s37, 1
      %p501 = por %p499, %p500
      %p503 = scmp.ne.s32.totalorder %s488, %s502
      %p504 = scmp.eq.s32.totalorder %s37, 0
      %p505 = por %p503, %p504
      %s506 = ssub.s32 %s31, %s38
      %p507 = scmp.eq.s32.totalorder %s506, 0
      %s509 = sadd.s32 %s508, 1
      %s510 = scalar_select %p507, %s508, %s509
      %p513 = pneg %p507
      %p514 = scmp.eq.s32.totalorder %s31, 1
      %p515 = por %p513, %p514
      %p516 = scmp.ne.s32.totalorder %s508, %s511
      %p517 = scmp.eq.s32.totalorder %s31, 0
      %p518 = por %p516, %p517
      %p519 = scmp.ne.s32.totalorder %s508, %s511
      %p520 = scmp.eq.s32.totalorder %s36, 1
      %p521 = por %p519, %p520
      %p522 = scmp.ne.s32.totalorder %s511, %s512
      %p523 = scmp.eq.s32.totalorder %s36, 0
      %p524 = por %p522, %p523
      %p525 = scmp.ne.s32.totalorder %s511, %s512
      %p526 = scmp.eq.s32.totalorder %s37, 1
      %p527 = por %p525, %p526
      %p529 = scmp.ne.s32.totalorder %s512, %s528
      %p530 = scmp.eq.s32.totalorder %s37, 0
      %p531 = por %p529, %p530
      %p532 = scmp.le.s32.totalorder 1, %s31
      %p533 = scmp.lt.s32.totalorder %s31, 3
      %p534 = pnand %p532, %p533
      %p535 = pneg %p534
      // Predicated region
      $region9: #{ssfenet_block_forward.1} parent=5 // pred_check
        _
      $region10: #{ssfenet_block_forward.1} parent=5 // pred_check_branch
        %537 = sbr.rel (%p534) target = $region12
      $region11: #{ssfenet_block_forward.1} parent=5 // pred_region
        %s538 = ssub.s32 %s31, 1
        // Predicated region
        $region13: #{ssfenet_block_forward.1} parent=11 // pred_check
          %p539 = pneg %p78
        $region14: #{ssfenet_block_forward.1} parent=11 // pred_check_branch
          %541 = sbr.rel (%p539) target = $region16
        $region15: #{ssfenet_block_forward.1} parent=11 // pred_region
          _
        $region16: #{ssfenet_block_forward.1} parent=11 // pred_fallthru
          _
        // Predicated region
        $region17: #{ssfenet_block_forward.1} parent=11 // pred_check
          %p542 = pneg %p99
        $region18: #{ssfenet_block_forward.1} parent=11 // pred_check_branch
          %544 = sbr.rel (%p542) target = $region20
        $region19: #{ssfenet_block_forward.1} parent=11 // pred_region
          _
        $region20: #{ssfenet_block_forward.1} parent=11 // pred_fallthru
          _
        // Predicated region
        $region21: #{ssfenet_block_forward.1} parent=11 // pred_check
          %p545 = pneg %p120
        $region22: #{ssfenet_block_forward.1} parent=11 // pred_check_branch
          %547 = sbr.rel (%p545) target = $region24
        $region23: #{ssfenet_block_forward.1} parent=11 // pred_region
          _
        $region24: #{ssfenet_block_forward.1} parent=11 // pred_fallthru
          _
        // Predicated region
        $region25: #{ssfenet_block_forward.1} parent=11 // pred_check
          %p548 = pneg %p141
        $region26: #{ssfenet_block_forward.1} parent=11 // pred_check_branch
          %550 = sbr.rel (%p548) target = $region28
        $region27: #{ssfenet_block_forward.1} parent=11 // pred_region
          _
        $region28: #{ssfenet_block_forward.1} parent=11 // pred_fallthru
          _
        // Predicated region
        $region29: #{ssfenet_block_forward.1} parent=11 // pred_check
          %p551 = pneg %p162
        $region30: #{ssfenet_block_forward.1} parent=11 // pred_check_branch
          %553 = sbr.rel (%p551) target = $region32
        $region31: #{ssfenet_block_forward.1} parent=11 // pred_region
          _
        $region32: #{ssfenet_block_forward.1} parent=11 // pred_fallthru
          _
        // Predicated region
        $region33: #{ssfenet_block_forward.1} parent=11 // pred_check
          %p554 = pneg %p183
        $region34: #{ssfenet_block_forward.1} parent=11 // pred_check_branch
          %556 = sbr.rel (%p554) target = $region36
        $region35: #{ssfenet_block_forward.1} parent=11 // pred_region
          _
        $region36: #{ssfenet_block_forward.1} parent=11 // pred_fallthru
          _
        // Predicated region
        $region37: #{ssfenet_block_forward.1} parent=11 // pred_check
          %p557 = pneg %p204
        $region38: #{ssfenet_block_forward.1} parent=11 // pred_check_branch
          %559 = sbr.rel (%p557) target = $region40
        $region39: #{ssfenet_block_forward.1} parent=11 // pred_region
          _
        $region40: #{ssfenet_block_forward.1} parent=11 // pred_fallthru
          _
        // Predicated region
        $region41: #{ssfenet_block_forward.1} parent=11 // pred_check
          %p560 = pneg %p225
        $region42: #{ssfenet_block_forward.1} parent=11 // pred_check_branch
          %562 = sbr.rel (%p560) target = $region44
        $region43: #{ssfenet_block_forward.1} parent=11 // pred_region
          _
        $region44: #{ssfenet_block_forward.1} parent=11 // pred_fallthru
          _
        // Predicated region
        $region45: #{ssfenet_block_forward.1} parent=11 // pred_check
          %p563 = pneg %p246
        $region46: #{ssfenet_block_forward.1} parent=11 // pred_check_branch
          %565 = sbr.rel (%p563) target = $region48
        $region47: #{ssfenet_block_forward.1} parent=11 // pred_region
          _
        $region48: #{ssfenet_block_forward.1} parent=11 // pred_fallthru
          _
        // Predicated region
        $region49: #{ssfenet_block_forward.1} parent=11 // pred_check
          %p566 = pneg %p267
        $region50: #{ssfenet_block_forward.1} parent=11 // pred_check_branch
          %568 = sbr.rel (%p566) target = $region52
        $region51: #{ssfenet_block_forward.1} parent=11 // pred_region
          _
        $region52: #{ssfenet_block_forward.1} parent=11 // pred_fallthru
          _
        // Predicated region
        $region53: #{ssfenet_block_forward.1} parent=11 // pred_check
          %p569 = pneg %p288
        $region54: #{ssfenet_block_forward.1} parent=11 // pred_check_branch
          %571 = sbr.rel (%p569) target = $region56
        $region55: #{ssfenet_block_forward.1} parent=11 // pred_region
          _
        $region56: #{ssfenet_block_forward.1} parent=11 // pred_fallthru
          _
        // Predicated region
        $region57: #{ssfenet_block_forward.1} parent=11 // pred_check
          %p572 = pneg %p309
        $region58: #{ssfenet_block_forward.1} parent=11 // pred_check_branch
          %574 = sbr.rel (%p572) target = $region60
        $region59: #{ssfenet_block_forward.1} parent=11 // pred_region
          _
        $region60: #{ssfenet_block_forward.1} parent=11 // pred_fallthru
          _
        // Predicated region
        $region61: #{ssfenet_block_forward.1} parent=11 // pred_check
          %p575 = pneg %p330
        $region62: #{ssfenet_block_forward.1} parent=11 // pred_check_branch
          %577 = sbr.rel (%p575) target = $region64
        $region63: #{ssfenet_block_forward.1} parent=11 // pred_region
          _
        $region64: #{ssfenet_block_forward.1} parent=11 // pred_fallthru
          _
        // Predicated region
        $region65: #{ssfenet_block_forward.1} parent=11 // pred_check
          %p578 = pneg %p351
        $region66: #{ssfenet_block_forward.1} parent=11 // pred_check_branch
          %580 = sbr.rel (%p578) target = $region68
        $region67: #{ssfenet_block_forward.1} parent=11 // pred_region
          _
        $region68: #{ssfenet_block_forward.1} parent=11 // pred_fallthru
          _
        // Predicated region
        $region69: #{ssfenet_block_forward.1} parent=11 // pred_check
          %p581 = pneg %p372
        $region70: #{ssfenet_block_forward.1} parent=11 // pred_check_branch
          %583 = sbr.rel (%p581) target = $region72
        $region71: #{ssfenet_block_forward.1} parent=11 // pred_region
          _
        $region72: #{ssfenet_block_forward.1} parent=11 // pred_fallthru
          _
        // Predicated region
        $region73: #{ssfenet_block_forward.1} parent=11 // pred_check
          %p584 = pneg %p393
        $region74: #{ssfenet_block_forward.1} parent=11 // pred_check_branch
          %586 = sbr.rel (%p584) target = $region76
        $region75: #{ssfenet_block_forward.1} parent=11 // pred_region
          _
        $region76: #{ssfenet_block_forward.1} parent=11 // pred_fallthru
          _
        // Predicated region
        $region77: #{ssfenet_block_forward.1} parent=11 // pred_check
          %p587 = pneg %p414
        $region78: #{ssfenet_block_forward.1} parent=11 // pred_check_branch
          %589 = sbr.rel (%p587) target = $region80
        $region79: #{ssfenet_block_forward.1} parent=11 // pred_region
          _
        $region80: #{ssfenet_block_forward.1} parent=11 // pred_fallthru
          _
        // Predicated region
        $region81: #{ssfenet_block_forward.1} parent=11 // pred_check
          %p590 = pneg %p435
        $region82: #{ssfenet_block_forward.1} parent=11 // pred_check_branch
          %592 = sbr.rel (%p590) target = $region84
        $region83: #{ssfenet_block_forward.1} parent=11 // pred_region
          _
        $region84: #{ssfenet_block_forward.1} parent=11 // pred_fallthru
          _
        // Predicated region
        $region85: #{ssfenet_block_forward.1} parent=11 // pred_check
          %p593 = pneg %p456
        $region86: #{ssfenet_block_forward.1} parent=11 // pred_check_branch
          %595 = sbr.rel (%p593) target = $region88
        $region87: #{ssfenet_block_forward.1} parent=11 // pred_region
          _
        $region88: #{ssfenet_block_forward.1} parent=11 // pred_fallthru
          _
        // Predicated region
        $region89: #{ssfenet_block_forward.1} parent=11 // pred_check
          %p596 = pneg %p477
        $region90: #{ssfenet_block_forward.1} parent=11 // pred_check_branch
          %598 = sbr.rel (%p596) target = $region92
        $region91: #{ssfenet_block_forward.1} parent=11 // pred_region
          _
        $region92: #{ssfenet_block_forward.1} parent=11 // pred_fallthru
          _
        // Predicated region
        $region93: #{ssfenet_block_forward.1} parent=11 // pred_check
          %p599 = pneg %p498
        $region94: #{ssfenet_block_forward.1} parent=11 // pred_check_branch
          %601 = sbr.rel (%p599) target = $region96
        $region95: #{ssfenet_block_forward.1} parent=11 // pred_region
          _
        $region96: #{ssfenet_block_forward.1} parent=11 // pred_fallthru
          _
      $region12: #{ssfenet_block_forward.1} parent=5 // pred_fallthru
        _
      %p602 = scmp.lt.s32.totalorder %s31, 2
      // Predicated region
      $region97: #{ssfenet_block_forward.1} parent=5 // pred_check
        %p603 = pneg %p602
      $region98: #{ssfenet_block_forward.1} parent=5 // pred_check_branch
        %605 = sbr.rel (%p603) target = $region100
      $region99: #{ssfenet_block_forward.1} parent=5 // pred_region
        // Predicated region
        $region101: #{ssfenet_block_forward.1} parent=99 // pred_check
          %p606 = pneg %p51
        $region102: #{ssfenet_block_forward.1} parent=99 // pred_check_branch
          %608 = sbr.rel (%p606) target = $region104
        $region103: #{ssfenet_block_forward.1} parent=99 // pred_region
          %s609 = sand.u32 %s41, 1
          %s610 = sand.u32 %s41, 1
          %s611 = smul.addr %s610, 256
          %s612 = scalar_lea.vmem [#allocation2], %s611
          %s613 = smul.u32 16, %s31
          %s614 = smul.addr %s613, 8
          %s615 = scalar_lea.vmem %s0, %s614
          // Predicated region
          $region105: #{ssfenet_block_forward.1} parent=103 // pred_check
            _
          $region106: #{ssfenet_block_forward.1} parent=103 // pred_check_branch
            %617 = sbr.rel (0) target = $region108
          $region107: #{ssfenet_block_forward.1} parent=103 // pred_region
            // Predicated region
            $region109: #{ssfenet_block_forward.1} parent=107 // pred_check
              _
            $region110: #{ssfenet_block_forward.1} parent=107 // pred_check_branch
              %619 = sbr.rel (0) target = $region112
            $region111: #{ssfenet_block_forward.1} parent=107 // pred_region
              // Predicated region
              $region124: #{ssfenet_block_forward.1} parent=111 // pred_check
                _
              $region125: #{ssfenet_block_forward.1} parent=111 // pred_check_branch
                %697 = sbr.rel (0) target = $region127
              $region126: #{ssfenet_block_forward.1} parent=111 // pred_region
                loop: start=0, step=1, limit=1
                $region128: #{ssfenet_block_forward.1} parent=126 // loop_pre_header
                  _
                $region129: #{ssfenet_block_forward.1} parent=126 // loop_header
                  %s699 = sphi 0, %s703
                  %p700 = scmp.ge.s32.totalorder %s699, 1
                  %s704 = sphi %s615, %s615
                  %s705 = sphi %s612, %s612
                $region130: #{ssfenet_block_forward.1} parent=126 // loop_header_branch
                  %702 = sbr.rel (%p700) target = $region134
                $region131: #{ssfenet_block_forward.1} parent=126 // loop_body
                  %v706 = vld [vmem:[%s704] sm:$0xff]
                  %707 = vst [vmem:[%s705] sm:$0xff] %v706
                  %v708 = vld [vmem:[%s704 + $0x8] sm:$0xff]
                  %709 = vst [vmem:[%s705 + $0x8] sm:$0xff] %v708
                  %v710 = vld [vmem:[%s704 + $0x10] sm:$0xff]
                  %711 = vst [vmem:[%s705 + $0x10] sm:$0xff] %v710
                  %v712 = vld [vmem:[%s704 + $0x18] sm:$0xff]
                  %713 = vst [vmem:[%s705 + $0x18] sm:$0xff] %v712
                  %v714 = vld [vmem:[%s704 + $0x20] sm:$0xff]
                  %715 = vst [vmem:[%s705 + $0x20] sm:$0xff] %v714
                  %v716 = vld [vmem:[%s704 + $0x28] sm:$0xff]
                  %717 = vst [vmem:[%s705 + $0x28] sm:$0xff] %v716
                  %v718 = vld [vmem:[%s704 + $0x30] sm:$0xff]
                  %719 = vst [vmem:[%s705 + $0x30] sm:$0xff] %v718
                  %v720 = vld [vmem:[%s704 + $0x38] sm:$0xff]
                  %721 = vst [vmem:[%s705 + $0x38] sm:$0xff] %v720
                  %v722 = vld [vmem:[%s704 + $0x40] sm:$0xff]
                  %723 = vst [vmem:[%s705 + $0x40] sm:$0xff] %v722
                  %v724 = vld [vmem:[%s704 + $0x48] sm:$0xff]
                  %725 = vst [vmem:[%s705 + $0x48] sm:$0xff] %v724
                  %v726 = vld [vmem:[%s704 + $0x50] sm:$0xff]
                  %727 = vst [vmem:[%s705 + $0x50] sm:$0xff] %v726
                  %v728 = vld [vmem:[%s704 + $0x58] sm:$0xff]
                  %729 = vst [vmem:[%s705 + $0x58] sm:$0xff] %v728
                  %v730 = vld [vmem:[%s704 + $0x60] sm:$0xff]
                  %731 = vst [vmem:[%s705 + $0x60] sm:$0xff] %v730
                  %v732 = vld [vmem:[%s704 + $0x68] sm:$0xff]
                  %733 = vst [vmem:[%s705 + $0x68] sm:$0xff] %v732
                  %v734 = vld [vmem:[%s704 + $0x70] sm:$0xff]
                  %735 = vst [vmem:[%s705 + $0x70] sm:$0xff] %v734
                  %v736 = vld [vmem:[%s704 + $0x78] sm:$0xff]
                  %737 = vst [vmem:[%s705 + $0x78] sm:$0xff] %v736
                  %v738 = vld [vmem:[%s704 + $0x100] sm:$0xff]
                  %739 = vst [vmem:[%s705 + $0x80] sm:$0xff] %v738
                  %v740 = vld [vmem:[%s704 + $0x108] sm:$0xff]
                  %741 = vst [vmem:[%s705 + $0x88] sm:$0xff] %v740
                  %v742 = vld [vmem:[%s704 + $0x110] sm:$0xff]
                  %743 = vst [vmem:[%s705 + $0x90] sm:$0xff] %v742
                  %v744 = vld [vmem:[%s704 + $0x118] sm:$0xff]
                  %745 = vst [vmem:[%s705 + $0x98] sm:$0xff] %v744
                  %v746 = vld [vmem:[%s704 + $0x120] sm:$0xff]
                  %747 = vst [vmem:[%s705 + $0xa0] sm:$0xff] %v746
                  %v748 = vld [vmem:[%s704 + $0x128] sm:$0xff]
                  %749 = vst [vmem:[%s705 + $0xa8] sm:$0xff] %v748
                  %v750 = vld [vmem:[%s704 + $0x130] sm:$0xff]
                  %751 = vst [vmem:[%s705 + $0xb0] sm:$0xff] %v750
                  %v752 = vld [vmem:[%s704 + $0x138] sm:$0xff]
                  %753 = vst [vmem:[%s705 + $0xb8] sm:$0xff] %v752
                  %v754 = vld [vmem:[%s704 + $0x140] sm:$0xff]
                  %755 = vst [vmem:[%s705 + $0xc0] sm:$0xff] %v754
                  %v756 = vld [vmem:[%s704 + $0x148] sm:$0xff]
                  %757 = vst [vmem:[%s705 + $0xc8] sm:$0xff] %v756
                  %v758 = vld [vmem:[%s704 + $0x150] sm:$0xff]
                  %759 = vst [vmem:[%s705 + $0xd0] sm:$0xff] %v758
                  %v760 = vld [vmem:[%s704 + $0x158] sm:$0xff]
                  %761 = vst [vmem:[%s705 + $0xd8] sm:$0xff] %v760
                  %v762 = vld [vmem:[%s704 + $0x160] sm:$0xff]
                  %763 = vst [vmem:[%s705 + $0xe0] sm:$0xff] %v762
                  %v764 = vld [vmem:[%s704 + $0x168] sm:$0xff]
                  %765 = vst [vmem:[%s705 + $0xe8] sm:$0xff] %v764
                  %v766 = vld [vmem:[%s704 + $0x170] sm:$0xff]
                  %767 = vst [vmem:[%s705 + $0xf0] sm:$0xff] %v766
                  %v768 = vld [vmem:[%s704 + $0x178] sm:$0xff]
                  %769 = vst [vmem:[%s705 + $0xf8] sm:$0xff] %v768
                $region132: #{ssfenet_block_forward.1} parent=126 // loop_footer
                  %s703 = sadd.s32 1, %s699
                $region133: #{ssfenet_block_forward.1} parent=126 // loop_footer_branch
                  %698 = sbr.rel target = $region129
                $region134: #{ssfenet_block_forward.1} parent=126 // loop_exit
                  _
              $region127: #{ssfenet_block_forward.1} parent=111 // pred_fallthru
                _
              // Predicated region
              $region135: #{ssfenet_block_forward.1} parent=111 // pred_check
                _
              $region136: #{ssfenet_block_forward.1} parent=111 // pred_check_branch
                %771 = sbr.rel target = $region138
              $region137: #{ssfenet_block_forward.1} parent=111 // pred_region
                _
              $region138: #{ssfenet_block_forward.1} parent=111 // pred_fallthru
                _
            $region112: #{ssfenet_block_forward.1} parent=107 // pred_fallthru
              _
            // Predicated region
            $region113: #{ssfenet_block_forward.1} parent=107 // pred_check
              _
            $region114: #{ssfenet_block_forward.1} parent=107 // pred_check_branch
              %621 = sbr.rel target = $region116
            $region115: #{ssfenet_block_forward.1} parent=107 // pred_region
              %s623 = ssub.s32 256, 1
              loop: start=0, step=1, limit=1
              $region117: #{ssfenet_block_forward.1} parent=115 // loop_pre_header
                _
              $region118: #{ssfenet_block_forward.1} parent=115 // loop_header
                %s625 = sphi 0, %s629
                %p626 = scmp.ge.s32.totalorder %s625, 1
                %s630 = sphi %s615, %s615
                %s631 = sphi %s612, %s612
              $region119: #{ssfenet_block_forward.1} parent=115 // loop_header_branch
                %628 = sbr.rel (%p626) target = $region123
              $region120: #{ssfenet_block_forward.1} parent=115 // loop_body
                %v632 = vld [vmem:[%s630] sm:%s623]
                %633 = vst [vmem:[%s631] sm:%s623] %v632
                %v634 = vld [vmem:[%s630 + $0x8] sm:%s623]
                %635 = vst [vmem:[%s631 + $0x8] sm:%s623] %v634
                %v636 = vld [vmem:[%s630 + $0x10] sm:%s623]
                %637 = vst [vmem:[%s631 + $0x10] sm:%s623] %v636
                %v638 = vld [vmem:[%s630 + $0x18] sm:%s623]
                %639 = vst [vmem:[%s631 + $0x18] sm:%s623] %v638
                %v640 = vld [vmem:[%s630 + $0x20] sm:%s623]
                %641 = vst [vmem:[%s631 + $0x20] sm:%s623] %v640
                %v642 = vld [vmem:[%s630 + $0x28] sm:%s623]
                %643 = vst [vmem:[%s631 + $0x28] sm:%s623] %v642
                %v644 = vld [vmem:[%s630 + $0x30] sm:%s623]
                %645 = vst [vmem:[%s631 + $0x30] sm:%s623] %v644
                %v646 = vld [vmem:[%s630 + $0x38] sm:%s623]
                %647 = vst [vmem:[%s631 + $0x38] sm:%s623] %v646
                %v648 = vld [vmem:[%s630 + $0x40] sm:%s623]
                %649 = vst [vmem:[%s631 + $0x40] sm:%s623] %v648
                %v650 = vld [vmem:[%s630 + $0x48] sm:%s623]
                %651 = vst [vmem:[%s631 + $0x48] sm:%s623] %v650
                %v652 = vld [vmem:[%s630 + $0x50] sm:%s623]
                %653 = vst [vmem:[%s631 + $0x50] sm:%s623] %v652
                %v654 = vld [vmem:[%s630 + $0x58] sm:%s623]
                %655 = vst [vmem:[%s631 + $0x58] sm:%s623] %v654
                %v656 = vld [vmem:[%s630 + $0x60] sm:%s623]
                %657 = vst [vmem:[%s631 + $0x60] sm:%s623] %v656
                %v658 = vld [vmem:[%s630 + $0x68] sm:%s623]
                %659 = vst [vmem:[%s631 + $0x68] sm:%s623] %v658
                %v660 = vld [vmem:[%s630 + $0x70] sm:%s623]
                %661 = vst [vmem:[%s631 + $0x70] sm:%s623] %v660
                %v662 = vld [vmem:[%s630 + $0x78] sm:%s623]
                %663 = vst [vmem:[%s631 + $0x78] sm:%s623] %v662
                %v664 = vld [vmem:[%s630 + $0x100] sm:%s623]
                %665 = vst [vmem:[%s631 + $0x80] sm:%s623] %v664
                %v666 = vld [vmem:[%s630 + $0x108] sm:%s623]
                %667 = vst [vmem:[%s631 + $0x88] sm:%s623] %v666
                %v668 = vld [vmem:[%s630 + $0x110] sm:%s623]
                %669 = vst [vmem:[%s631 + $0x90] sm:%s623] %v668
                %v670 = vld [vmem:[%s630 + $0x118] sm:%s623]
                %671 = vst [vmem:[%s631 + $0x98] sm:%s623] %v670
                %v672 = vld [vmem:[%s630 + $0x120] sm:%s623]
                %673 = vst [vmem:[%s631 + $0xa0] sm:%s623] %v672
                %v674 = vld [vmem:[%s630 + $0x128] sm:%s623]
                %675 = vst [vmem:[%s631 + $0xa8] sm:%s623] %v674
                %v676 = vld [vmem:[%s630 + $0x130] sm:%s623]
                %677 = vst [vmem:[%s631 + $0xb0] sm:%s623] %v676
                %v678 = vld [vmem:[%s630 + $0x138] sm:%s623]
                %679 = vst [vmem:[%s631 + $0xb8] sm:%s623] %v678
                %v680 = vld [vmem:[%s630 + $0x140] sm:%s623]
                %681 = vst [vmem:[%s631 + $0xc0] sm:%s623] %v680
                %v682 = vld [vmem:[%s630 + $0x148] sm:%s623]
                %683 = vst [vmem:[%s631 + $0xc8] sm:%s623] %v682
                %v684 = vld [vmem:[%s630 + $0x150] sm:%s623]
                %685 = vst [vmem:[%s631 + $0xd0] sm:%s623] %v684
                %v686 = vld [vmem:[%s630 + $0x158] sm:%s623]
                %687 = vst [vmem:[%s631 + $0xd8] sm:%s623] %v686
                %v688 = vld [vmem:[%s630 + $0x160] sm:%s623]
                %689 = vst [vmem:[%s631 + $0xe0] sm:%s623] %v688
                %v690 = vld [vmem:[%s630 + $0x168] sm:%s623]
                %691 = vst [vmem:[%s631 + $0xe8] sm:%s623] %v690
                %v692 = vld [vmem:[%s630 + $0x170] sm:%s623]
                %693 = vst [vmem:[%s631 + $0xf0] sm:%s623] %v692
                %v694 = vld [vmem:[%s630 + $0x178] sm:%s623]
                %695 = vst [vmem:[%s631 + $0xf8] sm:%s623] %v694
              $region121: #{ssfenet_block_forward.1} parent=115 // loop_footer
                %s629 = sadd.s32 1, %s625
              $region122: #{ssfenet_block_forward.1} parent=115 // loop_footer_branch
                %624 = sbr.rel target = $region118
              $region123: #{ssfenet_block_forward.1} parent=115 // loop_exit
                _
            $region116: #{ssfenet_block_forward.1} parent=107 // pred_fallthru
              _
          $region108: #{ssfenet_block_forward.1} parent=103 // pred_fallthru
            _
          %772 = vnop
        $region104: #{ssfenet_block_forward.1} parent=99 // pred_fallthru
          _
      $region100: #{ssfenet_block_forward.1} parent=5 // pred_fallthru
        _
      %p773 = scmp.le.s32.totalorder 1, %s31
      %p774 = scmp.lt.s32.totalorder %s31, 3
      %p775 = pnand %p773, %p774
      %p776 = pneg %p775
      // Predicated region
      $region139: #{ssfenet_block_forward.1} parent=5 // pred_check
        _
      $region140: #{ssfenet_block_forward.1} parent=5 // pred_check_branch
        %778 = sbr.rel (%p775) target = $region142
      $region141: #{ssfenet_block_forward.1} parent=5 // pred_region
        %s779 = ssub.s32 %s31, 1
        %s780 = sand.u32 %s44, 1
        %s781 = sand.u32 %s44, 1
        %s782 = smul.addr %s781, 256
        %s783 = scalar_lea.vmem [#allocation2], %s782
        // Predicated region
        $region143: #{ssfenet_block_forward.1} parent=141 // pred_check
          %p784 = pneg %p57
        $region144: #{ssfenet_block_forward.1} parent=141 // pred_check_branch
          %786 = sbr.rel (%p784) target = $region146
        $region145: #{ssfenet_block_forward.1} parent=141 // pred_region
          _
        $region146: #{ssfenet_block_forward.1} parent=141 // pred_fallthru
          _
        %s787 = sand.u32 %s44, 1
        %s788 = sand.u32 %s44, 1
        %s789 = smul.addr %s788, 256
        %s790 = scalar_lea.vmem [#allocation2], %s789
        %p791 = pneg %p57
        %p792 = pneg %p54
        %p793 = pneg %p78
        %p794 = pneg %p75
        %p795 = pneg %p99
        %p796 = pneg %p96
        %p797 = pneg %p120
        %p798 = pneg %p117
        %p799 = pneg %p141
        %p800 = pneg %p138
        %p801 = pneg %p162
        %p802 = pneg %p159
        %p803 = pneg %p183
        %p804 = pneg %p180
        %p805 = pneg %p204
        %p806 = pneg %p201
        %p807 = pneg %p225
        %p808 = pneg %p222
        %p809 = pneg %p246
        %p810 = pneg %p243
        %p811 = pneg %p267
        %p812 = pneg %p264
        %p813 = pneg %p288
        %p814 = pneg %p285
        %p815 = pneg %p309
        %p816 = pneg %p306
        %p817 = pneg %p330
        %p818 = pneg %p327
        %p819 = pneg %p351
        %p820 = pneg %p348
        %p821 = pneg %p372
        %p822 = pneg %p369
        %p823 = pneg %p393
        %p824 = pneg %p390
        %p825 = pneg %p414
        %p826 = pneg %p411
        %p827 = pneg %p435
        %p828 = pneg %p432
        %p829 = pneg %p456
        %p830 = pneg %p453
        %p831 = pneg %p477
        %p832 = pneg %p474
        %p833 = pneg %p498
        %p834 = pneg %p495
        %p835 = pneg %p524
        %p836 = pneg %p521
        %s837 = sand.u32 %s511, 1
        %s838 = scalar_lea.sflag [#allocation4], %s837
        %s839 = sand.u32 %s511, 1
        %s840 = smul.addr %s839, 256
        %s841 = scalar_lea.vmem [#allocation3], %s840
        %s842 = smul.u32 16, %s36
        %s843 = smul.u32 16, %s36
        %v844 = vld [vmem:[%s2] sm:$0x1]
        %v845 = vld [vmem:[%s3] sm:$0x1]
        %v846 = vld [vmem:[%s4] sm:$0x1]
        %v847 = vld [vmem:[%s5] sm:$0x1]
        %v848 = vld [vmem:[%s7] sm:$0x1]
        %v849 = vld [vmem:[%s9] sm:$0x1]
        %v850 = vld [vmem:[%s20] sm:$0xff]
        %v851 = vld [vmem:[%s20 + $0x8] sm:$0xff]
        %v852 = vld [vmem:[%s20 + $0x10] sm:$0xff]
        %v853 = vld [vmem:[%s20 + $0x18] sm:$0xff]
        %v854 = vld [vmem:[%s21] sm:$0xf]
        %v855 = vld [vmem:[%s783] sm:$0xff]
        %v856 = vld [vmem:[%s783 + $0x8] sm:$0xff]
        %v857 = vld [vmem:[%s783 + $0x10] sm:$0xff]
        %v858 = vld [vmem:[%s783 + $0x18] sm:$0xff]
        %v859 = vld [vmem:[%s783 + $0x20] sm:$0xff]
        %v860 = vld [vmem:[%s783 + $0x28] sm:$0xff]
        %v861 = vld [vmem:[%s783 + $0x30] sm:$0xff]
        %v862 = vld [vmem:[%s783 + $0x38] sm:$0xff]
        %v863 = vld [vmem:[%s783 + $0x40] sm:$0xff]
        %v864 = vld [vmem:[%s783 + $0x48] sm:$0xff]
        %v865 = vld [vmem:[%s783 + $0x50] sm:$0xff]
        %v866 = vld [vmem:[%s783 + $0x58] sm:$0xff]
        %v867 = vld [vmem:[%s783 + $0x60] sm:$0xff]
        %v868 = vld [vmem:[%s783 + $0x68] sm:$0xff]
        %v869 = vld [vmem:[%s783 + $0x70] sm:$0xff]
        %v870 = vld [vmem:[%s783 + $0x78] sm:$0xff]
        %v871 = vld [vmem:[%s1] sm:$0x1]
        %v872 = vperm.slane %v871, 0
        %v873 = vmul.f32 %v855, %v872
        %v874 = vmul.f32 %v856, %v872
        %v875 = vmul.f32 %v857, %v872
        %v876 = vmul.f32 %v858, %v872
        %v877 = vmul.f32 %v859, %v872
        %v878 = vmul.f32 %v860, %v872
        %v879 = vmul.f32 %v861, %v872
        %v880 = vmul.f32 %v862, %v872
        %v881 = vmul.f32 %v863, %v872
        %v882 = vmul.f32 %v864, %v872
        %v883 = vmul.f32 %v865, %v872
        %v884 = vmul.f32 %v866, %v872
        %v885 = vmul.f32 %v867, %v872
        %v886 = vmul.f32 %v868, %v872
        %v887 = vmul.f32 %v869, %v872
        %v888 = vmul.f32 %v870, %v872
        %vm889 = vcmask 261120
        %v890 = vsel %vm889, %v873, 0.0
        %891 = vadd.xlane.f32.xlu0 %v890
        %v892 = vpop.xlane.xlu0 %891
        %v893 = vsel %vm889, %v874, 0.0
        %894 = vadd.xlane.f32.xlu0 %v893
        %v895 = vpop.xlane.xlu0 %894
        %v896 = vsel %vm889, %v875, 0.0
        %897 = vadd.xlane.f32.xlu0 %v896
        %v898 = vpop.xlane.xlu0 %897
        %v899 = vsel %vm889, %v876, 0.0
        %900 = vadd.xlane.f32.xlu0 %v899
        %v901 = vpop.xlane.xlu0 %900
        %v902 = vsel %vm889, %v877, 0.0
        %903 = vadd.xlane.f32.xlu0 %v902
        %v904 = vpop.xlane.xlu0 %903
        %v905 = vsel %vm889, %v878, 0.0
        %906 = vadd.xlane.f32.xlu0 %v905
        %v907 = vpop.xlane.xlu0 %906
        %v908 = vsel %vm889, %v879, 0.0
        %909 = vadd.xlane.f32.xlu0 %v908
        %v910 = vpop.xlane.xlu0 %909
        %v911 = vsel %vm889, %v880, 0.0
        %912 = vadd.xlane.f32.xlu0 %v911
        %v913 = vpop.xlane.xlu0 %912
        %v914 = vsel %vm889, %v881, 0.0
        %915 = vadd.xlane.f32.xlu0 %v914
        %v916 = vpop.xlane.xlu0 %915
        %v917 = vsel %vm889, %v882, 0.0
        %918 = vadd.xlane.f32.xlu0 %v917
        %v919 = vpop.xlane.xlu0 %918
        %v920 = vsel %vm889, %v883, 0.0
        %921 = vadd.xlane.f32.xlu0 %v920
        %v922 = vpop.xlane.xlu0 %921
        %v923 = vsel %vm889, %v884, 0.0
        %924 = vadd.xlane.f32.xlu0 %v923
        %v925 = vpop.xlane.xlu0 %924
        %v926 = vsel %vm889, %v885, 0.0
        %927 = vadd.xlane.f32.xlu0 %v926
        %v928 = vpop.xlane.xlu0 %927
        %v929 = vsel %vm889, %v886, 0.0
        %930 = vadd.xlane.f32.xlu0 %v929
        %v931 = vpop.xlane.xlu0 %930
        %v932 = vsel %vm889, %v887, 0.0
        %933 = vadd.xlane.f32.xlu0 %v932
        %v934 = vpop.xlane.xlu0 %933
        %v935 = vsel %vm889, %v888, 0.0
        %936 = vadd.xlane.f32.xlu0 %v935
        %v937 = vpop.xlane.xlu0 %936
        %v938 = vrcp.pop 32.0
        %v939 = vmul.f32 32.0, %v938
        %v940 = vsub.f32 1.0, %v939
        %v941 = vmul.f32 %v938, %v940
        %v942 = vadd.f32 %v938, %v941
        %vm943 = vweird.f32 %v938
        %v944 = vsel %vm943, %v938, %v942
        %v945 = vmul.f32 %v892, %v944
        %v946 = vmul.f32 %v895, %v944
        %v947 = vmul.f32 %v898, %v944
        %v948 = vmul.f32 %v901, %v944
        %v949 = vmul.f32 %v904, %v944
        %v950 = vmul.f32 %v907, %v944
        %v951 = vmul.f32 %v910, %v944
        %v952 = vmul.f32 %v913, %v944
        %v953 = vmul.f32 %v916, %v944
        %v954 = vmul.f32 %v919, %v944
        %v955 = vmul.f32 %v922, %v944
        %v956 = vmul.f32 %v925, %v944
        %v957 = vmul.f32 %v928, %v944
        %v958 = vmul.f32 %v931, %v944
        %v959 = vmul.f32 %v934, %v944
        %v960 = vmul.f32 %v937, %v944
        %v961 = vsub.f32 %v873, %v945
        %v962 = vsub.f32 %v874, %v946
        %v963 = vsub.f32 %v875, %v947
        %v964 = vsub.f32 %v876, %v948
        %v965 = vsub.f32 %v877, %v949
        %v966 = vsub.f32 %v878, %v950
        %v967 = vsub.f32 %v879, %v951
        %v968 = vsub.f32 %v880, %v952
        %v969 = vsub.f32 %v881, %v953
        %v970 = vsub.f32 %v882, %v954
        %v971 = vsub.f32 %v883, %v955
        %v972 = vsub.f32 %v884, %v956
        %v973 = vsub.f32 %v885, %v957
        %v974 = vsub.f32 %v886, %v958
        %v975 = vsub.f32 %v887, %v959
        %v976 = vsub.f32 %v888, %v960
        %v977 = vmul.f32 %v961, %v961
        %v978 = vmul.f32 %v962, %v962
        %v979 = vmul.f32 %v963, %v963
        %v980 = vmul.f32 %v964, %v964
        %v981 = vmul.f32 %v965, %v965
        %v982 = vmul.f32 %v966, %v966
        %v983 = vmul.f32 %v967, %v967
        %v984 = vmul.f32 %v968, %v968
        %v985 = vmul.f32 %v969, %v969
        %v986 = vmul.f32 %v970, %v970
        %v987 = vmul.f32 %v971, %v971
        %v988 = vmul.f32 %v972, %v972
        %v989 = vmul.f32 %v973, %v973
        %v990 = vmul.f32 %v974, %v974
        %v991 = vmul.f32 %v975, %v975
        %v992 = vmul.f32 %v976, %v976
        %v993 = vsel %vm889, %v977, 0.0
        %994 = vadd.xlane.f32.xlu0 %v993
        %v995 = vpop.xlane.xlu0 %994
        %v996 = vsel %vm889, %v978, 0.0
        %997 = vadd.xlane.f32.xlu0 %v996
        %v998 = vpop.xlane.xlu0 %997
        %v999 = vsel %vm889, %v979, 0.0
        %1000 = vadd.xlane.f32.xlu0 %v999
        %v1001 = vpop.xlane.xlu0 %1000
        %v1002 = vsel %vm889, %v980, 0.0
        %1003 = vadd.xlane.f32.xlu0 %v1002
        %v1004 = vpop.xlane.xlu0 %1003
        %v1005 = vsel %vm889, %v981, 0.0
        %1006 = vadd.xlane.f32.xlu0 %v1005
        %v1007 = vpop.xlane.xlu0 %1006
        %v1008 = vsel %vm889, %v982, 0.0
        %1009 = vadd.xlane.f32.xlu0 %v1008
        %v1010 = vpop.xlane.xlu0 %1009
        %v1011 = vsel %vm889, %v983, 0.0
        %1012 = vadd.xlane.f32.xlu0 %v1011
        %v1013 = vpop.xlane.xlu0 %1012
        %v1014 = vsel %vm889, %v984, 0.0
        %1015 = vadd.xlane.f32.xlu0 %v1014
        %v1016 = vpop.xlane.xlu0 %1015
        %v1017 = vsel %vm889, %v985, 0.0
        %1018 = vadd.xlane.f32.xlu0 %v1017
        %v1019 = vpop.xlane.xlu0 %1018
        %v1020 = vsel %vm889, %v986, 0.0
        %1021 = vadd.xlane.f32.xlu0 %v1020
        %v1022 = vpop.xlane.xlu0 %1021
        %v1023 = vsel %vm889, %v987, 0.0
        %1024 = vadd.xlane.f32.xlu0 %v1023
        %v1025 = vpop.xlane.xlu0 %1024
        %v1026 = vsel %vm889, %v988, 0.0
        %1027 = vadd.xlane.f32.xlu0 %v1026
        %v1028 = vpop.xlane.xlu0 %1027
        %v1029 = vsel %vm889, %v989, 0.0
        %1030 = vadd.xlane.f32.xlu0 %v1029
        %v1031 = vpop.xlane.xlu0 %1030
        %v1032 = vsel %vm889, %v990, 0.0
        %1033 = vadd.xlane.f32.xlu0 %v1032
        %v1034 = vpop.xlane.xlu0 %1033
        %v1035 = vsel %vm889, %v991, 0.0
        %1036 = vadd.xlane.f32.xlu0 %v1035
        %v1037 = vpop.xlane.xlu0 %1036
        %v1038 = vsel %vm889, %v992, 0.0
        %1039 = vadd.xlane.f32.xlu0 %v1038
        %v1040 = vpop.xlane.xlu0 %1039
        %v1041 = vmul.f32 %v995, %v944
        %v1042 = vmul.f32 %v998, %v944
        %v1043 = vmul.f32 %v1001, %v944
        %v1044 = vmul.f32 %v1004, %v944
        %v1045 = vmul.f32 %v1007, %v944
        %v1046 = vmul.f32 %v1010, %v944
        %v1047 = vmul.f32 %v1013, %v944
        %v1048 = vmul.f32 %v1016, %v944
        %v1049 = vmul.f32 %v1019, %v944
        %v1050 = vmul.f32 %v1022, %v944
        %v1051 = vmul.f32 %v1025, %v944
        %v1052 = vmul.f32 %v1028, %v944
        %v1053 = vmul.f32 %v1031, %v944
        %v1054 = vmul.f32 %v1034, %v944
        %v1055 = vmul.f32 %v1037, %v944
        %v1056 = vmul.f32 %v1040, %v944
        %v1057 = vadd.f32 %v1041, 1e-05
        %v1058 = vadd.f32 %v1042, 1e-05
        %v1059 = vadd.f32 %v1043, 1e-05
        %v1060 = vadd.f32 %v1044, 1e-05
        %v1061 = vadd.f32 %v1045, 1e-05
        %v1062 = vadd.f32 %v1046, 1e-05
        %v1063 = vadd.f32 %v1047, 1e-05
        %v1064 = vadd.f32 %v1048, 1e-05
        %v1065 = vadd.f32 %v1049, 1e-05
        %v1066 = vadd.f32 %v1050, 1e-05
        %v1067 = vadd.f32 %v1051, 1e-05
        %v1068 = vadd.f32 %v1052, 1e-05
        %v1069 = vadd.f32 %v1053, 1e-05
        %v1070 = vadd.f32 %v1054, 1e-05
        %v1071 = vadd.f32 %v1055, 1e-05
        %v1072 = vadd.f32 %v1056, 1e-05
        %v1073 = vrsqrt.pop %v1057
        %v1074 = vmul.f32 %v1073, %v1057
        %v1075 = vmul.f32 %v1074, %v1073
        %v1076 = vmul.f32 0.5, %v1075
        %v1077 = vsub.f32 1.5, %v1076
        %v1078 = vmul.f32 %v1073, %v1077
        %vm1079 = vweird.f32 %v1057
        %vm1080 = vweird.f32 %v1073
        %vm1081 = vmor %vm1079, %vm1080
        %v1082 = vsel %vm1081, %v1073, %v1078
        %v1083 = vrsqrt.pop %v1058
        %v1084 = vmul.f32 %v1083, %v1058
        %v1085 = vmul.f32 %v1084, %v1083
        %v1086 = vmul.f32 0.5, %v1085
        %v1087 = vsub.f32 1.5, %v1086
        %v1088 = vmul.f32 %v1083, %v1087
        %vm1089 = vweird.f32 %v1058
        %vm1090 = vweird.f32 %v1083
        %vm1091 = vmor %vm1089, %vm1090
        %v1092 = vsel %vm1091, %v1083, %v1088
        %v1093 = vrsqrt.pop %v1059
        %v1094 = vmul.f32 %v1093, %v1059
        %v1095 = vmul.f32 %v1094, %v1093
        %v1096 = vmul.f32 0.5, %v1095
        %v1097 = vsub.f32 1.5, %v1096
        %v1098 = vmul.f32 %v1093, %v1097
        %vm1099 = vweird.f32 %v1059
        %vm1100 = vweird.f32 %v1093
        %vm1101 = vmor %vm1099, %vm1100
        %v1102 = vsel %vm1101, %v1093, %v1098
        %v1103 = vrsqrt.pop %v1060
        %v1104 = vmul.f32 %v1103, %v1060
        %v1105 = vmul.f32 %v1104, %v1103
        %v1106 = vmul.f32 0.5, %v1105
        %v1107 = vsub.f32 1.5, %v1106
        %v1108 = vmul.f32 %v1103, %v1107
        %vm1109 = vweird.f32 %v1060
        %vm1110 = vweird.f32 %v1103
        %vm1111 = vmor %vm1109, %vm1110
        %v1112 = vsel %vm1111, %v1103, %v1108
        %v1113 = vrsqrt.pop %v1061
        %v1114 = vmul.f32 %v1113, %v1061
        %v1115 = vmul.f32 %v1114, %v1113
        %v1116 = vmul.f32 0.5, %v1115
        %v1117 = vsub.f32 1.5, %v1116
        %v1118 = vmul.f32 %v1113, %v1117
        %vm1119 = vweird.f32 %v1061
        %vm1120 = vweird.f32 %v1113
        %vm1121 = vmor %vm1119, %vm1120
        %v1122 = vsel %vm1121, %v1113, %v1118
        %v1123 = vrsqrt.pop %v1062
        %v1124 = vmul.f32 %v1123, %v1062
        %v1125 = vmul.f32 %v1124, %v1123
        %v1126 = vmul.f32 0.5, %v1125
        %v1127 = vsub.f32 1.5, %v1126
        %v1128 = vmul.f32 %v1123, %v1127
        %vm1129 = vweird.f32 %v1062
        %vm1130 = vweird.f32 %v1123
        %vm1131 = vmor %vm1129, %vm1130
        %v1132 = vsel %vm1131, %v1123, %v1128
        %v1133 = vrsqrt.pop %v1063
        %v1134 = vmul.f32 %v1133, %v1063
        %v1135 = vmul.f32 %v1134, %v1133
        %v1136 = vmul.f32 0.5, %v1135
        %v1137 = vsub.f32 1.5, %v1136
        %v1138 = vmul.f32 %v1133, %v1137
        %vm1139 = vweird.f32 %v1063
        %vm1140 = vweird.f32 %v1133
        %vm1141 = vmor %vm1139, %vm1140
        %v1142 = vsel %vm1141, %v1133, %v1138
        %v1143 = vrsqrt.pop %v1064
        %v1144 = vmul.f32 %v1143, %v1064
        %v1145 = vmul.f32 %v1144, %v1143
        %v1146 = vmul.f32 0.5, %v1145
        %v1147 = vsub.f32 1.5, %v1146
        %v1148 = vmul.f32 %v1143, %v1147
        %vm1149 = vweird.f32 %v1064
        %vm1150 = vweird.f32 %v1143
        %vm1151 = vmor %vm1149, %vm1150
        %v1152 = vsel %vm1151, %v1143, %v1148
        %v1153 = vrsqrt.pop %v1065
        %v1154 = vmul.f32 %v1153, %v1065
        %v1155 = vmul.f32 %v1154, %v1153
        %v1156 = vmul.f32 0.5, %v1155
        %v1157 = vsub.f32 1.5, %v1156
        %v1158 = vmul.f32 %v1153, %v1157
        %vm1159 = vweird.f32 %v1065
        %vm1160 = vweird.f32 %v1153
        %vm1161 = vmor %vm1159, %vm1160
        %v1162 = vsel %vm1161, %v1153, %v1158
        %v1163 = vrsqrt.pop %v1066
        %v1164 = vmul.f32 %v1163, %v1066
        %v1165 = vmul.f32 %v1164, %v1163
        %v1166 = vmul.f32 0.5, %v1165
        %v1167 = vsub.f32 1.5, %v1166
        %v1168 = vmul.f32 %v1163, %v1167
        %vm1169 = vweird.f32 %v1066
        %vm1170 = vweird.f32 %v1163
        %vm1171 = vmor %vm1169, %vm1170
        %v1172 = vsel %vm1171, %v1163, %v1168
        %v1173 = vrsqrt.pop %v1067
        %v1174 = vmul.f32 %v1173, %v1067
        %v1175 = vmul.f32 %v1174, %v1173
        %v1176 = vmul.f32 0.5, %v1175
        %v1177 = vsub.f32 1.5, %v1176
        %v1178 = vmul.f32 %v1173, %v1177
        %vm1179 = vweird.f32 %v1067
        %vm1180 = vweird.f32 %v1173
        %vm1181 = vmor %vm1179, %vm1180
        %v1182 = vsel %vm1181, %v1173, %v1178
        %v1183 = vrsqrt.pop %v1068
        %v1184 = vmul.f32 %v1183, %v1068
        %v1185 = vmul.f32 %v1184, %v1183
        %v1186 = vmul.f32 0.5, %v1185
        %v1187 = vsub.f32 1.5, %v1186
        %v1188 = vmul.f32 %v1183, %v1187
        %vm1189 = vweird.f32 %v1068
        %vm1190 = vweird.f32 %v1183
        %vm1191 = vmor %vm1189, %vm1190
        %v1192 = vsel %vm1191, %v1183, %v1188
        %v1193 = vrsqrt.pop %v1069
        %v1194 = vmul.f32 %v1193, %v1069
        %v1195 = vmul.f32 %v1194, %v1193
        %v1196 = vmul.f32 0.5, %v1195
        %v1197 = vsub.f32 1.5, %v1196
        %v1198 = vmul.f32 %v1193, %v1197
        %vm1199 = vweird.f32 %v1069
        %vm1200 = vweird.f32 %v1193
        %vm1201 = vmor %vm1199, %vm1200
        %v1202 = vsel %vm1201, %v1193, %v1198
        %v1203 = vrsqrt.pop %v1070
        %v1204 = vmul.f32 %v1203, %v1070
        %v1205 = vmul.f32 %v1204, %v1203
        %v1206 = vmul.f32 0.5, %v1205
        %v1207 = vsub.f32 1.5, %v1206
        %v1208 = vmul.f32 %v1203, %v1207
        %vm1209 = vweird.f32 %v1070
        %vm1210 = vweird.f32 %v1203
        %vm1211 = vmor %vm1209, %vm1210
        %v1212 = vsel %vm1211, %v1203, %v1208
        %v1213 = vrsqrt.pop %v1071
        %v1214 = vmul.f32 %v1213, %v1071
        %v1215 = vmul.f32 %v1214, %v1213
        %v1216 = vmul.f32 0.5, %v1215
        %v1217 = vsub.f32 1.5, %v1216
        %v1218 = vmul.f32 %v1213, %v1217
        %vm1219 = vweird.f32 %v1071
        %vm1220 = vweird.f32 %v1213
        %vm1221 = vmor %vm1219, %vm1220
        %v1222 = vsel %vm1221, %v1213, %v1218
        %v1223 = vrsqrt.pop %v1072
        %v1224 = vmul.f32 %v1223, %v1072
        %v1225 = vmul.f32 %v1224, %v1223
        %v1226 = vmul.f32 0.5, %v1225
        %v1227 = vsub.f32 1.5, %v1226
        %v1228 = vmul.f32 %v1223, %v1227
        %vm1229 = vweird.f32 %v1072
        %vm1230 = vweird.f32 %v1223
        %vm1231 = vmor %vm1229, %vm1230
        %v1232 = vsel %vm1231, %v1223, %v1228
        %v1233 = vmul.f32 %v961, %v1082
        %v1234 = vmul.f32 %v962, %v1092
        %v1235 = vmul.f32 %v963, %v1102
        %v1236 = vmul.f32 %v964, %v1112
        %v1237 = vmul.f32 %v965, %v1122
        %v1238 = vmul.f32 %v966, %v1132
        %v1239 = vmul.f32 %v967, %v1142
        %v1240 = vmul.f32 %v968, %v1152
        %v1241 = vmul.f32 %v969, %v1162
        %v1242 = vmul.f32 %v970, %v1172
        %v1243 = vmul.f32 %v971, %v1182
        %v1244 = vmul.f32 %v972, %v1192
        %v1245 = vmul.f32 %v973, %v1202
        %v1246 = vmul.f32 %v974, %v1212
        %v1247 = vmul.f32 %v975, %v1222
        %v1248 = vmul.f32 %v976, %v1232
        %v1250 = vperm.slane %v844, 0
        %v1252 = vmul.f32 %v1233, %v1250
        %v1253 = vmul.f32 %v1234, %v1250
        %v1254 = vmul.f32 %v1235, %v1250
        %v1255 = vmul.f32 %v1236, %v1250
        %v1256 = vmul.f32 %v1237, %v1250
        %v1257 = vmul.f32 %v1238, %v1250
        %v1258 = vmul.f32 %v1239, %v1250
        %v1259 = vmul.f32 %v1240, %v1250
        %v1260 = vmul.f32 %v1241, %v1250
        %v1261 = vmul.f32 %v1242, %v1250
        %v1262 = vmul.f32 %v1243, %v1250
        %v1263 = vmul.f32 %v1244, %v1250
        %v1264 = vmul.f32 %v1245, %v1250
        %v1265 = vmul.f32 %v1246, %v1250
        %v1266 = vmul.f32 %v1247, %v1250
        %v1267 = vmul.f32 %v1248, %v1250
        %v1269 = vperm.slane %v845, 0
        %v1271 = vadd.f32 %v1252, %v1269
        %v1272 = vadd.f32 %v1253, %v1269
        %v1273 = vadd.f32 %v1254, %v1269
        %v1274 = vadd.f32 %v1255, %v1269
        %v1275 = vadd.f32 %v1256, %v1269
        %v1276 = vadd.f32 %v1257, %v1269
        %v1277 = vadd.f32 %v1258, %v1269
        %v1278 = vadd.f32 %v1259, %v1269
        %v1279 = vadd.f32 %v1260, %v1269
        %v1280 = vadd.f32 %v1261, %v1269
        %v1281 = vadd.f32 %v1262, %v1269
        %v1282 = vadd.f32 %v1263, %v1269
        %v1283 = vadd.f32 %v1264, %v1269
        %v1284 = vadd.f32 %v1265, %v1269
        %v1285 = vadd.f32 %v1266, %v1269
        %v1286 = vadd.f32 %v1267, %v1269
        %v1287 = vld [vmem:[%s6] sm:$0xff]
        %v1288 = vld [vmem:[%s6 + $0x8] sm:$0xff]
        %v1289 = vld [vmem:[%s6 + $0x10] sm:$0xff]
        %v1290 = vld [vmem:[%s6 + $0x18] sm:$0xff]
        %v1292 = vperm.slane %v848, 0
        %v1295 = vsel %vm889, %v1271, 0
        %v1298 = vsel %vm889, %v1272, 0
        %v1301 = vsel %vm889, %v1273, 0
        %v1304 = vsel %vm889, %v1274, 0
        %v1307 = vsel %vm889, %v1275, 0
        %v1310 = vsel %vm889, %v1276, 0
        %v1313 = vsel %vm889, %v1277, 0
        %v1316 = vsel %vm889, %v1278, 0
        %v1319 = vsel %vm889, %v1279, 0
        %v1322 = vsel %vm889, %v1280, 0
        %v1325 = vsel %vm889, %v1281, 0
        %v1328 = vsel %vm889, %v1282, 0
        %v1331 = vsel %vm889, %v1283, 0
        %v1334 = vsel %vm889, %v1284, 0
        %v1337 = vsel %vm889, %v1285, 0
        %v1340 = vsel %vm889, %v1286, 0
        %1342 = vmatpush.msra.mxu0 0.0
        %1343 = vmatpush.msra.mxu0 0.0
        %1344 = vmatpush.msra.mxu0 0.0
        %1345 = vmatpush.msra.mxu0 0.0
        %1346 = vmatpush.msra.mxu0 0.0
        %1347 = vmatpush.msra.mxu0 0.0
        %1348 = vmatpush.msra.mxu0 0.0
        %1349 = vmatpush.msra.mxu0 0.0
        %1350 = vmatpush.msra.mxu0 0.0
        %1351 = vmatpush.msra.mxu0 0.0
        %1352 = vmatpush.msra.mxu0 0.0
        %1353 = vmatpush.msra.mxu0 0.0
        %1354 = vmatpush.msra.mxu0 %v1290
        %1355 = vmatpush.msra.mxu0 %v1289
        %1356 = vmatpush.msra.mxu0 %v1288
        %1357 = vmatpush.msra.mxu0 %v1287
        %1358 = vmatmul.f32.gmra.mxu0 %v1295
        %v1359 = vpop.f32.mrf.mxu0
        %v1360 = vadd.f32 %v1292, %v1359
        %1361 = vmatmul.f32.gmra.mxu0 %v1298
        %v1362 = vpop.f32.mrf.mxu0
        %v1363 = vadd.f32 %v1292, %v1362
        %1364 = vmatmul.f32.gmra.mxu0 %v1301
        %v1365 = vpop.f32.mrf.mxu0
        %v1366 = vadd.f32 %v1292, %v1365
        %1367 = vmatmul.f32.gmra.mxu0 %v1304
        %v1368 = vpop.f32.mrf.mxu0
        %v1369 = vadd.f32 %v1292, %v1368
        %1370 = vmatmul.f32.gmra.mxu0 %v1307
        %v1371 = vpop.f32.mrf.mxu0
        %v1372 = vadd.f32 %v1292, %v1371
        %1373 = vmatmul.f32.gmra.mxu0 %v1310
        %v1374 = vpop.f32.mrf.mxu0
        %v1375 = vadd.f32 %v1292, %v1374
        %1376 = vmatmul.f32.gmra.mxu0 %v1313
        %v1377 = vpop.f32.mrf.mxu0
        %v1378 = vadd.f32 %v1292, %v1377
        %1379 = vmatmul.f32.gmra.mxu0 %v1316
        %v1380 = vpop.f32.mrf.mxu0
        %v1381 = vadd.f32 %v1292, %v1380
        %1382 = vmatmul.f32.gmra.mxu0 %v1319
        %v1383 = vpop.f32.mrf.mxu0
        %v1384 = vadd.f32 %v1292, %v1383
        %1385 = vmatmul.f32.gmra.mxu0 %v1322
        %v1386 = vpop.f32.mrf.mxu0
        %v1387 = vadd.f32 %v1292, %v1386
        %1388 = vmatmul.f32.gmra.mxu0 %v1325
        %v1389 = vpop.f32.mrf.mxu0
        %v1390 = vadd.f32 %v1292, %v1389
        %1391 = vmatmul.f32.gmra.mxu0 %v1328
        %v1392 = vpop.f32.mrf.mxu0
        %v1393 = vadd.f32 %v1292, %v1392
        %1394 = vmatmul.f32.gmra.mxu0 %v1331
        %v1395 = vpop.f32.mrf.mxu0
        %v1396 = vadd.f32 %v1292, %v1395
        %1397 = vmatmul.f32.gmra.mxu0 %v1334
        %v1398 = vpop.f32.mrf.mxu0
        %v1399 = vadd.f32 %v1292, %v1398
        %1400 = vmatmul.f32.gmra.mxu0 %v1337
        %v1401 = vpop.f32.mrf.mxu0
        %v1402 = vadd.f32 %v1292, %v1401
        %1403 = vmatmul.f32.gmra.mxu0 %v1340
        %v1404 = vpop.f32.mrf.mxu0
        %v1405 = vadd.f32 %v1292, %v1404
        %1406 = vdwg.mxu0
        %s1407 = scalar_lea.vmem %s783, 128 [#allocation2]
        %v1408 = vld [vmem:[%s1407] sm:$0xff]
        %v1409 = vld [vmem:[%s1407 + $0x8] sm:$0xff]
        %v1410 = vld [vmem:[%s1407 + $0x10] sm:$0xff]
        %v1411 = vld [vmem:[%s1407 + $0x18] sm:$0xff]
        %v1412 = vld [vmem:[%s1407 + $0x20] sm:$0xff]
        %v1413 = vld [vmem:[%s1407 + $0x28] sm:$0xff]
        %v1414 = vld [vmem:[%s1407 + $0x30] sm:$0xff]
        %v1415 = vld [vmem:[%s1407 + $0x38] sm:$0xff]
        %v1416 = vld [vmem:[%s1407 + $0x40] sm:$0xff]
        %v1417 = vld [vmem:[%s1407 + $0x48] sm:$0xff]
        %v1418 = vld [vmem:[%s1407 + $0x50] sm:$0xff]
        %v1419 = vld [vmem:[%s1407 + $0x58] sm:$0xff]
        %v1420 = vld [vmem:[%s1407 + $0x60] sm:$0xff]
        %v1421 = vld [vmem:[%s1407 + $0x68] sm:$0xff]
        %v1422 = vld [vmem:[%s1407 + $0x70] sm:$0xff]
        %v1423 = vld [vmem:[%s1407 + $0x78] sm:$0xff]
        %v1424 = vld [vmem:[%s1 + $0x1] sm:$0x1]
        %v1425 = vperm.slane %v1424, 0
        %v1426 = vmul.f32 %v1408, %v1425
        %v1427 = vmul.f32 %v1409, %v1425
        %v1428 = vmul.f32 %v1410, %v1425
        %v1429 = vmul.f32 %v1411, %v1425
        %v1430 = vmul.f32 %v1412, %v1425
        %v1431 = vmul.f32 %v1413, %v1425
        %v1432 = vmul.f32 %v1414, %v1425
        %v1433 = vmul.f32 %v1415, %v1425
        %v1434 = vmul.f32 %v1416, %v1425
        %v1435 = vmul.f32 %v1417, %v1425
        %v1436 = vmul.f32 %v1418, %v1425
        %v1437 = vmul.f32 %v1419, %v1425
        %v1438 = vmul.f32 %v1420, %v1425
        %v1439 = vmul.f32 %v1421, %v1425
        %v1440 = vmul.f32 %v1422, %v1425
        %v1441 = vmul.f32 %v1423, %v1425
        %v1442 = vsel %vm889, %v1426, 0.0
        %1443 = vadd.xlane.f32.xlu0 %v1442
        %v1444 = vpop.xlane.xlu0 %1443
        %v1445 = vsel %vm889, %v1427, 0.0
        %1446 = vadd.xlane.f32.xlu0 %v1445
        %v1447 = vpop.xlane.xlu0 %1446
        %v1448 = vsel %vm889, %v1428, 0.0
        %1449 = vadd.xlane.f32.xlu0 %v1448
        %v1450 = vpop.xlane.xlu0 %1449
        %v1451 = vsel %vm889, %v1429, 0.0
        %1452 = vadd.xlane.f32.xlu0 %v1451
        %v1453 = vpop.xlane.xlu0 %1452
        %v1454 = vsel %vm889, %v1430, 0.0
        %1455 = vadd.xlane.f32.xlu0 %v1454
        %v1456 = vpop.xlane.xlu0 %1455
        %v1457 = vsel %vm889, %v1431, 0.0
        %1458 = vadd.xlane.f32.xlu0 %v1457
        %v1459 = vpop.xlane.xlu0 %1458
        %v1460 = vsel %vm889, %v1432, 0.0
        %1461 = vadd.xlane.f32.xlu0 %v1460
        %v1462 = vpop.xlane.xlu0 %1461
        %v1463 = vsel %vm889, %v1433, 0.0
        %1464 = vadd.xlane.f32.xlu0 %v1463
        %v1465 = vpop.xlane.xlu0 %1464
        %v1466 = vsel %vm889, %v1434, 0.0
        %1467 = vadd.xlane.f32.xlu0 %v1466
        %v1468 = vpop.xlane.xlu0 %1467
        %v1469 = vsel %vm889, %v1435, 0.0
        %1470 = vadd.xlane.f32.xlu0 %v1469
        %v1471 = vpop.xlane.xlu0 %1470
        %v1472 = vsel %vm889, %v1436, 0.0
        %1473 = vadd.xlane.f32.xlu0 %v1472
        %v1474 = vpop.xlane.xlu0 %1473
        %v1475 = vsel %vm889, %v1437, 0.0
        %1476 = vadd.xlane.f32.xlu0 %v1475
        %v1477 = vpop.xlane.xlu0 %1476
        %v1478 = vsel %vm889, %v1438, 0.0
        %1479 = vadd.xlane.f32.xlu0 %v1478
        %v1480 = vpop.xlane.xlu0 %1479
        %v1481 = vsel %vm889, %v1439, 0.0
        %1482 = vadd.xlane.f32.xlu0 %v1481
        %v1483 = vpop.xlane.xlu0 %1482
        %v1484 = vsel %vm889, %v1440, 0.0
        %1485 = vadd.xlane.f32.xlu0 %v1484
        %v1486 = vpop.xlane.xlu0 %1485
        %v1487 = vsel %vm889, %v1441, 0.0
        %1488 = vadd.xlane.f32.xlu0 %v1487
        %v1489 = vpop.xlane.xlu0 %1488
        %v1490 = vmul.f32 %v1444, %v944
        %v1491 = vmul.f32 %v1447, %v944
        %v1492 = vmul.f32 %v1450, %v944
        %v1493 = vmul.f32 %v1453, %v944
        %v1494 = vmul.f32 %v1456, %v944
        %v1495 = vmul.f32 %v1459, %v944
        %v1496 = vmul.f32 %v1462, %v944
        %v1497 = vmul.f32 %v1465, %v944
        %v1498 = vmul.f32 %v1468, %v944
        %v1499 = vmul.f32 %v1471, %v944
        %v1500 = vmul.f32 %v1474, %v944
        %v1501 = vmul.f32 %v1477, %v944
        %v1502 = vmul.f32 %v1480, %v944
        %v1503 = vmul.f32 %v1483, %v944
        %v1504 = vmul.f32 %v1486, %v944
        %v1505 = vmul.f32 %v1489, %v944
        %v1506 = vsub.f32 %v1426, %v1490
        %v1507 = vsub.f32 %v1427, %v1491
        %v1508 = vsub.f32 %v1428, %v1492
        %v1509 = vsub.f32 %v1429, %v1493
        %v1510 = vsub.f32 %v1430, %v1494
        %v1511 = vsub.f32 %v1431, %v1495
        %v1512 = vsub.f32 %v1432, %v1496
        %v1513 = vsub.f32 %v1433, %v1497
        %v1514 = vsub.f32 %v1434, %v1498
        %v1515 = vsub.f32 %v1435, %v1499
        %v1516 = vsub.f32 %v1436, %v1500
        %v1517 = vsub.f32 %v1437, %v1501
        %v1518 = vsub.f32 %v1438, %v1502
        %v1519 = vsub.f32 %v1439, %v1503
        %v1520 = vsub.f32 %v1440, %v1504
        %v1521 = vsub.f32 %v1441, %v1505
        %v1522 = vmul.f32 %v1506, %v1506
        %v1523 = vmul.f32 %v1507, %v1507
        %v1524 = vmul.f32 %v1508, %v1508
        %v1525 = vmul.f32 %v1509, %v1509
        %v1526 = vmul.f32 %v1510, %v1510
        %v1527 = vmul.f32 %v1511, %v1511
        %v1528 = vmul.f32 %v1512, %v1512
        %v1529 = vmul.f32 %v1513, %v1513
        %v1530 = vmul.f32 %v1514, %v1514
        %v1531 = vmul.f32 %v1515, %v1515
        %v1532 = vmul.f32 %v1516, %v1516
        %v1533 = vmul.f32 %v1517, %v1517
        %v1534 = vmul.f32 %v1518, %v1518
        %v1535 = vmul.f32 %v1519, %v1519
        %v1536 = vmul.f32 %v1520, %v1520
        %v1537 = vmul.f32 %v1521, %v1521
        %v1538 = vsel %vm889, %v1522, 0.0
        %1539 = vadd.xlane.f32.xlu0 %v1538
        %v1540 = vpop.xlane.xlu0 %1539
        %v1541 = vsel %vm889, %v1523, 0.0
        %1542 = vadd.xlane.f32.xlu0 %v1541
        %v1543 = vpop.xlane.xlu0 %1542
        %v1544 = vsel %vm889, %v1524, 0.0
        %1545 = vadd.xlane.f32.xlu0 %v1544
        %v1546 = vpop.xlane.xlu0 %1545
        %v1547 = vsel %vm889, %v1525, 0.0
        %1548 = vadd.xlane.f32.xlu0 %v1547
        %v1549 = vpop.xlane.xlu0 %1548
        %v1550 = vsel %vm889, %v1526, 0.0
        %1551 = vadd.xlane.f32.xlu0 %v1550
        %v1552 = vpop.xlane.xlu0 %1551
        %v1553 = vsel %vm889, %v1527, 0.0
        %1554 = vadd.xlane.f32.xlu0 %v1553
        %v1555 = vpop.xlane.xlu0 %1554
        %v1556 = vsel %vm889, %v1528, 0.0
        %1557 = vadd.xlane.f32.xlu0 %v1556
        %v1558 = vpop.xlane.xlu0 %1557
        %v1559 = vsel %vm889, %v1529, 0.0
        %1560 = vadd.xlane.f32.xlu0 %v1559
        %v1561 = vpop.xlane.xlu0 %1560
        %v1562 = vsel %vm889, %v1530, 0.0
        %1563 = vadd.xlane.f32.xlu0 %v1562
        %v1564 = vpop.xlane.xlu0 %1563
        %v1565 = vsel %vm889, %v1531, 0.0
        %1566 = vadd.xlane.f32.xlu0 %v1565
        %v1567 = vpop.xlane.xlu0 %1566
        %v1568 = vsel %vm889, %v1532, 0.0
        %1569 = vadd.xlane.f32.xlu0 %v1568
        %v1570 = vpop.xlane.xlu0 %1569
        %v1571 = vsel %vm889, %v1533, 0.0
        %1572 = vadd.xlane.f32.xlu0 %v1571
        %v1573 = vpop.xlane.xlu0 %1572
        %v1574 = vsel %vm889, %v1534, 0.0
        %1575 = vadd.xlane.f32.xlu0 %v1574
        %v1576 = vpop.xlane.xlu0 %1575
        %v1577 = vsel %vm889, %v1535, 0.0
        %1578 = vadd.xlane.f32.xlu0 %v1577
        %v1579 = vpop.xlane.xlu0 %1578
        %v1580 = vsel %vm889, %v1536, 0.0
        %1581 = vadd.xlane.f32.xlu0 %v1580
        %v1582 = vpop.xlane.xlu0 %1581
        %v1583 = vsel %vm889, %v1537, 0.0
        %1584 = vadd.xlane.f32.xlu0 %v1583
        %v1585 = vpop.xlane.xlu0 %1584
        %v1586 = vmul.f32 %v1540, %v944
        %v1587 = vmul.f32 %v1543, %v944
        %v1588 = vmul.f32 %v1546, %v944
        %v1589 = vmul.f32 %v1549, %v944
        %v1590 = vmul.f32 %v1552, %v944
        %v1591 = vmul.f32 %v1555, %v944
        %v1592 = vmul.f32 %v1558, %v944
        %v1593 = vmul.f32 %v1561, %v944
        %v1594 = vmul.f32 %v1564, %v944
        %v1595 = vmul.f32 %v1567, %v944
        %v1596 = vmul.f32 %v1570, %v944
        %v1597 = vmul.f32 %v1573, %v944
        %v1598 = vmul.f32 %v1576, %v944
        %v1599 = vmul.f32 %v1579, %v944
        %v1600 = vmul.f32 %v1582, %v944
        %v1601 = vmul.f32 %v1585, %v944
        %v1602 = vadd.f32 %v1586, 1e-05
        %v1603 = vadd.f32 %v1587, 1e-05
        %v1604 = vadd.f32 %v1588, 1e-05
        %v1605 = vadd.f32 %v1589, 1e-05
        %v1606 = vadd.f32 %v1590, 1e-05
        %v1607 = vadd.f32 %v1591, 1e-05
        %v1608 = vadd.f32 %v1592, 1e-05
        %v1609 = vadd.f32 %v1593, 1e-05
        %v1610 = vadd.f32 %v1594, 1e-05
        %v1611 = vadd.f32 %v1595, 1e-05
        %v1612 = vadd.f32 %v1596, 1e-05
        %v1613 = vadd.f32 %v1597, 1e-05
        %v1614 = vadd.f32 %v1598, 1e-05
        %v1615 = vadd.f32 %v1599, 1e-05
        %v1616 = vadd.f32 %v1600, 1e-05
        %v1617 = vadd.f32 %v1601, 1e-05
        %v1618 = vrsqrt.pop %v1602
        %v1619 = vmul.f32 %v1618, %v1602
        %v1620 = vmul.f32 %v1619, %v1618
        %v1621 = vmul.f32 0.5, %v1620
        %v1622 = vsub.f32 1.5, %v1621
        %v1623 = vmul.f32 %v1618, %v1622
        %vm1624 = vweird.f32 %v1602
        %vm1625 = vweird.f32 %v1618
        %vm1626 = vmor %vm1624, %vm1625
        %v1627 = vsel %vm1626, %v1618, %v1623
        %v1628 = vrsqrt.pop %v1603
        %v1629 = vmul.f32 %v1628, %v1603
        %v1630 = vmul.f32 %v1629, %v1628
        %v1631 = vmul.f32 0.5, %v1630
        %v1632 = vsub.f32 1.5, %v1631
        %v1633 = vmul.f32 %v1628, %v1632
        %vm1634 = vweird.f32 %v1603
        %vm1635 = vweird.f32 %v1628
        %vm1636 = vmor %vm1634, %vm1635
        %v1637 = vsel %vm1636, %v1628, %v1633
        %v1638 = vrsqrt.pop %v1604
        %v1639 = vmul.f32 %v1638, %v1604
        %v1640 = vmul.f32 %v1639, %v1638
        %v1641 = vmul.f32 0.5, %v1640
        %v1642 = vsub.f32 1.5, %v1641
        %v1643 = vmul.f32 %v1638, %v1642
        %vm1644 = vweird.f32 %v1604
        %vm1645 = vweird.f32 %v1638
        %vm1646 = vmor %vm1644, %vm1645
        %v1647 = vsel %vm1646, %v1638, %v1643
        %v1648 = vrsqrt.pop %v1605
        %v1649 = vmul.f32 %v1648, %v1605
        %v1650 = vmul.f32 %v1649, %v1648
        %v1651 = vmul.f32 0.5, %v1650
        %v1652 = vsub.f32 1.5, %v1651
        %v1653 = vmul.f32 %v1648, %v1652
        %vm1654 = vweird.f32 %v1605
        %vm1655 = vweird.f32 %v1648
        %vm1656 = vmor %vm1654, %vm1655
        %v1657 = vsel %vm1656, %v1648, %v1653
        %v1658 = vrsqrt.pop %v1606
        %v1659 = vmul.f32 %v1658, %v1606
        %v1660 = vmul.f32 %v1659, %v1658
        %v1661 = vmul.f32 0.5, %v1660
        %v1662 = vsub.f32 1.5, %v1661
        %v1663 = vmul.f32 %v1658, %v1662
        %vm1664 = vweird.f32 %v1606
        %vm1665 = vweird.f32 %v1658
        %vm1666 = vmor %vm1664, %vm1665
        %v1667 = vsel %vm1666, %v1658, %v1663
        %v1668 = vrsqrt.pop %v1607
        %v1669 = vmul.f32 %v1668, %v1607
        %v1670 = vmul.f32 %v1669, %v1668
        %v1671 = vmul.f32 0.5, %v1670
        %v1672 = vsub.f32 1.5, %v1671
        %v1673 = vmul.f32 %v1668, %v1672
        %vm1674 = vweird.f32 %v1607
        %vm1675 = vweird.f32 %v1668
        %vm1676 = vmor %vm1674, %vm1675
        %v1677 = vsel %vm1676, %v1668, %v1673
        %v1678 = vrsqrt.pop %v1608
        %v1679 = vmul.f32 %v1678, %v1608
        %v1680 = vmul.f32 %v1679, %v1678
        %v1681 = vmul.f32 0.5, %v1680
        %v1682 = vsub.f32 1.5, %v1681
        %v1683 = vmul.f32 %v1678, %v1682
        %vm1684 = vweird.f32 %v1608
        %vm1685 = vweird.f32 %v1678
        %vm1686 = vmor %vm1684, %vm1685
        %v1687 = vsel %vm1686, %v1678, %v1683
        %v1688 = vrsqrt.pop %v1609
        %v1689 = vmul.f32 %v1688, %v1609
        %v1690 = vmul.f32 %v1689, %v1688
        %v1691 = vmul.f32 0.5, %v1690
        %v1692 = vsub.f32 1.5, %v1691
        %v1693 = vmul.f32 %v1688, %v1692
        %vm1694 = vweird.f32 %v1609
        %vm1695 = vweird.f32 %v1688
        %vm1696 = vmor %vm1694, %vm1695
        %v1697 = vsel %vm1696, %v1688, %v1693
        %v1698 = vrsqrt.pop %v1610
        %v1699 = vmul.f32 %v1698, %v1610
        %v1700 = vmul.f32 %v1699, %v1698
        %v1701 = vmul.f32 0.5, %v1700
        %v1702 = vsub.f32 1.5, %v1701
        %v1703 = vmul.f32 %v1698, %v1702
        %vm1704 = vweird.f32 %v1610
        %vm1705 = vweird.f32 %v1698
        %vm1706 = vmor %vm1704, %vm1705
        %v1707 = vsel %vm1706, %v1698, %v1703
        %v1708 = vrsqrt.pop %v1611
        %v1709 = vmul.f32 %v1708, %v1611
        %v1710 = vmul.f32 %v1709, %v1708
        %v1711 = vmul.f32 0.5, %v1710
        %v1712 = vsub.f32 1.5, %v1711
        %v1713 = vmul.f32 %v1708, %v1712
        %vm1714 = vweird.f32 %v1611
        %vm1715 = vweird.f32 %v1708
        %vm1716 = vmor %vm1714, %vm1715
        %v1717 = vsel %vm1716, %v1708, %v1713
        %v1718 = vrsqrt.pop %v1612
        %v1719 = vmul.f32 %v1718, %v1612
        %v1720 = vmul.f32 %v1719, %v1718
        %v1721 = vmul.f32 0.5, %v1720
        %v1722 = vsub.f32 1.5, %v1721
        %v1723 = vmul.f32 %v1718, %v1722
        %vm1724 = vweird.f32 %v1612
        %vm1725 = vweird.f32 %v1718
        %vm1726 = vmor %vm1724, %vm1725
        %v1727 = vsel %vm1726, %v1718, %v1723
        %v1728 = vrsqrt.pop %v1613
        %v1729 = vmul.f32 %v1728, %v1613
        %v1730 = vmul.f32 %v1729, %v1728
        %v1731 = vmul.f32 0.5, %v1730
        %v1732 = vsub.f32 1.5, %v1731
        %v1733 = vmul.f32 %v1728, %v1732
        %vm1734 = vweird.f32 %v1613
        %vm1735 = vweird.f32 %v1728
        %vm1736 = vmor %vm1734, %vm1735
        %v1737 = vsel %vm1736, %v1728, %v1733
        %v1738 = vrsqrt.pop %v1614
        %v1739 = vmul.f32 %v1738, %v1614
        %v1740 = vmul.f32 %v1739, %v1738
        %v1741 = vmul.f32 0.5, %v1740
        %v1742 = vsub.f32 1.5, %v1741
        %v1743 = vmul.f32 %v1738, %v1742
        %vm1744 = vweird.f32 %v1614
        %vm1745 = vweird.f32 %v1738
        %vm1746 = vmor %vm1744, %vm1745
        %v1747 = vsel %vm1746, %v1738, %v1743
        %v1748 = vrsqrt.pop %v1615
        %v1749 = vmul.f32 %v1748, %v1615
        %v1750 = vmul.f32 %v1749, %v1748
        %v1751 = vmul.f32 0.5, %v1750
        %v1752 = vsub.f32 1.5, %v1751
        %v1753 = vmul.f32 %v1748, %v1752
        %vm1754 = vweird.f32 %v1615
        %vm1755 = vweird.f32 %v1748
        %vm1756 = vmor %vm1754, %vm1755
        %v1757 = vsel %vm1756, %v1748, %v1753
        %v1758 = vrsqrt.pop %v1616
        %v1759 = vmul.f32 %v1758, %v1616
        %v1760 = vmul.f32 %v1759, %v1758
        %v1761 = vmul.f32 0.5, %v1760
        %v1762 = vsub.f32 1.5, %v1761
        %v1763 = vmul.f32 %v1758, %v1762
        %vm1764 = vweird.f32 %v1616
        %vm1765 = vweird.f32 %v1758
        %vm1766 = vmor %vm1764, %vm1765
        %v1767 = vsel %vm1766, %v1758, %v1763
        %v1768 = vrsqrt.pop %v1617
        %v1769 = vmul.f32 %v1768, %v1617
        %v1770 = vmul.f32 %v1769, %v1768
        %v1771 = vmul.f32 0.5, %v1770
        %v1772 = vsub.f32 1.5, %v1771
        %v1773 = vmul.f32 %v1768, %v1772
        %vm1774 = vweird.f32 %v1617
        %vm1775 = vweird.f32 %v1768
        %vm1776 = vmor %vm1774, %vm1775
        %v1777 = vsel %vm1776, %v1768, %v1773
        %v1778 = vmul.f32 %v1506, %v1627
        %v1779 = vmul.f32 %v1507, %v1637
        %v1780 = vmul.f32 %v1508, %v1647
        %v1781 = vmul.f32 %v1509, %v1657
        %v1782 = vmul.f32 %v1510, %v1667
        %v1783 = vmul.f32 %v1511, %v1677
        %v1784 = vmul.f32 %v1512, %v1687
        %v1785 = vmul.f32 %v1513, %v1697
        %v1786 = vmul.f32 %v1514, %v1707
        %v1787 = vmul.f32 %v1515, %v1717
        %v1788 = vmul.f32 %v1516, %v1727
        %v1789 = vmul.f32 %v1517, %v1737
        %v1790 = vmul.f32 %v1518, %v1747
        %v1791 = vmul.f32 %v1519, %v1757
        %v1792 = vmul.f32 %v1520, %v1767
        %v1793 = vmul.f32 %v1521, %v1777
        %v1794 = vmul.f32 %v1778, %v1250
        %v1795 = vmul.f32 %v1779, %v1250
        %v1796 = vmul.f32 %v1780, %v1250
        %v1797 = vmul.f32 %v1781, %v1250
        %v1798 = vmul.f32 %v1782, %v1250
        %v1799 = vmul.f32 %v1783, %v1250
        %v1800 = vmul.f32 %v1784, %v1250
        %v1801 = vmul.f32 %v1785, %v1250
        %v1802 = vmul.f32 %v1786, %v1250
        %v1803 = vmul.f32 %v1787, %v1250
        %v1804 = vmul.f32 %v1788, %v1250
        %v1805 = vmul.f32 %v1789, %v1250
        %v1806 = vmul.f32 %v1790, %v1250
        %v1807 = vmul.f32 %v1791, %v1250
        %v1808 = vmul.f32 %v1792, %v1250
        %v1809 = vmul.f32 %v1793, %v1250
        %v1810 = vadd.f32 %v1794, %v1269
        %v1811 = vadd.f32 %v1795, %v1269
        %v1812 = vadd.f32 %v1796, %v1269
        %v1813 = vadd.f32 %v1797, %v1269
        %v1814 = vadd.f32 %v1798, %v1269
        %v1815 = vadd.f32 %v1799, %v1269
        %v1816 = vadd.f32 %v1800, %v1269
        %v1817 = vadd.f32 %v1801, %v1269
        %v1818 = vadd.f32 %v1802, %v1269
        %v1819 = vadd.f32 %v1803, %v1269
        %v1820 = vadd.f32 %v1804, %v1269
        %v1821 = vadd.f32 %v1805, %v1269
        %v1822 = vadd.f32 %v1806, %v1269
        %v1823 = vadd.f32 %v1807, %v1269
        %v1824 = vadd.f32 %v1808, %v1269
        %v1825 = vadd.f32 %v1809, %v1269
        %v1827 = vsel %vm889, %v1810, 0
        %v1830 = vsel %vm889, %v1811, 0
        %v1833 = vsel %vm889, %v1812, 0
        %v1836 = vsel %vm889, %v1813, 0
        %v1839 = vsel %vm889, %v1814, 0
        %v1842 = vsel %vm889, %v1815, 0
        %v1845 = vsel %vm889, %v1816, 0
        %v1848 = vsel %vm889, %v1817, 0
        %v1851 = vsel %vm889, %v1818, 0
        %v1854 = vsel %vm889, %v1819, 0
        %v1857 = vsel %vm889, %v1820, 0
        %v1860 = vsel %vm889, %v1821, 0
        %v1863 = vsel %vm889, %v1822, 0
        %v1866 = vsel %vm889, %v1823, 0
        %v1869 = vsel %vm889, %v1824, 0
        %v1872 = vsel %vm889, %v1825, 0
        %1874 = vmatpush.msra.mxu0 0.0
        %1875 = vmatpush.msra.mxu0 0.0
        %1876 = vmatpush.msra.mxu0 0.0
        %1877 = vmatpush.msra.mxu0 0.0
        %1878 = vmatpush.msra.mxu0 0.0
        %1879 = vmatpush.msra.mxu0 0.0
        %1880 = vmatpush.msra.mxu0 0.0
        %1881 = vmatpush.msra.mxu0 0.0
        %1882 = vmatpush.msra.mxu0 0.0
        %1883 = vmatpush.msra.mxu0 0.0
        %1884 = vmatpush.msra.mxu0 0.0
        %1885 = vmatpush.msra.mxu0 0.0
        %1886 = vmatpush.msra.mxu0 %v1290
        %1887 = vmatpush.msra.mxu0 %v1289
        %1888 = vmatpush.msra.mxu0 %v1288
        %1889 = vmatpush.msra.mxu0 %v1287
        %1890 = vmatmul.f32.gmra.mxu0 %v1827
        %v1891 = vpop.f32.mrf.mxu0
        %v1892 = vadd.f32 %v1292, %v1891
        %1893 = vmatmul.f32.gmra.mxu0 %v1830
        %v1894 = vpop.f32.mrf.mxu0
        %v1895 = vadd.f32 %v1292, %v1894
        %1896 = vmatmul.f32.gmra.mxu0 %v1833
        %v1897 = vpop.f32.mrf.mxu0
        %v1898 = vadd.f32 %v1292, %v1897
        %1899 = vmatmul.f32.gmra.mxu0 %v1836
        %v1900 = vpop.f32.mrf.mxu0
        %v1901 = vadd.f32 %v1292, %v1900
        %1902 = vmatmul.f32.gmra.mxu0 %v1839
        %v1903 = vpop.f32.mrf.mxu0
        %v1904 = vadd.f32 %v1292, %v1903
        %1905 = vmatmul.f32.gmra.mxu0 %v1842
        %v1906 = vpop.f32.mrf.mxu0
        %v1907 = vadd.f32 %v1292, %v1906
        %1908 = vmatmul.f32.gmra.mxu0 %v1845
        %v1909 = vpop.f32.mrf.mxu0
        %v1910 = vadd.f32 %v1292, %v1909
        %1911 = vmatmul.f32.gmra.mxu0 %v1848
        %v1912 = vpop.f32.mrf.mxu0
        %v1913 = vadd.f32 %v1292, %v1912
        %1914 = vmatmul.f32.gmra.mxu0 %v1851
        %v1915 = vpop.f32.mrf.mxu0
        %v1916 = vadd.f32 %v1292, %v1915
        %1917 = vmatmul.f32.gmra.mxu0 %v1854
        %v1918 = vpop.f32.mrf.mxu0
        %v1919 = vadd.f32 %v1292, %v1918
        %1920 = vmatmul.f32.gmra.mxu0 %v1857
        %v1921 = vpop.f32.mrf.mxu0
        %v1922 = vadd.f32 %v1292, %v1921
        %1923 = vmatmul.f32.gmra.mxu0 %v1860
        %v1924 = vpop.f32.mrf.mxu0
        %v1925 = vadd.f32 %v1292, %v1924
        %1926 = vmatmul.f32.gmra.mxu0 %v1863
        %v1927 = vpop.f32.mrf.mxu0
        %v1928 = vadd.f32 %v1292, %v1927
        %1929 = vmatmul.f32.gmra.mxu0 %v1866
        %v1930 = vpop.f32.mrf.mxu0
        %v1931 = vadd.f32 %v1292, %v1930
        %1932 = vmatmul.f32.gmra.mxu0 %v1869
        %v1933 = vpop.f32.mrf.mxu0
        %v1934 = vadd.f32 %v1292, %v1933
        %1935 = vmatmul.f32.gmra.mxu0 %v1872
        %v1936 = vpop.f32.mrf.mxu0
        %v1937 = vadd.f32 %v1292, %v1936
        %1938 = vdwg.mxu0
        %1955 = vrot.lane.b32.xlu0 %v1360, 96
        %v1956 = vpop.permute.xlu0 %1955
        %1957 = vrot.lane.b32.xlu0 %v1363, 96
        %v1958 = vpop.permute.xlu0 %1957
        %1959 = vrot.lane.b32.xlu0 %v1366, 96
        %v1960 = vpop.permute.xlu0 %1959
        %1961 = vrot.lane.b32.xlu0 %v1369, 96
        %v1962 = vpop.permute.xlu0 %1961
        %1963 = vrot.lane.b32.xlu0 %v1372, 96
        %v1964 = vpop.permute.xlu0 %1963
        %1965 = vrot.lane.b32.xlu0 %v1375, 96
        %v1966 = vpop.permute.xlu0 %1965
        %1967 = vrot.lane.b32.xlu0 %v1378, 96
        %v1968 = vpop.permute.xlu0 %1967
        %1969 = vrot.lane.b32.xlu0 %v1381, 96
        %v1970 = vpop.permute.xlu0 %1969
        %1971 = vrot.lane.b32.xlu0 %v1384, 96
        %v1972 = vpop.permute.xlu0 %1971
        %1973 = vrot.lane.b32.xlu0 %v1387, 96
        %v1974 = vpop.permute.xlu0 %1973
        %1975 = vrot.lane.b32.xlu0 %v1390, 96
        %v1976 = vpop.permute.xlu0 %1975
        %1977 = vrot.lane.b32.xlu0 %v1393, 96
        %v1978 = vpop.permute.xlu0 %1977
        %1979 = vrot.lane.b32.xlu0 %v1396, 96
        %v1980 = vpop.permute.xlu0 %1979
        %1981 = vrot.lane.b32.xlu0 %v1399, 96
        %v1982 = vpop.permute.xlu0 %1981
        %1983 = vrot.lane.b32.xlu0 %v1402, 96
        %v1984 = vpop.permute.xlu0 %1983
        %1985 = vrot.lane.b32.xlu0 %v1405, 96
        %v1986 = vpop.permute.xlu0 %1985
        %v2003 = vmul.f32 %v1360, %v1956
        %v2004 = vmul.f32 %v1363, %v1958
        %v2005 = vmul.f32 %v1366, %v1960
        %v2006 = vmul.f32 %v1369, %v1962
        %v2007 = vmul.f32 %v1372, %v1964
        %v2008 = vmul.f32 %v1375, %v1966
        %v2009 = vmul.f32 %v1378, %v1968
        %v2010 = vmul.f32 %v1381, %v1970
        %v2011 = vmul.f32 %v1384, %v1972
        %v2012 = vmul.f32 %v1387, %v1974
        %v2013 = vmul.f32 %v1390, %v1976
        %v2014 = vmul.f32 %v1393, %v1978
        %v2015 = vmul.f32 %v1396, %v1980
        %v2016 = vmul.f32 %v1399, %v1982
        %v2017 = vmul.f32 %v1402, %v1984
        %v2018 = vmul.f32 %v1405, %v1986
        %v2020 = vsel %vm889, %v2003, 0
        %v2023 = vsel %vm889, %v2004, 0
        %v2026 = vsel %vm889, %v2005, 0
        %v2029 = vsel %vm889, %v2006, 0
        %v2032 = vsel %vm889, %v2007, 0
        %v2035 = vsel %vm889, %v2008, 0
        %v2038 = vsel %vm889, %v2009, 0
        %v2041 = vsel %vm889, %v2010, 0
        %v2044 = vsel %vm889, %v2011, 0
        %v2047 = vsel %vm889, %v2012, 0
        %v2050 = vsel %vm889, %v2013, 0
        %v2053 = vsel %vm889, %v2014, 0
        %v2056 = vsel %vm889, %v2015, 0
        %v2059 = vsel %vm889, %v2016, 0
        %v2062 = vsel %vm889, %v2017, 0
        %v2065 = vsel %vm889, %v2018, 0
        %2067 = vmatpush.msra.mxu0 0.0
        %2068 = vmatpush.msra.mxu0 0.0
        %2069 = vmatpush.msra.mxu0 0.0
        %2070 = vmatpush.msra.mxu0 0.0
        %2071 = vmatpush.msra.mxu0 0.0
        %2072 = vmatpush.msra.mxu0 0.0
        %2073 = vmatpush.msra.mxu0 0.0
        %2074 = vmatpush.msra.mxu0 0.0
        %2075 = vmatpush.msra.mxu0 0.0
        %2076 = vmatpush.msra.mxu0 0.0
        %2077 = vmatpush.msra.mxu0 0.0
        %2078 = vmatpush.msra.mxu0 0.0
        %2079 = vmatpush.msra.mxu0 %v853
        %2080 = vmatpush.msra.mxu0 %v852
        %2081 = vmatpush.msra.mxu0 %v851
        %2082 = vmatpush.msra.mxu0 %v850
        %2083 = vmatmul.f32.gmra.mxu0 %v2020
        %v2084 = vpop.f32.mrf.mxu0
        %v2085 = vadd.f32 0.0, %v2084
        %2086 = vmatmul.f32.gmra.mxu0 %v2023
        %v2087 = vpop.f32.mrf.mxu0
        %v2088 = vadd.f32 0.0, %v2087
        %2089 = vmatmul.f32.gmra.mxu0 %v2026
        %v2090 = vpop.f32.mrf.mxu0
        %v2091 = vadd.f32 0.0, %v2090
        %2092 = vmatmul.f32.gmra.mxu0 %v2029
        %v2093 = vpop.f32.mrf.mxu0
        %v2094 = vadd.f32 0.0, %v2093
        %2095 = vmatmul.f32.gmra.mxu0 %v2032
        %v2096 = vpop.f32.mrf.mxu0
        %v2097 = vadd.f32 0.0, %v2096
        %2098 = vmatmul.f32.gmra.mxu0 %v2035
        %v2099 = vpop.f32.mrf.mxu0
        %v2100 = vadd.f32 0.0, %v2099
        %2101 = vmatmul.f32.gmra.mxu0 %v2038
        %v2102 = vpop.f32.mrf.mxu0
        %v2103 = vadd.f32 0.0, %v2102
        %2104 = vmatmul.f32.gmra.mxu0 %v2041
        %v2105 = vpop.f32.mrf.mxu0
        %v2106 = vadd.f32 0.0, %v2105
        %2107 = vmatmul.f32.gmra.mxu0 %v2044
        %v2108 = vpop.f32.mrf.mxu0
        %v2109 = vadd.f32 0.0, %v2108
        %2110 = vmatmul.f32.gmra.mxu0 %v2047
        %v2111 = vpop.f32.mrf.mxu0
        %v2112 = vadd.f32 0.0, %v2111
        %2113 = vmatmul.f32.gmra.mxu0 %v2050
        %v2114 = vpop.f32.mrf.mxu0
        %v2115 = vadd.f32 0.0, %v2114
        %2116 = vmatmul.f32.gmra.mxu0 %v2053
        %v2117 = vpop.f32.mrf.mxu0
        %v2118 = vadd.f32 0.0, %v2117
        %2119 = vmatmul.f32.gmra.mxu0 %v2056
        %v2120 = vpop.f32.mrf.mxu0
        %v2121 = vadd.f32 0.0, %v2120
        %2122 = vmatmul.f32.gmra.mxu0 %v2059
        %v2123 = vpop.f32.mrf.mxu0
        %v2124 = vadd.f32 0.0, %v2123
        %2125 = vmatmul.f32.gmra.mxu0 %v2062
        %v2126 = vpop.f32.mrf.mxu0
        %v2127 = vadd.f32 0.0, %v2126
        %2128 = vmatmul.f32.gmra.mxu0 %v2065
        %v2129 = vpop.f32.mrf.mxu0
        %v2130 = vadd.f32 0.0, %v2129
        %2131 = vdwg.mxu0
        %2148 = vrot.lane.b32.xlu0 %v1892, 96
        %v2149 = vpop.permute.xlu0 %2148
        %2150 = vrot.lane.b32.xlu0 %v1895, 96
        %v2151 = vpop.permute.xlu0 %2150
        %2152 = vrot.lane.b32.xlu0 %v1898, 96
        %v2153 = vpop.permute.xlu0 %2152
        %2154 = vrot.lane.b32.xlu0 %v1901, 96
        %v2155 = vpop.permute.xlu0 %2154
        %2156 = vrot.lane.b32.xlu0 %v1904, 96
        %v2157 = vpop.permute.xlu0 %2156
        %2158 = vrot.lane.b32.xlu0 %v1907, 96
        %v2159 = vpop.permute.xlu0 %2158
        %2160 = vrot.lane.b32.xlu0 %v1910, 96
        %v2161 = vpop.permute.xlu0 %2160
        %2162 = vrot.lane.b32.xlu0 %v1913, 96
        %v2163 = vpop.permute.xlu0 %2162
        %2164 = vrot.lane.b32.xlu0 %v1916, 96
        %v2165 = vpop.permute.xlu0 %2164
        %2166 = vrot.lane.b32.xlu0 %v1919, 96
        %v2167 = vpop.permute.xlu0 %2166
        %2168 = vrot.lane.b32.xlu0 %v1922, 96
        %v2169 = vpop.permute.xlu0 %2168
        %2170 = vrot.lane.b32.xlu0 %v1925, 96
        %v2171 = vpop.permute.xlu0 %2170
        %2172 = vrot.lane.b32.xlu0 %v1928, 96
        %v2173 = vpop.permute.xlu0 %2172
        %2174 = vrot.lane.b32.xlu0 %v1931, 96
        %v2175 = vpop.permute.xlu0 %2174
        %2176 = vrot.lane.b32.xlu0 %v1934, 96
        %v2177 = vpop.permute.xlu0 %2176
        %2178 = vrot.lane.b32.xlu0 %v1937, 96
        %v2179 = vpop.permute.xlu0 %2178
        %v2196 = vmul.f32 %v1360, %v2149
        %v2197 = vmul.f32 %v1363, %v2151
        %v2198 = vmul.f32 %v1366, %v2153
        %v2199 = vmul.f32 %v1369, %v2155
        %v2200 = vmul.f32 %v1372, %v2157
        %v2201 = vmul.f32 %v1375, %v2159
        %v2202 = vmul.f32 %v1378, %v2161
        %v2203 = vmul.f32 %v1381, %v2163
        %v2204 = vmul.f32 %v1384, %v2165
        %v2205 = vmul.f32 %v1387, %v2167
        %v2206 = vmul.f32 %v1390, %v2169
        %v2207 = vmul.f32 %v1393, %v2171
        %v2208 = vmul.f32 %v1396, %v2173
        %v2209 = vmul.f32 %v1399, %v2175
        %v2210 = vmul.f32 %v1402, %v2177
        %v2211 = vmul.f32 %v1405, %v2179
        %v2213 = vsel %vm889, %v2196, 0
        %v2216 = vsel %vm889, %v2197, 0
        %v2219 = vsel %vm889, %v2198, 0
        %v2222 = vsel %vm889, %v2199, 0
        %v2225 = vsel %vm889, %v2200, 0
        %v2228 = vsel %vm889, %v2201, 0
        %v2231 = vsel %vm889, %v2202, 0
        %v2234 = vsel %vm889, %v2203, 0
        %v2237 = vsel %vm889, %v2204, 0
        %v2240 = vsel %vm889, %v2205, 0
        %v2243 = vsel %vm889, %v2206, 0
        %v2246 = vsel %vm889, %v2207, 0
        %v2249 = vsel %vm889, %v2208, 0
        %v2252 = vsel %vm889, %v2209, 0
        %v2255 = vsel %vm889, %v2210, 0
        %v2258 = vsel %vm889, %v2211, 0
        %2260 = vmatpush.msra.mxu0 0.0
        %2261 = vmatpush.msra.mxu0 0.0
        %2262 = vmatpush.msra.mxu0 0.0
        %2263 = vmatpush.msra.mxu0 0.0
        %2264 = vmatpush.msra.mxu0 0.0
        %2265 = vmatpush.msra.mxu0 0.0
        %2266 = vmatpush.msra.mxu0 0.0
        %2267 = vmatpush.msra.mxu0 0.0
        %2268 = vmatpush.msra.mxu0 0.0
        %2269 = vmatpush.msra.mxu0 0.0
        %2270 = vmatpush.msra.mxu0 0.0
        %2271 = vmatpush.msra.mxu0 0.0
        %2272 = vmatpush.msra.mxu0 %v853
        %2273 = vmatpush.msra.mxu0 %v852
        %2274 = vmatpush.msra.mxu0 %v851
        %2275 = vmatpush.msra.mxu0 %v850
        %2276 = vmatmul.f32.gmra.mxu0 %v2213
        %v2277 = vpop.f32.mrf.mxu0
        %v2278 = vadd.f32 0.0, %v2277
        %2279 = vmatmul.f32.gmra.mxu0 %v2216
        %v2280 = vpop.f32.mrf.mxu0
        %v2281 = vadd.f32 0.0, %v2280
        %2282 = vmatmul.f32.gmra.mxu0 %v2219
        %v2283 = vpop.f32.mrf.mxu0
        %v2284 = vadd.f32 0.0, %v2283
        %2285 = vmatmul.f32.gmra.mxu0 %v2222
        %v2286 = vpop.f32.mrf.mxu0
        %v2287 = vadd.f32 0.0, %v2286
        %2288 = vmatmul.f32.gmra.mxu0 %v2225
        %v2289 = vpop.f32.mrf.mxu0
        %v2290 = vadd.f32 0.0, %v2289
        %2291 = vmatmul.f32.gmra.mxu0 %v2228
        %v2292 = vpop.f32.mrf.mxu0
        %v2293 = vadd.f32 0.0, %v2292
        %2294 = vmatmul.f32.gmra.mxu0 %v2231
        %v2295 = vpop.f32.mrf.mxu0
        %v2296 = vadd.f32 0.0, %v2295
        %2297 = vmatmul.f32.gmra.mxu0 %v2234
        %v2298 = vpop.f32.mrf.mxu0
        %v2299 = vadd.f32 0.0, %v2298
        %2300 = vmatmul.f32.gmra.mxu0 %v2237
        %v2301 = vpop.f32.mrf.mxu0
        %v2302 = vadd.f32 0.0, %v2301
        %2303 = vmatmul.f32.gmra.mxu0 %v2240
        %v2304 = vpop.f32.mrf.mxu0
        %v2305 = vadd.f32 0.0, %v2304
        %2306 = vmatmul.f32.gmra.mxu0 %v2243
        %v2307 = vpop.f32.mrf.mxu0
        %v2308 = vadd.f32 0.0, %v2307
        %2309 = vmatmul.f32.gmra.mxu0 %v2246
        %v2310 = vpop.f32.mrf.mxu0
        %v2311 = vadd.f32 0.0, %v2310
        %2312 = vmatmul.f32.gmra.mxu0 %v2249
        %v2313 = vpop.f32.mrf.mxu0
        %v2314 = vadd.f32 0.0, %v2313
        %2315 = vmatmul.f32.gmra.mxu0 %v2252
        %v2316 = vpop.f32.mrf.mxu0
        %v2317 = vadd.f32 0.0, %v2316
        %2318 = vmatmul.f32.gmra.mxu0 %v2255
        %v2319 = vpop.f32.mrf.mxu0
        %v2320 = vadd.f32 0.0, %v2319
        %2321 = vmatmul.f32.gmra.mxu0 %v2258
        %v2322 = vpop.f32.mrf.mxu0
        %v2323 = vadd.f32 0.0, %v2322
        %2324 = vdwg.mxu0
        %v2325 = vmax.f32 %v2085, %v2278
        %v2326 = vmax.f32 %v2088, %v2281
        %v2327 = vmax.f32 %v2091, %v2284
        %v2328 = vmax.f32 %v2094, %v2287
        %v2329 = vmax.f32 %v2097, %v2290
        %v2330 = vmax.f32 %v2100, %v2293
        %v2331 = vmax.f32 %v2103, %v2296
        %v2332 = vmax.f32 %v2106, %v2299
        %v2333 = vmax.f32 %v2109, %v2302
        %v2334 = vmax.f32 %v2112, %v2305
        %v2335 = vmax.f32 %v2115, %v2308
        %v2336 = vmax.f32 %v2118, %v2311
        %v2337 = vmax.f32 %v2121, %v2314
        %v2338 = vmax.f32 %v2124, %v2317
        %v2339 = vmax.f32 %v2127, %v2320
        %v2340 = vmax.f32 %v2130, %v2323
        %v2341 = vsub.f32 %v2085, %v2325
        %v2342 = vsub.f32 %v2088, %v2326
        %v2343 = vsub.f32 %v2091, %v2327
        %v2344 = vsub.f32 %v2094, %v2328
        %v2345 = vsub.f32 %v2097, %v2329
        %v2346 = vsub.f32 %v2100, %v2330
        %v2347 = vsub.f32 %v2103, %v2331
        %v2348 = vsub.f32 %v2106, %v2332
        %v2349 = vsub.f32 %v2109, %v2333
        %v2350 = vsub.f32 %v2112, %v2334
        %v2351 = vsub.f32 %v2115, %v2335
        %v2352 = vsub.f32 %v2118, %v2336
        %v2353 = vsub.f32 %v2121, %v2337
        %v2354 = vsub.f32 %v2124, %v2338
        %v2355 = vsub.f32 %v2127, %v2339
        %v2356 = vsub.f32 %v2130, %v2340
        %v2357 = vmul.f32 %v2341, 1.442695
        %v2358 = vpow.pop %v2357
        %v2359 = vmul.f32 %v2342, 1.442695
        %v2360 = vpow.pop %v2359
        %v2361 = vmul.f32 %v2343, 1.442695
        %v2362 = vpow.pop %v2361
        %v2363 = vmul.f32 %v2344, 1.442695
        %v2364 = vpow.pop %v2363
        %v2365 = vmul.f32 %v2345, 1.442695
        %v2366 = vpow.pop %v2365
        %v2367 = vmul.f32 %v2346, 1.442695
        %v2368 = vpow.pop %v2367
        %v2369 = vmul.f32 %v2347, 1.442695
        %v2370 = vpow.pop %v2369
        %v2371 = vmul.f32 %v2348, 1.442695
        %v2372 = vpow.pop %v2371
        %v2373 = vmul.f32 %v2349, 1.442695
        %v2374 = vpow.pop %v2373
        %v2375 = vmul.f32 %v2350, 1.442695
        %v2376 = vpow.pop %v2375
        %v2377 = vmul.f32 %v2351, 1.442695
        %v2378 = vpow.pop %v2377
        %v2379 = vmul.f32 %v2352, 1.442695
        %v2380 = vpow.pop %v2379
        %v2381 = vmul.f32 %v2353, 1.442695
        %v2382 = vpow.pop %v2381
        %v2383 = vmul.f32 %v2354, 1.442695
        %v2384 = vpow.pop %v2383
        %v2385 = vmul.f32 %v2355, 1.442695
        %v2386 = vpow.pop %v2385
        %v2387 = vmul.f32 %v2356, 1.442695
        %v2388 = vpow.pop %v2387
        %v2389 = vsub.f32 %v2278, %v2325
        %v2390 = vsub.f32 %v2281, %v2326
        %v2391 = vsub.f32 %v2284, %v2327
        %v2392 = vsub.f32 %v2287, %v2328
        %v2393 = vsub.f32 %v2290, %v2329
        %v2394 = vsub.f32 %v2293, %v2330
        %v2395 = vsub.f32 %v2296, %v2331
        %v2396 = vsub.f32 %v2299, %v2332
        %v2397 = vsub.f32 %v2302, %v2333
        %v2398 = vsub.f32 %v2305, %v2334
        %v2399 = vsub.f32 %v2308, %v2335
        %v2400 = vsub.f32 %v2311, %v2336
        %v2401 = vsub.f32 %v2314, %v2337
        %v2402 = vsub.f32 %v2317, %v2338
        %v2403 = vsub.f32 %v2320, %v2339
        %v2404 = vsub.f32 %v2323, %v2340
        %v2405 = vmul.f32 %v2389, 1.442695
        %v2406 = vpow.pop %v2405
        %v2407 = vmul.f32 %v2390, 1.442695
        %v2408 = vpow.pop %v2407
        %v2409 = vmul.f32 %v2391, 1.442695
        %v2410 = vpow.pop %v2409
        %v2411 = vmul.f32 %v2392, 1.442695
        %v2412 = vpow.pop %v2411
        %v2413 = vmul.f32 %v2393, 1.442695
        %v2414 = vpow.pop %v2413
        %v2415 = vmul.f32 %v2394, 1.442695
        %v2416 = vpow.pop %v2415
        %v2417 = vmul.f32 %v2395, 1.442695
        %v2418 = vpow.pop %v2417
        %v2419 = vmul.f32 %v2396, 1.442695
        %v2420 = vpow.pop %v2419
        %v2421 = vmul.f32 %v2397, 1.442695
        %v2422 = vpow.pop %v2421
        %v2423 = vmul.f32 %v2398, 1.442695
        %v2424 = vpow.pop %v2423
        %v2425 = vmul.f32 %v2399, 1.442695
        %v2426 = vpow.pop %v2425
        %v2427 = vmul.f32 %v2400, 1.442695
        %v2428 = vpow.pop %v2427
        %v2429 = vmul.f32 %v2401, 1.442695
        %v2430 = vpow.pop %v2429
        %v2431 = vmul.f32 %v2402, 1.442695
        %v2432 = vpow.pop %v2431
        %v2433 = vmul.f32 %v2403, 1.442695
        %v2434 = vpow.pop %v2433
        %v2435 = vmul.f32 %v2404, 1.442695
        %v2436 = vpow.pop %v2435
        %v2437 = vadd.f32 %v2358, %v2406
        %v2438 = vadd.f32 %v2360, %v2408
        %v2439 = vadd.f32 %v2362, %v2410
        %v2440 = vadd.f32 %v2364, %v2412
        %v2441 = vadd.f32 %v2366, %v2414
        %v2442 = vadd.f32 %v2368, %v2416
        %v2443 = vadd.f32 %v2370, %v2418
        %v2444 = vadd.f32 %v2372, %v2420
        %v2445 = vadd.f32 %v2374, %v2422
        %v2446 = vadd.f32 %v2376, %v2424
        %v2447 = vadd.f32 %v2378, %v2426
        %v2448 = vadd.f32 %v2380, %v2428
        %v2449 = vadd.f32 %v2382, %v2430
        %v2450 = vadd.f32 %v2384, %v2432
        %v2451 = vadd.f32 %v2386, %v2434
        %v2452 = vadd.f32 %v2388, %v2436
        %v2453 = vrcp.pop %v2437
        %v2454 = vrcp.pop %v2438
        %v2455 = vrcp.pop %v2439
        %v2456 = vrcp.pop %v2440
        %v2457 = vrcp.pop %v2441
        %v2458 = vrcp.pop %v2442
        %v2459 = vrcp.pop %v2443
        %v2460 = vrcp.pop %v2444
        %v2461 = vrcp.pop %v2445
        %v2462 = vrcp.pop %v2446
        %v2463 = vrcp.pop %v2447
        %v2464 = vrcp.pop %v2448
        %v2465 = vrcp.pop %v2449
        %v2466 = vrcp.pop %v2450
        %v2467 = vrcp.pop %v2451
        %v2468 = vrcp.pop %v2452
        %v2469 = vmul.f32 %v2358, %v2453
        %v2470 = vmul.f32 %v2360, %v2454
        %v2471 = vmul.f32 %v2362, %v2455
        %v2472 = vmul.f32 %v2364, %v2456
        %v2473 = vmul.f32 %v2366, %v2457
        %v2474 = vmul.f32 %v2368, %v2458
        %v2475 = vmul.f32 %v2370, %v2459
        %v2476 = vmul.f32 %v2372, %v2460
        %v2477 = vmul.f32 %v2374, %v2461
        %v2478 = vmul.f32 %v2376, %v2462
        %v2479 = vmul.f32 %v2378, %v2463
        %v2480 = vmul.f32 %v2380, %v2464
        %v2481 = vmul.f32 %v2382, %v2465
        %v2482 = vmul.f32 %v2384, %v2466
        %v2483 = vmul.f32 %v2386, %v2467
        %v2484 = vmul.f32 %v2388, %v2468
        %vm2485 = vcmask 31744
        %v2487 = vsel %vm2485, %v2469, 0
        %v2490 = vsel %vm2485, %v2470, 0
        %v2493 = vsel %vm2485, %v2471, 0
        %v2496 = vsel %vm2485, %v2472, 0
        %v2499 = vsel %vm2485, %v2473, 0
        %v2502 = vsel %vm2485, %v2474, 0
        %v2505 = vsel %vm2485, %v2475, 0
        %v2508 = vsel %vm2485, %v2476, 0
        %v2511 = vsel %vm2485, %v2477, 0
        %v2514 = vsel %vm2485, %v2478, 0
        %v2517 = vsel %vm2485, %v2479, 0
        %v2520 = vsel %vm2485, %v2480, 0
        %v2523 = vsel %vm2485, %v2481, 0
        %v2526 = vsel %vm2485, %v2482, 0
        %v2529 = vsel %vm2485, %v2483, 0
        %v2532 = vsel %vm2485, %v2484, 0
        %vm2534 = vcmask 1043456
        %v2536 = vsel %vm2534, %v854, 0
        %2538 = vmatpush.msra.mxu0 0.0
        %2539 = vmatpush.msra.mxu0 0.0
        %2540 = vmatpush.msra.mxu0 0.0
        %2541 = vmatpush.msra.mxu0 0.0
        %2542 = vmatpush.msra.mxu0 0.0
        %2543 = vmatpush.msra.mxu0 0.0
        %2544 = vmatpush.msra.mxu0 0.0
        %2545 = vmatpush.msra.mxu0 0.0
        %2546 = vmatpush.msra.mxu0 0.0
        %2547 = vmatpush.msra.mxu0 0.0
        %2548 = vmatpush.msra.mxu0 0.0
        %2549 = vmatpush.msra.mxu0 0.0
        %2550 = vmatpush.msra.mxu0 0.0
        %2551 = vmatpush.msra.mxu0 0.0
        %2552 = vmatpush.msra.mxu0 0.0
        %2553 = vmatpush.msra.mxu0 %v2536
        %2554 = vmatmul.f32.gmra.mxu0 %v2487
        %v2555 = vpop.f32.mrf.mxu0
        %v2556 = vadd.f32 0.0, %v2555
        %2557 = vmatmul.f32.gmra.mxu0 %v2490
        %v2558 = vpop.f32.mrf.mxu0
        %v2559 = vadd.f32 0.0, %v2558
        %2560 = vmatmul.f32.gmra.mxu0 %v2493
        %v2561 = vpop.f32.mrf.mxu0
        %v2562 = vadd.f32 0.0, %v2561
        %2563 = vmatmul.f32.gmra.mxu0 %v2496
        %v2564 = vpop.f32.mrf.mxu0
        %v2565 = vadd.f32 0.0, %v2564
        %2566 = vmatmul.f32.gmra.mxu0 %v2499
        %v2567 = vpop.f32.mrf.mxu0
        %v2568 = vadd.f32 0.0, %v2567
        %2569 = vmatmul.f32.gmra.mxu0 %v2502
        %v2570 = vpop.f32.mrf.mxu0
        %v2571 = vadd.f32 0.0, %v2570
        %2572 = vmatmul.f32.gmra.mxu0 %v2505
        %v2573 = vpop.f32.mrf.mxu0
        %v2574 = vadd.f32 0.0, %v2573
        %2575 = vmatmul.f32.gmra.mxu0 %v2508
        %v2576 = vpop.f32.mrf.mxu0
        %v2577 = vadd.f32 0.0, %v2576
        %2578 = vmatmul.f32.gmra.mxu0 %v2511
        %v2579 = vpop.f32.mrf.mxu0
        %v2580 = vadd.f32 0.0, %v2579
        %2581 = vmatmul.f32.gmra.mxu0 %v2514
        %v2582 = vpop.f32.mrf.mxu0
        %v2583 = vadd.f32 0.0, %v2582
        %2584 = vmatmul.f32.gmra.mxu0 %v2517
        %v2585 = vpop.f32.mrf.mxu0
        %v2586 = vadd.f32 0.0, %v2585
        %2587 = vmatmul.f32.gmra.mxu0 %v2520
        %v2588 = vpop.f32.mrf.mxu0
        %v2589 = vadd.f32 0.0, %v2588
        %2590 = vmatmul.f32.gmra.mxu0 %v2523
        %v2591 = vpop.f32.mrf.mxu0
        %v2592 = vadd.f32 0.0, %v2591
        %2593 = vmatmul.f32.gmra.mxu0 %v2526
        %v2594 = vpop.f32.mrf.mxu0
        %v2595 = vadd.f32 0.0, %v2594
        %2596 = vmatmul.f32.gmra.mxu0 %v2529
        %v2597 = vpop.f32.mrf.mxu0
        %v2598 = vadd.f32 0.0, %v2597
        %2599 = vmatmul.f32.gmra.mxu0 %v2532
        %v2600 = vpop.f32.mrf.mxu0
        %v2601 = vadd.f32 0.0, %v2600
        %2602 = vdwg.mxu0
        %2603 = vrot.lane.b32.xlu0 %v1360, 64
        %v2604 = vpop.permute.xlu0 %2603
        %2605 = vrot.lane.b32.xlu0 %v1363, 64
        %v2606 = vpop.permute.xlu0 %2605
        %2607 = vrot.lane.b32.xlu0 %v1366, 64
        %v2608 = vpop.permute.xlu0 %2607
        %2609 = vrot.lane.b32.xlu0 %v1369, 64
        %v2610 = vpop.permute.xlu0 %2609
        %2611 = vrot.lane.b32.xlu0 %v1372, 64
        %v2612 = vpop.permute.xlu0 %2611
        %2613 = vrot.lane.b32.xlu0 %v1375, 64
        %v2614 = vpop.permute.xlu0 %2613
        %2615 = vrot.lane.b32.xlu0 %v1378, 64
        %v2616 = vpop.permute.xlu0 %2615
        %2617 = vrot.lane.b32.xlu0 %v1381, 64
        %v2618 = vpop.permute.xlu0 %2617
        %2619 = vrot.lane.b32.xlu0 %v1384, 64
        %v2620 = vpop.permute.xlu0 %2619
        %2621 = vrot.lane.b32.xlu0 %v1387, 64
        %v2622 = vpop.permute.xlu0 %2621
        %2623 = vrot.lane.b32.xlu0 %v1390, 64
        %v2624 = vpop.permute.xlu0 %2623
        %2625 = vrot.lane.b32.xlu0 %v1393, 64
        %v2626 = vpop.permute.xlu0 %2625
        %2627 = vrot.lane.b32.xlu0 %v1396, 64
        %v2628 = vpop.permute.xlu0 %2627
        %2629 = vrot.lane.b32.xlu0 %v1399, 64
        %v2630 = vpop.permute.xlu0 %2629
        %2631 = vrot.lane.b32.xlu0 %v1402, 64
        %v2632 = vpop.permute.xlu0 %2631
        %2633 = vrot.lane.b32.xlu0 %v1405, 64
        %v2634 = vpop.permute.xlu0 %2633
        %v2651 = vmul.f32 %v2556, %v2604
        %v2652 = vmul.f32 %v2559, %v2606
        %v2653 = vmul.f32 %v2562, %v2608
        %v2654 = vmul.f32 %v2565, %v2610
        %v2655 = vmul.f32 %v2568, %v2612
        %v2656 = vmul.f32 %v2571, %v2614
        %v2657 = vmul.f32 %v2574, %v2616
        %v2658 = vmul.f32 %v2577, %v2618
        %v2659 = vmul.f32 %v2580, %v2620
        %v2660 = vmul.f32 %v2583, %v2622
        %v2661 = vmul.f32 %v2586, %v2624
        %v2662 = vmul.f32 %v2589, %v2626
        %v2663 = vmul.f32 %v2592, %v2628
        %v2664 = vmul.f32 %v2595, %v2630
        %v2665 = vmul.f32 %v2598, %v2632
        %v2666 = vmul.f32 %v2601, %v2634
        %v2667 = vmul.f32 %v2406, %v2453
        %v2668 = vmul.f32 %v2408, %v2454
        %v2669 = vmul.f32 %v2410, %v2455
        %v2670 = vmul.f32 %v2412, %v2456
        %v2671 = vmul.f32 %v2414, %v2457
        %v2672 = vmul.f32 %v2416, %v2458
        %v2673 = vmul.f32 %v2418, %v2459
        %v2674 = vmul.f32 %v2420, %v2460
        %v2675 = vmul.f32 %v2422, %v2461
        %v2676 = vmul.f32 %v2424, %v2462
        %v2677 = vmul.f32 %v2426, %v2463
        %v2678 = vmul.f32 %v2428, %v2464
        %v2679 = vmul.f32 %v2430, %v2465
        %v2680 = vmul.f32 %v2432, %v2466
        %v2681 = vmul.f32 %v2434, %v2467
        %v2682 = vmul.f32 %v2436, %v2468
        %v2684 = vsel %vm2485, %v2667, 0
        %v2687 = vsel %vm2485, %v2668, 0
        %v2690 = vsel %vm2485, %v2669, 0
        %v2693 = vsel %vm2485, %v2670, 0
        %v2696 = vsel %vm2485, %v2671, 0
        %v2699 = vsel %vm2485, %v2672, 0
        %v2702 = vsel %vm2485, %v2673, 0
        %v2705 = vsel %vm2485, %v2674, 0
        %v2708 = vsel %vm2485, %v2675, 0
        %v2711 = vsel %vm2485, %v2676, 0
        %v2714 = vsel %vm2485, %v2677, 0
        %v2717 = vsel %vm2485, %v2678, 0
        %v2720 = vsel %vm2485, %v2679, 0
        %v2723 = vsel %vm2485, %v2680, 0
        %v2726 = vsel %vm2485, %v2681, 0
        %v2729 = vsel %vm2485, %v2682, 0
        %2731 = vmatpush.msra.mxu0 0.0
        %2732 = vmatpush.msra.mxu0 0.0
        %2733 = vmatpush.msra.mxu0 0.0
        %2734 = vmatpush.msra.mxu0 0.0
        %2735 = vmatpush.msra.mxu0 0.0
        %2736 = vmatpush.msra.mxu0 0.0
        %2737 = vmatpush.msra.mxu0 0.0
        %2738 = vmatpush.msra.mxu0 0.0
        %2739 = vmatpush.msra.mxu0 0.0
        %2740 = vmatpush.msra.mxu0 0.0
        %2741 = vmatpush.msra.mxu0 0.0
        %2742 = vmatpush.msra.mxu0 0.0
        %2743 = vmatpush.msra.mxu0 0.0
        %2744 = vmatpush.msra.mxu0 0.0
        %2745 = vmatpush.msra.mxu0 0.0
        %2746 = vmatpush.msra.mxu0 %v2536
        %2747 = vmatmul.f32.gmra.mxu0 %v2684
        %v2748 = vpop.f32.mrf.mxu0
        %v2749 = vadd.f32 0.0, %v2748
        %2750 = vmatmul.f32.gmra.mxu0 %v2687
        %v2751 = vpop.f32.mrf.mxu0
        %v2752 = vadd.f32 0.0, %v2751
        %2753 = vmatmul.f32.gmra.mxu0 %v2690
        %v2754 = vpop.f32.mrf.mxu0
        %v2755 = vadd.f32 0.0, %v2754
        %2756 = vmatmul.f32.gmra.mxu0 %v2693
        %v2757 = vpop.f32.mrf.mxu0
        %v2758 = vadd.f32 0.0, %v2757
        %2759 = vmatmul.f32.gmra.mxu0 %v2696
        %v2760 = vpop.f32.mrf.mxu0
        %v2761 = vadd.f32 0.0, %v2760
        %2762 = vmatmul.f32.gmra.mxu0 %v2699
        %v2763 = vpop.f32.mrf.mxu0
        %v2764 = vadd.f32 0.0, %v2763
        %2765 = vmatmul.f32.gmra.mxu0 %v2702
        %v2766 = vpop.f32.mrf.mxu0
        %v2767 = vadd.f32 0.0, %v2766
        %2768 = vmatmul.f32.gmra.mxu0 %v2705
        %v2769 = vpop.f32.mrf.mxu0
        %v2770 = vadd.f32 0.0, %v2769
        %2771 = vmatmul.f32.gmra.mxu0 %v2708
        %v2772 = vpop.f32.mrf.mxu0
        %v2773 = vadd.f32 0.0, %v2772
        %2774 = vmatmul.f32.gmra.mxu0 %v2711
        %v2775 = vpop.f32.mrf.mxu0
        %v2776 = vadd.f32 0.0, %v2775
        %2777 = vmatmul.f32.gmra.mxu0 %v2714
        %v2778 = vpop.f32.mrf.mxu0
        %v2779 = vadd.f32 0.0, %v2778
        %2780 = vmatmul.f32.gmra.mxu0 %v2717
        %v2781 = vpop.f32.mrf.mxu0
        %v2782 = vadd.f32 0.0, %v2781
        %2783 = vmatmul.f32.gmra.mxu0 %v2720
        %v2784 = vpop.f32.mrf.mxu0
        %v2785 = vadd.f32 0.0, %v2784
        %2786 = vmatmul.f32.gmra.mxu0 %v2723
        %v2787 = vpop.f32.mrf.mxu0
        %v2788 = vadd.f32 0.0, %v2787
        %2789 = vmatmul.f32.gmra.mxu0 %v2726
        %v2790 = vpop.f32.mrf.mxu0
        %v2791 = vadd.f32 0.0, %v2790
        %2792 = vmatmul.f32.gmra.mxu0 %v2729
        %v2793 = vpop.f32.mrf.mxu0
        %v2794 = vadd.f32 0.0, %v2793
        %2795 = vdwg.mxu0
        %2796 = vrot.lane.b32.xlu0 %v1892, 64
        %v2797 = vpop.permute.xlu0 %2796
        %2798 = vrot.lane.b32.xlu0 %v1895, 64
        %v2799 = vpop.permute.xlu0 %2798
        %2800 = vrot.lane.b32.xlu0 %v1898, 64
        %v2801 = vpop.permute.xlu0 %2800
        %2802 = vrot.lane.b32.xlu0 %v1901, 64
        %v2803 = vpop.permute.xlu0 %2802
        %2804 = vrot.lane.b32.xlu0 %v1904, 64
        %v2805 = vpop.permute.xlu0 %2804
        %2806 = vrot.lane.b32.xlu0 %v1907, 64
        %v2807 = vpop.permute.xlu0 %2806
        %2808 = vrot.lane.b32.xlu0 %v1910, 64
        %v2809 = vpop.permute.xlu0 %2808
        %2810 = vrot.lane.b32.xlu0 %v1913, 64
        %v2811 = vpop.permute.xlu0 %2810
        %2812 = vrot.lane.b32.xlu0 %v1916, 64
        %v2813 = vpop.permute.xlu0 %2812
        %2814 = vrot.lane.b32.xlu0 %v1919, 64
        %v2815 = vpop.permute.xlu0 %2814
        %2816 = vrot.lane.b32.xlu0 %v1922, 64
        %v2817 = vpop.permute.xlu0 %2816
        %2818 = vrot.lane.b32.xlu0 %v1925, 64
        %v2819 = vpop.permute.xlu0 %2818
        %2820 = vrot.lane.b32.xlu0 %v1928, 64
        %v2821 = vpop.permute.xlu0 %2820
        %2822 = vrot.lane.b32.xlu0 %v1931, 64
        %v2823 = vpop.permute.xlu0 %2822
        %2824 = vrot.lane.b32.xlu0 %v1934, 64
        %v2825 = vpop.permute.xlu0 %2824
        %2826 = vrot.lane.b32.xlu0 %v1937, 64
        %v2827 = vpop.permute.xlu0 %2826
        %v2844 = vmul.f32 %v2749, %v2797
        %v2845 = vmul.f32 %v2752, %v2799
        %v2846 = vmul.f32 %v2755, %v2801
        %v2847 = vmul.f32 %v2758, %v2803
        %v2848 = vmul.f32 %v2761, %v2805
        %v2849 = vmul.f32 %v2764, %v2807
        %v2850 = vmul.f32 %v2767, %v2809
        %v2851 = vmul.f32 %v2770, %v2811
        %v2852 = vmul.f32 %v2773, %v2813
        %v2853 = vmul.f32 %v2776, %v2815
        %v2854 = vmul.f32 %v2779, %v2817
        %v2855 = vmul.f32 %v2782, %v2819
        %v2856 = vmul.f32 %v2785, %v2821
        %v2857 = vmul.f32 %v2788, %v2823
        %v2858 = vmul.f32 %v2791, %v2825
        %v2859 = vmul.f32 %v2794, %v2827
        %v2860 = vadd.f32 %v2651, %v2844
        %v2861 = vadd.f32 %v2652, %v2845
        %v2862 = vadd.f32 %v2653, %v2846
        %v2863 = vadd.f32 %v2654, %v2847
        %v2864 = vadd.f32 %v2655, %v2848
        %v2865 = vadd.f32 %v2656, %v2849
        %v2866 = vadd.f32 %v2657, %v2850
        %v2867 = vadd.f32 %v2658, %v2851
        %v2868 = vadd.f32 %v2659, %v2852
        %v2869 = vadd.f32 %v2660, %v2853
        %v2870 = vadd.f32 %v2661, %v2854
        %v2871 = vadd.f32 %v2662, %v2855
        %v2872 = vadd.f32 %v2663, %v2856
        %v2873 = vadd.f32 %v2664, %v2857
        %v2874 = vadd.f32 %v2665, %v2858
        %v2875 = vadd.f32 %v2666, %v2859
        %v2876 = vld [vmem:[%s8] sm:$0xff]
        %v2877 = vld [vmem:[%s8 + $0x8] sm:$0xff]
        %v2878 = vld [vmem:[%s8 + $0x10] sm:$0xff]
        %v2879 = vld [vmem:[%s8 + $0x18] sm:$0xff]
        %v2881 = vperm.slane %v849, 0
        %v2884 = vsel %vm889, %v2860, 0
        %v2887 = vsel %vm889, %v2861, 0
        %v2890 = vsel %vm889, %v2862, 0
        %v2893 = vsel %vm889, %v2863, 0
        %v2896 = vsel %vm889, %v2864, 0
        %v2899 = vsel %vm889, %v2865, 0
        %v2902 = vsel %vm889, %v2866, 0
        %v2905 = vsel %vm889, %v2867, 0
        %v2908 = vsel %vm889, %v2868, 0
        %v2911 = vsel %vm889, %v2869, 0
        %v2914 = vsel %vm889, %v2870, 0
        %v2917 = vsel %vm889, %v2871, 0
        %v2920 = vsel %vm889, %v2872, 0
        %v2923 = vsel %vm889, %v2873, 0
        %v2926 = vsel %vm889, %v2874, 0
        %v2929 = vsel %vm889, %v2875, 0
        %2931 = vmatpush.msra.mxu0 0.0
        %2932 = vmatpush.msra.mxu0 0.0
        %2933 = vmatpush.msra.mxu0 0.0
        %2934 = vmatpush.msra.mxu0 0.0
        %2935 = vmatpush.msra.mxu0 0.0
        %2936 = vmatpush.msra.mxu0 0.0
        %2937 = vmatpush.msra.mxu0 0.0
        %2938 = vmatpush.msra.mxu0 0.0
        %2939 = vmatpush.msra.mxu0 0.0
        %2940 = vmatpush.msra.mxu0 0.0
        %2941 = vmatpush.msra.mxu0 0.0
        %2942 = vmatpush.msra.mxu0 0.0
        %2943 = vmatpush.msra.mxu0 %v2879
        %2944 = vmatpush.msra.mxu0 %v2878
        %2945 = vmatpush.msra.mxu0 %v2877
        %2946 = vmatpush.msra.mxu0 %v2876
        %2947 = vmatmul.f32.gmra.mxu0 %v2884
        %v2948 = vpop.f32.mrf.mxu0
        %v2949 = vadd.f32 %v2881, %v2948
        %2950 = vmatmul.f32.gmra.mxu0 %v2887
        %v2951 = vpop.f32.mrf.mxu0
        %v2952 = vadd.f32 %v2881, %v2951
        %2953 = vmatmul.f32.gmra.mxu0 %v2890
        %v2954 = vpop.f32.mrf.mxu0
        %v2955 = vadd.f32 %v2881, %v2954
        %2956 = vmatmul.f32.gmra.mxu0 %v2893
        %v2957 = vpop.f32.mrf.mxu0
        %v2958 = vadd.f32 %v2881, %v2957
        %2959 = vmatmul.f32.gmra.mxu0 %v2896
        %v2960 = vpop.f32.mrf.mxu0
        %v2961 = vadd.f32 %v2881, %v2960
        %2962 = vmatmul.f32.gmra.mxu0 %v2899
        %v2963 = vpop.f32.mrf.mxu0
        %v2964 = vadd.f32 %v2881, %v2963
        %2965 = vmatmul.f32.gmra.mxu0 %v2902
        %v2966 = vpop.f32.mrf.mxu0
        %v2967 = vadd.f32 %v2881, %v2966
        %2968 = vmatmul.f32.gmra.mxu0 %v2905
        %v2969 = vpop.f32.mrf.mxu0
        %v2970 = vadd.f32 %v2881, %v2969
        %2971 = vmatmul.f32.gmra.mxu0 %v2908
        %v2972 = vpop.f32.mrf.mxu0
        %v2973 = vadd.f32 %v2881, %v2972
        %2974 = vmatmul.f32.gmra.mxu0 %v2911
        %v2975 = vpop.f32.mrf.mxu0
        %v2976 = vadd.f32 %v2881, %v2975
        %2977 = vmatmul.f32.gmra.mxu0 %v2914
        %v2978 = vpop.f32.mrf.mxu0
        %v2979 = vadd.f32 %v2881, %v2978
        %2980 = vmatmul.f32.gmra.mxu0 %v2917
        %v2981 = vpop.f32.mrf.mxu0
        %v2982 = vadd.f32 %v2881, %v2981
        %2983 = vmatmul.f32.gmra.mxu0 %v2920
        %v2984 = vpop.f32.mrf.mxu0
        %v2985 = vadd.f32 %v2881, %v2984
        %2986 = vmatmul.f32.gmra.mxu0 %v2923
        %v2987 = vpop.f32.mrf.mxu0
        %v2988 = vadd.f32 %v2881, %v2987
        %2989 = vmatmul.f32.gmra.mxu0 %v2926
        %v2990 = vpop.f32.mrf.mxu0
        %v2991 = vadd.f32 %v2881, %v2990
        %2992 = vmatmul.f32.gmra.mxu0 %v2929
        %v2993 = vpop.f32.mrf.mxu0
        %v2994 = vadd.f32 %v2881, %v2993
        %2995 = vdwg.mxu0
        %v2996 = vsel %vm889, %v2949, 0.0
        %2997 = vadd.xlane.f32.xlu0 %v2996
        %v2998 = vpop.xlane.xlu0 %2997
        %v2999 = vsel %vm889, %v2952, 0.0
        %3000 = vadd.xlane.f32.xlu0 %v2999
        %v3001 = vpop.xlane.xlu0 %3000
        %v3002 = vsel %vm889, %v2955, 0.0
        %3003 = vadd.xlane.f32.xlu0 %v3002
        %v3004 = vpop.xlane.xlu0 %3003
        %v3005 = vsel %vm889, %v2958, 0.0
        %3006 = vadd.xlane.f32.xlu0 %v3005
        %v3007 = vpop.xlane.xlu0 %3006
        %v3008 = vsel %vm889, %v2961, 0.0
        %3009 = vadd.xlane.f32.xlu0 %v3008
        %v3010 = vpop.xlane.xlu0 %3009
        %v3011 = vsel %vm889, %v2964, 0.0
        %3012 = vadd.xlane.f32.xlu0 %v3011
        %v3013 = vpop.xlane.xlu0 %3012
        %v3014 = vsel %vm889, %v2967, 0.0
        %3015 = vadd.xlane.f32.xlu0 %v3014
        %v3016 = vpop.xlane.xlu0 %3015
        %v3017 = vsel %vm889, %v2970, 0.0
        %3018 = vadd.xlane.f32.xlu0 %v3017
        %v3019 = vpop.xlane.xlu0 %3018
        %v3020 = vsel %vm889, %v2973, 0.0
        %3021 = vadd.xlane.f32.xlu0 %v3020
        %v3022 = vpop.xlane.xlu0 %3021
        %v3023 = vsel %vm889, %v2976, 0.0
        %3024 = vadd.xlane.f32.xlu0 %v3023
        %v3025 = vpop.xlane.xlu0 %3024
        %v3026 = vsel %vm889, %v2979, 0.0
        %3027 = vadd.xlane.f32.xlu0 %v3026
        %v3028 = vpop.xlane.xlu0 %3027
        %v3029 = vsel %vm889, %v2982, 0.0
        %3030 = vadd.xlane.f32.xlu0 %v3029
        %v3031 = vpop.xlane.xlu0 %3030
        %v3032 = vsel %vm889, %v2985, 0.0
        %3033 = vadd.xlane.f32.xlu0 %v3032
        %v3034 = vpop.xlane.xlu0 %3033
        %v3035 = vsel %vm889, %v2988, 0.0
        %3036 = vadd.xlane.f32.xlu0 %v3035
        %v3037 = vpop.xlane.xlu0 %3036
        %v3038 = vsel %vm889, %v2991, 0.0
        %3039 = vadd.xlane.f32.xlu0 %v3038
        %v3040 = vpop.xlane.xlu0 %3039
        %v3041 = vsel %vm889, %v2994, 0.0
        %3042 = vadd.xlane.f32.xlu0 %v3041
        %v3043 = vpop.xlane.xlu0 %3042
        %v3044 = vmul.f32 %v2998, %v944
        %v3045 = vmul.f32 %v3001, %v944
        %v3046 = vmul.f32 %v3004, %v944
        %v3047 = vmul.f32 %v3007, %v944
        %v3048 = vmul.f32 %v3010, %v944
        %v3049 = vmul.f32 %v3013, %v944
        %v3050 = vmul.f32 %v3016, %v944
        %v3051 = vmul.f32 %v3019, %v944
        %v3052 = vmul.f32 %v3022, %v944
        %v3053 = vmul.f32 %v3025, %v944
        %v3054 = vmul.f32 %v3028, %v944
        %v3055 = vmul.f32 %v3031, %v944
        %v3056 = vmul.f32 %v3034, %v944
        %v3057 = vmul.f32 %v3037, %v944
        %v3058 = vmul.f32 %v3040, %v944
        %v3059 = vmul.f32 %v3043, %v944
        %v3060 = vsub.f32 %v2949, %v3044
        %v3061 = vsub.f32 %v2952, %v3045
        %v3062 = vsub.f32 %v2955, %v3046
        %v3063 = vsub.f32 %v2958, %v3047
        %v3064 = vsub.f32 %v2961, %v3048
        %v3065 = vsub.f32 %v2964, %v3049
        %v3066 = vsub.f32 %v2967, %v3050
        %v3067 = vsub.f32 %v2970, %v3051
        %v3068 = vsub.f32 %v2973, %v3052
        %v3069 = vsub.f32 %v2976, %v3053
        %v3070 = vsub.f32 %v2979, %v3054
        %v3071 = vsub.f32 %v2982, %v3055
        %v3072 = vsub.f32 %v2985, %v3056
        %v3073 = vsub.f32 %v2988, %v3057
        %v3074 = vsub.f32 %v2991, %v3058
        %v3075 = vsub.f32 %v2994, %v3059
        %v3076 = vmul.f32 %v3060, %v3060
        %v3077 = vmul.f32 %v3061, %v3061
        %v3078 = vmul.f32 %v3062, %v3062
        %v3079 = vmul.f32 %v3063, %v3063
        %v3080 = vmul.f32 %v3064, %v3064
        %v3081 = vmul.f32 %v3065, %v3065
        %v3082 = vmul.f32 %v3066, %v3066
        %v3083 = vmul.f32 %v3067, %v3067
        %v3084 = vmul.f32 %v3068, %v3068
        %v3085 = vmul.f32 %v3069, %v3069
        %v3086 = vmul.f32 %v3070, %v3070
        %v3087 = vmul.f32 %v3071, %v3071
        %v3088 = vmul.f32 %v3072, %v3072
        %v3089 = vmul.f32 %v3073, %v3073
        %v3090 = vmul.f32 %v3074, %v3074
        %v3091 = vmul.f32 %v3075, %v3075
        %v3092 = vsel %vm889, %v3076, 0.0
        %3093 = vadd.xlane.f32.xlu0 %v3092
        %v3094 = vpop.xlane.xlu0 %3093
        %v3095 = vsel %vm889, %v3077, 0.0
        %3096 = vadd.xlane.f32.xlu0 %v3095
        %v3097 = vpop.xlane.xlu0 %3096
        %v3098 = vsel %vm889, %v3078, 0.0
        %3099 = vadd.xlane.f32.xlu0 %v3098
        %v3100 = vpop.xlane.xlu0 %3099
        %v3101 = vsel %vm889, %v3079, 0.0
        %3102 = vadd.xlane.f32.xlu0 %v3101
        %v3103 = vpop.xlane.xlu0 %3102
        %v3104 = vsel %vm889, %v3080, 0.0
        %3105 = vadd.xlane.f32.xlu0 %v3104
        %v3106 = vpop.xlane.xlu0 %3105
        %v3107 = vsel %vm889, %v3081, 0.0
        %3108 = vadd.xlane.f32.xlu0 %v3107
        %v3109 = vpop.xlane.xlu0 %3108
        %v3110 = vsel %vm889, %v3082, 0.0
        %3111 = vadd.xlane.f32.xlu0 %v3110
        %v3112 = vpop.xlane.xlu0 %3111
        %v3113 = vsel %vm889, %v3083, 0.0
        %3114 = vadd.xlane.f32.xlu0 %v3113
        %v3115 = vpop.xlane.xlu0 %3114
        %v3116 = vsel %vm889, %v3084, 0.0
        %3117 = vadd.xlane.f32.xlu0 %v3116
        %v3118 = vpop.xlane.xlu0 %3117
        %v3119 = vsel %vm889, %v3085, 0.0
        %3120 = vadd.xlane.f32.xlu0 %v3119
        %v3121 = vpop.xlane.xlu0 %3120
        %v3122 = vsel %vm889, %v3086, 0.0
        %3123 = vadd.xlane.f32.xlu0 %v3122
        %v3124 = vpop.xlane.xlu0 %3123
        %v3125 = vsel %vm889, %v3087, 0.0
        %3126 = vadd.xlane.f32.xlu0 %v3125
        %v3127 = vpop.xlane.xlu0 %3126
        %v3128 = vsel %vm889, %v3088, 0.0
        %3129 = vadd.xlane.f32.xlu0 %v3128
        %v3130 = vpop.xlane.xlu0 %3129
        %v3131 = vsel %vm889, %v3089, 0.0
        %3132 = vadd.xlane.f32.xlu0 %v3131
        %v3133 = vpop.xlane.xlu0 %3132
        %v3134 = vsel %vm889, %v3090, 0.0
        %3135 = vadd.xlane.f32.xlu0 %v3134
        %v3136 = vpop.xlane.xlu0 %3135
        %v3137 = vsel %vm889, %v3091, 0.0
        %3138 = vadd.xlane.f32.xlu0 %v3137
        %v3139 = vpop.xlane.xlu0 %3138
        %v3140 = vmul.f32 %v3094, %v944
        %v3141 = vmul.f32 %v3097, %v944
        %v3142 = vmul.f32 %v3100, %v944
        %v3143 = vmul.f32 %v3103, %v944
        %v3144 = vmul.f32 %v3106, %v944
        %v3145 = vmul.f32 %v3109, %v944
        %v3146 = vmul.f32 %v3112, %v944
        %v3147 = vmul.f32 %v3115, %v944
        %v3148 = vmul.f32 %v3118, %v944
        %v3149 = vmul.f32 %v3121, %v944
        %v3150 = vmul.f32 %v3124, %v944
        %v3151 = vmul.f32 %v3127, %v944
        %v3152 = vmul.f32 %v3130, %v944
        %v3153 = vmul.f32 %v3133, %v944
        %v3154 = vmul.f32 %v3136, %v944
        %v3155 = vmul.f32 %v3139, %v944
        %v3156 = vadd.f32 %v3140, 1e-05
        %v3157 = vadd.f32 %v3141, 1e-05
        %v3158 = vadd.f32 %v3142, 1e-05
        %v3159 = vadd.f32 %v3143, 1e-05
        %v3160 = vadd.f32 %v3144, 1e-05
        %v3161 = vadd.f32 %v3145, 1e-05
        %v3162 = vadd.f32 %v3146, 1e-05
        %v3163 = vadd.f32 %v3147, 1e-05
        %v3164 = vadd.f32 %v3148, 1e-05
        %v3165 = vadd.f32 %v3149, 1e-05
        %v3166 = vadd.f32 %v3150, 1e-05
        %v3167 = vadd.f32 %v3151, 1e-05
        %v3168 = vadd.f32 %v3152, 1e-05
        %v3169 = vadd.f32 %v3153, 1e-05
        %v3170 = vadd.f32 %v3154, 1e-05
        %v3171 = vadd.f32 %v3155, 1e-05
        %v3172 = vrsqrt.pop %v3156
        %v3173 = vmul.f32 %v3172, %v3156
        %v3174 = vmul.f32 %v3173, %v3172
        %v3175 = vmul.f32 0.5, %v3174
        %v3176 = vsub.f32 1.5, %v3175
        %v3177 = vmul.f32 %v3172, %v3176
        %vm3178 = vweird.f32 %v3156
        %vm3179 = vweird.f32 %v3172
        %vm3180 = vmor %vm3178, %vm3179
        %v3181 = vsel %vm3180, %v3172, %v3177
        %v3182 = vrsqrt.pop %v3157
        %v3183 = vmul.f32 %v3182, %v3157
        %v3184 = vmul.f32 %v3183, %v3182
        %v3185 = vmul.f32 0.5, %v3184
        %v3186 = vsub.f32 1.5, %v3185
        %v3187 = vmul.f32 %v3182, %v3186
        %vm3188 = vweird.f32 %v3157
        %vm3189 = vweird.f32 %v3182
        %vm3190 = vmor %vm3188, %vm3189
        %v3191 = vsel %vm3190, %v3182, %v3187
        %v3192 = vrsqrt.pop %v3158
        %v3193 = vmul.f32 %v3192, %v3158
        %v3194 = vmul.f32 %v3193, %v3192
        %v3195 = vmul.f32 0.5, %v3194
        %v3196 = vsub.f32 1.5, %v3195
        %v3197 = vmul.f32 %v3192, %v3196
        %vm3198 = vweird.f32 %v3158
        %vm3199 = vweird.f32 %v3192
        %vm3200 = vmor %vm3198, %vm3199
        %v3201 = vsel %vm3200, %v3192, %v3197
        %v3202 = vrsqrt.pop %v3159
        %v3203 = vmul.f32 %v3202, %v3159
        %v3204 = vmul.f32 %v3203, %v3202
        %v3205 = vmul.f32 0.5, %v3204
        %v3206 = vsub.f32 1.5, %v3205
        %v3207 = vmul.f32 %v3202, %v3206
        %vm3208 = vweird.f32 %v3159
        %vm3209 = vweird.f32 %v3202
        %vm3210 = vmor %vm3208, %vm3209
        %v3211 = vsel %vm3210, %v3202, %v3207
        %v3212 = vrsqrt.pop %v3160
        %v3213 = vmul.f32 %v3212, %v3160
        %v3214 = vmul.f32 %v3213, %v3212
        %v3215 = vmul.f32 0.5, %v3214
        %v3216 = vsub.f32 1.5, %v3215
        %v3217 = vmul.f32 %v3212, %v3216
        %vm3218 = vweird.f32 %v3160
        %vm3219 = vweird.f32 %v3212
        %vm3220 = vmor %vm3218, %vm3219
        %v3221 = vsel %vm3220, %v3212, %v3217
        %v3222 = vrsqrt.pop %v3161
        %v3223 = vmul.f32 %v3222, %v3161
        %v3224 = vmul.f32 %v3223, %v3222
        %v3225 = vmul.f32 0.5, %v3224
        %v3226 = vsub.f32 1.5, %v3225
        %v3227 = vmul.f32 %v3222, %v3226
        %vm3228 = vweird.f32 %v3161
        %vm3229 = vweird.f32 %v3222
        %vm3230 = vmor %vm3228, %vm3229
        %v3231 = vsel %vm3230, %v3222, %v3227
        %v3232 = vrsqrt.pop %v3162
        %v3233 = vmul.f32 %v3232, %v3162
        %v3234 = vmul.f32 %v3233, %v3232
        %v3235 = vmul.f32 0.5, %v3234
        %v3236 = vsub.f32 1.5, %v3235
        %v3237 = vmul.f32 %v3232, %v3236
        %vm3238 = vweird.f32 %v3162
        %vm3239 = vweird.f32 %v3232
        %vm3240 = vmor %vm3238, %vm3239
        %v3241 = vsel %vm3240, %v3232, %v3237
        %v3242 = vrsqrt.pop %v3163
        %v3243 = vmul.f32 %v3242, %v3163
        %v3244 = vmul.f32 %v3243, %v3242
        %v3245 = vmul.f32 0.5, %v3244
        %v3246 = vsub.f32 1.5, %v3245
        %v3247 = vmul.f32 %v3242, %v3246
        %vm3248 = vweird.f32 %v3163
        %vm3249 = vweird.f32 %v3242
        %vm3250 = vmor %vm3248, %vm3249
        %v3251 = vsel %vm3250, %v3242, %v3247
        %v3252 = vrsqrt.pop %v3164
        %v3253 = vmul.f32 %v3252, %v3164
        %v3254 = vmul.f32 %v3253, %v3252
        %v3255 = vmul.f32 0.5, %v3254
        %v3256 = vsub.f32 1.5, %v3255
        %v3257 = vmul.f32 %v3252, %v3256
        %vm3258 = vweird.f32 %v3164
        %vm3259 = vweird.f32 %v3252
        %vm3260 = vmor %vm3258, %vm3259
        %v3261 = vsel %vm3260, %v3252, %v3257
        %v3262 = vrsqrt.pop %v3165
        %v3263 = vmul.f32 %v3262, %v3165
        %v3264 = vmul.f32 %v3263, %v3262
        %v3265 = vmul.f32 0.5, %v3264
        %v3266 = vsub.f32 1.5, %v3265
        %v3267 = vmul.f32 %v3262, %v3266
        %vm3268 = vweird.f32 %v3165
        %vm3269 = vweird.f32 %v3262
        %vm3270 = vmor %vm3268, %vm3269
        %v3271 = vsel %vm3270, %v3262, %v3267
        %v3272 = vrsqrt.pop %v3166
        %v3273 = vmul.f32 %v3272, %v3166
        %v3274 = vmul.f32 %v3273, %v3272
        %v3275 = vmul.f32 0.5, %v3274
        %v3276 = vsub.f32 1.5, %v3275
        %v3277 = vmul.f32 %v3272, %v3276
        %vm3278 = vweird.f32 %v3166
        %vm3279 = vweird.f32 %v3272
        %vm3280 = vmor %vm3278, %vm3279
        %v3281 = vsel %vm3280, %v3272, %v3277
        %v3282 = vrsqrt.pop %v3167
        %v3283 = vmul.f32 %v3282, %v3167
        %v3284 = vmul.f32 %v3283, %v3282
        %v3285 = vmul.f32 0.5, %v3284
        %v3286 = vsub.f32 1.5, %v3285
        %v3287 = vmul.f32 %v3282, %v3286
        %vm3288 = vweird.f32 %v3167
        %vm3289 = vweird.f32 %v3282
        %vm3290 = vmor %vm3288, %vm3289
        %v3291 = vsel %vm3290, %v3282, %v3287
        %v3292 = vrsqrt.pop %v3168
        %v3293 = vmul.f32 %v3292, %v3168
        %v3294 = vmul.f32 %v3293, %v3292
        %v3295 = vmul.f32 0.5, %v3294
        %v3296 = vsub.f32 1.5, %v3295
        %v3297 = vmul.f32 %v3292, %v3296
        %vm3298 = vweird.f32 %v3168
        %vm3299 = vweird.f32 %v3292
        %vm3300 = vmor %vm3298, %vm3299
        %v3301 = vsel %vm3300, %v3292, %v3297
        %v3302 = vrsqrt.pop %v3169
        %v3303 = vmul.f32 %v3302, %v3169
        %v3304 = vmul.f32 %v3303, %v3302
        %v3305 = vmul.f32 0.5, %v3304
        %v3306 = vsub.f32 1.5, %v3305
        %v3307 = vmul.f32 %v3302, %v3306
        %vm3308 = vweird.f32 %v3169
        %vm3309 = vweird.f32 %v3302
        %vm3310 = vmor %vm3308, %vm3309
        %v3311 = vsel %vm3310, %v3302, %v3307
        %v3312 = vrsqrt.pop %v3170
        %v3313 = vmul.f32 %v3312, %v3170
        %v3314 = vmul.f32 %v3313, %v3312
        %v3315 = vmul.f32 0.5, %v3314
        %v3316 = vsub.f32 1.5, %v3315
        %v3317 = vmul.f32 %v3312, %v3316
        %vm3318 = vweird.f32 %v3170
        %vm3319 = vweird.f32 %v3312
        %vm3320 = vmor %vm3318, %vm3319
        %v3321 = vsel %vm3320, %v3312, %v3317
        %v3322 = vrsqrt.pop %v3171
        %v3323 = vmul.f32 %v3322, %v3171
        %v3324 = vmul.f32 %v3323, %v3322
        %v3325 = vmul.f32 0.5, %v3324
        %v3326 = vsub.f32 1.5, %v3325
        %v3327 = vmul.f32 %v3322, %v3326
        %vm3328 = vweird.f32 %v3171
        %vm3329 = vweird.f32 %v3322
        %vm3330 = vmor %vm3328, %vm3329
        %v3331 = vsel %vm3330, %v3322, %v3327
        %v3332 = vmul.f32 %v3060, %v3181
        %v3333 = vmul.f32 %v3061, %v3191
        %v3334 = vmul.f32 %v3062, %v3201
        %v3335 = vmul.f32 %v3063, %v3211
        %v3336 = vmul.f32 %v3064, %v3221
        %v3337 = vmul.f32 %v3065, %v3231
        %v3338 = vmul.f32 %v3066, %v3241
        %v3339 = vmul.f32 %v3067, %v3251
        %v3340 = vmul.f32 %v3068, %v3261
        %v3341 = vmul.f32 %v3069, %v3271
        %v3342 = vmul.f32 %v3070, %v3281
        %v3343 = vmul.f32 %v3071, %v3291
        %v3344 = vmul.f32 %v3072, %v3301
        %v3345 = vmul.f32 %v3073, %v3311
        %v3346 = vmul.f32 %v3074, %v3321
        %v3347 = vmul.f32 %v3075, %v3331
        %v3348 = vmul.f32 %v3332, %v1250
        %v3349 = vmul.f32 %v3333, %v1250
        %v3350 = vmul.f32 %v3334, %v1250
        %v3351 = vmul.f32 %v3335, %v1250
        %v3352 = vmul.f32 %v3336, %v1250
        %v3353 = vmul.f32 %v3337, %v1250
        %v3354 = vmul.f32 %v3338, %v1250
        %v3355 = vmul.f32 %v3339, %v1250
        %v3356 = vmul.f32 %v3340, %v1250
        %v3357 = vmul.f32 %v3341, %v1250
        %v3358 = vmul.f32 %v3342, %v1250
        %v3359 = vmul.f32 %v3343, %v1250
        %v3360 = vmul.f32 %v3344, %v1250
        %v3361 = vmul.f32 %v3345, %v1250
        %v3362 = vmul.f32 %v3346, %v1250
        %v3363 = vmul.f32 %v3347, %v1250
        %v3364 = vadd.f32 %v3348, %v1269
        %v3365 = vadd.f32 %v3349, %v1269
        %v3366 = vadd.f32 %v3350, %v1269
        %v3367 = vadd.f32 %v3351, %v1269
        %v3368 = vadd.f32 %v3352, %v1269
        %v3369 = vadd.f32 %v3353, %v1269
        %v3370 = vadd.f32 %v3354, %v1269
        %v3371 = vadd.f32 %v3355, %v1269
        %v3372 = vadd.f32 %v3356, %v1269
        %v3373 = vadd.f32 %v3357, %v1269
        %v3374 = vadd.f32 %v3358, %v1269
        %v3375 = vadd.f32 %v3359, %v1269
        %v3376 = vadd.f32 %v3360, %v1269
        %v3377 = vadd.f32 %v3361, %v1269
        %v3378 = vadd.f32 %v3362, %v1269
        %v3379 = vadd.f32 %v3363, %v1269
        %v3380 = vadd.f32 %v2949, %v3364
        %v3381 = vadd.f32 %v2952, %v3365
        %v3382 = vadd.f32 %v2955, %v3366
        %v3383 = vadd.f32 %v2958, %v3367
        %v3384 = vadd.f32 %v2961, %v3368
        %v3385 = vadd.f32 %v2964, %v3369
        %v3386 = vadd.f32 %v2967, %v3370
        %v3387 = vadd.f32 %v2970, %v3371
        %v3388 = vadd.f32 %v2973, %v3372
        %v3389 = vadd.f32 %v2976, %v3373
        %v3390 = vadd.f32 %v2979, %v3374
        %v3391 = vadd.f32 %v2982, %v3375
        %v3392 = vadd.f32 %v2985, %v3376
        %v3393 = vadd.f32 %v2988, %v3377
        %v3394 = vadd.f32 %v2991, %v3378
        %v3395 = vadd.f32 %v2994, %v3379
        %v3396 = vld [vmem:[%s10] sm:$0xff]
        %v3397 = vld [vmem:[%s10 + $0x8] sm:$0xff]
        %v3398 = vld [vmem:[%s10 + $0x10] sm:$0xff]
        %v3399 = vld [vmem:[%s10 + $0x18] sm:$0xff]
        %v3400 = vld [vmem:[%s11] sm:$0x1]
        %v3402 = vperm.slane %v3400, 0
        %v3405 = vsel %vm889, %v3380, 0
        %v3408 = vsel %vm889, %v3381, 0
        %v3411 = vsel %vm889, %v3382, 0
        %v3414 = vsel %vm889, %v3383, 0
        %v3417 = vsel %vm889, %v3384, 0
        %v3420 = vsel %vm889, %v3385, 0
        %v3423 = vsel %vm889, %v3386, 0
        %v3426 = vsel %vm889, %v3387, 0
        %v3429 = vsel %vm889, %v3388, 0
        %v3432 = vsel %vm889, %v3389, 0
        %v3435 = vsel %vm889, %v3390, 0
        %v3438 = vsel %vm889, %v3391, 0
        %v3441 = vsel %vm889, %v3392, 0
        %v3444 = vsel %vm889, %v3393, 0
        %v3447 = vsel %vm889, %v3394, 0
        %v3450 = vsel %vm889, %v3395, 0
        %3452 = vmatpush.msra.mxu0 0.0
        %3453 = vmatpush.msra.mxu0 0.0
        %3454 = vmatpush.msra.mxu0 0.0
        %3455 = vmatpush.msra.mxu0 0.0
        %3456 = vmatpush.msra.mxu0 0.0
        %3457 = vmatpush.msra.mxu0 0.0
        %3458 = vmatpush.msra.mxu0 0.0
        %3459 = vmatpush.msra.mxu0 0.0
        %3460 = vmatpush.msra.mxu0 0.0
        %3461 = vmatpush.msra.mxu0 0.0
        %3462 = vmatpush.msra.mxu0 0.0
        %3463 = vmatpush.msra.mxu0 0.0
        %3464 = vmatpush.msra.mxu0 %v3399
        %3465 = vmatpush.msra.mxu0 %v3398
        %3466 = vmatpush.msra.mxu0 %v3397
        %3467 = vmatpush.msra.mxu0 %v3396
        %3468 = vmatmul.f32.gmra.mxu0 %v3405
        %v3469 = vpop.f32.mrf.mxu0
        %v3470 = vadd.f32 %v3402, %v3469
        %3471 = vmatmul.f32.gmra.mxu0 %v3408
        %v3472 = vpop.f32.mrf.mxu0
        %v3473 = vadd.f32 %v3402, %v3472
        %3474 = vmatmul.f32.gmra.mxu0 %v3411
        %v3475 = vpop.f32.mrf.mxu0
        %v3476 = vadd.f32 %v3402, %v3475
        %3477 = vmatmul.f32.gmra.mxu0 %v3414
        %v3478 = vpop.f32.mrf.mxu0
        %v3479 = vadd.f32 %v3402, %v3478
        %3480 = vmatmul.f32.gmra.mxu0 %v3417
        %v3481 = vpop.f32.mrf.mxu0
        %v3482 = vadd.f32 %v3402, %v3481
        %3483 = vmatmul.f32.gmra.mxu0 %v3420
        %v3484 = vpop.f32.mrf.mxu0
        %v3485 = vadd.f32 %v3402, %v3484
        %3486 = vmatmul.f32.gmra.mxu0 %v3423
        %v3487 = vpop.f32.mrf.mxu0
        %v3488 = vadd.f32 %v3402, %v3487
        %3489 = vmatmul.f32.gmra.mxu0 %v3426
        %v3490 = vpop.f32.mrf.mxu0
        %v3491 = vadd.f32 %v3402, %v3490
        %3492 = vmatmul.f32.gmra.mxu0 %v3429
        %v3493 = vpop.f32.mrf.mxu0
        %v3494 = vadd.f32 %v3402, %v3493
        %3495 = vmatmul.f32.gmra.mxu0 %v3432
        %v3496 = vpop.f32.mrf.mxu0
        %v3497 = vadd.f32 %v3402, %v3496
        %3498 = vmatmul.f32.gmra.mxu0 %v3435
        %v3499 = vpop.f32.mrf.mxu0
        %v3500 = vadd.f32 %v3402, %v3499
        %3501 = vmatmul.f32.gmra.mxu0 %v3438
        %v3502 = vpop.f32.mrf.mxu0
        %v3503 = vadd.f32 %v3402, %v3502
        %3504 = vmatmul.f32.gmra.mxu0 %v3441
        %v3505 = vpop.f32.mrf.mxu0
        %v3506 = vadd.f32 %v3402, %v3505
        %3507 = vmatmul.f32.gmra.mxu0 %v3444
        %v3508 = vpop.f32.mrf.mxu0
        %v3509 = vadd.f32 %v3402, %v3508
        %3510 = vmatmul.f32.gmra.mxu0 %v3447
        %v3511 = vpop.f32.mrf.mxu0
        %v3512 = vadd.f32 %v3402, %v3511
        %3513 = vmatmul.f32.gmra.mxu0 %v3450
        %v3514 = vpop.f32.mrf.mxu0
        %v3515 = vadd.f32 %v3402, %v3514
        %3516 = vdwg.mxu0
        %v3517 = vmax.f32 %v3470, 0.0
        %v3518 = vmax.f32 %v3473, 0.0
        %v3519 = vmax.f32 %v3476, 0.0
        %v3520 = vmax.f32 %v3479, 0.0
        %v3521 = vmax.f32 %v3482, 0.0
        %v3522 = vmax.f32 %v3485, 0.0
        %v3523 = vmax.f32 %v3488, 0.0
        %v3524 = vmax.f32 %v3491, 0.0
        %v3525 = vmax.f32 %v3494, 0.0
        %v3526 = vmax.f32 %v3497, 0.0
        %v3527 = vmax.f32 %v3500, 0.0
        %v3528 = vmax.f32 %v3503, 0.0
        %v3529 = vmax.f32 %v3506, 0.0
        %v3530 = vmax.f32 %v3509, 0.0
        %v3531 = vmax.f32 %v3512, 0.0
        %v3532 = vmax.f32 %v3515, 0.0
        %v3533 = vld [vmem:[%s12] sm:$0xff]
        %v3534 = vld [vmem:[%s12 + $0x8] sm:$0xff]
        %v3535 = vld [vmem:[%s12 + $0x10] sm:$0xff]
        %v3536 = vld [vmem:[%s12 + $0x18] sm:$0xff]
        %v3537 = vld [vmem:[%s12 + $0x20] sm:$0xff]
        %v3538 = vld [vmem:[%s12 + $0x28] sm:$0xff]
        %v3539 = vld [vmem:[%s12 + $0x30] sm:$0xff]
        %v3540 = vld [vmem:[%s12 + $0x38] sm:$0xff]
        %v3541 = vld [vmem:[%s12 + $0x40] sm:$0xff]
        %v3542 = vld [vmem:[%s12 + $0x48] sm:$0xff]
        %v3543 = vld [vmem:[%s12 + $0x50] sm:$0xff]
        %v3544 = vld [vmem:[%s12 + $0x58] sm:$0xff]
        %v3545 = vld [vmem:[%s12 + $0x60] sm:$0xff]
        %v3546 = vld [vmem:[%s12 + $0x68] sm:$0xff]
        %v3547 = vld [vmem:[%s12 + $0x70] sm:$0xff]
        %v3548 = vld [vmem:[%s12 + $0x78] sm:$0xff]
        %v3549 = vld [vmem:[%s13] sm:$0x1]
        %v3551 = vperm.slane %v3549, 0
        %3553 = vmatpush.msra.mxu0 %v3548
        %3554 = vmatpush.msra.mxu0 %v3547
        %3555 = vmatpush.msra.mxu0 %v3546
        %3556 = vmatpush.msra.mxu0 %v3545
        %3557 = vmatpush.msra.mxu0 %v3544
        %3558 = vmatpush.msra.mxu0 %v3543
        %3559 = vmatpush.msra.mxu0 %v3542
        %3560 = vmatpush.msra.mxu0 %v3541
        %3561 = vmatpush.msra.mxu0 %v3540
        %3562 = vmatpush.msra.mxu0 %v3539
        %3563 = vmatpush.msra.mxu0 %v3538
        %3564 = vmatpush.msra.mxu0 %v3537
        %3565 = vmatpush.msra.mxu0 %v3536
        %3566 = vmatpush.msra.mxu0 %v3535
        %3567 = vmatpush.msra.mxu0 %v3534
        %3568 = vmatpush.msra.mxu0 %v3533
        %3569 = vmatmul.f32.gmra.mxu0 %v3517
        %v3570 = vpop.f32.mrf.mxu0
        %v3571 = vadd.f32 %v3551, %v3570
        %3572 = vmatmul.f32.gmra.mxu0 %v3518
        %v3573 = vpop.f32.mrf.mxu0
        %v3574 = vadd.f32 %v3551, %v3573
        %3575 = vmatmul.f32.gmra.mxu0 %v3519
        %v3576 = vpop.f32.mrf.mxu0
        %v3577 = vadd.f32 %v3551, %v3576
        %3578 = vmatmul.f32.gmra.mxu0 %v3520
        %v3579 = vpop.f32.mrf.mxu0
        %v3580 = vadd.f32 %v3551, %v3579
        %3581 = vmatmul.f32.gmra.mxu0 %v3521
        %v3582 = vpop.f32.mrf.mxu0
        %v3583 = vadd.f32 %v3551, %v3582
        %3584 = vmatmul.f32.gmra.mxu0 %v3522
        %v3585 = vpop.f32.mrf.mxu0
        %v3586 = vadd.f32 %v3551, %v3585
        %3587 = vmatmul.f32.gmra.mxu0 %v3523
        %v3588 = vpop.f32.mrf.mxu0
        %v3589 = vadd.f32 %v3551, %v3588
        %3590 = vmatmul.f32.gmra.mxu0 %v3524
        %v3591 = vpop.f32.mrf.mxu0
        %v3592 = vadd.f32 %v3551, %v3591
        %3593 = vmatmul.f32.gmra.mxu0 %v3525
        %v3594 = vpop.f32.mrf.mxu0
        %v3595 = vadd.f32 %v3551, %v3594
        %3596 = vmatmul.f32.gmra.mxu0 %v3526
        %v3597 = vpop.f32.mrf.mxu0
        %v3598 = vadd.f32 %v3551, %v3597
        %3599 = vmatmul.f32.gmra.mxu0 %v3527
        %v3600 = vpop.f32.mrf.mxu0
        %v3601 = vadd.f32 %v3551, %v3600
        %3602 = vmatmul.f32.gmra.mxu0 %v3528
        %v3603 = vpop.f32.mrf.mxu0
        %v3604 = vadd.f32 %v3551, %v3603
        %3605 = vmatmul.f32.gmra.mxu0 %v3529
        %v3606 = vpop.f32.mrf.mxu0
        %v3607 = vadd.f32 %v3551, %v3606
        %3608 = vmatmul.f32.gmra.mxu0 %v3530
        %v3609 = vpop.f32.mrf.mxu0
        %v3610 = vadd.f32 %v3551, %v3609
        %3611 = vmatmul.f32.gmra.mxu0 %v3531
        %v3612 = vpop.f32.mrf.mxu0
        %v3613 = vadd.f32 %v3551, %v3612
        %3614 = vmatmul.f32.gmra.mxu0 %v3532
        %v3615 = vpop.f32.mrf.mxu0
        %v3616 = vadd.f32 %v3551, %v3615
        %3617 = vdwg.mxu0
        %v3618 = vsel %vm889, %v3571, 0.0
        %3619 = vadd.xlane.f32.xlu0 %v3618
        %v3620 = vpop.xlane.xlu0 %3619
        %v3621 = vsel %vm889, %v3574, 0.0
        %3622 = vadd.xlane.f32.xlu0 %v3621
        %v3623 = vpop.xlane.xlu0 %3622
        %v3624 = vsel %vm889, %v3577, 0.0
        %3625 = vadd.xlane.f32.xlu0 %v3624
        %v3626 = vpop.xlane.xlu0 %3625
        %v3627 = vsel %vm889, %v3580, 0.0
        %3628 = vadd.xlane.f32.xlu0 %v3627
        %v3629 = vpop.xlane.xlu0 %3628
        %v3630 = vsel %vm889, %v3583, 0.0
        %3631 = vadd.xlane.f32.xlu0 %v3630
        %v3632 = vpop.xlane.xlu0 %3631
        %v3633 = vsel %vm889, %v3586, 0.0
        %3634 = vadd.xlane.f32.xlu0 %v3633
        %v3635 = vpop.xlane.xlu0 %3634
        %v3636 = vsel %vm889, %v3589, 0.0
        %3637 = vadd.xlane.f32.xlu0 %v3636
        %v3638 = vpop.xlane.xlu0 %3637
        %v3639 = vsel %vm889, %v3592, 0.0
        %3640 = vadd.xlane.f32.xlu0 %v3639
        %v3641 = vpop.xlane.xlu0 %3640
        %v3642 = vsel %vm889, %v3595, 0.0
        %3643 = vadd.xlane.f32.xlu0 %v3642
        %v3644 = vpop.xlane.xlu0 %3643
        %v3645 = vsel %vm889, %v3598, 0.0
        %3646 = vadd.xlane.f32.xlu0 %v3645
        %v3647 = vpop.xlane.xlu0 %3646
        %v3648 = vsel %vm889, %v3601, 0.0
        %3649 = vadd.xlane.f32.xlu0 %v3648
        %v3650 = vpop.xlane.xlu0 %3649
        %v3651 = vsel %vm889, %v3604, 0.0
        %3652 = vadd.xlane.f32.xlu0 %v3651
        %v3653 = vpop.xlane.xlu0 %3652
        %v3654 = vsel %vm889, %v3607, 0.0
        %3655 = vadd.xlane.f32.xlu0 %v3654
        %v3656 = vpop.xlane.xlu0 %3655
        %v3657 = vsel %vm889, %v3610, 0.0
        %3658 = vadd.xlane.f32.xlu0 %v3657
        %v3659 = vpop.xlane.xlu0 %3658
        %v3660 = vsel %vm889, %v3613, 0.0
        %3661 = vadd.xlane.f32.xlu0 %v3660
        %v3662 = vpop.xlane.xlu0 %3661
        %v3663 = vsel %vm889, %v3616, 0.0
        %3664 = vadd.xlane.f32.xlu0 %v3663
        %v3665 = vpop.xlane.xlu0 %3664
        %v3666 = vmul.f32 %v3620, %v944
        %v3667 = vmul.f32 %v3623, %v944
        %v3668 = vmul.f32 %v3626, %v944
        %v3669 = vmul.f32 %v3629, %v944
        %v3670 = vmul.f32 %v3632, %v944
        %v3671 = vmul.f32 %v3635, %v944
        %v3672 = vmul.f32 %v3638, %v944
        %v3673 = vmul.f32 %v3641, %v944
        %v3674 = vmul.f32 %v3644, %v944
        %v3675 = vmul.f32 %v3647, %v944
        %v3676 = vmul.f32 %v3650, %v944
        %v3677 = vmul.f32 %v3653, %v944
        %v3678 = vmul.f32 %v3656, %v944
        %v3679 = vmul.f32 %v3659, %v944
        %v3680 = vmul.f32 %v3662, %v944
        %v3681 = vmul.f32 %v3665, %v944
        %v3682 = vsub.f32 %v3571, %v3666
        %v3683 = vsub.f32 %v3574, %v3667
        %v3684 = vsub.f32 %v3577, %v3668
        %v3685 = vsub.f32 %v3580, %v3669
        %v3686 = vsub.f32 %v3583, %v3670
        %v3687 = vsub.f32 %v3586, %v3671
        %v3688 = vsub.f32 %v3589, %v3672
        %v3689 = vsub.f32 %v3592, %v3673
        %v3690 = vsub.f32 %v3595, %v3674
        %v3691 = vsub.f32 %v3598, %v3675
        %v3692 = vsub.f32 %v3601, %v3676
        %v3693 = vsub.f32 %v3604, %v3677
        %v3694 = vsub.f32 %v3607, %v3678
        %v3695 = vsub.f32 %v3610, %v3679
        %v3696 = vsub.f32 %v3613, %v3680
        %v3697 = vsub.f32 %v3616, %v3681
        %v3698 = vmul.f32 %v3682, %v3682
        %v3699 = vmul.f32 %v3683, %v3683
        %v3700 = vmul.f32 %v3684, %v3684
        %v3701 = vmul.f32 %v3685, %v3685
        %v3702 = vmul.f32 %v3686, %v3686
        %v3703 = vmul.f32 %v3687, %v3687
        %v3704 = vmul.f32 %v3688, %v3688
        %v3705 = vmul.f32 %v3689, %v3689
        %v3706 = vmul.f32 %v3690, %v3690
        %v3707 = vmul.f32 %v3691, %v3691
        %v3708 = vmul.f32 %v3692, %v3692
        %v3709 = vmul.f32 %v3693, %v3693
        %v3710 = vmul.f32 %v3694, %v3694
        %v3711 = vmul.f32 %v3695, %v3695
        %v3712 = vmul.f32 %v3696, %v3696
        %v3713 = vmul.f32 %v3697, %v3697
        %v3714 = vsel %vm889, %v3698, 0.0
        %3715 = vadd.xlane.f32.xlu0 %v3714
        %v3716 = vpop.xlane.xlu0 %3715
        %v3717 = vsel %vm889, %v3699, 0.0
        %3718 = vadd.xlane.f32.xlu0 %v3717
        %v3719 = vpop.xlane.xlu0 %3718
        %v3720 = vsel %vm889, %v3700, 0.0
        %3721 = vadd.xlane.f32.xlu0 %v3720
        %v3722 = vpop.xlane.xlu0 %3721
        %v3723 = vsel %vm889, %v3701, 0.0
        %3724 = vadd.xlane.f32.xlu0 %v3723
        %v3725 = vpop.xlane.xlu0 %3724
        %v3726 = vsel %vm889, %v3702, 0.0
        %3727 = vadd.xlane.f32.xlu0 %v3726
        %v3728 = vpop.xlane.xlu0 %3727
        %v3729 = vsel %vm889, %v3703, 0.0
        %3730 = vadd.xlane.f32.xlu0 %v3729
        %v3731 = vpop.xlane.xlu0 %3730
        %v3732 = vsel %vm889, %v3704, 0.0
        %3733 = vadd.xlane.f32.xlu0 %v3732
        %v3734 = vpop.xlane.xlu0 %3733
        %v3735 = vsel %vm889, %v3705, 0.0
        %3736 = vadd.xlane.f32.xlu0 %v3735
        %v3737 = vpop.xlane.xlu0 %3736
        %v3738 = vsel %vm889, %v3706, 0.0
        %3739 = vadd.xlane.f32.xlu0 %v3738
        %v3740 = vpop.xlane.xlu0 %3739
        %v3741 = vsel %vm889, %v3707, 0.0
        %3742 = vadd.xlane.f32.xlu0 %v3741
        %v3743 = vpop.xlane.xlu0 %3742
        %v3744 = vsel %vm889, %v3708, 0.0
        %3745 = vadd.xlane.f32.xlu0 %v3744
        %v3746 = vpop.xlane.xlu0 %3745
        %v3747 = vsel %vm889, %v3709, 0.0
        %3748 = vadd.xlane.f32.xlu0 %v3747
        %v3749 = vpop.xlane.xlu0 %3748
        %v3750 = vsel %vm889, %v3710, 0.0
        %3751 = vadd.xlane.f32.xlu0 %v3750
        %v3752 = vpop.xlane.xlu0 %3751
        %v3753 = vsel %vm889, %v3711, 0.0
        %3754 = vadd.xlane.f32.xlu0 %v3753
        %v3755 = vpop.xlane.xlu0 %3754
        %v3756 = vsel %vm889, %v3712, 0.0
        %3757 = vadd.xlane.f32.xlu0 %v3756
        %v3758 = vpop.xlane.xlu0 %3757
        %v3759 = vsel %vm889, %v3713, 0.0
        %3760 = vadd.xlane.f32.xlu0 %v3759
        %v3761 = vpop.xlane.xlu0 %3760
        %v3762 = vmul.f32 %v3716, %v944
        %v3763 = vmul.f32 %v3719, %v944
        %v3764 = vmul.f32 %v3722, %v944
        %v3765 = vmul.f32 %v3725, %v944
        %v3766 = vmul.f32 %v3728, %v944
        %v3767 = vmul.f32 %v3731, %v944
        %v3768 = vmul.f32 %v3734, %v944
        %v3769 = vmul.f32 %v3737, %v944
        %v3770 = vmul.f32 %v3740, %v944
        %v3771 = vmul.f32 %v3743, %v944
        %v3772 = vmul.f32 %v3746, %v944
        %v3773 = vmul.f32 %v3749, %v944
        %v3774 = vmul.f32 %v3752, %v944
        %v3775 = vmul.f32 %v3755, %v944
        %v3776 = vmul.f32 %v3758, %v944
        %v3777 = vmul.f32 %v3761, %v944
        %v3778 = vadd.f32 %v3762, 1e-05
        %v3779 = vadd.f32 %v3763, 1e-05
        %v3780 = vadd.f32 %v3764, 1e-05
        %v3781 = vadd.f32 %v3765, 1e-05
        %v3782 = vadd.f32 %v3766, 1e-05
        %v3783 = vadd.f32 %v3767, 1e-05
        %v3784 = vadd.f32 %v3768, 1e-05
        %v3785 = vadd.f32 %v3769, 1e-05
        %v3786 = vadd.f32 %v3770, 1e-05
        %v3787 = vadd.f32 %v3771, 1e-05
        %v3788 = vadd.f32 %v3772, 1e-05
        %v3789 = vadd.f32 %v3773, 1e-05
        %v3790 = vadd.f32 %v3774, 1e-05
        %v3791 = vadd.f32 %v3775, 1e-05
        %v3792 = vadd.f32 %v3776, 1e-05
        %v3793 = vadd.f32 %v3777, 1e-05
        %v3794 = vrsqrt.pop %v3778
        %v3795 = vmul.f32 %v3794, %v3778
        %v3796 = vmul.f32 %v3795, %v3794
        %v3797 = vmul.f32 0.5, %v3796
        %v3798 = vsub.f32 1.5, %v3797
        %v3799 = vmul.f32 %v3794, %v3798
        %vm3800 = vweird.f32 %v3778
        %vm3801 = vweird.f32 %v3794
        %vm3802 = vmor %vm3800, %vm3801
        %v3803 = vsel %vm3802, %v3794, %v3799
        %v3804 = vrsqrt.pop %v3779
        %v3805 = vmul.f32 %v3804, %v3779
        %v3806 = vmul.f32 %v3805, %v3804
        %v3807 = vmul.f32 0.5, %v3806
        %v3808 = vsub.f32 1.5, %v3807
        %v3809 = vmul.f32 %v3804, %v3808
        %vm3810 = vweird.f32 %v3779
        %vm3811 = vweird.f32 %v3804
        %vm3812 = vmor %vm3810, %vm3811
        %v3813 = vsel %vm3812, %v3804, %v3809
        %v3814 = vrsqrt.pop %v3780
        %v3815 = vmul.f32 %v3814, %v3780
        %v3816 = vmul.f32 %v3815, %v3814
        %v3817 = vmul.f32 0.5, %v3816
        %v3818 = vsub.f32 1.5, %v3817
        %v3819 = vmul.f32 %v3814, %v3818
        %vm3820 = vweird.f32 %v3780
        %vm3821 = vweird.f32 %v3814
        %vm3822 = vmor %vm3820, %vm3821
        %v3823 = vsel %vm3822, %v3814, %v3819
        %v3824 = vrsqrt.pop %v3781
        %v3825 = vmul.f32 %v3824, %v3781
        %v3826 = vmul.f32 %v3825, %v3824
        %v3827 = vmul.f32 0.5, %v3826
        %v3828 = vsub.f32 1.5, %v3827
        %v3829 = vmul.f32 %v3824, %v3828
        %vm3830 = vweird.f32 %v3781
        %vm3831 = vweird.f32 %v3824
        %vm3832 = vmor %vm3830, %vm3831
        %v3833 = vsel %vm3832, %v3824, %v3829
        %v3834 = vrsqrt.pop %v3782
        %v3835 = vmul.f32 %v3834, %v3782
        %v3836 = vmul.f32 %v3835, %v3834
        %v3837 = vmul.f32 0.5, %v3836
        %v3838 = vsub.f32 1.5, %v3837
        %v3839 = vmul.f32 %v3834, %v3838
        %vm3840 = vweird.f32 %v3782
        %vm3841 = vweird.f32 %v3834
        %vm3842 = vmor %vm3840, %vm3841
        %v3843 = vsel %vm3842, %v3834, %v3839
        %v3844 = vrsqrt.pop %v3783
        %v3845 = vmul.f32 %v3844, %v3783
        %v3846 = vmul.f32 %v3845, %v3844
        %v3847 = vmul.f32 0.5, %v3846
        %v3848 = vsub.f32 1.5, %v3847
        %v3849 = vmul.f32 %v3844, %v3848
        %vm3850 = vweird.f32 %v3783
        %vm3851 = vweird.f32 %v3844
        %vm3852 = vmor %vm3850, %vm3851
        %v3853 = vsel %vm3852, %v3844, %v3849
        %v3854 = vrsqrt.pop %v3784
        %v3855 = vmul.f32 %v3854, %v3784
        %v3856 = vmul.f32 %v3855, %v3854
        %v3857 = vmul.f32 0.5, %v3856
        %v3858 = vsub.f32 1.5, %v3857
        %v3859 = vmul.f32 %v3854, %v3858
        %vm3860 = vweird.f32 %v3784
        %vm3861 = vweird.f32 %v3854
        %vm3862 = vmor %vm3860, %vm3861
        %v3863 = vsel %vm3862, %v3854, %v3859
        %v3864 = vrsqrt.pop %v3785
        %v3865 = vmul.f32 %v3864, %v3785
        %v3866 = vmul.f32 %v3865, %v3864
        %v3867 = vmul.f32 0.5, %v3866
        %v3868 = vsub.f32 1.5, %v3867
        %v3869 = vmul.f32 %v3864, %v3868
        %vm3870 = vweird.f32 %v3785
        %vm3871 = vweird.f32 %v3864
        %vm3872 = vmor %vm3870, %vm3871
        %v3873 = vsel %vm3872, %v3864, %v3869
        %v3874 = vrsqrt.pop %v3786
        %v3875 = vmul.f32 %v3874, %v3786
        %v3876 = vmul.f32 %v3875, %v3874
        %v3877 = vmul.f32 0.5, %v3876
        %v3878 = vsub.f32 1.5, %v3877
        %v3879 = vmul.f32 %v3874, %v3878
        %vm3880 = vweird.f32 %v3786
        %vm3881 = vweird.f32 %v3874
        %vm3882 = vmor %vm3880, %vm3881
        %v3883 = vsel %vm3882, %v3874, %v3879
        %v3884 = vrsqrt.pop %v3787
        %v3885 = vmul.f32 %v3884, %v3787
        %v3886 = vmul.f32 %v3885, %v3884
        %v3887 = vmul.f32 0.5, %v3886
        %v3888 = vsub.f32 1.5, %v3887
        %v3889 = vmul.f32 %v3884, %v3888
        %vm3890 = vweird.f32 %v3787
        %vm3891 = vweird.f32 %v3884
        %vm3892 = vmor %vm3890, %vm3891
        %v3893 = vsel %vm3892, %v3884, %v3889
        %v3894 = vrsqrt.pop %v3788
        %v3895 = vmul.f32 %v3894, %v3788
        %v3896 = vmul.f32 %v3895, %v3894
        %v3897 = vmul.f32 0.5, %v3896
        %v3898 = vsub.f32 1.5, %v3897
        %v3899 = vmul.f32 %v3894, %v3898
        %vm3900 = vweird.f32 %v3788
        %vm3901 = vweird.f32 %v3894
        %vm3902 = vmor %vm3900, %vm3901
        %v3903 = vsel %vm3902, %v3894, %v3899
        %v3904 = vrsqrt.pop %v3789
        %v3905 = vmul.f32 %v3904, %v3789
        %v3906 = vmul.f32 %v3905, %v3904
        %v3907 = vmul.f32 0.5, %v3906
        %v3908 = vsub.f32 1.5, %v3907
        %v3909 = vmul.f32 %v3904, %v3908
        %vm3910 = vweird.f32 %v3789
        %vm3911 = vweird.f32 %v3904
        %vm3912 = vmor %vm3910, %vm3911
        %v3913 = vsel %vm3912, %v3904, %v3909
        %v3914 = vrsqrt.pop %v3790
        %v3915 = vmul.f32 %v3914, %v3790
        %v3916 = vmul.f32 %v3915, %v3914
        %v3917 = vmul.f32 0.5, %v3916
        %v3918 = vsub.f32 1.5, %v3917
        %v3919 = vmul.f32 %v3914, %v3918
        %vm3920 = vweird.f32 %v3790
        %vm3921 = vweird.f32 %v3914
        %vm3922 = vmor %vm3920, %vm3921
        %v3923 = vsel %vm3922, %v3914, %v3919
        %v3924 = vrsqrt.pop %v3791
        %v3925 = vmul.f32 %v3924, %v3791
        %v3926 = vmul.f32 %v3925, %v3924
        %v3927 = vmul.f32 0.5, %v3926
        %v3928 = vsub.f32 1.5, %v3927
        %v3929 = vmul.f32 %v3924, %v3928
        %vm3930 = vweird.f32 %v3791
        %vm3931 = vweird.f32 %v3924
        %vm3932 = vmor %vm3930, %vm3931
        %v3933 = vsel %vm3932, %v3924, %v3929
        %v3934 = vrsqrt.pop %v3792
        %v3935 = vmul.f32 %v3934, %v3792
        %v3936 = vmul.f32 %v3935, %v3934
        %v3937 = vmul.f32 0.5, %v3936
        %v3938 = vsub.f32 1.5, %v3937
        %v3939 = vmul.f32 %v3934, %v3938
        %vm3940 = vweird.f32 %v3792
        %vm3941 = vweird.f32 %v3934
        %vm3942 = vmor %vm3940, %vm3941
        %v3943 = vsel %vm3942, %v3934, %v3939
        %v3944 = vrsqrt.pop %v3793
        %v3945 = vmul.f32 %v3944, %v3793
        %v3946 = vmul.f32 %v3945, %v3944
        %v3947 = vmul.f32 0.5, %v3946
        %v3948 = vsub.f32 1.5, %v3947
        %v3949 = vmul.f32 %v3944, %v3948
        %vm3950 = vweird.f32 %v3793
        %vm3951 = vweird.f32 %v3944
        %vm3952 = vmor %vm3950, %vm3951
        %v3953 = vsel %vm3952, %v3944, %v3949
        %v3954 = vmul.f32 %v3682, %v3803
        %v3955 = vmul.f32 %v3683, %v3813
        %v3956 = vmul.f32 %v3684, %v3823
        %v3957 = vmul.f32 %v3685, %v3833
        %v3958 = vmul.f32 %v3686, %v3843
        %v3959 = vmul.f32 %v3687, %v3853
        %v3960 = vmul.f32 %v3688, %v3863
        %v3961 = vmul.f32 %v3689, %v3873
        %v3962 = vmul.f32 %v3690, %v3883
        %v3963 = vmul.f32 %v3691, %v3893
        %v3964 = vmul.f32 %v3692, %v3903
        %v3965 = vmul.f32 %v3693, %v3913
        %v3966 = vmul.f32 %v3694, %v3923
        %v3967 = vmul.f32 %v3695, %v3933
        %v3968 = vmul.f32 %v3696, %v3943
        %v3969 = vmul.f32 %v3697, %v3953
        %v3971 = vperm.slane %v846, 0
        %v3973 = vmul.f32 %v3954, %v3971
        %v3974 = vmul.f32 %v3955, %v3971
        %v3975 = vmul.f32 %v3956, %v3971
        %v3976 = vmul.f32 %v3957, %v3971
        %v3977 = vmul.f32 %v3958, %v3971
        %v3978 = vmul.f32 %v3959, %v3971
        %v3979 = vmul.f32 %v3960, %v3971
        %v3980 = vmul.f32 %v3961, %v3971
        %v3981 = vmul.f32 %v3962, %v3971
        %v3982 = vmul.f32 %v3963, %v3971
        %v3983 = vmul.f32 %v3964, %v3971
        %v3984 = vmul.f32 %v3965, %v3971
        %v3985 = vmul.f32 %v3966, %v3971
        %v3986 = vmul.f32 %v3967, %v3971
        %v3987 = vmul.f32 %v3968, %v3971
        %v3988 = vmul.f32 %v3969, %v3971
        %v3990 = vperm.slane %v847, 0
        %v3992 = vadd.f32 %v3973, %v3990
        %v3993 = vadd.f32 %v3974, %v3990
        %v3994 = vadd.f32 %v3975, %v3990
        %v3995 = vadd.f32 %v3976, %v3990
        %v3996 = vadd.f32 %v3977, %v3990
        %v3997 = vadd.f32 %v3978, %v3990
        %v3998 = vadd.f32 %v3979, %v3990
        %v3999 = vadd.f32 %v3980, %v3990
        %v4000 = vadd.f32 %v3981, %v3990
        %v4001 = vadd.f32 %v3982, %v3990
        %v4002 = vadd.f32 %v3983, %v3990
        %v4003 = vadd.f32 %v3984, %v3990
        %v4004 = vadd.f32 %v3985, %v3990
        %v4005 = vadd.f32 %v3986, %v3990
        %v4006 = vadd.f32 %v3987, %v3990
        %v4007 = vadd.f32 %v3988, %v3990
        %v4008 = vadd.f32 %v3571, %v3992
        %v4009 = vadd.f32 %v3574, %v3993
        %v4010 = vadd.f32 %v3577, %v3994
        %v4011 = vadd.f32 %v3580, %v3995
        %v4012 = vadd.f32 %v3583, %v3996
        %v4013 = vadd.f32 %v3586, %v3997
        %v4014 = vadd.f32 %v3589, %v3998
        %v4015 = vadd.f32 %v3592, %v3999
        %v4016 = vadd.f32 %v3595, %v4000
        %v4017 = vadd.f32 %v3598, %v4001
        %v4018 = vadd.f32 %v3601, %v4002
        %v4019 = vadd.f32 %v3604, %v4003
        %v4020 = vadd.f32 %v3607, %v4004
        %v4021 = vadd.f32 %v3610, %v4005
        %v4022 = vadd.f32 %v3613, %v4006
        %v4023 = vadd.f32 %v3616, %v4007
        %v4024 = vld [vmem:[%s14] sm:$0xff]
        %v4025 = vld [vmem:[%s14 + $0x8] sm:$0xff]
        %v4026 = vld [vmem:[%s14 + $0x10] sm:$0xff]
        %v4027 = vld [vmem:[%s14 + $0x18] sm:$0xff]
        %v4028 = vld [vmem:[%s15] sm:$0x1]
        %v4030 = vperm.slane %v4028, 0
        %v4033 = vsel %vm889, %v4008, 0
        %v4036 = vsel %vm889, %v4009, 0
        %v4039 = vsel %vm889, %v4010, 0
        %v4042 = vsel %vm889, %v4011, 0
        %v4045 = vsel %vm889, %v4012, 0
        %v4048 = vsel %vm889, %v4013, 0
        %v4051 = vsel %vm889, %v4014, 0
        %v4054 = vsel %vm889, %v4015, 0
        %v4057 = vsel %vm889, %v4016, 0
        %v4060 = vsel %vm889, %v4017, 0
        %v4063 = vsel %vm889, %v4018, 0
        %v4066 = vsel %vm889, %v4019, 0
        %v4069 = vsel %vm889, %v4020, 0
        %v4072 = vsel %vm889, %v4021, 0
        %v4075 = vsel %vm889, %v4022, 0
        %v4078 = vsel %vm889, %v4023, 0
        %4080 = vmatpush.msra.mxu0 0.0
        %4081 = vmatpush.msra.mxu0 0.0
        %4082 = vmatpush.msra.mxu0 0.0
        %4083 = vmatpush.msra.mxu0 0.0
        %4084 = vmatpush.msra.mxu0 0.0
        %4085 = vmatpush.msra.mxu0 0.0
        %4086 = vmatpush.msra.mxu0 0.0
        %4087 = vmatpush.msra.mxu0 0.0
        %4088 = vmatpush.msra.mxu0 0.0
        %4089 = vmatpush.msra.mxu0 0.0
        %4090 = vmatpush.msra.mxu0 0.0
        %4091 = vmatpush.msra.mxu0 0.0
        %4092 = vmatpush.msra.mxu0 %v4027
        %4093 = vmatpush.msra.mxu0 %v4026
        %4094 = vmatpush.msra.mxu0 %v4025
        %4095 = vmatpush.msra.mxu0 %v4024
        %4096 = vmatmul.f32.gmra.mxu0 %v4033
        %v4097 = vpop.f32.mrf.mxu0
        %v4098 = vadd.f32 %v4030, %v4097
        %4099 = vmatmul.f32.gmra.mxu0 %v4036
        %v4100 = vpop.f32.mrf.mxu0
        %v4101 = vadd.f32 %v4030, %v4100
        %4102 = vmatmul.f32.gmra.mxu0 %v4039
        %v4103 = vpop.f32.mrf.mxu0
        %v4104 = vadd.f32 %v4030, %v4103
        %4105 = vmatmul.f32.gmra.mxu0 %v4042
        %v4106 = vpop.f32.mrf.mxu0
        %v4107 = vadd.f32 %v4030, %v4106
        %4108 = vmatmul.f32.gmra.mxu0 %v4045
        %v4109 = vpop.f32.mrf.mxu0
        %v4110 = vadd.f32 %v4030, %v4109
        %4111 = vmatmul.f32.gmra.mxu0 %v4048
        %v4112 = vpop.f32.mrf.mxu0
        %v4113 = vadd.f32 %v4030, %v4112
        %4114 = vmatmul.f32.gmra.mxu0 %v4051
        %v4115 = vpop.f32.mrf.mxu0
        %v4116 = vadd.f32 %v4030, %v4115
        %4117 = vmatmul.f32.gmra.mxu0 %v4054
        %v4118 = vpop.f32.mrf.mxu0
        %v4119 = vadd.f32 %v4030, %v4118
        %4120 = vmatmul.f32.gmra.mxu0 %v4057
        %v4121 = vpop.f32.mrf.mxu0
        %v4122 = vadd.f32 %v4030, %v4121
        %4123 = vmatmul.f32.gmra.mxu0 %v4060
        %v4124 = vpop.f32.mrf.mxu0
        %v4125 = vadd.f32 %v4030, %v4124
        %4126 = vmatmul.f32.gmra.mxu0 %v4063
        %v4127 = vpop.f32.mrf.mxu0
        %v4128 = vadd.f32 %v4030, %v4127
        %4129 = vmatmul.f32.gmra.mxu0 %v4066
        %v4130 = vpop.f32.mrf.mxu0
        %v4131 = vadd.f32 %v4030, %v4130
        %4132 = vmatmul.f32.gmra.mxu0 %v4069
        %v4133 = vpop.f32.mrf.mxu0
        %v4134 = vadd.f32 %v4030, %v4133
        %4135 = vmatmul.f32.gmra.mxu0 %v4072
        %v4136 = vpop.f32.mrf.mxu0
        %v4137 = vadd.f32 %v4030, %v4136
        %4138 = vmatmul.f32.gmra.mxu0 %v4075
        %v4139 = vpop.f32.mrf.mxu0
        %v4140 = vadd.f32 %v4030, %v4139
        %4141 = vmatmul.f32.gmra.mxu0 %v4078
        %v4142 = vpop.f32.mrf.mxu0
        %v4143 = vadd.f32 %v4030, %v4142
        %4144 = vdwg.mxu0
        %v4145 = vmax.f32 %v4098, 0.0
        %v4146 = vmax.f32 %v4101, 0.0
        %v4147 = vmax.f32 %v4104, 0.0
        %v4148 = vmax.f32 %v4107, 0.0
        %v4149 = vmax.f32 %v4110, 0.0
        %v4150 = vmax.f32 %v4113, 0.0
        %v4151 = vmax.f32 %v4116, 0.0
        %v4152 = vmax.f32 %v4119, 0.0
        %v4153 = vmax.f32 %v4122, 0.0
        %v4154 = vmax.f32 %v4125, 0.0
        %v4155 = vmax.f32 %v4128, 0.0
        %v4156 = vmax.f32 %v4131, 0.0
        %v4157 = vmax.f32 %v4134, 0.0
        %v4158 = vmax.f32 %v4137, 0.0
        %v4159 = vmax.f32 %v4140, 0.0
        %v4160 = vmax.f32 %v4143, 0.0
        %v4161 = vld [vmem:[%s16] sm:$0xff]
        %v4162 = vld [vmem:[%s16 + $0x8] sm:$0xff]
        %vm4163 = vcmask 130048
        %v4165 = vsel %vm4163, %v4145, 0
        %v4168 = vsel %vm4163, %v4146, 0
        %v4171 = vsel %vm4163, %v4147, 0
        %v4174 = vsel %vm4163, %v4148, 0
        %v4177 = vsel %vm4163, %v4149, 0
        %v4180 = vsel %vm4163, %v4150, 0
        %v4183 = vsel %vm4163, %v4151, 0
        %v4186 = vsel %vm4163, %v4152, 0
        %v4189 = vsel %vm4163, %v4153, 0
        %v4192 = vsel %vm4163, %v4154, 0
        %v4195 = vsel %vm4163, %v4155, 0
        %v4198 = vsel %vm4163, %v4156, 0
        %v4201 = vsel %vm4163, %v4157, 0
        %v4204 = vsel %vm4163, %v4158, 0
        %v4207 = vsel %vm4163, %v4159, 0
        %v4210 = vsel %vm4163, %v4160, 0
        %4212 = vmatpush.msra.mxu0 0.0
        %4213 = vmatpush.msra.mxu0 0.0
        %4214 = vmatpush.msra.mxu0 0.0
        %4215 = vmatpush.msra.mxu0 0.0
        %4216 = vmatpush.msra.mxu0 0.0
        %4217 = vmatpush.msra.mxu0 0.0
        %4218 = vmatpush.msra.mxu0 0.0
        %4219 = vmatpush.msra.mxu0 0.0
        %4220 = vmatpush.msra.mxu0 0.0
        %4221 = vmatpush.msra.mxu0 0.0
        %4222 = vmatpush.msra.mxu0 0.0
        %4223 = vmatpush.msra.mxu0 0.0
        %4224 = vmatpush.msra.mxu0 0.0
        %4225 = vmatpush.msra.mxu0 0.0
        %4226 = vmatpush.msra.mxu0 %v4162
        %4227 = vmatpush.msra.mxu0 %v4161
        %4228 = vmatmul.f32.gmra.mxu0 %v4165
        %v4229 = vpop.f32.mrf.mxu0
        %v4230 = vadd.f32 0.0, %v4229
        %4231 = vmatmul.f32.gmra.mxu0 %v4168
        %v4232 = vpop.f32.mrf.mxu0
        %v4233 = vadd.f32 0.0, %v4232
        %4234 = vmatmul.f32.gmra.mxu0 %v4171
        %v4235 = vpop.f32.mrf.mxu0
        %v4236 = vadd.f32 0.0, %v4235
        %4237 = vmatmul.f32.gmra.mxu0 %v4174
        %v4238 = vpop.f32.mrf.mxu0
        %v4239 = vadd.f32 0.0, %v4238
        %4240 = vmatmul.f32.gmra.mxu0 %v4177
        %v4241 = vpop.f32.mrf.mxu0
        %v4242 = vadd.f32 0.0, %v4241
        %4243 = vmatmul.f32.gmra.mxu0 %v4180
        %v4244 = vpop.f32.mrf.mxu0
        %v4245 = vadd.f32 0.0, %v4244
        %4246 = vmatmul.f32.gmra.mxu0 %v4183
        %v4247 = vpop.f32.mrf.mxu0
        %v4248 = vadd.f32 0.0, %v4247
        %4249 = vmatmul.f32.gmra.mxu0 %v4186
        %v4250 = vpop.f32.mrf.mxu0
        %v4251 = vadd.f32 0.0, %v4250
        %4252 = vmatmul.f32.gmra.mxu0 %v4189
        %v4253 = vpop.f32.mrf.mxu0
        %v4254 = vadd.f32 0.0, %v4253
        %4255 = vmatmul.f32.gmra.mxu0 %v4192
        %v4256 = vpop.f32.mrf.mxu0
        %v4257 = vadd.f32 0.0, %v4256
        %4258 = vmatmul.f32.gmra.mxu0 %v4195
        %v4259 = vpop.f32.mrf.mxu0
        %v4260 = vadd.f32 0.0, %v4259
        %4261 = vmatmul.f32.gmra.mxu0 %v4198
        %v4262 = vpop.f32.mrf.mxu0
        %v4263 = vadd.f32 0.0, %v4262
        %4264 = vmatmul.f32.gmra.mxu0 %v4201
        %v4265 = vpop.f32.mrf.mxu0
        %v4266 = vadd.f32 0.0, %v4265
        %4267 = vmatmul.f32.gmra.mxu0 %v4204
        %v4268 = vpop.f32.mrf.mxu0
        %v4269 = vadd.f32 0.0, %v4268
        %4270 = vmatmul.f32.gmra.mxu0 %v4207
        %v4271 = vpop.f32.mrf.mxu0
        %v4272 = vadd.f32 0.0, %v4271
        %4273 = vmatmul.f32.gmra.mxu0 %v4210
        %v4274 = vpop.f32.mrf.mxu0
        %v4275 = vadd.f32 0.0, %v4274
        %4276 = vdwg.mxu0
        %v4277 = vsub.f32 0.0, %v4230
        %v4278 = vsub.f32 0.0, %v4233
        %v4279 = vsub.f32 0.0, %v4236
        %v4280 = vsub.f32 0.0, %v4239
        %v4281 = vsub.f32 0.0, %v4242
        %v4282 = vsub.f32 0.0, %v4245
        %v4283 = vsub.f32 0.0, %v4248
        %v4284 = vsub.f32 0.0, %v4251
        %v4285 = vsub.f32 0.0, %v4254
        %v4286 = vsub.f32 0.0, %v4257
        %v4287 = vsub.f32 0.0, %v4260
        %v4288 = vsub.f32 0.0, %v4263
        %v4289 = vsub.f32 0.0, %v4266
        %v4290 = vsub.f32 0.0, %v4269
        %v4291 = vsub.f32 0.0, %v4272
        %v4292 = vsub.f32 0.0, %v4275
        %v4293 = vmul.f32 %v4277, 1.442695
        %v4294 = vpow.pop %v4293
        %v4295 = vmul.f32 %v4278, 1.442695
        %v4296 = vpow.pop %v4295
        %v4297 = vmul.f32 %v4279, 1.442695
        %v4298 = vpow.pop %v4297
        %v4299 = vmul.f32 %v4280, 1.442695
        %v4300 = vpow.pop %v4299
        %v4301 = vmul.f32 %v4281, 1.442695
        %v4302 = vpow.pop %v4301
        %v4303 = vmul.f32 %v4282, 1.442695
        %v4304 = vpow.pop %v4303
        %v4305 = vmul.f32 %v4283, 1.442695
        %v4306 = vpow.pop %v4305
        %v4307 = vmul.f32 %v4284, 1.442695
        %v4308 = vpow.pop %v4307
        %v4309 = vmul.f32 %v4285, 1.442695
        %v4310 = vpow.pop %v4309
        %v4311 = vmul.f32 %v4286, 1.442695
        %v4312 = vpow.pop %v4311
        %v4313 = vmul.f32 %v4287, 1.442695
        %v4314 = vpow.pop %v4313
        %v4315 = vmul.f32 %v4288, 1.442695
        %v4316 = vpow.pop %v4315
        %v4317 = vmul.f32 %v4289, 1.442695
        %v4318 = vpow.pop %v4317
        %v4319 = vmul.f32 %v4290, 1.442695
        %v4320 = vpow.pop %v4319
        %v4321 = vmul.f32 %v4291, 1.442695
        %v4322 = vpow.pop %v4321
        %v4323 = vmul.f32 %v4292, 1.442695
        %v4324 = vpow.pop %v4323
        %v4325 = vadd.f32 %v4294, 1.0
        %v4326 = vadd.f32 %v4296, 1.0
        %v4327 = vadd.f32 %v4298, 1.0
        %v4328 = vadd.f32 %v4300, 1.0
        %v4329 = vadd.f32 %v4302, 1.0
        %v4330 = vadd.f32 %v4304, 1.0
        %v4331 = vadd.f32 %v4306, 1.0
        %v4332 = vadd.f32 %v4308, 1.0
        %v4333 = vadd.f32 %v4310, 1.0
        %v4334 = vadd.f32 %v4312, 1.0
        %v4335 = vadd.f32 %v4314, 1.0
        %v4336 = vadd.f32 %v4316, 1.0
        %v4337 = vadd.f32 %v4318, 1.0
        %v4338 = vadd.f32 %v4320, 1.0
        %v4339 = vadd.f32 %v4322, 1.0
        %v4340 = vadd.f32 %v4324, 1.0
        %v4341 = vrcp.pop %v4325
        %v4342 = vrcp.pop %v4326
        %v4343 = vrcp.pop %v4327
        %v4344 = vrcp.pop %v4328
        %v4345 = vrcp.pop %v4329
        %v4346 = vrcp.pop %v4330
        %v4347 = vrcp.pop %v4331
        %v4348 = vrcp.pop %v4332
        %v4349 = vrcp.pop %v4333
        %v4350 = vrcp.pop %v4334
        %v4351 = vrcp.pop %v4335
        %v4352 = vrcp.pop %v4336
        %v4353 = vrcp.pop %v4337
        %v4354 = vrcp.pop %v4338
        %v4355 = vrcp.pop %v4339
        %v4356 = vrcp.pop %v4340
        %v4357 = vmul.f32 %v4145, %v4341
        %v4358 = vmul.f32 %v4146, %v4342
        %v4359 = vmul.f32 %v4147, %v4343
        %v4360 = vmul.f32 %v4148, %v4344
        %v4361 = vmul.f32 %v4149, %v4345
        %v4362 = vmul.f32 %v4150, %v4346
        %v4363 = vmul.f32 %v4151, %v4347
        %v4364 = vmul.f32 %v4152, %v4348
        %v4365 = vmul.f32 %v4153, %v4349
        %v4366 = vmul.f32 %v4154, %v4350
        %v4367 = vmul.f32 %v4155, %v4351
        %v4368 = vmul.f32 %v4156, %v4352
        %v4369 = vmul.f32 %v4157, %v4353
        %v4370 = vmul.f32 %v4158, %v4354
        %v4371 = vmul.f32 %v4159, %v4355
        %v4372 = vmul.f32 %v4160, %v4356
        %v4373 = vld [vmem:[%s17] sm:$0xff]
        %v4374 = vld [vmem:[%s17 + $0x8] sm:$0xff]
        %v4375 = vld [vmem:[%s17 + $0x10] sm:$0xff]
        %v4376 = vld [vmem:[%s17 + $0x18] sm:$0xff]
        %v4377 = vld [vmem:[%s18] sm:$0x1]
        %v4379 = vperm.slane %v4377, 0
        %v4382 = vsel %vm889, %v855, 0
        %v4385 = vsel %vm889, %v856, 0
        %v4388 = vsel %vm889, %v857, 0
        %v4391 = vsel %vm889, %v858, 0
        %v4394 = vsel %vm889, %v859, 0
        %v4397 = vsel %vm889, %v860, 0
        %v4400 = vsel %vm889, %v861, 0
        %v4403 = vsel %vm889, %v862, 0
        %v4406 = vsel %vm889, %v863, 0
        %v4409 = vsel %vm889, %v864, 0
        %v4412 = vsel %vm889, %v865, 0
        %v4415 = vsel %vm889, %v866, 0
        %v4418 = vsel %vm889, %v867, 0
        %v4421 = vsel %vm889, %v868, 0
        %v4424 = vsel %vm889, %v869, 0
        %v4427 = vsel %vm889, %v870, 0
        %4429 = vmatpush.msra.mxu0 0.0
        %4430 = vmatpush.msra.mxu0 0.0
        %4431 = vmatpush.msra.mxu0 0.0
        %4432 = vmatpush.msra.mxu0 0.0
        %4433 = vmatpush.msra.mxu0 0.0
        %4434 = vmatpush.msra.mxu0 0.0
        %4435 = vmatpush.msra.mxu0 0.0
        %4436 = vmatpush.msra.mxu0 0.0
        %4437 = vmatpush.msra.mxu0 0.0
        %4438 = vmatpush.msra.mxu0 0.0
        %4439 = vmatpush.msra.mxu0 0.0
        %4440 = vmatpush.msra.mxu0 0.0
        %4441 = vmatpush.msra.mxu0 %v4376
        %4442 = vmatpush.msra.mxu0 %v4375
        %4443 = vmatpush.msra.mxu0 %v4374
        %4444 = vmatpush.msra.mxu0 %v4373
        %4445 = vmatmul.f32.gmra.mxu0 %v4382
        %v4446 = vpop.f32.mrf.mxu0
        %v4447 = vadd.f32 %v4379, %v4446
        %4448 = vmatmul.f32.gmra.mxu0 %v4385
        %v4449 = vpop.f32.mrf.mxu0
        %v4450 = vadd.f32 %v4379, %v4449
        %4451 = vmatmul.f32.gmra.mxu0 %v4388
        %v4452 = vpop.f32.mrf.mxu0
        %v4453 = vadd.f32 %v4379, %v4452
        %4454 = vmatmul.f32.gmra.mxu0 %v4391
        %v4455 = vpop.f32.mrf.mxu0
        %v4456 = vadd.f32 %v4379, %v4455
        %4457 = vmatmul.f32.gmra.mxu0 %v4394
        %v4458 = vpop.f32.mrf.mxu0
        %v4459 = vadd.f32 %v4379, %v4458
        %4460 = vmatmul.f32.gmra.mxu0 %v4397
        %v4461 = vpop.f32.mrf.mxu0
        %v4462 = vadd.f32 %v4379, %v4461
        %4463 = vmatmul.f32.gmra.mxu0 %v4400
        %v4464 = vpop.f32.mrf.mxu0
        %v4465 = vadd.f32 %v4379, %v4464
        %4466 = vmatmul.f32.gmra.mxu0 %v4403
        %v4467 = vpop.f32.mrf.mxu0
        %v4468 = vadd.f32 %v4379, %v4467
        %4469 = vmatmul.f32.gmra.mxu0 %v4406
        %v4470 = vpop.f32.mrf.mxu0
        %v4471 = vadd.f32 %v4379, %v4470
        %4472 = vmatmul.f32.gmra.mxu0 %v4409
        %v4473 = vpop.f32.mrf.mxu0
        %v4474 = vadd.f32 %v4379, %v4473
        %4475 = vmatmul.f32.gmra.mxu0 %v4412
        %v4476 = vpop.f32.mrf.mxu0
        %v4477 = vadd.f32 %v4379, %v4476
        %4478 = vmatmul.f32.gmra.mxu0 %v4415
        %v4479 = vpop.f32.mrf.mxu0
        %v4480 = vadd.f32 %v4379, %v4479
        %4481 = vmatmul.f32.gmra.mxu0 %v4418
        %v4482 = vpop.f32.mrf.mxu0
        %v4483 = vadd.f32 %v4379, %v4482
        %4484 = vmatmul.f32.gmra.mxu0 %v4421
        %v4485 = vpop.f32.mrf.mxu0
        %v4486 = vadd.f32 %v4379, %v4485
        %4487 = vmatmul.f32.gmra.mxu0 %v4424
        %v4488 = vpop.f32.mrf.mxu0
        %v4489 = vadd.f32 %v4379, %v4488
        %4490 = vmatmul.f32.gmra.mxu0 %v4427
        %v4491 = vpop.f32.mrf.mxu0
        %v4492 = vadd.f32 %v4379, %v4491
        %4493 = vdwg.mxu0
        %v4494 = vadd.f32 %v4357, %v4447
        %v4495 = vadd.f32 %v4358, %v4450
        %v4496 = vadd.f32 %v4359, %v4453
        %v4497 = vadd.f32 %v4360, %v4456
        %v4498 = vadd.f32 %v4361, %v4459
        %v4499 = vadd.f32 %v4362, %v4462
        %v4500 = vadd.f32 %v4363, %v4465
        %v4501 = vadd.f32 %v4364, %v4468
        %v4502 = vadd.f32 %v4365, %v4471
        %v4503 = vadd.f32 %v4366, %v4474
        %v4504 = vadd.f32 %v4367, %v4477
        %v4505 = vadd.f32 %v4368, %v4480
        %v4506 = vadd.f32 %v4369, %v4483
        %v4507 = vadd.f32 %v4370, %v4486
        %v4508 = vadd.f32 %v4371, %v4489
        %v4509 = vadd.f32 %v4372, %v4492
        %v4510 = vld [vmem:[%s19] sm:$0xff]
        %v4511 = vld [vmem:[%s19 + $0x8] sm:$0xff]
        %v4513 = vsel %vm4163, %v4494, 0
        %v4516 = vsel %vm4163, %v4495, 0
        %v4519 = vsel %vm4163, %v4496, 0
        %v4522 = vsel %vm4163, %v4497, 0
        %v4525 = vsel %vm4163, %v4498, 0
        %v4528 = vsel %vm4163, %v4499, 0
        %v4531 = vsel %vm4163, %v4500, 0
        %v4534 = vsel %vm4163, %v4501, 0
        %v4537 = vsel %vm4163, %v4502, 0
        %v4540 = vsel %vm4163, %v4503, 0
        %v4543 = vsel %vm4163, %v4504, 0
        %v4546 = vsel %vm4163, %v4505, 0
        %v4549 = vsel %vm4163, %v4506, 0
        %v4552 = vsel %vm4163, %v4507, 0
        %v4555 = vsel %vm4163, %v4508, 0
        %v4558 = vsel %vm4163, %v4509, 0
        %4560 = vmatpush.msra.mxu0 0.0
        %4561 = vmatpush.msra.mxu0 0.0
        %4562 = vmatpush.msra.mxu0 0.0
        %4563 = vmatpush.msra.mxu0 0.0
        %4564 = vmatpush.msra.mxu0 0.0
        %4565 = vmatpush.msra.mxu0 0.0
        %4566 = vmatpush.msra.mxu0 0.0
        %4567 = vmatpush.msra.mxu0 0.0
        %4568 = vmatpush.msra.mxu0 0.0
        %4569 = vmatpush.msra.mxu0 0.0
        %4570 = vmatpush.msra.mxu0 0.0
        %4571 = vmatpush.msra.mxu0 0.0
        %4572 = vmatpush.msra.mxu0 0.0
        %4573 = vmatpush.msra.mxu0 0.0
        %4574 = vmatpush.msra.mxu0 %v4511
        %4575 = vmatpush.msra.mxu0 %v4510
        %4576 = vmatmul.f32.gmra.mxu0 %v4513
        %v4577 = vpop.f32.mrf.mxu0
        %v4578 = vadd.f32 0.0, %v4577
        %4579 = vmatmul.f32.gmra.mxu0 %v4516
        %v4580 = vpop.f32.mrf.mxu0
        %v4581 = vadd.f32 0.0, %v4580
        %4582 = vmatmul.f32.gmra.mxu0 %v4519
        %v4583 = vpop.f32.mrf.mxu0
        %v4584 = vadd.f32 0.0, %v4583
        %4585 = vmatmul.f32.gmra.mxu0 %v4522
        %v4586 = vpop.f32.mrf.mxu0
        %v4587 = vadd.f32 0.0, %v4586
        %4588 = vmatmul.f32.gmra.mxu0 %v4525
        %v4589 = vpop.f32.mrf.mxu0
        %v4590 = vadd.f32 0.0, %v4589
        %4591 = vmatmul.f32.gmra.mxu0 %v4528
        %v4592 = vpop.f32.mrf.mxu0
        %v4593 = vadd.f32 0.0, %v4592
        %4594 = vmatmul.f32.gmra.mxu0 %v4531
        %v4595 = vpop.f32.mrf.mxu0
        %v4596 = vadd.f32 0.0, %v4595
        %4597 = vmatmul.f32.gmra.mxu0 %v4534
        %v4598 = vpop.f32.mrf.mxu0
        %v4599 = vadd.f32 0.0, %v4598
        %4600 = vmatmul.f32.gmra.mxu0 %v4537
        %v4601 = vpop.f32.mrf.mxu0
        %v4602 = vadd.f32 0.0, %v4601
        %4603 = vmatmul.f32.gmra.mxu0 %v4540
        %v4604 = vpop.f32.mrf.mxu0
        %v4605 = vadd.f32 0.0, %v4604
        %4606 = vmatmul.f32.gmra.mxu0 %v4543
        %v4607 = vpop.f32.mrf.mxu0
        %v4608 = vadd.f32 0.0, %v4607
        %4609 = vmatmul.f32.gmra.mxu0 %v4546
        %v4610 = vpop.f32.mrf.mxu0
        %v4611 = vadd.f32 0.0, %v4610
        %4612 = vmatmul.f32.gmra.mxu0 %v4549
        %v4613 = vpop.f32.mrf.mxu0
        %v4614 = vadd.f32 0.0, %v4613
        %4615 = vmatmul.f32.gmra.mxu0 %v4552
        %v4616 = vpop.f32.mrf.mxu0
        %v4617 = vadd.f32 0.0, %v4616
        %4618 = vmatmul.f32.gmra.mxu0 %v4555
        %v4619 = vpop.f32.mrf.mxu0
        %v4620 = vadd.f32 0.0, %v4619
        %4621 = vmatmul.f32.gmra.mxu0 %v4558
        %v4622 = vpop.f32.mrf.mxu0
        %v4623 = vadd.f32 0.0, %v4622
        %4624 = vdwg.mxu0
        %v4625 = vmax.f32 %v4578, 0.0
        %v4626 = vmax.f32 %v4581, 0.0
        %v4627 = vmax.f32 %v4584, 0.0
        %v4628 = vmax.f32 %v4587, 0.0
        %v4629 = vmax.f32 %v4590, 0.0
        %v4630 = vmax.f32 %v4593, 0.0
        %v4631 = vmax.f32 %v4596, 0.0
        %v4632 = vmax.f32 %v4599, 0.0
        %v4633 = vmax.f32 %v4602, 0.0
        %v4634 = vmax.f32 %v4605, 0.0
        %v4635 = vmax.f32 %v4608, 0.0
        %v4636 = vmax.f32 %v4611, 0.0
        %v4637 = vmax.f32 %v4614, 0.0
        %v4638 = vmax.f32 %v4617, 0.0
        %v4639 = vmax.f32 %v4620, 0.0
        %v4640 = vmax.f32 %v4623, 0.0
        %vm4641 = vcmask 523264
        %4642 = vst.msk [vmem:[%s841] sm:$0xff] %vm4641, %v4625
        %4643 = vst.msk [vmem:[%s841 + $0x8] sm:$0xff] %vm4641, %v4626
        %4644 = vst.msk [vmem:[%s841 + $0x10] sm:$0xff] %vm4641, %v4627
        %4645 = vst.msk [vmem:[%s841 + $0x18] sm:$0xff] %vm4641, %v4628
        %4646 = vst.msk [vmem:[%s841 + $0x20] sm:$0xff] %vm4641, %v4629
        %4647 = vst.msk [vmem:[%s841 + $0x28] sm:$0xff] %vm4641, %v4630
        %4648 = vst.msk [vmem:[%s841 + $0x30] sm:$0xff] %vm4641, %v4631
        %4649 = vst.msk [vmem:[%s841 + $0x38] sm:$0xff] %vm4641, %v4632
        %4650 = vst.msk [vmem:[%s841 + $0x40] sm:$0xff] %vm4641, %v4633
        %4651 = vst.msk [vmem:[%s841 + $0x48] sm:$0xff] %vm4641, %v4634
        %4652 = vst.msk [vmem:[%s841 + $0x50] sm:$0xff] %vm4641, %v4635
        %4653 = vst.msk [vmem:[%s841 + $0x58] sm:$0xff] %vm4641, %v4636
        %4654 = vst.msk [vmem:[%s841 + $0x60] sm:$0xff] %vm4641, %v4637
        %4655 = vst.msk [vmem:[%s841 + $0x68] sm:$0xff] %vm4641, %v4638
        %4656 = vst.msk [vmem:[%s841 + $0x70] sm:$0xff] %vm4641, %v4639
        %4657 = vst.msk [vmem:[%s841 + $0x78] sm:$0xff] %vm4641, %v4640
        %v4658 = vmul.f32 %v1892, %v1956
        %v4659 = vmul.f32 %v1895, %v1958
        %v4660 = vmul.f32 %v1898, %v1960
        %v4661 = vmul.f32 %v1901, %v1962
        %v4662 = vmul.f32 %v1904, %v1964
        %v4663 = vmul.f32 %v1907, %v1966
        %v4664 = vmul.f32 %v1910, %v1968
        %v4665 = vmul.f32 %v1913, %v1970
        %v4666 = vmul.f32 %v1916, %v1972
        %v4667 = vmul.f32 %v1919, %v1974
        %v4668 = vmul.f32 %v1922, %v1976
        %v4669 = vmul.f32 %v1925, %v1978
        %v4670 = vmul.f32 %v1928, %v1980
        %v4671 = vmul.f32 %v1931, %v1982
        %v4672 = vmul.f32 %v1934, %v1984
        %v4673 = vmul.f32 %v1937, %v1986
        %v4675 = vsel %vm889, %v4658, 0
        %v4678 = vsel %vm889, %v4659, 0
        %v4681 = vsel %vm889, %v4660, 0
        %v4684 = vsel %vm889, %v4661, 0
        %v4687 = vsel %vm889, %v4662, 0
        %v4690 = vsel %vm889, %v4663, 0
        %v4693 = vsel %vm889, %v4664, 0
        %v4696 = vsel %vm889, %v4665, 0
        %v4699 = vsel %vm889, %v4666, 0
        %v4702 = vsel %vm889, %v4667, 0
        %v4705 = vsel %vm889, %v4668, 0
        %v4708 = vsel %vm889, %v4669, 0
        %v4711 = vsel %vm889, %v4670, 0
        %v4714 = vsel %vm889, %v4671, 0
        %v4717 = vsel %vm889, %v4672, 0
        %v4720 = vsel %vm889, %v4673, 0
        %4722 = vmatpush.msra.mxu0 0.0
        %4723 = vmatpush.msra.mxu0 0.0
        %4724 = vmatpush.msra.mxu0 0.0
        %4725 = vmatpush.msra.mxu0 0.0
        %4726 = vmatpush.msra.mxu0 0.0
        %4727 = vmatpush.msra.mxu0 0.0
        %4728 = vmatpush.msra.mxu0 0.0
        %4729 = vmatpush.msra.mxu0 0.0
        %4730 = vmatpush.msra.mxu0 0.0
        %4731 = vmatpush.msra.mxu0 0.0
        %4732 = vmatpush.msra.mxu0 0.0
        %4733 = vmatpush.msra.mxu0 0.0
        %4734 = vmatpush.msra.mxu0 %v853
        %4735 = vmatpush.msra.mxu0 %v852
        %4736 = vmatpush.msra.mxu0 %v851
        %4737 = vmatpush.msra.mxu0 %v850
        %4738 = vmatmul.f32.gmra.mxu0 %v4675
        %v4739 = vpop.f32.mrf.mxu0
        %v4740 = vadd.f32 0.0, %v4739
        %4741 = vmatmul.f32.gmra.mxu0 %v4678
        %v4742 = vpop.f32.mrf.mxu0
        %v4743 = vadd.f32 0.0, %v4742
        %4744 = vmatmul.f32.gmra.mxu0 %v4681
        %v4745 = vpop.f32.mrf.mxu0
        %v4746 = vadd.f32 0.0, %v4745
        %4747 = vmatmul.f32.gmra.mxu0 %v4684
        %v4748 = vpop.f32.mrf.mxu0
        %v4749 = vadd.f32 0.0, %v4748
        %4750 = vmatmul.f32.gmra.mxu0 %v4687
        %v4751 = vpop.f32.mrf.mxu0
        %v4752 = vadd.f32 0.0, %v4751
        %4753 = vmatmul.f32.gmra.mxu0 %v4690
        %v4754 = vpop.f32.mrf.mxu0
        %v4755 = vadd.f32 0.0, %v4754
        %4756 = vmatmul.f32.gmra.mxu0 %v4693
        %v4757 = vpop.f32.mrf.mxu0
        %v4758 = vadd.f32 0.0, %v4757
        %4759 = vmatmul.f32.gmra.mxu0 %v4696
        %v4760 = vpop.f32.mrf.mxu0
        %v4761 = vadd.f32 0.0, %v4760
        %4762 = vmatmul.f32.gmra.mxu0 %v4699
        %v4763 = vpop.f32.mrf.mxu0
        %v4764 = vadd.f32 0.0, %v4763
        %4765 = vmatmul.f32.gmra.mxu0 %v4702
        %v4766 = vpop.f32.mrf.mxu0
        %v4767 = vadd.f32 0.0, %v4766
        %4768 = vmatmul.f32.gmra.mxu0 %v4705
        %v4769 = vpop.f32.mrf.mxu0
        %v4770 = vadd.f32 0.0, %v4769
        %4771 = vmatmul.f32.gmra.mxu0 %v4708
        %v4772 = vpop.f32.mrf.mxu0
        %v4773 = vadd.f32 0.0, %v4772
        %4774 = vmatmul.f32.gmra.mxu0 %v4711
        %v4775 = vpop.f32.mrf.mxu0
        %v4776 = vadd.f32 0.0, %v4775
        %4777 = vmatmul.f32.gmra.mxu0 %v4714
        %v4778 = vpop.f32.mrf.mxu0
        %v4779 = vadd.f32 0.0, %v4778
        %4780 = vmatmul.f32.gmra.mxu0 %v4717
        %v4781 = vpop.f32.mrf.mxu0
        %v4782 = vadd.f32 0.0, %v4781
        %4783 = vmatmul.f32.gmra.mxu0 %v4720
        %v4784 = vpop.f32.mrf.mxu0
        %v4785 = vadd.f32 0.0, %v4784
        %4786 = vdwg.mxu0
        %v4787 = vmul.f32 %v1892, %v2149
        %v4788 = vmul.f32 %v1895, %v2151
        %v4789 = vmul.f32 %v1898, %v2153
        %v4790 = vmul.f32 %v1901, %v2155
        %v4791 = vmul.f32 %v1904, %v2157
        %v4792 = vmul.f32 %v1907, %v2159
        %v4793 = vmul.f32 %v1910, %v2161
        %v4794 = vmul.f32 %v1913, %v2163
        %v4795 = vmul.f32 %v1916, %v2165
        %v4796 = vmul.f32 %v1919, %v2167
        %v4797 = vmul.f32 %v1922, %v2169
        %v4798 = vmul.f32 %v1925, %v2171
        %v4799 = vmul.f32 %v1928, %v2173
        %v4800 = vmul.f32 %v1931, %v2175
        %v4801 = vmul.f32 %v1934, %v2177
        %v4802 = vmul.f32 %v1937, %v2179
        %v4804 = vsel %vm889, %v4787, 0
        %v4807 = vsel %vm889, %v4788, 0
        %v4810 = vsel %vm889, %v4789, 0
        %v4813 = vsel %vm889, %v4790, 0
        %v4816 = vsel %vm889, %v4791, 0
        %v4819 = vsel %vm889, %v4792, 0
        %v4822 = vsel %vm889, %v4793, 0
        %v4825 = vsel %vm889, %v4794, 0
        %v4828 = vsel %vm889, %v4795, 0
        %v4831 = vsel %vm889, %v4796, 0
        %v4834 = vsel %vm889, %v4797, 0
        %v4837 = vsel %vm889, %v4798, 0
        %v4840 = vsel %vm889, %v4799, 0
        %v4843 = vsel %vm889, %v4800, 0
        %v4846 = vsel %vm889, %v4801, 0
        %v4849 = vsel %vm889, %v4802, 0
        %4851 = vmatpush.msra.mxu0 0.0
        %4852 = vmatpush.msra.mxu0 0.0
        %4853 = vmatpush.msra.mxu0 0.0
        %4854 = vmatpush.msra.mxu0 0.0
        %4855 = vmatpush.msra.mxu0 0.0
        %4856 = vmatpush.msra.mxu0 0.0
        %4857 = vmatpush.msra.mxu0 0.0
        %4858 = vmatpush.msra.mxu0 0.0
        %4859 = vmatpush.msra.mxu0 0.0
        %4860 = vmatpush.msra.mxu0 0.0
        %4861 = vmatpush.msra.mxu0 0.0
        %4862 = vmatpush.msra.mxu0 0.0
        %4863 = vmatpush.msra.mxu0 %v853
        %4864 = vmatpush.msra.mxu0 %v852
        %4865 = vmatpush.msra.mxu0 %v851
        %4866 = vmatpush.msra.mxu0 %v850
        %4867 = vmatmul.f32.gmra.mxu0 %v4804
        %v4868 = vpop.f32.mrf.mxu0
        %v4869 = vadd.f32 0.0, %v4868
        %4870 = vmatmul.f32.gmra.mxu0 %v4807
        %v4871 = vpop.f32.mrf.mxu0
        %v4872 = vadd.f32 0.0, %v4871
        %4873 = vmatmul.f32.gmra.mxu0 %v4810
        %v4874 = vpop.f32.mrf.mxu0
        %v4875 = vadd.f32 0.0, %v4874
        %4876 = vmatmul.f32.gmra.mxu0 %v4813
        %v4877 = vpop.f32.mrf.mxu0
        %v4878 = vadd.f32 0.0, %v4877
        %4879 = vmatmul.f32.gmra.mxu0 %v4816
        %v4880 = vpop.f32.mrf.mxu0
        %v4881 = vadd.f32 0.0, %v4880
        %4882 = vmatmul.f32.gmra.mxu0 %v4819
        %v4883 = vpop.f32.mrf.mxu0
        %v4884 = vadd.f32 0.0, %v4883
        %4885 = vmatmul.f32.gmra.mxu0 %v4822
        %v4886 = vpop.f32.mrf.mxu0
        %v4887 = vadd.f32 0.0, %v4886
        %4888 = vmatmul.f32.gmra.mxu0 %v4825
        %v4889 = vpop.f32.mrf.mxu0
        %v4890 = vadd.f32 0.0, %v4889
        %4891 = vmatmul.f32.gmra.mxu0 %v4828
        %v4892 = vpop.f32.mrf.mxu0
        %v4893 = vadd.f32 0.0, %v4892
        %4894 = vmatmul.f32.gmra.mxu0 %v4831
        %v4895 = vpop.f32.mrf.mxu0
        %v4896 = vadd.f32 0.0, %v4895
        %4897 = vmatmul.f32.gmra.mxu0 %v4834
        %v4898 = vpop.f32.mrf.mxu0
        %v4899 = vadd.f32 0.0, %v4898
        %4900 = vmatmul.f32.gmra.mxu0 %v4837
        %v4901 = vpop.f32.mrf.mxu0
        %v4902 = vadd.f32 0.0, %v4901
        %4903 = vmatmul.f32.gmra.mxu0 %v4840
        %v4904 = vpop.f32.mrf.mxu0
        %v4905 = vadd.f32 0.0, %v4904
        %4906 = vmatmul.f32.gmra.mxu0 %v4843
        %v4907 = vpop.f32.mrf.mxu0
        %v4908 = vadd.f32 0.0, %v4907
        %4909 = vmatmul.f32.gmra.mxu0 %v4846
        %v4910 = vpop.f32.mrf.mxu0
        %v4911 = vadd.f32 0.0, %v4910
        %4912 = vmatmul.f32.gmra.mxu0 %v4849
        %v4913 = vpop.f32.mrf.mxu0
        %v4914 = vadd.f32 0.0, %v4913
        %4915 = vdwg.mxu0
        %v4916 = vmax.f32 %v4740, %v4869
        %v4917 = vmax.f32 %v4743, %v4872
        %v4918 = vmax.f32 %v4746, %v4875
        %v4919 = vmax.f32 %v4749, %v4878
        %v4920 = vmax.f32 %v4752, %v4881
        %v4921 = vmax.f32 %v4755, %v4884
        %v4922 = vmax.f32 %v4758, %v4887
        %v4923 = vmax.f32 %v4761, %v4890
        %v4924 = vmax.f32 %v4764, %v4893
        %v4925 = vmax.f32 %v4767, %v4896
        %v4926 = vmax.f32 %v4770, %v4899
        %v4927 = vmax.f32 %v4773, %v4902
        %v4928 = vmax.f32 %v4776, %v4905
        %v4929 = vmax.f32 %v4779, %v4908
        %v4930 = vmax.f32 %v4782, %v4911
        %v4931 = vmax.f32 %v4785, %v4914
        %v4932 = vsub.f32 %v4740, %v4916
        %v4933 = vsub.f32 %v4743, %v4917
        %v4934 = vsub.f32 %v4746, %v4918
        %v4935 = vsub.f32 %v4749, %v4919
        %v4936 = vsub.f32 %v4752, %v4920
        %v4937 = vsub.f32 %v4755, %v4921
        %v4938 = vsub.f32 %v4758, %v4922
        %v4939 = vsub.f32 %v4761, %v4923
        %v4940 = vsub.f32 %v4764, %v4924
        %v4941 = vsub.f32 %v4767, %v4925
        %v4942 = vsub.f32 %v4770, %v4926
        %v4943 = vsub.f32 %v4773, %v4927
        %v4944 = vsub.f32 %v4776, %v4928
        %v4945 = vsub.f32 %v4779, %v4929
        %v4946 = vsub.f32 %v4782, %v4930
        %v4947 = vsub.f32 %v4785, %v4931
        %v4948 = vmul.f32 %v4932, 1.442695
        %v4949 = vpow.pop %v4948
        %v4950 = vmul.f32 %v4933, 1.442695
        %v4951 = vpow.pop %v4950
        %v4952 = vmul.f32 %v4934, 1.442695
        %v4953 = vpow.pop %v4952
        %v4954 = vmul.f32 %v4935, 1.442695
        %v4955 = vpow.pop %v4954
        %v4956 = vmul.f32 %v4936, 1.442695
        %v4957 = vpow.pop %v4956
        %v4958 = vmul.f32 %v4937, 1.442695
        %v4959 = vpow.pop %v4958
        %v4960 = vmul.f32 %v4938, 1.442695
        %v4961 = vpow.pop %v4960
        %v4962 = vmul.f32 %v4939, 1.442695
        %v4963 = vpow.pop %v4962
        %v4964 = vmul.f32 %v4940, 1.442695
        %v4965 = vpow.pop %v4964
        %v4966 = vmul.f32 %v4941, 1.442695
        %v4967 = vpow.pop %v4966
        %v4968 = vmul.f32 %v4942, 1.442695
        %v4969 = vpow.pop %v4968
        %v4970 = vmul.f32 %v4943, 1.442695
        %v4971 = vpow.pop %v4970
        %v4972 = vmul.f32 %v4944, 1.442695
        %v4973 = vpow.pop %v4972
        %v4974 = vmul.f32 %v4945, 1.442695
        %v4975 = vpow.pop %v4974
        %v4976 = vmul.f32 %v4946, 1.442695
        %v4977 = vpow.pop %v4976
        %v4978 = vmul.f32 %v4947, 1.442695
        %v4979 = vpow.pop %v4978
        %v4980 = vsub.f32 %v4869, %v4916
        %v4981 = vsub.f32 %v4872, %v4917
        %v4982 = vsub.f32 %v4875, %v4918
        %v4983 = vsub.f32 %v4878, %v4919
        %v4984 = vsub.f32 %v4881, %v4920
        %v4985 = vsub.f32 %v4884, %v4921
        %v4986 = vsub.f32 %v4887, %v4922
        %v4987 = vsub.f32 %v4890, %v4923
        %v4988 = vsub.f32 %v4893, %v4924
        %v4989 = vsub.f32 %v4896, %v4925
        %v4990 = vsub.f32 %v4899, %v4926
        %v4991 = vsub.f32 %v4902, %v4927
        %v4992 = vsub.f32 %v4905, %v4928
        %v4993 = vsub.f32 %v4908, %v4929
        %v4994 = vsub.f32 %v4911, %v4930
        %v4995 = vsub.f32 %v4914, %v4931
        %v4996 = vmul.f32 %v4980, 1.442695
        %v4997 = vpow.pop %v4996
        %v4998 = vmul.f32 %v4981, 1.442695
        %v4999 = vpow.pop %v4998
        %v5000 = vmul.f32 %v4982, 1.442695
        %v5001 = vpow.pop %v5000
        %v5002 = vmul.f32 %v4983, 1.442695
        %v5003 = vpow.pop %v5002
        %v5004 = vmul.f32 %v4984, 1.442695
        %v5005 = vpow.pop %v5004
        %v5006 = vmul.f32 %v4985, 1.442695
        %v5007 = vpow.pop %v5006
        %v5008 = vmul.f32 %v4986, 1.442695
        %v5009 = vpow.pop %v5008
        %v5010 = vmul.f32 %v4987, 1.442695
        %v5011 = vpow.pop %v5010
        %v5012 = vmul.f32 %v4988, 1.442695
        %v5013 = vpow.pop %v5012
        %v5014 = vmul.f32 %v4989, 1.442695
        %v5015 = vpow.pop %v5014
        %v5016 = vmul.f32 %v4990, 1.442695
        %v5017 = vpow.pop %v5016
        %v5018 = vmul.f32 %v4991, 1.442695
        %v5019 = vpow.pop %v5018
        %v5020 = vmul.f32 %v4992, 1.442695
        %v5021 = vpow.pop %v5020
        %v5022 = vmul.f32 %v4993, 1.442695
        %v5023 = vpow.pop %v5022
        %v5024 = vmul.f32 %v4994, 1.442695
        %v5025 = vpow.pop %v5024
        %v5026 = vmul.f32 %v4995, 1.442695
        %v5027 = vpow.pop %v5026
        %v5028 = vadd.f32 %v4949, %v4997
        %v5029 = vadd.f32 %v4951, %v4999
        %v5030 = vadd.f32 %v4953, %v5001
        %v5031 = vadd.f32 %v4955, %v5003
        %v5032 = vadd.f32 %v4957, %v5005
        %v5033 = vadd.f32 %v4959, %v5007
        %v5034 = vadd.f32 %v4961, %v5009
        %v5035 = vadd.f32 %v4963, %v5011
        %v5036 = vadd.f32 %v4965, %v5013
        %v5037 = vadd.f32 %v4967, %v5015
        %v5038 = vadd.f32 %v4969, %v5017
        %v5039 = vadd.f32 %v4971, %v5019
        %v5040 = vadd.f32 %v4973, %v5021
        %v5041 = vadd.f32 %v4975, %v5023
        %v5042 = vadd.f32 %v4977, %v5025
        %v5043 = vadd.f32 %v4979, %v5027
        %v5044 = vrcp.pop %v5028
        %v5045 = vrcp.pop %v5029
        %v5046 = vrcp.pop %v5030
        %v5047 = vrcp.pop %v5031
        %v5048 = vrcp.pop %v5032
        %v5049 = vrcp.pop %v5033
        %v5050 = vrcp.pop %v5034
        %v5051 = vrcp.pop %v5035
        %v5052 = vrcp.pop %v5036
        %v5053 = vrcp.pop %v5037
        %v5054 = vrcp.pop %v5038
        %v5055 = vrcp.pop %v5039
        %v5056 = vrcp.pop %v5040
        %v5057 = vrcp.pop %v5041
        %v5058 = vrcp.pop %v5042
        %v5059 = vrcp.pop %v5043
        %v5060 = vmul.f32 %v4949, %v5044
        %v5061 = vmul.f32 %v4951, %v5045
        %v5062 = vmul.f32 %v4953, %v5046
        %v5063 = vmul.f32 %v4955, %v5047
        %v5064 = vmul.f32 %v4957, %v5048
        %v5065 = vmul.f32 %v4959, %v5049
        %v5066 = vmul.f32 %v4961, %v5050
        %v5067 = vmul.f32 %v4963, %v5051
        %v5068 = vmul.f32 %v4965, %v5052
        %v5069 = vmul.f32 %v4967, %v5053
        %v5070 = vmul.f32 %v4969, %v5054
        %v5071 = vmul.f32 %v4971, %v5055
        %v5072 = vmul.f32 %v4973, %v5056
        %v5073 = vmul.f32 %v4975, %v5057
        %v5074 = vmul.f32 %v4977, %v5058
        %v5075 = vmul.f32 %v4979, %v5059
        %v5077 = vsel %vm2485, %v5060, 0
        %v5080 = vsel %vm2485, %v5061, 0
        %v5083 = vsel %vm2485, %v5062, 0
        %v5086 = vsel %vm2485, %v5063, 0
        %v5089 = vsel %vm2485, %v5064, 0
        %v5092 = vsel %vm2485, %v5065, 0
        %v5095 = vsel %vm2485, %v5066, 0
        %v5098 = vsel %vm2485, %v5067, 0
        %v5101 = vsel %vm2485, %v5068, 0
        %v5104 = vsel %vm2485, %v5069, 0
        %v5107 = vsel %vm2485, %v5070, 0
        %v5110 = vsel %vm2485, %v5071, 0
        %v5113 = vsel %vm2485, %v5072, 0
        %v5116 = vsel %vm2485, %v5073, 0
        %v5119 = vsel %vm2485, %v5074, 0
        %v5122 = vsel %vm2485, %v5075, 0
        %5124 = vmatpush.msra.mxu0 0.0
        %5125 = vmatpush.msra.mxu0 0.0
        %5126 = vmatpush.msra.mxu0 0.0
        %5127 = vmatpush.msra.mxu0 0.0
        %5128 = vmatpush.msra.mxu0 0.0
        %5129 = vmatpush.msra.mxu0 0.0
        %5130 = vmatpush.msra.mxu0 0.0
        %5131 = vmatpush.msra.mxu0 0.0
        %5132 = vmatpush.msra.mxu0 0.0
        %5133 = vmatpush.msra.mxu0 0.0
        %5134 = vmatpush.msra.mxu0 0.0
        %5135 = vmatpush.msra.mxu0 0.0
        %5136 = vmatpush.msra.mxu0 0.0
        %5137 = vmatpush.msra.mxu0 0.0
        %5138 = vmatpush.msra.mxu0 0.0
        %5139 = vmatpush.msra.mxu0 %v2536
        %5140 = vmatmul.f32.gmra.mxu0 %v5077
        %v5141 = vpop.f32.mrf.mxu0
        %v5142 = vadd.f32 0.0, %v5141
        %5143 = vmatmul.f32.gmra.mxu0 %v5080
        %v5144 = vpop.f32.mrf.mxu0
        %v5145 = vadd.f32 0.0, %v5144
        %5146 = vmatmul.f32.gmra.mxu0 %v5083
        %v5147 = vpop.f32.mrf.mxu0
        %v5148 = vadd.f32 0.0, %v5147
        %5149 = vmatmul.f32.gmra.mxu0 %v5086
        %v5150 = vpop.f32.mrf.mxu0
        %v5151 = vadd.f32 0.0, %v5150
        %5152 = vmatmul.f32.gmra.mxu0 %v5089
        %v5153 = vpop.f32.mrf.mxu0
        %v5154 = vadd.f32 0.0, %v5153
        %5155 = vmatmul.f32.gmra.mxu0 %v5092
        %v5156 = vpop.f32.mrf.mxu0
        %v5157 = vadd.f32 0.0, %v5156
        %5158 = vmatmul.f32.gmra.mxu0 %v5095
        %v5159 = vpop.f32.mrf.mxu0
        %v5160 = vadd.f32 0.0, %v5159
        %5161 = vmatmul.f32.gmra.mxu0 %v5098
        %v5162 = vpop.f32.mrf.mxu0
        %v5163 = vadd.f32 0.0, %v5162
        %5164 = vmatmul.f32.gmra.mxu0 %v5101
        %v5165 = vpop.f32.mrf.mxu0
        %v5166 = vadd.f32 0.0, %v5165
        %5167 = vmatmul.f32.gmra.mxu0 %v5104
        %v5168 = vpop.f32.mrf.mxu0
        %v5169 = vadd.f32 0.0, %v5168
        %5170 = vmatmul.f32.gmra.mxu0 %v5107
        %v5171 = vpop.f32.mrf.mxu0
        %v5172 = vadd.f32 0.0, %v5171
        %5173 = vmatmul.f32.gmra.mxu0 %v5110
        %v5174 = vpop.f32.mrf.mxu0
        %v5175 = vadd.f32 0.0, %v5174
        %5176 = vmatmul.f32.gmra.mxu0 %v5113
        %v5177 = vpop.f32.mrf.mxu0
        %v5178 = vadd.f32 0.0, %v5177
        %5179 = vmatmul.f32.gmra.mxu0 %v5116
        %v5180 = vpop.f32.mrf.mxu0
        %v5181 = vadd.f32 0.0, %v5180
        %5182 = vmatmul.f32.gmra.mxu0 %v5119
        %v5183 = vpop.f32.mrf.mxu0
        %v5184 = vadd.f32 0.0, %v5183
        %5185 = vmatmul.f32.gmra.mxu0 %v5122
        %v5186 = vpop.f32.mrf.mxu0
        %v5187 = vadd.f32 0.0, %v5186
        %5188 = vdwg.mxu0
        %v5189 = vmul.f32 %v5142, %v2604
        %v5190 = vmul.f32 %v5145, %v2606
        %v5191 = vmul.f32 %v5148, %v2608
        %v5192 = vmul.f32 %v5151, %v2610
        %v5193 = vmul.f32 %v5154, %v2612
        %v5194 = vmul.f32 %v5157, %v2614
        %v5195 = vmul.f32 %v5160, %v2616
        %v5196 = vmul.f32 %v5163, %v2618
        %v5197 = vmul.f32 %v5166, %v2620
        %v5198 = vmul.f32 %v5169, %v2622
        %v5199 = vmul.f32 %v5172, %v2624
        %v5200 = vmul.f32 %v5175, %v2626
        %v5201 = vmul.f32 %v5178, %v2628
        %v5202 = vmul.f32 %v5181, %v2630
        %v5203 = vmul.f32 %v5184, %v2632
        %v5204 = vmul.f32 %v5187, %v2634
        %v5205 = vmul.f32 %v4997, %v5044
        %v5206 = vmul.f32 %v4999, %v5045
        %v5207 = vmul.f32 %v5001, %v5046
        %v5208 = vmul.f32 %v5003, %v5047
        %v5209 = vmul.f32 %v5005, %v5048
        %v5210 = vmul.f32 %v5007, %v5049
        %v5211 = vmul.f32 %v5009, %v5050
        %v5212 = vmul.f32 %v5011, %v5051
        %v5213 = vmul.f32 %v5013, %v5052
        %v5214 = vmul.f32 %v5015, %v5053
        %v5215 = vmul.f32 %v5017, %v5054
        %v5216 = vmul.f32 %v5019, %v5055
        %v5217 = vmul.f32 %v5021, %v5056
        %v5218 = vmul.f32 %v5023, %v5057
        %v5219 = vmul.f32 %v5025, %v5058
        %v5220 = vmul.f32 %v5027, %v5059
        %v5222 = vsel %vm2485, %v5205, 0
        %v5225 = vsel %vm2485, %v5206, 0
        %v5228 = vsel %vm2485, %v5207, 0
        %v5231 = vsel %vm2485, %v5208, 0
        %v5234 = vsel %vm2485, %v5209, 0
        %v5237 = vsel %vm2485, %v5210, 0
        %v5240 = vsel %vm2485, %v5211, 0
        %v5243 = vsel %vm2485, %v5212, 0
        %v5246 = vsel %vm2485, %v5213, 0
        %v5249 = vsel %vm2485, %v5214, 0
        %v5252 = vsel %vm2485, %v5215, 0
        %v5255 = vsel %vm2485, %v5216, 0
        %v5258 = vsel %vm2485, %v5217, 0
        %v5261 = vsel %vm2485, %v5218, 0
        %v5264 = vsel %vm2485, %v5219, 0
        %v5267 = vsel %vm2485, %v5220, 0
        %5269 = vmatpush.msra.mxu0 0.0
        %5270 = vmatpush.msra.mxu0 0.0
        %5271 = vmatpush.msra.mxu0 0.0
        %5272 = vmatpush.msra.mxu0 0.0
        %5273 = vmatpush.msra.mxu0 0.0
        %5274 = vmatpush.msra.mxu0 0.0
        %5275 = vmatpush.msra.mxu0 0.0
        %5276 = vmatpush.msra.mxu0 0.0
        %5277 = vmatpush.msra.mxu0 0.0
        %5278 = vmatpush.msra.mxu0 0.0
        %5279 = vmatpush.msra.mxu0 0.0
        %5280 = vmatpush.msra.mxu0 0.0
        %5281 = vmatpush.msra.mxu0 0.0
        %5282 = vmatpush.msra.mxu0 0.0
        %5283 = vmatpush.msra.mxu0 0.0
        %5284 = vmatpush.msra.mxu0 %v2536
        %5285 = vmatmul.f32.gmra.mxu0 %v5222
        %v5286 = vpop.f32.mrf.mxu0
        %v5287 = vadd.f32 0.0, %v5286
        %5288 = vmatmul.f32.gmra.mxu0 %v5225
        %v5289 = vpop.f32.mrf.mxu0
        %v5290 = vadd.f32 0.0, %v5289
        %5291 = vmatmul.f32.gmra.mxu0 %v5228
        %v5292 = vpop.f32.mrf.mxu0
        %v5293 = vadd.f32 0.0, %v5292
        %5294 = vmatmul.f32.gmra.mxu0 %v5231
        %v5295 = vpop.f32.mrf.mxu0
        %v5296 = vadd.f32 0.0, %v5295
        %5297 = vmatmul.f32.gmra.mxu0 %v5234
        %v5298 = vpop.f32.mrf.mxu0
        %v5299 = vadd.f32 0.0, %v5298
        %5300 = vmatmul.f32.gmra.mxu0 %v5237
        %v5301 = vpop.f32.mrf.mxu0
        %v5302 = vadd.f32 0.0, %v5301
        %5303 = vmatmul.f32.gmra.mxu0 %v5240
        %v5304 = vpop.f32.mrf.mxu0
        %v5305 = vadd.f32 0.0, %v5304
        %5306 = vmatmul.f32.gmra.mxu0 %v5243
        %v5307 = vpop.f32.mrf.mxu0
        %v5308 = vadd.f32 0.0, %v5307
        %5309 = vmatmul.f32.gmra.mxu0 %v5246
        %v5310 = vpop.f32.mrf.mxu0
        %v5311 = vadd.f32 0.0, %v5310
        %5312 = vmatmul.f32.gmra.mxu0 %v5249
        %v5313 = vpop.f32.mrf.mxu0
        %v5314 = vadd.f32 0.0, %v5313
        %5315 = vmatmul.f32.gmra.mxu0 %v5252
        %v5316 = vpop.f32.mrf.mxu0
        %v5317 = vadd.f32 0.0, %v5316
        %5318 = vmatmul.f32.gmra.mxu0 %v5255
        %v5319 = vpop.f32.mrf.mxu0
        %v5320 = vadd.f32 0.0, %v5319
        %5321 = vmatmul.f32.gmra.mxu0 %v5258
        %v5322 = vpop.f32.mrf.mxu0
        %v5323 = vadd.f32 0.0, %v5322
        %5324 = vmatmul.f32.gmra.mxu0 %v5261
        %v5325 = vpop.f32.mrf.mxu0
        %v5326 = vadd.f32 0.0, %v5325
        %5327 = vmatmul.f32.gmra.mxu0 %v5264
        %v5328 = vpop.f32.mrf.mxu0
        %v5329 = vadd.f32 0.0, %v5328
        %5330 = vmatmul.f32.gmra.mxu0 %v5267
        %v5331 = vpop.f32.mrf.mxu0
        %v5332 = vadd.f32 0.0, %v5331
        %5333 = vdwg.mxu0
        %v5334 = vmul.f32 %v5287, %v2797
        %v5335 = vmul.f32 %v5290, %v2799
        %v5336 = vmul.f32 %v5293, %v2801
        %v5337 = vmul.f32 %v5296, %v2803
        %v5338 = vmul.f32 %v5299, %v2805
        %v5339 = vmul.f32 %v5302, %v2807
        %v5340 = vmul.f32 %v5305, %v2809
        %v5341 = vmul.f32 %v5308, %v2811
        %v5342 = vmul.f32 %v5311, %v2813
        %v5343 = vmul.f32 %v5314, %v2815
        %v5344 = vmul.f32 %v5317, %v2817
        %v5345 = vmul.f32 %v5320, %v2819
        %v5346 = vmul.f32 %v5323, %v2821
        %v5347 = vmul.f32 %v5326, %v2823
        %v5348 = vmul.f32 %v5329, %v2825
        %v5349 = vmul.f32 %v5332, %v2827
        %v5350 = vadd.f32 %v5189, %v5334
        %v5351 = vadd.f32 %v5190, %v5335
        %v5352 = vadd.f32 %v5191, %v5336
        %v5353 = vadd.f32 %v5192, %v5337
        %v5354 = vadd.f32 %v5193, %v5338
        %v5355 = vadd.f32 %v5194, %v5339
        %v5356 = vadd.f32 %v5195, %v5340
        %v5357 = vadd.f32 %v5196, %v5341
        %v5358 = vadd.f32 %v5197, %v5342
        %v5359 = vadd.f32 %v5198, %v5343
        %v5360 = vadd.f32 %v5199, %v5344
        %v5361 = vadd.f32 %v5200, %v5345
        %v5362 = vadd.f32 %v5201, %v5346
        %v5363 = vadd.f32 %v5202, %v5347
        %v5364 = vadd.f32 %v5203, %v5348
        %v5365 = vadd.f32 %v5204, %v5349
        %v5366 = vld [vmem:[%s8] sm:$0xff]
        %v5367 = vld [vmem:[%s8 + $0x8] sm:$0xff]
        %v5368 = vld [vmem:[%s8 + $0x10] sm:$0xff]
        %v5369 = vld [vmem:[%s8 + $0x18] sm:$0xff]
        %v5371 = vsel %vm889, %v5350, 0
        %v5374 = vsel %vm889, %v5351, 0
        %v5377 = vsel %vm889, %v5352, 0
        %v5380 = vsel %vm889, %v5353, 0
        %v5383 = vsel %vm889, %v5354, 0
        %v5386 = vsel %vm889, %v5355, 0
        %v5389 = vsel %vm889, %v5356, 0
        %v5392 = vsel %vm889, %v5357, 0
        %v5395 = vsel %vm889, %v5358, 0
        %v5398 = vsel %vm889, %v5359, 0
        %v5401 = vsel %vm889, %v5360, 0
        %v5404 = vsel %vm889, %v5361, 0
        %v5407 = vsel %vm889, %v5362, 0
        %v5410 = vsel %vm889, %v5363, 0
        %v5413 = vsel %vm889, %v5364, 0
        %v5416 = vsel %vm889, %v5365, 0
        %5418 = vmatpush.msra.mxu0 0.0
        %5419 = vmatpush.msra.mxu0 0.0
        %5420 = vmatpush.msra.mxu0 0.0
        %5421 = vmatpush.msra.mxu0 0.0
        %5422 = vmatpush.msra.mxu0 0.0
        %5423 = vmatpush.msra.mxu0 0.0
        %5424 = vmatpush.msra.mxu0 0.0
        %5425 = vmatpush.msra.mxu0 0.0
        %5426 = vmatpush.msra.mxu0 0.0
        %5427 = vmatpush.msra.mxu0 0.0
        %5428 = vmatpush.msra.mxu0 0.0
        %5429 = vmatpush.msra.mxu0 0.0
        %5430 = vmatpush.msra.mxu0 %v5369
        %5431 = vmatpush.msra.mxu0 %v5368
        %5432 = vmatpush.msra.mxu0 %v5367
        %5433 = vmatpush.msra.mxu0 %v5366
        %5434 = vmatmul.f32.gmra.mxu0 %v5371
        %v5435 = vpop.f32.mrf.mxu0
        %v5436 = vadd.f32 %v2881, %v5435
        %5437 = vmatmul.f32.gmra.mxu0 %v5374
        %v5438 = vpop.f32.mrf.mxu0
        %v5439 = vadd.f32 %v2881, %v5438
        %5440 = vmatmul.f32.gmra.mxu0 %v5377
        %v5441 = vpop.f32.mrf.mxu0
        %v5442 = vadd.f32 %v2881, %v5441
        %5443 = vmatmul.f32.gmra.mxu0 %v5380
        %v5444 = vpop.f32.mrf.mxu0
        %v5445 = vadd.f32 %v2881, %v5444
        %5446 = vmatmul.f32.gmra.mxu0 %v5383
        %v5447 = vpop.f32.mrf.mxu0
        %v5448 = vadd.f32 %v2881, %v5447
        %5449 = vmatmul.f32.gmra.mxu0 %v5386
        %v5450 = vpop.f32.mrf.mxu0
        %v5451 = vadd.f32 %v2881, %v5450
        %5452 = vmatmul.f32.gmra.mxu0 %v5389
        %v5453 = vpop.f32.mrf.mxu0
        %v5454 = vadd.f32 %v2881, %v5453
        %5455 = vmatmul.f32.gmra.mxu0 %v5392
        %v5456 = vpop.f32.mrf.mxu0
        %v5457 = vadd.f32 %v2881, %v5456
        %5458 = vmatmul.f32.gmra.mxu0 %v5395
        %v5459 = vpop.f32.mrf.mxu0
        %v5460 = vadd.f32 %v2881, %v5459
        %5461 = vmatmul.f32.gmra.mxu0 %v5398
        %v5462 = vpop.f32.mrf.mxu0
        %v5463 = vadd.f32 %v2881, %v5462
        %5464 = vmatmul.f32.gmra.mxu0 %v5401
        %v5465 = vpop.f32.mrf.mxu0
        %v5466 = vadd.f32 %v2881, %v5465
        %5467 = vmatmul.f32.gmra.mxu0 %v5404
        %v5468 = vpop.f32.mrf.mxu0
        %v5469 = vadd.f32 %v2881, %v5468
        %5470 = vmatmul.f32.gmra.mxu0 %v5407
        %v5471 = vpop.f32.mrf.mxu0
        %v5472 = vadd.f32 %v2881, %v5471
        %5473 = vmatmul.f32.gmra.mxu0 %v5410
        %v5474 = vpop.f32.mrf.mxu0
        %v5475 = vadd.f32 %v2881, %v5474
        %5476 = vmatmul.f32.gmra.mxu0 %v5413
        %v5477 = vpop.f32.mrf.mxu0
        %v5478 = vadd.f32 %v2881, %v5477
        %5479 = vmatmul.f32.gmra.mxu0 %v5416
        %v5480 = vpop.f32.mrf.mxu0
        %v5481 = vadd.f32 %v2881, %v5480
        %5482 = vdwg.mxu0
        %v5483 = vsel %vm889, %v5436, 0.0
        %5484 = vadd.xlane.f32.xlu0 %v5483
        %v5485 = vpop.xlane.xlu0 %5484
        %v5486 = vsel %vm889, %v5439, 0.0
        %5487 = vadd.xlane.f32.xlu0 %v5486
        %v5488 = vpop.xlane.xlu0 %5487
        %v5489 = vsel %vm889, %v5442, 0.0
        %5490 = vadd.xlane.f32.xlu0 %v5489
        %v5491 = vpop.xlane.xlu0 %5490
        %v5492 = vsel %vm889, %v5445, 0.0
        %5493 = vadd.xlane.f32.xlu0 %v5492
        %v5494 = vpop.xlane.xlu0 %5493
        %v5495 = vsel %vm889, %v5448, 0.0
        %5496 = vadd.xlane.f32.xlu0 %v5495
        %v5497 = vpop.xlane.xlu0 %5496
        %v5498 = vsel %vm889, %v5451, 0.0
        %5499 = vadd.xlane.f32.xlu0 %v5498
        %v5500 = vpop.xlane.xlu0 %5499
        %v5501 = vsel %vm889, %v5454, 0.0
        %5502 = vadd.xlane.f32.xlu0 %v5501
        %v5503 = vpop.xlane.xlu0 %5502
        %v5504 = vsel %vm889, %v5457, 0.0
        %5505 = vadd.xlane.f32.xlu0 %v5504
        %v5506 = vpop.xlane.xlu0 %5505
        %v5507 = vsel %vm889, %v5460, 0.0
        %5508 = vadd.xlane.f32.xlu0 %v5507
        %v5509 = vpop.xlane.xlu0 %5508
        %v5510 = vsel %vm889, %v5463, 0.0
        %5511 = vadd.xlane.f32.xlu0 %v5510
        %v5512 = vpop.xlane.xlu0 %5511
        %v5513 = vsel %vm889, %v5466, 0.0
        %5514 = vadd.xlane.f32.xlu0 %v5513
        %v5515 = vpop.xlane.xlu0 %5514
        %v5516 = vsel %vm889, %v5469, 0.0
        %5517 = vadd.xlane.f32.xlu0 %v5516
        %v5518 = vpop.xlane.xlu0 %5517
        %v5519 = vsel %vm889, %v5472, 0.0
        %5520 = vadd.xlane.f32.xlu0 %v5519
        %v5521 = vpop.xlane.xlu0 %5520
        %v5522 = vsel %vm889, %v5475, 0.0
        %5523 = vadd.xlane.f32.xlu0 %v5522
        %v5524 = vpop.xlane.xlu0 %5523
        %v5525 = vsel %vm889, %v5478, 0.0
        %5526 = vadd.xlane.f32.xlu0 %v5525
        %v5527 = vpop.xlane.xlu0 %5526
        %v5528 = vsel %vm889, %v5481, 0.0
        %5529 = vadd.xlane.f32.xlu0 %v5528
        %v5530 = vpop.xlane.xlu0 %5529
        %v5531 = vmul.f32 %v5485, %v944
        %v5532 = vmul.f32 %v5488, %v944
        %v5533 = vmul.f32 %v5491, %v944
        %v5534 = vmul.f32 %v5494, %v944
        %v5535 = vmul.f32 %v5497, %v944
        %v5536 = vmul.f32 %v5500, %v944
        %v5537 = vmul.f32 %v5503, %v944
        %v5538 = vmul.f32 %v5506, %v944
        %v5539 = vmul.f32 %v5509, %v944
        %v5540 = vmul.f32 %v5512, %v944
        %v5541 = vmul.f32 %v5515, %v944
        %v5542 = vmul.f32 %v5518, %v944
        %v5543 = vmul.f32 %v5521, %v944
        %v5544 = vmul.f32 %v5524, %v944
        %v5545 = vmul.f32 %v5527, %v944
        %v5546 = vmul.f32 %v5530, %v944
        %v5547 = vsub.f32 %v5436, %v5531
        %v5548 = vsub.f32 %v5439, %v5532
        %v5549 = vsub.f32 %v5442, %v5533
        %v5550 = vsub.f32 %v5445, %v5534
        %v5551 = vsub.f32 %v5448, %v5535
        %v5552 = vsub.f32 %v5451, %v5536
        %v5553 = vsub.f32 %v5454, %v5537
        %v5554 = vsub.f32 %v5457, %v5538
        %v5555 = vsub.f32 %v5460, %v5539
        %v5556 = vsub.f32 %v5463, %v5540
        %v5557 = vsub.f32 %v5466, %v5541
        %v5558 = vsub.f32 %v5469, %v5542
        %v5559 = vsub.f32 %v5472, %v5543
        %v5560 = vsub.f32 %v5475, %v5544
        %v5561 = vsub.f32 %v5478, %v5545
        %v5562 = vsub.f32 %v5481, %v5546
        %v5563 = vmul.f32 %v5547, %v5547
        %v5564 = vmul.f32 %v5548, %v5548
        %v5565 = vmul.f32 %v5549, %v5549
        %v5566 = vmul.f32 %v5550, %v5550
        %v5567 = vmul.f32 %v5551, %v5551
        %v5568 = vmul.f32 %v5552, %v5552
        %v5569 = vmul.f32 %v5553, %v5553
        %v5570 = vmul.f32 %v5554, %v5554
        %v5571 = vmul.f32 %v5555, %v5555
        %v5572 = vmul.f32 %v5556, %v5556
        %v5573 = vmul.f32 %v5557, %v5557
        %v5574 = vmul.f32 %v5558, %v5558
        %v5575 = vmul.f32 %v5559, %v5559
        %v5576 = vmul.f32 %v5560, %v5560
        %v5577 = vmul.f32 %v5561, %v5561
        %v5578 = vmul.f32 %v5562, %v5562
        %v5579 = vsel %vm889, %v5563, 0.0
        %5580 = vadd.xlane.f32.xlu0 %v5579
        %v5581 = vpop.xlane.xlu0 %5580
        %v5582 = vsel %vm889, %v5564, 0.0
        %5583 = vadd.xlane.f32.xlu0 %v5582
        %v5584 = vpop.xlane.xlu0 %5583
        %v5585 = vsel %vm889, %v5565, 0.0
        %5586 = vadd.xlane.f32.xlu0 %v5585
        %v5587 = vpop.xlane.xlu0 %5586
        %v5588 = vsel %vm889, %v5566, 0.0
        %5589 = vadd.xlane.f32.xlu0 %v5588
        %v5590 = vpop.xlane.xlu0 %5589
        %v5591 = vsel %vm889, %v5567, 0.0
        %5592 = vadd.xlane.f32.xlu0 %v5591
        %v5593 = vpop.xlane.xlu0 %5592
        %v5594 = vsel %vm889, %v5568, 0.0
        %5595 = vadd.xlane.f32.xlu0 %v5594
        %v5596 = vpop.xlane.xlu0 %5595
        %v5597 = vsel %vm889, %v5569, 0.0
        %5598 = vadd.xlane.f32.xlu0 %v5597
        %v5599 = vpop.xlane.xlu0 %5598
        %v5600 = vsel %vm889, %v5570, 0.0
        %5601 = vadd.xlane.f32.xlu0 %v5600
        %v5602 = vpop.xlane.xlu0 %5601
        %v5603 = vsel %vm889, %v5571, 0.0
        %5604 = vadd.xlane.f32.xlu0 %v5603
        %v5605 = vpop.xlane.xlu0 %5604
        %v5606 = vsel %vm889, %v5572, 0.0
        %5607 = vadd.xlane.f32.xlu0 %v5606
        %v5608 = vpop.xlane.xlu0 %5607
        %v5609 = vsel %vm889, %v5573, 0.0
        %5610 = vadd.xlane.f32.xlu0 %v5609
        %v5611 = vpop.xlane.xlu0 %5610
        %v5612 = vsel %vm889, %v5574, 0.0
        %5613 = vadd.xlane.f32.xlu0 %v5612
        %v5614 = vpop.xlane.xlu0 %5613
        %v5615 = vsel %vm889, %v5575, 0.0
        %5616 = vadd.xlane.f32.xlu0 %v5615
        %v5617 = vpop.xlane.xlu0 %5616
        %v5618 = vsel %vm889, %v5576, 0.0
        %5619 = vadd.xlane.f32.xlu0 %v5618
        %v5620 = vpop.xlane.xlu0 %5619
        %v5621 = vsel %vm889, %v5577, 0.0
        %5622 = vadd.xlane.f32.xlu0 %v5621
        %v5623 = vpop.xlane.xlu0 %5622
        %v5624 = vsel %vm889, %v5578, 0.0
        %5625 = vadd.xlane.f32.xlu0 %v5624
        %v5626 = vpop.xlane.xlu0 %5625
        %v5627 = vmul.f32 %v5581, %v944
        %v5628 = vmul.f32 %v5584, %v944
        %v5629 = vmul.f32 %v5587, %v944
        %v5630 = vmul.f32 %v5590, %v944
        %v5631 = vmul.f32 %v5593, %v944
        %v5632 = vmul.f32 %v5596, %v944
        %v5633 = vmul.f32 %v5599, %v944
        %v5634 = vmul.f32 %v5602, %v944
        %v5635 = vmul.f32 %v5605, %v944
        %v5636 = vmul.f32 %v5608, %v944
        %v5637 = vmul.f32 %v5611, %v944
        %v5638 = vmul.f32 %v5614, %v944
        %v5639 = vmul.f32 %v5617, %v944
        %v5640 = vmul.f32 %v5620, %v944
        %v5641 = vmul.f32 %v5623, %v944
        %v5642 = vmul.f32 %v5626, %v944
        %v5643 = vadd.f32 %v5627, 1e-05
        %v5644 = vadd.f32 %v5628, 1e-05
        %v5645 = vadd.f32 %v5629, 1e-05
        %v5646 = vadd.f32 %v5630, 1e-05
        %v5647 = vadd.f32 %v5631, 1e-05
        %v5648 = vadd.f32 %v5632, 1e-05
        %v5649 = vadd.f32 %v5633, 1e-05
        %v5650 = vadd.f32 %v5634, 1e-05
        %v5651 = vadd.f32 %v5635, 1e-05
        %v5652 = vadd.f32 %v5636, 1e-05
        %v5653 = vadd.f32 %v5637, 1e-05
        %v5654 = vadd.f32 %v5638, 1e-05
        %v5655 = vadd.f32 %v5639, 1e-05
        %v5656 = vadd.f32 %v5640, 1e-05
        %v5657 = vadd.f32 %v5641, 1e-05
        %v5658 = vadd.f32 %v5642, 1e-05
        %v5659 = vrsqrt.pop %v5643
        %v5660 = vmul.f32 %v5659, %v5643
        %v5661 = vmul.f32 %v5660, %v5659
        %v5662 = vmul.f32 0.5, %v5661
        %v5663 = vsub.f32 1.5, %v5662
        %v5664 = vmul.f32 %v5659, %v5663
        %vm5665 = vweird.f32 %v5643
        %vm5666 = vweird.f32 %v5659
        %vm5667 = vmor %vm5665, %vm5666
        %v5668 = vsel %vm5667, %v5659, %v5664
        %v5669 = vrsqrt.pop %v5644
        %v5670 = vmul.f32 %v5669, %v5644
        %v5671 = vmul.f32 %v5670, %v5669
        %v5672 = vmul.f32 0.5, %v5671
        %v5673 = vsub.f32 1.5, %v5672
        %v5674 = vmul.f32 %v5669, %v5673
        %vm5675 = vweird.f32 %v5644
        %vm5676 = vweird.f32 %v5669
        %vm5677 = vmor %vm5675, %vm5676
        %v5678 = vsel %vm5677, %v5669, %v5674
        %v5679 = vrsqrt.pop %v5645
        %v5680 = vmul.f32 %v5679, %v5645
        %v5681 = vmul.f32 %v5680, %v5679
        %v5682 = vmul.f32 0.5, %v5681
        %v5683 = vsub.f32 1.5, %v5682
        %v5684 = vmul.f32 %v5679, %v5683
        %vm5685 = vweird.f32 %v5645
        %vm5686 = vweird.f32 %v5679
        %vm5687 = vmor %vm5685, %vm5686
        %v5688 = vsel %vm5687, %v5679, %v5684
        %v5689 = vrsqrt.pop %v5646
        %v5690 = vmul.f32 %v5689, %v5646
        %v5691 = vmul.f32 %v5690, %v5689
        %v5692 = vmul.f32 0.5, %v5691
        %v5693 = vsub.f32 1.5, %v5692
        %v5694 = vmul.f32 %v5689, %v5693
        %vm5695 = vweird.f32 %v5646
        %vm5696 = vweird.f32 %v5689
        %vm5697 = vmor %vm5695, %vm5696
        %v5698 = vsel %vm5697, %v5689, %v5694
        %v5699 = vrsqrt.pop %v5647
        %v5700 = vmul.f32 %v5699, %v5647
        %v5701 = vmul.f32 %v5700, %v5699
        %v5702 = vmul.f32 0.5, %v5701
        %v5703 = vsub.f32 1.5, %v5702
        %v5704 = vmul.f32 %v5699, %v5703
        %vm5705 = vweird.f32 %v5647
        %vm5706 = vweird.f32 %v5699
        %vm5707 = vmor %vm5705, %vm5706
        %v5708 = vsel %vm5707, %v5699, %v5704
        %v5709 = vrsqrt.pop %v5648
        %v5710 = vmul.f32 %v5709, %v5648
        %v5711 = vmul.f32 %v5710, %v5709
        %v5712 = vmul.f32 0.5, %v5711
        %v5713 = vsub.f32 1.5, %v5712
        %v5714 = vmul.f32 %v5709, %v5713
        %vm5715 = vweird.f32 %v5648
        %vm5716 = vweird.f32 %v5709
        %vm5717 = vmor %vm5715, %vm5716
        %v5718 = vsel %vm5717, %v5709, %v5714
        %v5719 = vrsqrt.pop %v5649
        %v5720 = vmul.f32 %v5719, %v5649
        %v5721 = vmul.f32 %v5720, %v5719
        %v5722 = vmul.f32 0.5, %v5721
        %v5723 = vsub.f32 1.5, %v5722
        %v5724 = vmul.f32 %v5719, %v5723
        %vm5725 = vweird.f32 %v5649
        %vm5726 = vweird.f32 %v5719
        %vm5727 = vmor %vm5725, %vm5726
        %v5728 = vsel %vm5727, %v5719, %v5724
        %v5729 = vrsqrt.pop %v5650
        %v5730 = vmul.f32 %v5729, %v5650
        %v5731 = vmul.f32 %v5730, %v5729
        %v5732 = vmul.f32 0.5, %v5731
        %v5733 = vsub.f32 1.5, %v5732
        %v5734 = vmul.f32 %v5729, %v5733
        %vm5735 = vweird.f32 %v5650
        %vm5736 = vweird.f32 %v5729
        %vm5737 = vmor %vm5735, %vm5736
        %v5738 = vsel %vm5737, %v5729, %v5734
        %v5739 = vrsqrt.pop %v5651
        %v5740 = vmul.f32 %v5739, %v5651
        %v5741 = vmul.f32 %v5740, %v5739
        %v5742 = vmul.f32 0.5, %v5741
        %v5743 = vsub.f32 1.5, %v5742
        %v5744 = vmul.f32 %v5739, %v5743
        %vm5745 = vweird.f32 %v5651
        %vm5746 = vweird.f32 %v5739
        %vm5747 = vmor %vm5745, %vm5746
        %v5748 = vsel %vm5747, %v5739, %v5744
        %v5749 = vrsqrt.pop %v5652
        %v5750 = vmul.f32 %v5749, %v5652
        %v5751 = vmul.f32 %v5750, %v5749
        %v5752 = vmul.f32 0.5, %v5751
        %v5753 = vsub.f32 1.5, %v5752
        %v5754 = vmul.f32 %v5749, %v5753
        %vm5755 = vweird.f32 %v5652
        %vm5756 = vweird.f32 %v5749
        %vm5757 = vmor %vm5755, %vm5756
        %v5758 = vsel %vm5757, %v5749, %v5754
        %v5759 = vrsqrt.pop %v5653
        %v5760 = vmul.f32 %v5759, %v5653
        %v5761 = vmul.f32 %v5760, %v5759
        %v5762 = vmul.f32 0.5, %v5761
        %v5763 = vsub.f32 1.5, %v5762
        %v5764 = vmul.f32 %v5759, %v5763
        %vm5765 = vweird.f32 %v5653
        %vm5766 = vweird.f32 %v5759
        %vm5767 = vmor %vm5765, %vm5766
        %v5768 = vsel %vm5767, %v5759, %v5764
        %v5769 = vrsqrt.pop %v5654
        %v5770 = vmul.f32 %v5769, %v5654
        %v5771 = vmul.f32 %v5770, %v5769
        %v5772 = vmul.f32 0.5, %v5771
        %v5773 = vsub.f32 1.5, %v5772
        %v5774 = vmul.f32 %v5769, %v5773
        %vm5775 = vweird.f32 %v5654
        %vm5776 = vweird.f32 %v5769
        %vm5777 = vmor %vm5775, %vm5776
        %v5778 = vsel %vm5777, %v5769, %v5774
        %v5779 = vrsqrt.pop %v5655
        %v5780 = vmul.f32 %v5779, %v5655
        %v5781 = vmul.f32 %v5780, %v5779
        %v5782 = vmul.f32 0.5, %v5781
        %v5783 = vsub.f32 1.5, %v5782
        %v5784 = vmul.f32 %v5779, %v5783
        %vm5785 = vweird.f32 %v5655
        %vm5786 = vweird.f32 %v5779
        %vm5787 = vmor %vm5785, %vm5786
        %v5788 = vsel %vm5787, %v5779, %v5784
        %v5789 = vrsqrt.pop %v5656
        %v5790 = vmul.f32 %v5789, %v5656
        %v5791 = vmul.f32 %v5790, %v5789
        %v5792 = vmul.f32 0.5, %v5791
        %v5793 = vsub.f32 1.5, %v5792
        %v5794 = vmul.f32 %v5789, %v5793
        %vm5795 = vweird.f32 %v5656
        %vm5796 = vweird.f32 %v5789
        %vm5797 = vmor %vm5795, %vm5796
        %v5798 = vsel %vm5797, %v5789, %v5794
        %v5799 = vrsqrt.pop %v5657
        %v5800 = vmul.f32 %v5799, %v5657
        %v5801 = vmul.f32 %v5800, %v5799
        %v5802 = vmul.f32 0.5, %v5801
        %v5803 = vsub.f32 1.5, %v5802
        %v5804 = vmul.f32 %v5799, %v5803
        %vm5805 = vweird.f32 %v5657
        %vm5806 = vweird.f32 %v5799
        %vm5807 = vmor %vm5805, %vm5806
        %v5808 = vsel %vm5807, %v5799, %v5804
        %v5809 = vrsqrt.pop %v5658
        %v5810 = vmul.f32 %v5809, %v5658
        %v5811 = vmul.f32 %v5810, %v5809
        %v5812 = vmul.f32 0.5, %v5811
        %v5813 = vsub.f32 1.5, %v5812
        %v5814 = vmul.f32 %v5809, %v5813
        %vm5815 = vweird.f32 %v5658
        %vm5816 = vweird.f32 %v5809
        %vm5817 = vmor %vm5815, %vm5816
        %v5818 = vsel %vm5817, %v5809, %v5814
        %v5819 = vmul.f32 %v5547, %v5668
        %v5820 = vmul.f32 %v5548, %v5678
        %v5821 = vmul.f32 %v5549, %v5688
        %v5822 = vmul.f32 %v5550, %v5698
        %v5823 = vmul.f32 %v5551, %v5708
        %v5824 = vmul.f32 %v5552, %v5718
        %v5825 = vmul.f32 %v5553, %v5728
        %v5826 = vmul.f32 %v5554, %v5738
        %v5827 = vmul.f32 %v5555, %v5748
        %v5828 = vmul.f32 %v5556, %v5758
        %v5829 = vmul.f32 %v5557, %v5768
        %v5830 = vmul.f32 %v5558, %v5778
        %v5831 = vmul.f32 %v5559, %v5788
        %v5832 = vmul.f32 %v5560, %v5798
        %v5833 = vmul.f32 %v5561, %v5808
        %v5834 = vmul.f32 %v5562, %v5818
        %v5835 = vmul.f32 %v5819, %v1250
        %v5836 = vmul.f32 %v5820, %v1250
        %v5837 = vmul.f32 %v5821, %v1250
        %v5838 = vmul.f32 %v5822, %v1250
        %v5839 = vmul.f32 %v5823, %v1250
        %v5840 = vmul.f32 %v5824, %v1250
        %v5841 = vmul.f32 %v5825, %v1250
        %v5842 = vmul.f32 %v5826, %v1250
        %v5843 = vmul.f32 %v5827, %v1250
        %v5844 = vmul.f32 %v5828, %v1250
        %v5845 = vmul.f32 %v5829, %v1250
        %v5846 = vmul.f32 %v5830, %v1250
        %v5847 = vmul.f32 %v5831, %v1250
        %v5848 = vmul.f32 %v5832, %v1250
        %v5849 = vmul.f32 %v5833, %v1250
        %v5850 = vmul.f32 %v5834, %v1250
        %v5851 = vadd.f32 %v5835, %v1269
        %v5852 = vadd.f32 %v5836, %v1269
        %v5853 = vadd.f32 %v5837, %v1269
        %v5854 = vadd.f32 %v5838, %v1269
        %v5855 = vadd.f32 %v5839, %v1269
        %v5856 = vadd.f32 %v5840, %v1269
        %v5857 = vadd.f32 %v5841, %v1269
        %v5858 = vadd.f32 %v5842, %v1269
        %v5859 = vadd.f32 %v5843, %v1269
        %v5860 = vadd.f32 %v5844, %v1269
        %v5861 = vadd.f32 %v5845, %v1269
        %v5862 = vadd.f32 %v5846, %v1269
        %v5863 = vadd.f32 %v5847, %v1269
        %v5864 = vadd.f32 %v5848, %v1269
        %v5865 = vadd.f32 %v5849, %v1269
        %v5866 = vadd.f32 %v5850, %v1269
        %v5867 = vadd.f32 %v5436, %v5851
        %v5868 = vadd.f32 %v5439, %v5852
        %v5869 = vadd.f32 %v5442, %v5853
        %v5870 = vadd.f32 %v5445, %v5854
        %v5871 = vadd.f32 %v5448, %v5855
        %v5872 = vadd.f32 %v5451, %v5856
        %v5873 = vadd.f32 %v5454, %v5857
        %v5874 = vadd.f32 %v5457, %v5858
        %v5875 = vadd.f32 %v5460, %v5859
        %v5876 = vadd.f32 %v5463, %v5860
        %v5877 = vadd.f32 %v5466, %v5861
        %v5878 = vadd.f32 %v5469, %v5862
        %v5879 = vadd.f32 %v5472, %v5863
        %v5880 = vadd.f32 %v5475, %v5864
        %v5881 = vadd.f32 %v5478, %v5865
        %v5882 = vadd.f32 %v5481, %v5866
        %v5883 = vld [vmem:[%s10] sm:$0xff]
        %v5884 = vld [vmem:[%s10 + $0x8] sm:$0xff]
        %v5885 = vld [vmem:[%s10 + $0x10] sm:$0xff]
        %v5886 = vld [vmem:[%s10 + $0x18] sm:$0xff]
        %v5887 = vld [vmem:[%s11] sm:$0x1]
        %v5889 = vperm.slane %v5887, 0
        %v5892 = vsel %vm889, %v5867, 0
        %v5895 = vsel %vm889, %v5868, 0
        %v5898 = vsel %vm889, %v5869, 0
        %v5901 = vsel %vm889, %v5870, 0
        %v5904 = vsel %vm889, %v5871, 0
        %v5907 = vsel %vm889, %v5872, 0
        %v5910 = vsel %vm889, %v5873, 0
        %v5913 = vsel %vm889, %v5874, 0
        %v5916 = vsel %vm889, %v5875, 0
        %v5919 = vsel %vm889, %v5876, 0
        %v5922 = vsel %vm889, %v5877, 0
        %v5925 = vsel %vm889, %v5878, 0
        %v5928 = vsel %vm889, %v5879, 0
        %v5931 = vsel %vm889, %v5880, 0
        %v5934 = vsel %vm889, %v5881, 0
        %v5937 = vsel %vm889, %v5882, 0
        %5939 = vmatpush.msra.mxu0 0.0
        %5940 = vmatpush.msra.mxu0 0.0
        %5941 = vmatpush.msra.mxu0 0.0
        %5942 = vmatpush.msra.mxu0 0.0
        %5943 = vmatpush.msra.mxu0 0.0
        %5944 = vmatpush.msra.mxu0 0.0
        %5945 = vmatpush.msra.mxu0 0.0
        %5946 = vmatpush.msra.mxu0 0.0
        %5947 = vmatpush.msra.mxu0 0.0
        %5948 = vmatpush.msra.mxu0 0.0
        %5949 = vmatpush.msra.mxu0 0.0
        %5950 = vmatpush.msra.mxu0 0.0
        %5951 = vmatpush.msra.mxu0 %v5886
        %5952 = vmatpush.msra.mxu0 %v5885
        %5953 = vmatpush.msra.mxu0 %v5884
        %5954 = vmatpush.msra.mxu0 %v5883
        %5955 = vmatmul.f32.gmra.mxu0 %v5892
        %v5956 = vpop.f32.mrf.mxu0
        %v5957 = vadd.f32 %v5889, %v5956
        %5958 = vmatmul.f32.gmra.mxu0 %v5895
        %v5959 = vpop.f32.mrf.mxu0
        %v5960 = vadd.f32 %v5889, %v5959
        %5961 = vmatmul.f32.gmra.mxu0 %v5898
        %v5962 = vpop.f32.mrf.mxu0
        %v5963 = vadd.f32 %v5889, %v5962
        %5964 = vmatmul.f32.gmra.mxu0 %v5901
        %v5965 = vpop.f32.mrf.mxu0
        %v5966 = vadd.f32 %v5889, %v5965
        %5967 = vmatmul.f32.gmra.mxu0 %v5904
        %v5968 = vpop.f32.mrf.mxu0
        %v5969 = vadd.f32 %v5889, %v5968
        %5970 = vmatmul.f32.gmra.mxu0 %v5907
        %v5971 = vpop.f32.mrf.mxu0
        %v5972 = vadd.f32 %v5889, %v5971
        %5973 = vmatmul.f32.gmra.mxu0 %v5910
        %v5974 = vpop.f32.mrf.mxu0
        %v5975 = vadd.f32 %v5889, %v5974
        %5976 = vmatmul.f32.gmra.mxu0 %v5913
        %v5977 = vpop.f32.mrf.mxu0
        %v5978 = vadd.f32 %v5889, %v5977
        %5979 = vmatmul.f32.gmra.mxu0 %v5916
        %v5980 = vpop.f32.mrf.mxu0
        %v5981 = vadd.f32 %v5889, %v5980
        %5982 = vmatmul.f32.gmra.mxu0 %v5919
        %v5983 = vpop.f32.mrf.mxu0
        %v5984 = vadd.f32 %v5889, %v5983
        %5985 = vmatmul.f32.gmra.mxu0 %v5922
        %v5986 = vpop.f32.mrf.mxu0
        %v5987 = vadd.f32 %v5889, %v5986
        %5988 = vmatmul.f32.gmra.mxu0 %v5925
        %v5989 = vpop.f32.mrf.mxu0
        %v5990 = vadd.f32 %v5889, %v5989
        %5991 = vmatmul.f32.gmra.mxu0 %v5928
        %v5992 = vpop.f32.mrf.mxu0
        %v5993 = vadd.f32 %v5889, %v5992
        %5994 = vmatmul.f32.gmra.mxu0 %v5931
        %v5995 = vpop.f32.mrf.mxu0
        %v5996 = vadd.f32 %v5889, %v5995
        %5997 = vmatmul.f32.gmra.mxu0 %v5934
        %v5998 = vpop.f32.mrf.mxu0
        %v5999 = vadd.f32 %v5889, %v5998
        %6000 = vmatmul.f32.gmra.mxu0 %v5937
        %v6001 = vpop.f32.mrf.mxu0
        %v6002 = vadd.f32 %v5889, %v6001
        %6003 = vdwg.mxu0
        %v6004 = vmax.f32 %v5957, 0.0
        %v6005 = vmax.f32 %v5960, 0.0
        %v6006 = vmax.f32 %v5963, 0.0
        %v6007 = vmax.f32 %v5966, 0.0
        %v6008 = vmax.f32 %v5969, 0.0
        %v6009 = vmax.f32 %v5972, 0.0
        %v6010 = vmax.f32 %v5975, 0.0
        %v6011 = vmax.f32 %v5978, 0.0
        %v6012 = vmax.f32 %v5981, 0.0
        %v6013 = vmax.f32 %v5984, 0.0
        %v6014 = vmax.f32 %v5987, 0.0
        %v6015 = vmax.f32 %v5990, 0.0
        %v6016 = vmax.f32 %v5993, 0.0
        %v6017 = vmax.f32 %v5996, 0.0
        %v6018 = vmax.f32 %v5999, 0.0
        %v6019 = vmax.f32 %v6002, 0.0
        %v6020 = vld [vmem:[%s12] sm:$0xff]
        %v6021 = vld [vmem:[%s12 + $0x8] sm:$0xff]
        %v6022 = vld [vmem:[%s12 + $0x10] sm:$0xff]
        %v6023 = vld [vmem:[%s12 + $0x18] sm:$0xff]
        %v6024 = vld [vmem:[%s12 + $0x20] sm:$0xff]
        %v6025 = vld [vmem:[%s12 + $0x28] sm:$0xff]
        %v6026 = vld [vmem:[%s12 + $0x30] sm:$0xff]
        %v6027 = vld [vmem:[%s12 + $0x38] sm:$0xff]
        %v6028 = vld [vmem:[%s12 + $0x40] sm:$0xff]
        %v6029 = vld [vmem:[%s12 + $0x48] sm:$0xff]
        %v6030 = vld [vmem:[%s12 + $0x50] sm:$0xff]
        %v6031 = vld [vmem:[%s12 + $0x58] sm:$0xff]
        %v6032 = vld [vmem:[%s12 + $0x60] sm:$0xff]
        %v6033 = vld [vmem:[%s12 + $0x68] sm:$0xff]
        %v6034 = vld [vmem:[%s12 + $0x70] sm:$0xff]
        %v6035 = vld [vmem:[%s12 + $0x78] sm:$0xff]
        %v6036 = vld [vmem:[%s13] sm:$0x1]
        %v6038 = vperm.slane %v6036, 0
        %6040 = vmatpush.msra.mxu0 %v6035
        %6041 = vmatpush.msra.mxu0 %v6034
        %6042 = vmatpush.msra.mxu0 %v6033
        %6043 = vmatpush.msra.mxu0 %v6032
        %6044 = vmatpush.msra.mxu0 %v6031
        %6045 = vmatpush.msra.mxu0 %v6030
        %6046 = vmatpush.msra.mxu0 %v6029
        %6047 = vmatpush.msra.mxu0 %v6028
        %6048 = vmatpush.msra.mxu0 %v6027
        %6049 = vmatpush.msra.mxu0 %v6026
        %6050 = vmatpush.msra.mxu0 %v6025
        %6051 = vmatpush.msra.mxu0 %v6024
        %6052 = vmatpush.msra.mxu0 %v6023
        %6053 = vmatpush.msra.mxu0 %v6022
        %6054 = vmatpush.msra.mxu0 %v6021
        %6055 = vmatpush.msra.mxu0 %v6020
        %6056 = vmatmul.f32.gmra.mxu0 %v6004
        %v6057 = vpop.f32.mrf.mxu0
        %v6058 = vadd.f32 %v6038, %v6057
        %6059 = vmatmul.f32.gmra.mxu0 %v6005
        %v6060 = vpop.f32.mrf.mxu0
        %v6061 = vadd.f32 %v6038, %v6060
        %6062 = vmatmul.f32.gmra.mxu0 %v6006
        %v6063 = vpop.f32.mrf.mxu0
        %v6064 = vadd.f32 %v6038, %v6063
        %6065 = vmatmul.f32.gmra.mxu0 %v6007
        %v6066 = vpop.f32.mrf.mxu0
        %v6067 = vadd.f32 %v6038, %v6066
        %6068 = vmatmul.f32.gmra.mxu0 %v6008
        %v6069 = vpop.f32.mrf.mxu0
        %v6070 = vadd.f32 %v6038, %v6069
        %6071 = vmatmul.f32.gmra.mxu0 %v6009
        %v6072 = vpop.f32.mrf.mxu0
        %v6073 = vadd.f32 %v6038, %v6072
        %6074 = vmatmul.f32.gmra.mxu0 %v6010
        %v6075 = vpop.f32.mrf.mxu0
        %v6076 = vadd.f32 %v6038, %v6075
        %6077 = vmatmul.f32.gmra.mxu0 %v6011
        %v6078 = vpop.f32.mrf.mxu0
        %v6079 = vadd.f32 %v6038, %v6078
        %6080 = vmatmul.f32.gmra.mxu0 %v6012
        %v6081 = vpop.f32.mrf.mxu0
        %v6082 = vadd.f32 %v6038, %v6081
        %6083 = vmatmul.f32.gmra.mxu0 %v6013
        %v6084 = vpop.f32.mrf.mxu0
        %v6085 = vadd.f32 %v6038, %v6084
        %6086 = vmatmul.f32.gmra.mxu0 %v6014
        %v6087 = vpop.f32.mrf.mxu0
        %v6088 = vadd.f32 %v6038, %v6087
        %6089 = vmatmul.f32.gmra.mxu0 %v6015
        %v6090 = vpop.f32.mrf.mxu0
        %v6091 = vadd.f32 %v6038, %v6090
        %6092 = vmatmul.f32.gmra.mxu0 %v6016
        %v6093 = vpop.f32.mrf.mxu0
        %v6094 = vadd.f32 %v6038, %v6093
        %6095 = vmatmul.f32.gmra.mxu0 %v6017
        %v6096 = vpop.f32.mrf.mxu0
        %v6097 = vadd.f32 %v6038, %v6096
        %6098 = vmatmul.f32.gmra.mxu0 %v6018
        %v6099 = vpop.f32.mrf.mxu0
        %v6100 = vadd.f32 %v6038, %v6099
        %6101 = vmatmul.f32.gmra.mxu0 %v6019
        %v6102 = vpop.f32.mrf.mxu0
        %v6103 = vadd.f32 %v6038, %v6102
        %6104 = vdwg.mxu0
        %v6105 = vsel %vm889, %v6058, 0.0
        %6106 = vadd.xlane.f32.xlu0 %v6105
        %v6107 = vpop.xlane.xlu0 %6106
        %v6108 = vsel %vm889, %v6061, 0.0
        %6109 = vadd.xlane.f32.xlu0 %v6108
        %v6110 = vpop.xlane.xlu0 %6109
        %v6111 = vsel %vm889, %v6064, 0.0
        %6112 = vadd.xlane.f32.xlu0 %v6111
        %v6113 = vpop.xlane.xlu0 %6112
        %v6114 = vsel %vm889, %v6067, 0.0
        %6115 = vadd.xlane.f32.xlu0 %v6114
        %v6116 = vpop.xlane.xlu0 %6115
        %v6117 = vsel %vm889, %v6070, 0.0
        %6118 = vadd.xlane.f32.xlu0 %v6117
        %v6119 = vpop.xlane.xlu0 %6118
        %v6120 = vsel %vm889, %v6073, 0.0
        %6121 = vadd.xlane.f32.xlu0 %v6120
        %v6122 = vpop.xlane.xlu0 %6121
        %v6123 = vsel %vm889, %v6076, 0.0
        %6124 = vadd.xlane.f32.xlu0 %v6123
        %v6125 = vpop.xlane.xlu0 %6124
        %v6126 = vsel %vm889, %v6079, 0.0
        %6127 = vadd.xlane.f32.xlu0 %v6126
        %v6128 = vpop.xlane.xlu0 %6127
        %v6129 = vsel %vm889, %v6082, 0.0
        %6130 = vadd.xlane.f32.xlu0 %v6129
        %v6131 = vpop.xlane.xlu0 %6130
        %v6132 = vsel %vm889, %v6085, 0.0
        %6133 = vadd.xlane.f32.xlu0 %v6132
        %v6134 = vpop.xlane.xlu0 %6133
        %v6135 = vsel %vm889, %v6088, 0.0
        %6136 = vadd.xlane.f32.xlu0 %v6135
        %v6137 = vpop.xlane.xlu0 %6136
        %v6138 = vsel %vm889, %v6091, 0.0
        %6139 = vadd.xlane.f32.xlu0 %v6138
        %v6140 = vpop.xlane.xlu0 %6139
        %v6141 = vsel %vm889, %v6094, 0.0
        %6142 = vadd.xlane.f32.xlu0 %v6141
        %v6143 = vpop.xlane.xlu0 %6142
        %v6144 = vsel %vm889, %v6097, 0.0
        %6145 = vadd.xlane.f32.xlu0 %v6144
        %v6146 = vpop.xlane.xlu0 %6145
        %v6147 = vsel %vm889, %v6100, 0.0
        %6148 = vadd.xlane.f32.xlu0 %v6147
        %v6149 = vpop.xlane.xlu0 %6148
        %v6150 = vsel %vm889, %v6103, 0.0
        %6151 = vadd.xlane.f32.xlu0 %v6150
        %v6152 = vpop.xlane.xlu0 %6151
        %v6153 = vmul.f32 %v6107, %v944
        %v6154 = vmul.f32 %v6110, %v944
        %v6155 = vmul.f32 %v6113, %v944
        %v6156 = vmul.f32 %v6116, %v944
        %v6157 = vmul.f32 %v6119, %v944
        %v6158 = vmul.f32 %v6122, %v944
        %v6159 = vmul.f32 %v6125, %v944
        %v6160 = vmul.f32 %v6128, %v944
        %v6161 = vmul.f32 %v6131, %v944
        %v6162 = vmul.f32 %v6134, %v944
        %v6163 = vmul.f32 %v6137, %v944
        %v6164 = vmul.f32 %v6140, %v944
        %v6165 = vmul.f32 %v6143, %v944
        %v6166 = vmul.f32 %v6146, %v944
        %v6167 = vmul.f32 %v6149, %v944
        %v6168 = vmul.f32 %v6152, %v944
        %v6169 = vsub.f32 %v6058, %v6153
        %v6170 = vsub.f32 %v6061, %v6154
        %v6171 = vsub.f32 %v6064, %v6155
        %v6172 = vsub.f32 %v6067, %v6156
        %v6173 = vsub.f32 %v6070, %v6157
        %v6174 = vsub.f32 %v6073, %v6158
        %v6175 = vsub.f32 %v6076, %v6159
        %v6176 = vsub.f32 %v6079, %v6160
        %v6177 = vsub.f32 %v6082, %v6161
        %v6178 = vsub.f32 %v6085, %v6162
        %v6179 = vsub.f32 %v6088, %v6163
        %v6180 = vsub.f32 %v6091, %v6164
        %v6181 = vsub.f32 %v6094, %v6165
        %v6182 = vsub.f32 %v6097, %v6166
        %v6183 = vsub.f32 %v6100, %v6167
        %v6184 = vsub.f32 %v6103, %v6168
        %v6185 = vmul.f32 %v6169, %v6169
        %v6186 = vmul.f32 %v6170, %v6170
        %v6187 = vmul.f32 %v6171, %v6171
        %v6188 = vmul.f32 %v6172, %v6172
        %v6189 = vmul.f32 %v6173, %v6173
        %v6190 = vmul.f32 %v6174, %v6174
        %v6191 = vmul.f32 %v6175, %v6175
        %v6192 = vmul.f32 %v6176, %v6176
        %v6193 = vmul.f32 %v6177, %v6177
        %v6194 = vmul.f32 %v6178, %v6178
        %v6195 = vmul.f32 %v6179, %v6179
        %v6196 = vmul.f32 %v6180, %v6180
        %v6197 = vmul.f32 %v6181, %v6181
        %v6198 = vmul.f32 %v6182, %v6182
        %v6199 = vmul.f32 %v6183, %v6183
        %v6200 = vmul.f32 %v6184, %v6184
        %v6201 = vsel %vm889, %v6185, 0.0
        %6202 = vadd.xlane.f32.xlu0 %v6201
        %v6203 = vpop.xlane.xlu0 %6202
        %v6204 = vsel %vm889, %v6186, 0.0
        %6205 = vadd.xlane.f32.xlu0 %v6204
        %v6206 = vpop.xlane.xlu0 %6205
        %v6207 = vsel %vm889, %v6187, 0.0
        %6208 = vadd.xlane.f32.xlu0 %v6207
        %v6209 = vpop.xlane.xlu0 %6208
        %v6210 = vsel %vm889, %v6188, 0.0
        %6211 = vadd.xlane.f32.xlu0 %v6210
        %v6212 = vpop.xlane.xlu0 %6211
        %v6213 = vsel %vm889, %v6189, 0.0
        %6214 = vadd.xlane.f32.xlu0 %v6213
        %v6215 = vpop.xlane.xlu0 %6214
        %v6216 = vsel %vm889, %v6190, 0.0
        %6217 = vadd.xlane.f32.xlu0 %v6216
        %v6218 = vpop.xlane.xlu0 %6217
        %v6219 = vsel %vm889, %v6191, 0.0
        %6220 = vadd.xlane.f32.xlu0 %v6219
        %v6221 = vpop.xlane.xlu0 %6220
        %v6222 = vsel %vm889, %v6192, 0.0
        %6223 = vadd.xlane.f32.xlu0 %v6222
        %v6224 = vpop.xlane.xlu0 %6223
        %v6225 = vsel %vm889, %v6193, 0.0
        %6226 = vadd.xlane.f32.xlu0 %v6225
        %v6227 = vpop.xlane.xlu0 %6226
        %v6228 = vsel %vm889, %v6194, 0.0
        %6229 = vadd.xlane.f32.xlu0 %v6228
        %v6230 = vpop.xlane.xlu0 %6229
        %v6231 = vsel %vm889, %v6195, 0.0
        %6232 = vadd.xlane.f32.xlu0 %v6231
        %v6233 = vpop.xlane.xlu0 %6232
        %v6234 = vsel %vm889, %v6196, 0.0
        %6235 = vadd.xlane.f32.xlu0 %v6234
        %v6236 = vpop.xlane.xlu0 %6235
        %v6237 = vsel %vm889, %v6197, 0.0
        %6238 = vadd.xlane.f32.xlu0 %v6237
        %v6239 = vpop.xlane.xlu0 %6238
        %v6240 = vsel %vm889, %v6198, 0.0
        %6241 = vadd.xlane.f32.xlu0 %v6240
        %v6242 = vpop.xlane.xlu0 %6241
        %v6243 = vsel %vm889, %v6199, 0.0
        %6244 = vadd.xlane.f32.xlu0 %v6243
        %v6245 = vpop.xlane.xlu0 %6244
        %v6246 = vsel %vm889, %v6200, 0.0
        %6247 = vadd.xlane.f32.xlu0 %v6246
        %v6248 = vpop.xlane.xlu0 %6247
        %v6249 = vmul.f32 %v6203, %v944
        %v6250 = vmul.f32 %v6206, %v944
        %v6251 = vmul.f32 %v6209, %v944
        %v6252 = vmul.f32 %v6212, %v944
        %v6253 = vmul.f32 %v6215, %v944
        %v6254 = vmul.f32 %v6218, %v944
        %v6255 = vmul.f32 %v6221, %v944
        %v6256 = vmul.f32 %v6224, %v944
        %v6257 = vmul.f32 %v6227, %v944
        %v6258 = vmul.f32 %v6230, %v944
        %v6259 = vmul.f32 %v6233, %v944
        %v6260 = vmul.f32 %v6236, %v944
        %v6261 = vmul.f32 %v6239, %v944
        %v6262 = vmul.f32 %v6242, %v944
        %v6263 = vmul.f32 %v6245, %v944
        %v6264 = vmul.f32 %v6248, %v944
        %v6265 = vadd.f32 %v6249, 1e-05
        %v6266 = vadd.f32 %v6250, 1e-05
        %v6267 = vadd.f32 %v6251, 1e-05
        %v6268 = vadd.f32 %v6252, 1e-05
        %v6269 = vadd.f32 %v6253, 1e-05
        %v6270 = vadd.f32 %v6254, 1e-05
        %v6271 = vadd.f32 %v6255, 1e-05
        %v6272 = vadd.f32 %v6256, 1e-05
        %v6273 = vadd.f32 %v6257, 1e-05
        %v6274 = vadd.f32 %v6258, 1e-05
        %v6275 = vadd.f32 %v6259, 1e-05
        %v6276 = vadd.f32 %v6260, 1e-05
        %v6277 = vadd.f32 %v6261, 1e-05
        %v6278 = vadd.f32 %v6262, 1e-05
        %v6279 = vadd.f32 %v6263, 1e-05
        %v6280 = vadd.f32 %v6264, 1e-05
        %v6281 = vrsqrt.pop %v6265
        %v6282 = vmul.f32 %v6281, %v6265
        %v6283 = vmul.f32 %v6282, %v6281
        %v6284 = vmul.f32 0.5, %v6283
        %v6285 = vsub.f32 1.5, %v6284
        %v6286 = vmul.f32 %v6281, %v6285
        %vm6287 = vweird.f32 %v6265
        %vm6288 = vweird.f32 %v6281
        %vm6289 = vmor %vm6287, %vm6288
        %v6290 = vsel %vm6289, %v6281, %v6286
        %v6291 = vrsqrt.pop %v6266
        %v6292 = vmul.f32 %v6291, %v6266
        %v6293 = vmul.f32 %v6292, %v6291
        %v6294 = vmul.f32 0.5, %v6293
        %v6295 = vsub.f32 1.5, %v6294
        %v6296 = vmul.f32 %v6291, %v6295
        %vm6297 = vweird.f32 %v6266
        %vm6298 = vweird.f32 %v6291
        %vm6299 = vmor %vm6297, %vm6298
        %v6300 = vsel %vm6299, %v6291, %v6296
        %v6301 = vrsqrt.pop %v6267
        %v6302 = vmul.f32 %v6301, %v6267
        %v6303 = vmul.f32 %v6302, %v6301
        %v6304 = vmul.f32 0.5, %v6303
        %v6305 = vsub.f32 1.5, %v6304
        %v6306 = vmul.f32 %v6301, %v6305
        %vm6307 = vweird.f32 %v6267
        %vm6308 = vweird.f32 %v6301
        %vm6309 = vmor %vm6307, %vm6308
        %v6310 = vsel %vm6309, %v6301, %v6306
        %v6311 = vrsqrt.pop %v6268
        %v6312 = vmul.f32 %v6311, %v6268
        %v6313 = vmul.f32 %v6312, %v6311
        %v6314 = vmul.f32 0.5, %v6313
        %v6315 = vsub.f32 1.5, %v6314
        %v6316 = vmul.f32 %v6311, %v6315
        %vm6317 = vweird.f32 %v6268
        %vm6318 = vweird.f32 %v6311
        %vm6319 = vmor %vm6317, %vm6318
        %v6320 = vsel %vm6319, %v6311, %v6316
        %v6321 = vrsqrt.pop %v6269
        %v6322 = vmul.f32 %v6321, %v6269
        %v6323 = vmul.f32 %v6322, %v6321
        %v6324 = vmul.f32 0.5, %v6323
        %v6325 = vsub.f32 1.5, %v6324
        %v6326 = vmul.f32 %v6321, %v6325
        %vm6327 = vweird.f32 %v6269
        %vm6328 = vweird.f32 %v6321
        %vm6329 = vmor %vm6327, %vm6328
        %v6330 = vsel %vm6329, %v6321, %v6326
        %v6331 = vrsqrt.pop %v6270
        %v6332 = vmul.f32 %v6331, %v6270
        %v6333 = vmul.f32 %v6332, %v6331
        %v6334 = vmul.f32 0.5, %v6333
        %v6335 = vsub.f32 1.5, %v6334
        %v6336 = vmul.f32 %v6331, %v6335
        %vm6337 = vweird.f32 %v6270
        %vm6338 = vweird.f32 %v6331
        %vm6339 = vmor %vm6337, %vm6338
        %v6340 = vsel %vm6339, %v6331, %v6336
        %v6341 = vrsqrt.pop %v6271
        %v6342 = vmul.f32 %v6341, %v6271
        %v6343 = vmul.f32 %v6342, %v6341
        %v6344 = vmul.f32 0.5, %v6343
        %v6345 = vsub.f32 1.5, %v6344
        %v6346 = vmul.f32 %v6341, %v6345
        %vm6347 = vweird.f32 %v6271
        %vm6348 = vweird.f32 %v6341
        %vm6349 = vmor %vm6347, %vm6348
        %v6350 = vsel %vm6349, %v6341, %v6346
        %v6351 = vrsqrt.pop %v6272
        %v6352 = vmul.f32 %v6351, %v6272
        %v6353 = vmul.f32 %v6352, %v6351
        %v6354 = vmul.f32 0.5, %v6353
        %v6355 = vsub.f32 1.5, %v6354
        %v6356 = vmul.f32 %v6351, %v6355
        %vm6357 = vweird.f32 %v6272
        %vm6358 = vweird.f32 %v6351
        %vm6359 = vmor %vm6357, %vm6358
        %v6360 = vsel %vm6359, %v6351, %v6356
        %v6361 = vrsqrt.pop %v6273
        %v6362 = vmul.f32 %v6361, %v6273
        %v6363 = vmul.f32 %v6362, %v6361
        %v6364 = vmul.f32 0.5, %v6363
        %v6365 = vsub.f32 1.5, %v6364
        %v6366 = vmul.f32 %v6361, %v6365
        %vm6367 = vweird.f32 %v6273
        %vm6368 = vweird.f32 %v6361
        %vm6369 = vmor %vm6367, %vm6368
        %v6370 = vsel %vm6369, %v6361, %v6366
        %v6371 = vrsqrt.pop %v6274
        %v6372 = vmul.f32 %v6371, %v6274
        %v6373 = vmul.f32 %v6372, %v6371
        %v6374 = vmul.f32 0.5, %v6373
        %v6375 = vsub.f32 1.5, %v6374
        %v6376 = vmul.f32 %v6371, %v6375
        %vm6377 = vweird.f32 %v6274
        %vm6378 = vweird.f32 %v6371
        %vm6379 = vmor %vm6377, %vm6378
        %v6380 = vsel %vm6379, %v6371, %v6376
        %v6381 = vrsqrt.pop %v6275
        %v6382 = vmul.f32 %v6381, %v6275
        %v6383 = vmul.f32 %v6382, %v6381
        %v6384 = vmul.f32 0.5, %v6383
        %v6385 = vsub.f32 1.5, %v6384
        %v6386 = vmul.f32 %v6381, %v6385
        %vm6387 = vweird.f32 %v6275
        %vm6388 = vweird.f32 %v6381
        %vm6389 = vmor %vm6387, %vm6388
        %v6390 = vsel %vm6389, %v6381, %v6386
        %v6391 = vrsqrt.pop %v6276
        %v6392 = vmul.f32 %v6391, %v6276
        %v6393 = vmul.f32 %v6392, %v6391
        %v6394 = vmul.f32 0.5, %v6393
        %v6395 = vsub.f32 1.5, %v6394
        %v6396 = vmul.f32 %v6391, %v6395
        %vm6397 = vweird.f32 %v6276
        %vm6398 = vweird.f32 %v6391
        %vm6399 = vmor %vm6397, %vm6398
        %v6400 = vsel %vm6399, %v6391, %v6396
        %v6401 = vrsqrt.pop %v6277
        %v6402 = vmul.f32 %v6401, %v6277
        %v6403 = vmul.f32 %v6402, %v6401
        %v6404 = vmul.f32 0.5, %v6403
        %v6405 = vsub.f32 1.5, %v6404
        %v6406 = vmul.f32 %v6401, %v6405
        %vm6407 = vweird.f32 %v6277
        %vm6408 = vweird.f32 %v6401
        %vm6409 = vmor %vm6407, %vm6408
        %v6410 = vsel %vm6409, %v6401, %v6406
        %v6411 = vrsqrt.pop %v6278
        %v6412 = vmul.f32 %v6411, %v6278
        %v6413 = vmul.f32 %v6412, %v6411
        %v6414 = vmul.f32 0.5, %v6413
        %v6415 = vsub.f32 1.5, %v6414
        %v6416 = vmul.f32 %v6411, %v6415
        %vm6417 = vweird.f32 %v6278
        %vm6418 = vweird.f32 %v6411
        %vm6419 = vmor %vm6417, %vm6418
        %v6420 = vsel %vm6419, %v6411, %v6416
        %v6421 = vrsqrt.pop %v6279
        %v6422 = vmul.f32 %v6421, %v6279
        %v6423 = vmul.f32 %v6422, %v6421
        %v6424 = vmul.f32 0.5, %v6423
        %v6425 = vsub.f32 1.5, %v6424
        %v6426 = vmul.f32 %v6421, %v6425
        %vm6427 = vweird.f32 %v6279
        %vm6428 = vweird.f32 %v6421
        %vm6429 = vmor %vm6427, %vm6428
        %v6430 = vsel %vm6429, %v6421, %v6426
        %v6431 = vrsqrt.pop %v6280
        %v6432 = vmul.f32 %v6431, %v6280
        %v6433 = vmul.f32 %v6432, %v6431
        %v6434 = vmul.f32 0.5, %v6433
        %v6435 = vsub.f32 1.5, %v6434
        %v6436 = vmul.f32 %v6431, %v6435
        %vm6437 = vweird.f32 %v6280
        %vm6438 = vweird.f32 %v6431
        %vm6439 = vmor %vm6437, %vm6438
        %v6440 = vsel %vm6439, %v6431, %v6436
        %v6441 = vmul.f32 %v6169, %v6290
        %v6442 = vmul.f32 %v6170, %v6300
        %v6443 = vmul.f32 %v6171, %v6310
        %v6444 = vmul.f32 %v6172, %v6320
        %v6445 = vmul.f32 %v6173, %v6330
        %v6446 = vmul.f32 %v6174, %v6340
        %v6447 = vmul.f32 %v6175, %v6350
        %v6448 = vmul.f32 %v6176, %v6360
        %v6449 = vmul.f32 %v6177, %v6370
        %v6450 = vmul.f32 %v6178, %v6380
        %v6451 = vmul.f32 %v6179, %v6390
        %v6452 = vmul.f32 %v6180, %v6400
        %v6453 = vmul.f32 %v6181, %v6410
        %v6454 = vmul.f32 %v6182, %v6420
        %v6455 = vmul.f32 %v6183, %v6430
        %v6456 = vmul.f32 %v6184, %v6440
        %v6457 = vmul.f32 %v6441, %v3971
        %v6458 = vmul.f32 %v6442, %v3971
        %v6459 = vmul.f32 %v6443, %v3971
        %v6460 = vmul.f32 %v6444, %v3971
        %v6461 = vmul.f32 %v6445, %v3971
        %v6462 = vmul.f32 %v6446, %v3971
        %v6463 = vmul.f32 %v6447, %v3971
        %v6464 = vmul.f32 %v6448, %v3971
        %v6465 = vmul.f32 %v6449, %v3971
        %v6466 = vmul.f32 %v6450, %v3971
        %v6467 = vmul.f32 %v6451, %v3971
        %v6468 = vmul.f32 %v6452, %v3971
        %v6469 = vmul.f32 %v6453, %v3971
        %v6470 = vmul.f32 %v6454, %v3971
        %v6471 = vmul.f32 %v6455, %v3971
        %v6472 = vmul.f32 %v6456, %v3971
        %v6473 = vadd.f32 %v6457, %v3990
        %v6474 = vadd.f32 %v6458, %v3990
        %v6475 = vadd.f32 %v6459, %v3990
        %v6476 = vadd.f32 %v6460, %v3990
        %v6477 = vadd.f32 %v6461, %v3990
        %v6478 = vadd.f32 %v6462, %v3990
        %v6479 = vadd.f32 %v6463, %v3990
        %v6480 = vadd.f32 %v6464, %v3990
        %v6481 = vadd.f32 %v6465, %v3990
        %v6482 = vadd.f32 %v6466, %v3990
        %v6483 = vadd.f32 %v6467, %v3990
        %v6484 = vadd.f32 %v6468, %v3990
        %v6485 = vadd.f32 %v6469, %v3990
        %v6486 = vadd.f32 %v6470, %v3990
        %v6487 = vadd.f32 %v6471, %v3990
        %v6488 = vadd.f32 %v6472, %v3990
        %v6489 = vadd.f32 %v6058, %v6473
        %v6490 = vadd.f32 %v6061, %v6474
        %v6491 = vadd.f32 %v6064, %v6475
        %v6492 = vadd.f32 %v6067, %v6476
        %v6493 = vadd.f32 %v6070, %v6477
        %v6494 = vadd.f32 %v6073, %v6478
        %v6495 = vadd.f32 %v6076, %v6479
        %v6496 = vadd.f32 %v6079, %v6480
        %v6497 = vadd.f32 %v6082, %v6481
        %v6498 = vadd.f32 %v6085, %v6482
        %v6499 = vadd.f32 %v6088, %v6483
        %v6500 = vadd.f32 %v6091, %v6484
        %v6501 = vadd.f32 %v6094, %v6485
        %v6502 = vadd.f32 %v6097, %v6486
        %v6503 = vadd.f32 %v6100, %v6487
        %v6504 = vadd.f32 %v6103, %v6488
        %v6505 = vld [vmem:[%s14] sm:$0xff]
        %v6506 = vld [vmem:[%s14 + $0x8] sm:$0xff]
        %v6507 = vld [vmem:[%s14 + $0x10] sm:$0xff]
        %v6508 = vld [vmem:[%s14 + $0x18] sm:$0xff]
        %v6509 = vld [vmem:[%s15] sm:$0x1]
        %v6511 = vperm.slane %v6509, 0
        %v6514 = vsel %vm889, %v6489, 0
        %v6517 = vsel %vm889, %v6490, 0
        %v6520 = vsel %vm889, %v6491, 0
        %v6523 = vsel %vm889, %v6492, 0
        %v6526 = vsel %vm889, %v6493, 0
        %v6529 = vsel %vm889, %v6494, 0
        %v6532 = vsel %vm889, %v6495, 0
        %v6535 = vsel %vm889, %v6496, 0
        %v6538 = vsel %vm889, %v6497, 0
        %v6541 = vsel %vm889, %v6498, 0
        %v6544 = vsel %vm889, %v6499, 0
        %v6547 = vsel %vm889, %v6500, 0
        %v6550 = vsel %vm889, %v6501, 0
        %v6553 = vsel %vm889, %v6502, 0
        %v6556 = vsel %vm889, %v6503, 0
        %v6559 = vsel %vm889, %v6504, 0
        %6561 = vmatpush.msra.mxu0 0.0
        %6562 = vmatpush.msra.mxu0 0.0
        %6563 = vmatpush.msra.mxu0 0.0
        %6564 = vmatpush.msra.mxu0 0.0
        %6565 = vmatpush.msra.mxu0 0.0
        %6566 = vmatpush.msra.mxu0 0.0
        %6567 = vmatpush.msra.mxu0 0.0
        %6568 = vmatpush.msra.mxu0 0.0
        %6569 = vmatpush.msra.mxu0 0.0
        %6570 = vmatpush.msra.mxu0 0.0
        %6571 = vmatpush.msra.mxu0 0.0
        %6572 = vmatpush.msra.mxu0 0.0
        %6573 = vmatpush.msra.mxu0 %v6508
        %6574 = vmatpush.msra.mxu0 %v6507
        %6575 = vmatpush.msra.mxu0 %v6506
        %6576 = vmatpush.msra.mxu0 %v6505
        %6577 = vmatmul.f32.gmra.mxu0 %v6514
        %v6578 = vpop.f32.mrf.mxu0
        %v6579 = vadd.f32 %v6511, %v6578
        %6580 = vmatmul.f32.gmra.mxu0 %v6517
        %v6581 = vpop.f32.mrf.mxu0
        %v6582 = vadd.f32 %v6511, %v6581
        %6583 = vmatmul.f32.gmra.mxu0 %v6520
        %v6584 = vpop.f32.mrf.mxu0
        %v6585 = vadd.f32 %v6511, %v6584
        %6586 = vmatmul.f32.gmra.mxu0 %v6523
        %v6587 = vpop.f32.mrf.mxu0
        %v6588 = vadd.f32 %v6511, %v6587
        %6589 = vmatmul.f32.gmra.mxu0 %v6526
        %v6590 = vpop.f32.mrf.mxu0
        %v6591 = vadd.f32 %v6511, %v6590
        %6592 = vmatmul.f32.gmra.mxu0 %v6529
        %v6593 = vpop.f32.mrf.mxu0
        %v6594 = vadd.f32 %v6511, %v6593
        %6595 = vmatmul.f32.gmra.mxu0 %v6532
        %v6596 = vpop.f32.mrf.mxu0
        %v6597 = vadd.f32 %v6511, %v6596
        %6598 = vmatmul.f32.gmra.mxu0 %v6535
        %v6599 = vpop.f32.mrf.mxu0
        %v6600 = vadd.f32 %v6511, %v6599
        %6601 = vmatmul.f32.gmra.mxu0 %v6538
        %v6602 = vpop.f32.mrf.mxu0
        %v6603 = vadd.f32 %v6511, %v6602
        %6604 = vmatmul.f32.gmra.mxu0 %v6541
        %v6605 = vpop.f32.mrf.mxu0
        %v6606 = vadd.f32 %v6511, %v6605
        %6607 = vmatmul.f32.gmra.mxu0 %v6544
        %v6608 = vpop.f32.mrf.mxu0
        %v6609 = vadd.f32 %v6511, %v6608
        %6610 = vmatmul.f32.gmra.mxu0 %v6547
        %v6611 = vpop.f32.mrf.mxu0
        %v6612 = vadd.f32 %v6511, %v6611
        %6613 = vmatmul.f32.gmra.mxu0 %v6550
        %v6614 = vpop.f32.mrf.mxu0
        %v6615 = vadd.f32 %v6511, %v6614
        %6616 = vmatmul.f32.gmra.mxu0 %v6553
        %v6617 = vpop.f32.mrf.mxu0
        %v6618 = vadd.f32 %v6511, %v6617
        %6619 = vmatmul.f32.gmra.mxu0 %v6556
        %v6620 = vpop.f32.mrf.mxu0
        %v6621 = vadd.f32 %v6511, %v6620
        %6622 = vmatmul.f32.gmra.mxu0 %v6559
        %v6623 = vpop.f32.mrf.mxu0
        %v6624 = vadd.f32 %v6511, %v6623
        %6625 = vdwg.mxu0
        %v6626 = vmax.f32 %v6579, 0.0
        %v6627 = vmax.f32 %v6582, 0.0
        %v6628 = vmax.f32 %v6585, 0.0
        %v6629 = vmax.f32 %v6588, 0.0
        %v6630 = vmax.f32 %v6591, 0.0
        %v6631 = vmax.f32 %v6594, 0.0
        %v6632 = vmax.f32 %v6597, 0.0
        %v6633 = vmax.f32 %v6600, 0.0
        %v6634 = vmax.f32 %v6603, 0.0
        %v6635 = vmax.f32 %v6606, 0.0
        %v6636 = vmax.f32 %v6609, 0.0
        %v6637 = vmax.f32 %v6612, 0.0
        %v6638 = vmax.f32 %v6615, 0.0
        %v6639 = vmax.f32 %v6618, 0.0
        %v6640 = vmax.f32 %v6621, 0.0
        %v6641 = vmax.f32 %v6624, 0.0
        %v6642 = vld [vmem:[%s16] sm:$0xff]
        %v6643 = vld [vmem:[%s16 + $0x8] sm:$0xff]
        %v6645 = vsel %vm4163, %v6626, 0
        %v6648 = vsel %vm4163, %v6627, 0
        %v6651 = vsel %vm4163, %v6628, 0
        %v6654 = vsel %vm4163, %v6629, 0
        %v6657 = vsel %vm4163, %v6630, 0
        %v6660 = vsel %vm4163, %v6631, 0
        %v6663 = vsel %vm4163, %v6632, 0
        %v6666 = vsel %vm4163, %v6633, 0
        %v6669 = vsel %vm4163, %v6634, 0
        %v6672 = vsel %vm4163, %v6635, 0
        %v6675 = vsel %vm4163, %v6636, 0
        %v6678 = vsel %vm4163, %v6637, 0
        %v6681 = vsel %vm4163, %v6638, 0
        %v6684 = vsel %vm4163, %v6639, 0
        %v6687 = vsel %vm4163, %v6640, 0
        %v6690 = vsel %vm4163, %v6641, 0
        %6692 = vmatpush.msra.mxu0 0.0
        %6693 = vmatpush.msra.mxu0 0.0
        %6694 = vmatpush.msra.mxu0 0.0
        %6695 = vmatpush.msra.mxu0 0.0
        %6696 = vmatpush.msra.mxu0 0.0
        %6697 = vmatpush.msra.mxu0 0.0
        %6698 = vmatpush.msra.mxu0 0.0
        %6699 = vmatpush.msra.mxu0 0.0
        %6700 = vmatpush.msra.mxu0 0.0
        %6701 = vmatpush.msra.mxu0 0.0
        %6702 = vmatpush.msra.mxu0 0.0
        %6703 = vmatpush.msra.mxu0 0.0
        %6704 = vmatpush.msra.mxu0 0.0
        %6705 = vmatpush.msra.mxu0 0.0
        %6706 = vmatpush.msra.mxu0 %v6643
        %6707 = vmatpush.msra.mxu0 %v6642
        %6708 = vmatmul.f32.gmra.mxu0 %v6645
        %v6709 = vpop.f32.mrf.mxu0
        %v6710 = vadd.f32 0.0, %v6709
        %6711 = vmatmul.f32.gmra.mxu0 %v6648
        %v6712 = vpop.f32.mrf.mxu0
        %v6713 = vadd.f32 0.0, %v6712
        %6714 = vmatmul.f32.gmra.mxu0 %v6651
        %v6715 = vpop.f32.mrf.mxu0
        %v6716 = vadd.f32 0.0, %v6715
        %6717 = vmatmul.f32.gmra.mxu0 %v6654
        %v6718 = vpop.f32.mrf.mxu0
        %v6719 = vadd.f32 0.0, %v6718
        %6720 = vmatmul.f32.gmra.mxu0 %v6657
        %v6721 = vpop.f32.mrf.mxu0
        %v6722 = vadd.f32 0.0, %v6721
        %6723 = vmatmul.f32.gmra.mxu0 %v6660
        %v6724 = vpop.f32.mrf.mxu0
        %v6725 = vadd.f32 0.0, %v6724
        %6726 = vmatmul.f32.gmra.mxu0 %v6663
        %v6727 = vpop.f32.mrf.mxu0
        %v6728 = vadd.f32 0.0, %v6727
        %6729 = vmatmul.f32.gmra.mxu0 %v6666
        %v6730 = vpop.f32.mrf.mxu0
        %v6731 = vadd.f32 0.0, %v6730
        %6732 = vmatmul.f32.gmra.mxu0 %v6669
        %v6733 = vpop.f32.mrf.mxu0
        %v6734 = vadd.f32 0.0, %v6733
        %6735 = vmatmul.f32.gmra.mxu0 %v6672
        %v6736 = vpop.f32.mrf.mxu0
        %v6737 = vadd.f32 0.0, %v6736
        %6738 = vmatmul.f32.gmra.mxu0 %v6675
        %v6739 = vpop.f32.mrf.mxu0
        %v6740 = vadd.f32 0.0, %v6739
        %6741 = vmatmul.f32.gmra.mxu0 %v6678
        %v6742 = vpop.f32.mrf.mxu0
        %v6743 = vadd.f32 0.0, %v6742
        %6744 = vmatmul.f32.gmra.mxu0 %v6681
        %v6745 = vpop.f32.mrf.mxu0
        %v6746 = vadd.f32 0.0, %v6745
        %6747 = vmatmul.f32.gmra.mxu0 %v6684
        %v6748 = vpop.f32.mrf.mxu0
        %v6749 = vadd.f32 0.0, %v6748
        %6750 = vmatmul.f32.gmra.mxu0 %v6687
        %v6751 = vpop.f32.mrf.mxu0
        %v6752 = vadd.f32 0.0, %v6751
        %6753 = vmatmul.f32.gmra.mxu0 %v6690
        %v6754 = vpop.f32.mrf.mxu0
        %v6755 = vadd.f32 0.0, %v6754
        %6756 = vdwg.mxu0
        %v6757 = vsub.f32 0.0, %v6710
        %v6758 = vsub.f32 0.0, %v6713
        %v6759 = vsub.f32 0.0, %v6716
        %v6760 = vsub.f32 0.0, %v6719
        %v6761 = vsub.f32 0.0, %v6722
        %v6762 = vsub.f32 0.0, %v6725
        %v6763 = vsub.f32 0.0, %v6728
        %v6764 = vsub.f32 0.0, %v6731
        %v6765 = vsub.f32 0.0, %v6734
        %v6766 = vsub.f32 0.0, %v6737
        %v6767 = vsub.f32 0.0, %v6740
        %v6768 = vsub.f32 0.0, %v6743
        %v6769 = vsub.f32 0.0, %v6746
        %v6770 = vsub.f32 0.0, %v6749
        %v6771 = vsub.f32 0.0, %v6752
        %v6772 = vsub.f32 0.0, %v6755
        %v6773 = vmul.f32 %v6757, 1.442695
        %v6774 = vpow.pop %v6773
        %v6775 = vmul.f32 %v6758, 1.442695
        %v6776 = vpow.pop %v6775
        %v6777 = vmul.f32 %v6759, 1.442695
        %v6778 = vpow.pop %v6777
        %v6779 = vmul.f32 %v6760, 1.442695
        %v6780 = vpow.pop %v6779
        %v6781 = vmul.f32 %v6761, 1.442695
        %v6782 = vpow.pop %v6781
        %v6783 = vmul.f32 %v6762, 1.442695
        %v6784 = vpow.pop %v6783
        %v6785 = vmul.f32 %v6763, 1.442695
        %v6786 = vpow.pop %v6785
        %v6787 = vmul.f32 %v6764, 1.442695
        %v6788 = vpow.pop %v6787
        %v6789 = vmul.f32 %v6765, 1.442695
        %v6790 = vpow.pop %v6789
        %v6791 = vmul.f32 %v6766, 1.442695
        %v6792 = vpow.pop %v6791
        %v6793 = vmul.f32 %v6767, 1.442695
        %v6794 = vpow.pop %v6793
        %v6795 = vmul.f32 %v6768, 1.442695
        %v6796 = vpow.pop %v6795
        %v6797 = vmul.f32 %v6769, 1.442695
        %v6798 = vpow.pop %v6797
        %v6799 = vmul.f32 %v6770, 1.442695
        %v6800 = vpow.pop %v6799
        %v6801 = vmul.f32 %v6771, 1.442695
        %v6802 = vpow.pop %v6801
        %v6803 = vmul.f32 %v6772, 1.442695
        %v6804 = vpow.pop %v6803
        %v6805 = vadd.f32 %v6774, 1.0
        %v6806 = vadd.f32 %v6776, 1.0
        %v6807 = vadd.f32 %v6778, 1.0
        %v6808 = vadd.f32 %v6780, 1.0
        %v6809 = vadd.f32 %v6782, 1.0
        %v6810 = vadd.f32 %v6784, 1.0
        %v6811 = vadd.f32 %v6786, 1.0
        %v6812 = vadd.f32 %v6788, 1.0
        %v6813 = vadd.f32 %v6790, 1.0
        %v6814 = vadd.f32 %v6792, 1.0
        %v6815 = vadd.f32 %v6794, 1.0
        %v6816 = vadd.f32 %v6796, 1.0
        %v6817 = vadd.f32 %v6798, 1.0
        %v6818 = vadd.f32 %v6800, 1.0
        %v6819 = vadd.f32 %v6802, 1.0
        %v6820 = vadd.f32 %v6804, 1.0
        %v6821 = vrcp.pop %v6805
        %v6822 = vrcp.pop %v6806
        %v6823 = vrcp.pop %v6807
        %v6824 = vrcp.pop %v6808
        %v6825 = vrcp.pop %v6809
        %v6826 = vrcp.pop %v6810
        %v6827 = vrcp.pop %v6811
        %v6828 = vrcp.pop %v6812
        %v6829 = vrcp.pop %v6813
        %v6830 = vrcp.pop %v6814
        %v6831 = vrcp.pop %v6815
        %v6832 = vrcp.pop %v6816
        %v6833 = vrcp.pop %v6817
        %v6834 = vrcp.pop %v6818
        %v6835 = vrcp.pop %v6819
        %v6836 = vrcp.pop %v6820
        %v6837 = vmul.f32 %v6626, %v6821
        %v6838 = vmul.f32 %v6627, %v6822
        %v6839 = vmul.f32 %v6628, %v6823
        %v6840 = vmul.f32 %v6629, %v6824
        %v6841 = vmul.f32 %v6630, %v6825
        %v6842 = vmul.f32 %v6631, %v6826
        %v6843 = vmul.f32 %v6632, %v6827
        %v6844 = vmul.f32 %v6633, %v6828
        %v6845 = vmul.f32 %v6634, %v6829
        %v6846 = vmul.f32 %v6635, %v6830
        %v6847 = vmul.f32 %v6636, %v6831
        %v6848 = vmul.f32 %v6637, %v6832
        %v6849 = vmul.f32 %v6638, %v6833
        %v6850 = vmul.f32 %v6639, %v6834
        %v6851 = vmul.f32 %v6640, %v6835
        %v6852 = vmul.f32 %v6641, %v6836
        %v6853 = vld [vmem:[%s1407] sm:$0xff]
        %v6854 = vld [vmem:[%s1407 + $0x8] sm:$0xff]
        %v6855 = vld [vmem:[%s1407 + $0x10] sm:$0xff]
        %v6856 = vld [vmem:[%s1407 + $0x18] sm:$0xff]
        %v6857 = vld [vmem:[%s1407 + $0x20] sm:$0xff]
        %v6858 = vld [vmem:[%s1407 + $0x28] sm:$0xff]
        %v6859 = vld [vmem:[%s1407 + $0x30] sm:$0xff]
        %v6860 = vld [vmem:[%s1407 + $0x38] sm:$0xff]
        %v6861 = vld [vmem:[%s1407 + $0x40] sm:$0xff]
        %v6862 = vld [vmem:[%s1407 + $0x48] sm:$0xff]
        %v6863 = vld [vmem:[%s1407 + $0x50] sm:$0xff]
        %v6864 = vld [vmem:[%s1407 + $0x58] sm:$0xff]
        %v6865 = vld [vmem:[%s1407 + $0x60] sm:$0xff]
        %v6866 = vld [vmem:[%s1407 + $0x68] sm:$0xff]
        %v6867 = vld [vmem:[%s1407 + $0x70] sm:$0xff]
        %v6868 = vld [vmem:[%s1407 + $0x78] sm:$0xff]
        %v6869 = vld [vmem:[%s17] sm:$0xff]
        %v6870 = vld [vmem:[%s17 + $0x8] sm:$0xff]
        %v6871 = vld [vmem:[%s17 + $0x10] sm:$0xff]
        %v6872 = vld [vmem:[%s17 + $0x18] sm:$0xff]
        %v6873 = vld [vmem:[%s18] sm:$0x1]
        %v6875 = vperm.slane %v6873, 0
        %v6878 = vsel %vm889, %v6853, 0
        %v6881 = vsel %vm889, %v6854, 0
        %v6884 = vsel %vm889, %v6855, 0
        %v6887 = vsel %vm889, %v6856, 0
        %v6890 = vsel %vm889, %v6857, 0
        %v6893 = vsel %vm889, %v6858, 0
        %v6896 = vsel %vm889, %v6859, 0
        %v6899 = vsel %vm889, %v6860, 0
        %v6902 = vsel %vm889, %v6861, 0
        %v6905 = vsel %vm889, %v6862, 0
        %v6908 = vsel %vm889, %v6863, 0
        %v6911 = vsel %vm889, %v6864, 0
        %v6914 = vsel %vm889, %v6865, 0
        %v6917 = vsel %vm889, %v6866, 0
        %v6920 = vsel %vm889, %v6867, 0
        %v6923 = vsel %vm889, %v6868, 0
        %6925 = vmatpush.msra.mxu0 0.0
        %6926 = vmatpush.msra.mxu0 0.0
        %6927 = vmatpush.msra.mxu0 0.0
        %6928 = vmatpush.msra.mxu0 0.0
        %6929 = vmatpush.msra.mxu0 0.0
        %6930 = vmatpush.msra.mxu0 0.0
        %6931 = vmatpush.msra.mxu0 0.0
        %6932 = vmatpush.msra.mxu0 0.0
        %6933 = vmatpush.msra.mxu0 0.0
        %6934 = vmatpush.msra.mxu0 0.0
        %6935 = vmatpush.msra.mxu0 0.0
        %6936 = vmatpush.msra.mxu0 0.0
        %6937 = vmatpush.msra.mxu0 %v6872
        %6938 = vmatpush.msra.mxu0 %v6871
        %6939 = vmatpush.msra.mxu0 %v6870
        %6940 = vmatpush.msra.mxu0 %v6869
        %6941 = vmatmul.f32.gmra.mxu0 %v6878
        %v6942 = vpop.f32.mrf.mxu0
        %v6943 = vadd.f32 %v6875, %v6942
        %6944 = vmatmul.f32.gmra.mxu0 %v6881
        %v6945 = vpop.f32.mrf.mxu0
        %v6946 = vadd.f32 %v6875, %v6945
        %6947 = vmatmul.f32.gmra.mxu0 %v6884
        %v6948 = vpop.f32.mrf.mxu0
        %v6949 = vadd.f32 %v6875, %v6948
        %6950 = vmatmul.f32.gmra.mxu0 %v6887
        %v6951 = vpop.f32.mrf.mxu0
        %v6952 = vadd.f32 %v6875, %v6951
        %6953 = vmatmul.f32.gmra.mxu0 %v6890
        %v6954 = vpop.f32.mrf.mxu0
        %v6955 = vadd.f32 %v6875, %v6954
        %6956 = vmatmul.f32.gmra.mxu0 %v6893
        %v6957 = vpop.f32.mrf.mxu0
        %v6958 = vadd.f32 %v6875, %v6957
        %6959 = vmatmul.f32.gmra.mxu0 %v6896
        %v6960 = vpop.f32.mrf.mxu0
        %v6961 = vadd.f32 %v6875, %v6960
        %6962 = vmatmul.f32.gmra.mxu0 %v6899
        %v6963 = vpop.f32.mrf.mxu0
        %v6964 = vadd.f32 %v6875, %v6963
        %6965 = vmatmul.f32.gmra.mxu0 %v6902
        %v6966 = vpop.f32.mrf.mxu0
        %v6967 = vadd.f32 %v6875, %v6966
        %6968 = vmatmul.f32.gmra.mxu0 %v6905
        %v6969 = vpop.f32.mrf.mxu0
        %v6970 = vadd.f32 %v6875, %v6969
        %6971 = vmatmul.f32.gmra.mxu0 %v6908
        %v6972 = vpop.f32.mrf.mxu0
        %v6973 = vadd.f32 %v6875, %v6972
        %6974 = vmatmul.f32.gmra.mxu0 %v6911
        %v6975 = vpop.f32.mrf.mxu0
        %v6976 = vadd.f32 %v6875, %v6975
        %6977 = vmatmul.f32.gmra.mxu0 %v6914
        %v6978 = vpop.f32.mrf.mxu0
        %v6979 = vadd.f32 %v6875, %v6978
        %6980 = vmatmul.f32.gmra.mxu0 %v6917
        %v6981 = vpop.f32.mrf.mxu0
        %v6982 = vadd.f32 %v6875, %v6981
        %6983 = vmatmul.f32.gmra.mxu0 %v6920
        %v6984 = vpop.f32.mrf.mxu0
        %v6985 = vadd.f32 %v6875, %v6984
        %6986 = vmatmul.f32.gmra.mxu0 %v6923
        %v6987 = vpop.f32.mrf.mxu0
        %v6988 = vadd.f32 %v6875, %v6987
        %6989 = vdwg.mxu0
        %v6990 = vadd.f32 %v6837, %v6943
        %v6991 = vadd.f32 %v6838, %v6946
        %v6992 = vadd.f32 %v6839, %v6949
        %v6993 = vadd.f32 %v6840, %v6952
        %v6994 = vadd.f32 %v6841, %v6955
        %v6995 = vadd.f32 %v6842, %v6958
        %v6996 = vadd.f32 %v6843, %v6961
        %v6997 = vadd.f32 %v6844, %v6964
        %v6998 = vadd.f32 %v6845, %v6967
        %v6999 = vadd.f32 %v6846, %v6970
        %v7000 = vadd.f32 %v6847, %v6973
        %v7001 = vadd.f32 %v6848, %v6976
        %v7002 = vadd.f32 %v6849, %v6979
        %v7003 = vadd.f32 %v6850, %v6982
        %v7004 = vadd.f32 %v6851, %v6985
        %v7005 = vadd.f32 %v6852, %v6988
        %v7006 = vld [vmem:[%s19] sm:$0xff]
        %v7007 = vld [vmem:[%s19 + $0x8] sm:$0xff]
        %v7009 = vsel %vm4163, %v6990, 0
        %v7012 = vsel %vm4163, %v6991, 0
        %v7015 = vsel %vm4163, %v6992, 0
        %v7018 = vsel %vm4163, %v6993, 0
        %v7021 = vsel %vm4163, %v6994, 0
        %v7024 = vsel %vm4163, %v6995, 0
        %v7027 = vsel %vm4163, %v6996, 0
        %v7030 = vsel %vm4163, %v6997, 0
        %v7033 = vsel %vm4163, %v6998, 0
        %v7036 = vsel %vm4163, %v6999, 0
        %v7039 = vsel %vm4163, %v7000, 0
        %v7042 = vsel %vm4163, %v7001, 0
        %v7045 = vsel %vm4163, %v7002, 0
        %v7048 = vsel %vm4163, %v7003, 0
        %v7051 = vsel %vm4163, %v7004, 0
        %v7054 = vsel %vm4163, %v7005, 0
        %7056 = vmatpush.msra.mxu0 0.0
        %7057 = vmatpush.msra.mxu0 0.0
        %7058 = vmatpush.msra.mxu0 0.0
        %7059 = vmatpush.msra.mxu0 0.0
        %7060 = vmatpush.msra.mxu0 0.0
        %7061 = vmatpush.msra.mxu0 0.0
        %7062 = vmatpush.msra.mxu0 0.0
        %7063 = vmatpush.msra.mxu0 0.0
        %7064 = vmatpush.msra.mxu0 0.0
        %7065 = vmatpush.msra.mxu0 0.0
        %7066 = vmatpush.msra.mxu0 0.0
        %7067 = vmatpush.msra.mxu0 0.0
        %7068 = vmatpush.msra.mxu0 0.0
        %7069 = vmatpush.msra.mxu0 0.0
        %7070 = vmatpush.msra.mxu0 %v7007
        %7071 = vmatpush.msra.mxu0 %v7006
        %7072 = vmatmul.f32.gmra.mxu0 %v7009
        %v7073 = vpop.f32.mrf.mxu0
        %v7074 = vadd.f32 0.0, %v7073
        %7075 = vmatmul.f32.gmra.mxu0 %v7012
        %v7076 = vpop.f32.mrf.mxu0
        %v7077 = vadd.f32 0.0, %v7076
        %7078 = vmatmul.f32.gmra.mxu0 %v7015
        %v7079 = vpop.f32.mrf.mxu0
        %v7080 = vadd.f32 0.0, %v7079
        %7081 = vmatmul.f32.gmra.mxu0 %v7018
        %v7082 = vpop.f32.mrf.mxu0
        %v7083 = vadd.f32 0.0, %v7082
        %7084 = vmatmul.f32.gmra.mxu0 %v7021
        %v7085 = vpop.f32.mrf.mxu0
        %v7086 = vadd.f32 0.0, %v7085
        %7087 = vmatmul.f32.gmra.mxu0 %v7024
        %v7088 = vpop.f32.mrf.mxu0
        %v7089 = vadd.f32 0.0, %v7088
        %7090 = vmatmul.f32.gmra.mxu0 %v7027
        %v7091 = vpop.f32.mrf.mxu0
        %v7092 = vadd.f32 0.0, %v7091
        %7093 = vmatmul.f32.gmra.mxu0 %v7030
        %v7094 = vpop.f32.mrf.mxu0
        %v7095 = vadd.f32 0.0, %v7094
        %7096 = vmatmul.f32.gmra.mxu0 %v7033
        %v7097 = vpop.f32.mrf.mxu0
        %v7098 = vadd.f32 0.0, %v7097
        %7099 = vmatmul.f32.gmra.mxu0 %v7036
        %v7100 = vpop.f32.mrf.mxu0
        %v7101 = vadd.f32 0.0, %v7100
        %7102 = vmatmul.f32.gmra.mxu0 %v7039
        %v7103 = vpop.f32.mrf.mxu0
        %v7104 = vadd.f32 0.0, %v7103
        %7105 = vmatmul.f32.gmra.mxu0 %v7042
        %v7106 = vpop.f32.mrf.mxu0
        %v7107 = vadd.f32 0.0, %v7106
        %7108 = vmatmul.f32.gmra.mxu0 %v7045
        %v7109 = vpop.f32.mrf.mxu0
        %v7110 = vadd.f32 0.0, %v7109
        %7111 = vmatmul.f32.gmra.mxu0 %v7048
        %v7112 = vpop.f32.mrf.mxu0
        %v7113 = vadd.f32 0.0, %v7112
        %7114 = vmatmul.f32.gmra.mxu0 %v7051
        %v7115 = vpop.f32.mrf.mxu0
        %v7116 = vadd.f32 0.0, %v7115
        %7117 = vmatmul.f32.gmra.mxu0 %v7054
        %v7118 = vpop.f32.mrf.mxu0
        %v7119 = vadd.f32 0.0, %v7118
        %7120 = vdwg.mxu0
        %v7121 = vmax.f32 %v7074, 0.0
        %v7122 = vmax.f32 %v7077, 0.0
        %v7123 = vmax.f32 %v7080, 0.0
        %v7124 = vmax.f32 %v7083, 0.0
        %v7125 = vmax.f32 %v7086, 0.0
        %v7126 = vmax.f32 %v7089, 0.0
        %v7127 = vmax.f32 %v7092, 0.0
        %v7128 = vmax.f32 %v7095, 0.0
        %v7129 = vmax.f32 %v7098, 0.0
        %v7130 = vmax.f32 %v7101, 0.0
        %v7131 = vmax.f32 %v7104, 0.0
        %v7132 = vmax.f32 %v7107, 0.0
        %v7133 = vmax.f32 %v7110, 0.0
        %v7134 = vmax.f32 %v7113, 0.0
        %v7135 = vmax.f32 %v7116, 0.0
        %v7136 = vmax.f32 %v7119, 0.0
        %s7137 = scalar_lea.vmem %s841, 128 [#allocation3]
        %7138 = vst.msk [vmem:[%s7137] sm:$0xff] %vm4641, %v7121
        %7139 = vst.msk [vmem:[%s7137 + $0x8] sm:$0xff] %vm4641, %v7122
        %7140 = vst.msk [vmem:[%s7137 + $0x10] sm:$0xff] %vm4641, %v7123
        %7141 = vst.msk [vmem:[%s7137 + $0x18] sm:$0xff] %vm4641, %v7124
        %7142 = vst.msk [vmem:[%s7137 + $0x20] sm:$0xff] %vm4641, %v7125
        %7143 = vst.msk [vmem:[%s7137 + $0x28] sm:$0xff] %vm4641, %v7126
        %7144 = vst.msk [vmem:[%s7137 + $0x30] sm:$0xff] %vm4641, %v7127
        %7145 = vst.msk [vmem:[%s7137 + $0x38] sm:$0xff] %vm4641, %v7128
        %7146 = vst.msk [vmem:[%s7137 + $0x40] sm:$0xff] %vm4641, %v7129
        %7147 = vst.msk [vmem:[%s7137 + $0x48] sm:$0xff] %vm4641, %v7130
        %7148 = vst.msk [vmem:[%s7137 + $0x50] sm:$0xff] %vm4641, %v7131
        %7149 = vst.msk [vmem:[%s7137 + $0x58] sm:$0xff] %vm4641, %v7132
        %7150 = vst.msk [vmem:[%s7137 + $0x60] sm:$0xff] %vm4641, %v7133
        %7151 = vst.msk [vmem:[%s7137 + $0x68] sm:$0xff] %vm4641, %v7134
        %7152 = vst.msk [vmem:[%s7137 + $0x70] sm:$0xff] %vm4641, %v7135
        %7153 = vst.msk [vmem:[%s7137 + $0x78] sm:$0xff] %vm4641, %v7136
        %s7154 = sand.u32 %s511, 1
        %s7155 = scalar_lea.sflag [#allocation4], %s7154
        %s7156 = sand.u32 %s511, 1
        %s7157 = smul.addr %s7156, 256
        %s7158 = scalar_lea.vmem [#allocation3], %s7157
        // Predicated region
        $region147: #{ssfenet_block_forward.1} parent=141 // pred_check
          %p7159 = pneg %p521
        $region148: #{ssfenet_block_forward.1} parent=141 // pred_check_branch
          %7161 = sbr.rel (%p7159) target = $region150
        $region149: #{ssfenet_block_forward.1} parent=141 // pred_region
          #allocation6 [shape = 'u32[6]{0}', space=smem, size = 0x18, scoped, tag = 'DMA stride descriptor']
          %s7162 = smul.u32 16, %s36
          %7164 = vsyncadd %s7155, 0
          %s7165 = smul.addr %s7162, 8
          %s7166 = scalar_lea.hbm %s22, %s7165
          %s7168 = sshll.u32 1, 14
          %s7169 = sxor.u32 4294967295, %s7168
          %s7172 = sshll.u32 7, 18
          %s7173 = sxor.u32 4294967295, %s7172
          %s7174 = sand.u32 0, %s7173
          %s7176 = sor.u32 %s7174, 0
          %s7177 = sshll.u32 %s7158, 4
          %s7178 = int_to_ptr.vmem [resolvable:$true] %s7177
          %s7179 = sshll.u32 %s7166, 4
          %s7180 = int_to_ptr.hbm [resolvable:$true] %s7179
          %7186 = sst [smem:[#allocation6]] 2048
          %s7187 = scalar_lea.smem [#allocation6], 1
          %7188 = sst [smem:[%s7187]] 4096
          %s7189 = scalar_lea.smem [#allocation6], 2
          %7190 = sst [smem:[%s7189]] 16
          %s7191 = scalar_lea.smem [#allocation6], 3
          %7192 = sst [smem:[%s7191]] 128
          %s7193 = scalar_lea.smem [#allocation6], 4
          %7194 = sst [smem:[%s7193]] 128
          %s7195 = scalar_lea.smem [#allocation6], 5
          %7196 = sst [smem:[%s7195]] 8
          %7198 = dma.general %s7178, 4096, %s7180, %s7155, [#allocation5], [#allocation6], %s7176, 0
        $region150: #{ssfenet_block_forward.1} parent=141 // pred_fallthru
          _
      $region142: #{ssfenet_block_forward.1} parent=5 // pred_fallthru
        _
      %p7199 = scmp.le.s32.totalorder 2, %s31
      // Predicated region
      $region151: #{ssfenet_block_forward.1} parent=5 // pred_check
        %p7200 = pneg %p7199
      $region152: #{ssfenet_block_forward.1} parent=5 // pred_check_branch
        %7202 = sbr.rel (%p7200) target = $region154
      $region153: #{ssfenet_block_forward.1} parent=5 // pred_region
        %s7203 = ssub.s32 %s31, 2
        // Predicated region
        $region155: #{ssfenet_block_forward.1} parent=153 // pred_check
          %p7204 = pneg %p527
        $region156: #{ssfenet_block_forward.1} parent=153 // pred_check_branch
          %7206 = sbr.rel (%p7204) target = $region158
        $region157: #{ssfenet_block_forward.1} parent=153 // pred_region
          %s7207 = sand.u32 %s512, 1
          %s7208 = scalar_lea.sflag [#allocation4], %s7207
          %s7209 = sand.u32 %s512, 1
          %s7210 = smul.addr %s7209, 256
          %s7211 = scalar_lea.vmem [#allocation3], %s7210
          %7213 = dma.done %s7208, 4096
        $region158: #{ssfenet_block_forward.1} parent=153 // pred_fallthru
          _
      $region154: #{ssfenet_block_forward.1} parent=5 // pred_fallthru
        _
    $region6: #{ssfenet_block_forward.1} parent=1 // loop_footer
      %s35 = sadd.s32 1, %s31
    $region7: #{ssfenet_block_forward.1} parent=1 // loop_footer_branch
      %30 = sbr.rel target = $region3
    $region8: #{ssfenet_block_forward.1} parent=1 // loop_exit
      _
    %7214 = vsyncpa [#allocation4], 1
    %s7215 = scalar_lea.sflag [#allocation4], 1
    %7216 = vsyncpa %s7215, 1

</llo_original>
